<compile_context>
chip_gen: v5e
topology: v5e:2x2
jax: 0.10.0
libtpu: 0.0.40
codegen_flags: <defaults>
</compile_context>

<pallas_src>
import functools

import numpy as np
import jax
import jax.numpy as jnp
from jax.experimental import pallas as pl
from jax.experimental.pallas import tpu as pltpu


def _round_up(n, m):
    return ((n + m - 1) // m) * m


# ---------------------------------------------------------------------------
# Fused forward kernel
# ---------------------------------------------------------------------------
def _fused_forward_kernel(x_ref, shift_ref, rowid_ref, mean_ref, *refs,
                          num_conv, seq_len):
    """Whole AlexNetDANN forward on VMEM-resident weights.

    x_ref     : (B*LMAX, C_in) f32, batch folded into M; rows past the valid
                sequence length are zero.
    shift_ref : (B*LMAX, B*LMAX) f32, h_prev[r] = h[r-1] within each batch block.
    rowid_ref : (B*LMAX, 1) int32, row index local to each batch block.
    mean_ref  : (B, B*LMAX) f32, per-batch mean over the valid conv outputs.
    refs      : 3*num_conv conv params (w0, w1, b) per layer,
                6 classifier params (w1,b1,w2,b2,w3,b3), 6 domain params,
                then the two output refs.
    """
    n_conv = 3 * num_conv
    conv_refs = refs[:n_conv]
    cls_refs = refs[n_conv:n_conv + 6]
    dom_refs = refs[n_conv + 6:n_conv + 12]
    cls_out_ref = refs[-2]
    dom_out_ref = refs[-1]

    # ---- feature extractor: num_conv x (Conv1d(k=2, pad=1) + ReLU) ---------
    # out[j] = x_pad[j] @ W0 + x_pad[j+1] @ W1 + b with zero padding; in the
    # fixed slab representation this is y = (S @ h) @ W0 + h @ W1 + b followed
    # by zeroing the rows past the new valid length (keeps the slab exact).
    h = x_ref[...]                              # (M, C0) f32
    shift = shift_ref[...]                      # (M, M)  f32 (loaded once)
    row_local = rowid_ref[...]                  # (M, 1)  int32 (loaded once)

    for li in range(num_conv):
        w0 = conv_refs[3 * li][...]             # (C_in, C_out) == torch w[:, :, 0].T
        w1 = conv_refs[3 * li + 1][...]         # (C_in, C_out) == torch w[:, :, 1].T
        bb = conv_refs[3 * li + 2][...]         # (1, C_out)
        h_prev = jnp.dot(shift, h, preferred_element_type=jnp.float32)
        y = (jnp.dot(h_prev, w0, preferred_element_type=jnp.float32)
             + jnp.dot(h, w1, preferred_element_type=jnp.float32)
             + bb)
        y = jnp.maximum(y, 0.0)                 # fused ReLU
        l_out = seq_len + li + 1                # Conv1d(k=2, pad=1): L -> L + 1
        h = jnp.where(row_local < l_out, y, 0.0)   # keep invalid rows at zero

    # torch.mean(features, dim=2) folded into one small matmul -> (B, 128)
    features = jnp.dot(mean_ref[...], h, preferred_element_type=jnp.float32)

    # ---- the two MLP heads (bf16 weights, f32 accumulation) -----------------
    def mlp_head(feat, w_b_refs, out_ref):
        w1_, b1_, w2_, b2_, w3_, b3_ = (r[...] for r in w_b_refs)
        z = jnp.dot(feat.astype(w1_.dtype), w1_,
                    preferred_element_type=jnp.float32) + b1_
        z = jnp.maximum(z, 0.0)
        z = jnp.dot(z.astype(w2_.dtype), w2_,
                    preferred_element_type=jnp.float32) + b2_
        z = jnp.maximum(z, 0.0)
        out_ref[...] = jnp.dot(z.astype(w3_.dtype), w3_,
                               preferred_element_type=jnp.float32) + b3_

    # GradientReversalLayer is identity in the forward pass -> same features.
    mlp_head(features, cls_refs, cls_out_ref)
    mlp_head(features, dom_refs, dom_out_ref)


# ---------------------------------------------------------------------------
# Parameter init (deterministic, PyTorch-default-style uniform bounds)
# ---------------------------------------------------------------------------
def init_params(key, input_size, num_classes, domain_output_size):
    """Conv weights f32 (tiny); MLP weights bf16 (dominant HBM bytes).

    Layout for loading real PyTorch weights:
      conv:   w0 == weight[:, :, 0].T, w1 == weight[:, :, 1].T  -> (C_in, C_out)
      linear: w  == weight.T                                    -> (D_in, D_out)
    The last layer of each MLP head is zero-padded to a multiple of 128 output
    columns so kernel stores are lane-dense (sliced back in the wrapper).
    """
    params = {"conv": [], "classifier": [], "domain": []}

    conv_channels = [input_size, 64, 128, 256, 128, 128]
    for c_in, c_out in zip(conv_channels[:-1], conv_channels[1:]):
        key, k0, k1, kb = jax.random.split(key, 4)
        bound = 1.0 / float(np.sqrt(c_in * 2.0))      # fan_in = C_in * kernel_size
        params["conv"].append(dict(
            w0=jax.random.uniform(k0, (c_in, c_out), jnp.float32, -bound, bound),
            w1=jax.random.uniform(k1, (c_in, c_out), jnp.float32, -bound, bound),
            b=jax.random.uniform(kb, (1, c_out), jnp.float32, -bound, bound),
        ))

    def make_mlp(key, dims):
        layers = []
        last = len(dims) - 2
        for i, (d_in, d_out) in enumerate(zip(dims[:-1], dims[1:])):
            key, kw, kb = jax.random.split(key, 3)
            bound = 1.0 / float(np.sqrt(d_in))
            w = jax.random.uniform(kw, (d_in, d_out), jnp.float32, -bound, bound)
            b = jax.random.uniform(kb, (1, d_out), jnp.float32, -bound, bound)
            if i == last:
                pad_to = _round_up(d_out, 128)
                w = jnp.pad(w, ((0, 0), (0, pad_to - d_out)))
                b = jnp.pad(b, ((0, 0), (0, pad_to - d_out)))
            layers.append(dict(w=w.astype(jnp.bfloat16), b=b))
        return key, layers

    key, params["classifier"] = make_mlp(key, [128, 1024, 1024, num_classes])
    key, params["domain"] = make_mlp(key, [128, 1024, 1024, domain_output_size])
    return params


# ---------------------------------------------------------------------------
# Forward pass (eval mode)
# ---------------------------------------------------------------------------
def alexnet_dann_forward(params, x, alpha=0.0, *, num_classes, domain_output_size):
    """x: (B, seq_len, input_size) -> (class_output (B, num_classes),
                                       domain_output (B, domain_output_size))."""
    del alpha                          # GradientReversalLayer: identity forward.
    x = x.astype(jnp.float32)
    B, seq_len, c_in = x.shape
    num_conv = len(params["conv"])
    l_final = seq_len + num_conv                   # length after the conv stack
    lmax = _round_up(l_final, 8)                   # fixed per-batch row budget
    M = B * lmax

    # Fold batch into the sublane (M) dim; rows >= seq_len per block are zero.
    x_buf = jnp.pad(x, ((0, 0), (0, lmax - seq_len), (0, 0))).reshape(M, c_in)

    # Static helper matrices (constant-folded under jit).
    shift = np.zeros((M, M), np.float32)           # h_prev[r] = h[r-1] (per block)
    for r in range(M):
        if r % lmax != 0:
            shift[r, r - 1] = 1.0
    rowid = (np.arange(M, dtype=np.int32) % lmax).reshape(M, 1)
    mean_mat = np.zeros((B, M), np.float32)        # per-batch mean over valid rows
    for b in range(B):
        mean_mat[b, b * lmax:b * lmax + l_final] = 1.0 / float(l_final)

    flat = []
    for layer in params["conv"]:
        flat += [layer["w0"], layer["w1"], layer["b"]]
    for name in ("classifier", "domain"):
        for layer in params[name]:
            flat += [layer["w"], layer["b"]]

    pad_cls = params["classifier"][-1]["w"].shape[1]   # lane-dense widths
    pad_dom = params["domain"][-1]["w"].shape[1]

    # Advisory cost hint for the XLA scheduler around the custom call.
    chans = [c_in] + [l["w0"].shape[1] for l in params["conv"]]
    flops = 0
    for ci, co in zip(chans[:-1], chans[1:]):
        flops += 2 * M * M * ci          # shift matmul
        flops += 4 * M * ci * co         # two conv taps
    flops += 2 * B * M * chans[-1]       # mean reduction matmul
    for name in ("classifier", "domain"):
        for layer in params[name]:
            d_in, d_out = layer["w"].shape
            flops += 2 * B * d_in * d_out
    nbytes = lambda a: int(np.prod(a.shape)) * jnp.dtype(a.dtype).itemsize
    bytes_accessed = (nbytes(x_buf) + shift.nbytes + rowid.nbytes + mean_mat.nbytes
                      + sum(nbytes(a) for a in flat)
                      + B * (pad_cls + pad_dom) * 4)

    kern = functools.partial(_fused_forward_kernel,
                             num_conv=num_conv, seq_len=seq_len)
    cls_pad, dom_pad = pl.pallas_call(
        kern,
        out_shape=(jax.ShapeDtypeStruct((B, pad_cls), jnp.float32),
                   jax.ShapeDtypeStruct((B, pad_dom), jnp.float32)),
        compiler_params=pltpu.CompilerParams(
            vmem_limit_bytes=32 * 1024 * 1024),
        cost_estimate=pl.CostEstimate(flops=int(flops), transcendentals=0,
                                      bytes_accessed=int(bytes_accessed)),
    )(x_buf, jnp.asarray(shift), jnp.asarray(rowid), jnp.asarray(mean_mat), *flat)

    # Slice the lane-padded head outputs back to their logical widths.
    return cls_pad[:, :num_classes], dom_pad[:, :domain_output_size]


# ---------------------------------------------------------------------------
# Pure-JAX reference (same params / same precision policy) for verification
# ---------------------------------------------------------------------------
def reference_forward(params, x, *, num_classes, domain_output_size):
    x = x.astype(jnp.float32)
    h = x                                            # (B, L, C_in)
    hi = jax.lax.Precision.HIGHEST
    for layer in params["conv"]:
        w0, w1, b = layer["w0"], layer["w1"], layer["b"]
        hp = jnp.pad(h, ((0, 0), (1, 1), (0, 0)))    # Conv1d padding=1
        y = (jnp.matmul(hp[:, :-1, :], w0, precision=hi)
             + jnp.matmul(hp[:, 1:, :], w1, precision=hi) + b)
        h = jnp.maximum(y, 0.0)                      # length grows by 1 per layer
    feats = jnp.mean(h, axis=1)                      # (B, 128)

    def head(layers, f):
        z = f
        for i, lyr in enumerate(layers):
            w, b = lyr["w"], lyr["b"]
            z = jnp.dot(z.astype(w.dtype), w,
                        preferred_element_type=jnp.float32) + b
            if i < len(layers) - 1:
                z = jnp.maximum(z, 0.0)
        return z

    cls = head(params["classifier"], feats)[:, :num_classes]
    dom = head(params["domain"], feats)[:, :domain_output_size]
    return cls, dom


if __name__ == "__main__":
    BATCH, SEQ, INPUT_SIZE = 2, 8, 4
    NUM_CLASSES, DOMAIN_OUT = 3, 2

    key = jax.random.PRNGKey(0)
    key, kx, kp = jax.random.split(key, 3)
    x = jax.random.normal(kx, (BATCH, SEQ, INPUT_SIZE), jnp.float32)
    params = init_params(kp, INPUT_SIZE, NUM_CLASSES, DOMAIN_OUT)

    fwd = jax.jit(functools.partial(alexnet_dann_forward,
                                    num_classes=NUM_CLASSES,
                                    domain_output_size=DOMAIN_OUT))
    class_out, domain_out = fwd(params, x, 0.0)
    jax.block_until_ready((class_out, domain_out))

    assert class_out.shape == (BATCH, NUM_CLASSES)
    assert domain_out.shape == (BATCH, DOMAIN_OUT)
    assert jnp.all(jnp.isfinite(class_out)) and jnp.all(jnp.isfinite(domain_out))

    # Numerics check against the pure-JAX reference (generous tolerance: the
    # only expected deltas are MXU accumulation-order / bf16 rounding noise).
    ref_cls, ref_dom = reference_forward(params, x, num_classes=NUM_CLASSES,
                                         domain_output_size=DOMAIN_OUT)
    assert jnp.allclose(class_out, ref_cls, atol=2e-2, rtol=2e-2)
    assert jnp.allclose(domain_out, ref_dom, atol=2e-2, rtol=2e-2)

    print("KERNEL_OK")
</pallas_src>

<mosaic_0001>
module attributes {stable_mosaic.version = 11 : i64} {
  func.func @_fused_forward_kernel(%arg0: memref<32x4xf32, #tpu.memory_space<vmem>>, %arg1: memref<32x32xf32, #tpu.memory_space<vmem>>, %arg2: memref<32x1xi32, #tpu.memory_space<vmem>>, %arg3: memref<2x32xf32, #tpu.memory_space<vmem>>, %arg4: memref<4x64xf32, #tpu.memory_space<vmem>>, %arg5: memref<4x64xf32, #tpu.memory_space<vmem>>, %arg6: memref<1x64xf32, #tpu.memory_space<vmem>>, %arg7: memref<64x128xf32, #tpu.memory_space<vmem>>, %arg8: memref<64x128xf32, #tpu.memory_space<vmem>>, %arg9: memref<1x128xf32, #tpu.memory_space<vmem>>, %arg10: memref<128x256xf32, #tpu.memory_space<vmem>>, %arg11: memref<128x256xf32, #tpu.memory_space<vmem>>, %arg12: memref<1x256xf32, #tpu.memory_space<vmem>>, %arg13: memref<256x128xf32, #tpu.memory_space<vmem>>, %arg14: memref<256x128xf32, #tpu.memory_space<vmem>>, %arg15: memref<1x128xf32, #tpu.memory_space<vmem>>, %arg16: memref<128x128xf32, #tpu.memory_space<vmem>>, %arg17: memref<128x128xf32, #tpu.memory_space<vmem>>, %arg18: memref<1x128xf32, #tpu.memory_space<vmem>>, %arg19: memref<128x1024xbf16, #tpu.memory_space<vmem>>, %arg20: memref<1x1024xf32, #tpu.memory_space<vmem>>, %arg21: memref<1024x1024xbf16, #tpu.memory_space<vmem>>, %arg22: memref<1x1024xf32, #tpu.memory_space<vmem>>, %arg23: memref<1024x128xbf16, #tpu.memory_space<vmem>>, %arg24: memref<1x128xf32, #tpu.memory_space<vmem>>, %arg25: memref<128x1024xbf16, #tpu.memory_space<vmem>>, %arg26: memref<1x1024xf32, #tpu.memory_space<vmem>>, %arg27: memref<1024x1024xbf16, #tpu.memory_space<vmem>>, %arg28: memref<1x1024xf32, #tpu.memory_space<vmem>>, %arg29: memref<1024x128xbf16, #tpu.memory_space<vmem>>, %arg30: memref<1x128xf32, #tpu.memory_space<vmem>>, %arg31: memref<2x128xf32, #tpu.memory_space<vmem>>, %arg32: memref<2x128xf32, #tpu.memory_space<vmem>>) attributes {dimension_semantics = [], scalar_prefetch = 0 : i64, scratch_operands = 0 : i64, tpu.core_type = #tpu.core_type<tc>} {
    %c0 = arith.constant 0 : index
    %c0_0 = arith.constant 0 : index
    %0 = vector.load %arg0[%c0, %c0_0] : memref<32x4xf32, #tpu.memory_space<vmem>>, vector<32x4xf32>
    %c0_1 = arith.constant 0 : index
    %c0_2 = arith.constant 0 : index
    %1 = vector.load %arg1[%c0_1, %c0_2] : memref<32x32xf32, #tpu.memory_space<vmem>>, vector<32x32xf32>
    %c0_3 = arith.constant 0 : index
    %c0_4 = arith.constant 0 : index
    %2 = vector.load %arg2[%c0_3, %c0_4] : memref<32x1xi32, #tpu.memory_space<vmem>>, vector<32x1xi32>
    %c0_5 = arith.constant 0 : index
    %c0_6 = arith.constant 0 : index
    %3 = vector.load %arg4[%c0_5, %c0_6] : memref<4x64xf32, #tpu.memory_space<vmem>>, vector<4x64xf32>
    %c0_7 = arith.constant 0 : index
    %c0_8 = arith.constant 0 : index
    %4 = vector.load %arg5[%c0_7, %c0_8] : memref<4x64xf32, #tpu.memory_space<vmem>>, vector<4x64xf32>
    %c0_9 = arith.constant 0 : index
    %c0_10 = arith.constant 0 : index
    %5 = vector.load %arg6[%c0_9, %c0_10] : memref<1x64xf32, #tpu.memory_space<vmem>>, vector<1x64xf32>
    %cst = arith.constant dense<0.000000e+00> : vector<32x4xf32>
    %6 = tpu.matmul %1, %0, %cst {dimension_numbers = #tpu.dot_dimension_numbers<[1], [0], [0], [1], [0, 0, 1, 1], [], []>} : vector<32x32xf32>, vector<32x4xf32>, vector<32x4xf32> -> vector<32x4xf32>
    %cst_11 = arith.constant dense<0.000000e+00> : vector<32x64xf32>
    %7 = tpu.matmul %6, %3, %cst_11 {dimension_numbers = #tpu.dot_dimension_numbers<[1], [0], [0], [1], [0, 0, 1, 1], [], []>} : vector<32x4xf32>, vector<4x64xf32>, vector<32x64xf32> -> vector<32x64xf32>
    %cst_12 = arith.constant dense<0.000000e+00> : vector<32x64xf32>
    %8 = tpu.matmul %0, %4, %cst_12 {dimension_numbers = #tpu.dot_dimension_numbers<[1], [0], [0], [1], [0, 0, 1, 1], [], []>} : vector<32x4xf32>, vector<4x64xf32>, vector<32x64xf32> -> vector<32x64xf32>
    %9 = arith.addf %7, %8 : vector<32x64xf32>
    %10 = vector.broadcast %5 : vector<1x64xf32> to vector<32x64xf32>
    %11 = arith.addf %9, %10 : vector<32x64xf32>
    %cst_13 = arith.constant 0.000000e+00 : f32
    %12 = vector.broadcast %cst_13 : f32 to vector<32x64xf32>
    %13 = arith.maximumf %11, %12 : vector<32x64xf32>
    %c9_i32 = arith.constant 9 : i32
    %14 = vector.broadcast %c9_i32 : i32 to vector<32x1xi32>
    %15 = arith.cmpi slt, %2, %14 : vector<32x1xi32>
    %cst_14 = arith.constant 0.000000e+00 : f32
    %16 = vector.shape_cast %15 : vector<32x1xi1> to vector<32x1xi1>
    %17 = vector.broadcast %16 : vector<32x1xi1> to vector<32x64xi1>
    %18 = vector.broadcast %cst_14 : f32 to vector<32x64xf32>
    %19 = arith.select %17, %13, %18 : vector<32x64xi1>, vector<32x64xf32>
    %c0_15 = arith.constant 0 : index
    %c0_16 = arith.constant 0 : index
    %20 = vector.load %arg7[%c0_15, %c0_16] : memref<64x128xf32, #tpu.memory_space<vmem>>, vector<64x128xf32>
    %c0_17 = arith.constant 0 : index
    %c0_18 = arith.constant 0 : index
    %21 = vector.load %arg8[%c0_17, %c0_18] : memref<64x128xf32, #tpu.memory_space<vmem>>, vector<64x128xf32>
    %c0_19 = arith.constant 0 : index
    %c0_20 = arith.constant 0 : index
    %22 = vector.load %arg9[%c0_19, %c0_20] : memref<1x128xf32, #tpu.memory_space<vmem>>, vector<1x128xf32>
    %cst_21 = arith.constant dense<0.000000e+00> : vector<32x64xf32>
    %23 = tpu.matmul %1, %19, %cst_21 {dimension_numbers = #tpu.dot_dimension_numbers<[1], [0], [0], [1], [0, 0, 1, 1], [], []>} : vector<32x32xf32>, vector<32x64xf32>, vector<32x64xf32> -> vector<32x64xf32>
    %cst_22 = arith.constant dense<0.000000e+00> : vector<32x128xf32>
    %24 = tpu.matmul %23, %20, %cst_22 {dimension_numbers = #tpu.dot_dimension_numbers<[1], [0], [0], [1], [0, 0, 1, 1], [], []>} : vector<32x64xf32>, vector<64x128xf32>, vector<32x128xf32> -> vector<32x128xf32>
    %cst_23 = arith.constant dense<0.000000e+00> : vector<32x128xf32>
    %25 = tpu.matmul %19, %21, %cst_23 {dimension_numbers = #tpu.dot_dimension_numbers<[1], [0], [0], [1], [0, 0, 1, 1], [], []>} : vector<32x64xf32>, vector<64x128xf32>, vector<32x128xf32> -> vector<32x128xf32>
    %26 = arith.addf %24, %25 : vector<32x128xf32>
    %27 = vector.broadcast %22 : vector<1x128xf32> to vector<32x128xf32>
    %28 = arith.addf %26, %27 : vector<32x128xf32>
    %cst_24 = arith.constant 0.000000e+00 : f32
    %29 = vector.broadcast %cst_24 : f32 to vector<32x128xf32>
    %30 = arith.maximumf %28, %29 : vector<32x128xf32>
    %c10_i32 = arith.constant 10 : i32
    %31 = vector.broadcast %c10_i32 : i32 to vector<32x1xi32>
    %32 = arith.cmpi slt, %2, %31 : vector<32x1xi32>
    %cst_25 = arith.constant 0.000000e+00 : f32
    %33 = vector.shape_cast %32 : vector<32x1xi1> to vector<32x1xi1>
    %34 = vector.broadcast %33 : vector<32x1xi1> to vector<32x128xi1>
    %35 = vector.broadcast %cst_25 : f32 to vector<32x128xf32>
    %36 = arith.select %34, %30, %35 : vector<32x128xi1>, vector<32x128xf32>
    %c0_26 = arith.constant 0 : index
    %c0_27 = arith.constant 0 : index
    %37 = vector.load %arg10[%c0_26, %c0_27] : memref<128x256xf32, #tpu.memory_space<vmem>>, vector<128x256xf32>
    %c0_28 = arith.constant 0 : index
    %c0_29 = arith.constant 0 : index
    %38 = vector.load %arg11[%c0_28, %c0_29] : memref<128x256xf32, #tpu.memory_space<vmem>>, vector<128x256xf32>
    %c0_30 = arith.constant 0 : index
    %c0_31 = arith.constant 0 : index
    %39 = vector.load %arg12[%c0_30, %c0_31] : memref<1x256xf32, #tpu.memory_space<vmem>>, vector<1x256xf32>
    %cst_32 = arith.constant dense<0.000000e+00> : vector<32x128xf32>
    %40 = tpu.matmul %1, %36, %cst_32 {dimension_numbers = #tpu.dot_dimension_numbers<[1], [0], [0], [1], [0, 0, 1, 1], [], []>} : vector<32x32xf32>, vector<32x128xf32>, vector<32x128xf32> -> vector<32x128xf32>
    %cst_33 = arith.constant dense<0.000000e+00> : vector<32x256xf32>
    %41 = tpu.matmul %40, %37, %cst_33 {dimension_numbers = #tpu.dot_dimension_numbers<[1], [0], [0], [1], [0, 0, 1, 1], [], []>} : vector<32x128xf32>, vector<128x256xf32>, vector<32x256xf32> -> vector<32x256xf32>
    %cst_34 = arith.constant dense<0.000000e+00> : vector<32x256xf32>
    %42 = tpu.matmul %36, %38, %cst_34 {dimension_numbers = #tpu.dot_dimension_numbers<[1], [0], [0], [1], [0, 0, 1, 1], [], []>} : vector<32x128xf32>, vector<128x256xf32>, vector<32x256xf32> -> vector<32x256xf32>
    %43 = arith.addf %41, %42 : vector<32x256xf32>
    %44 = vector.broadcast %39 : vector<1x256xf32> to vector<32x256xf32>
    %45 = arith.addf %43, %44 : vector<32x256xf32>
    %cst_35 = arith.constant 0.000000e+00 : f32
    %46 = vector.broadcast %cst_35 : f32 to vector<32x256xf32>
    %47 = arith.maximumf %45, %46 : vector<32x256xf32>
    %c11_i32 = arith.constant 11 : i32
    %48 = vector.broadcast %c11_i32 : i32 to vector<32x1xi32>
    %49 = arith.cmpi slt, %2, %48 : vector<32x1xi32>
    %cst_36 = arith.constant 0.000000e+00 : f32
    %50 = vector.shape_cast %49 : vector<32x1xi1> to vector<32x1xi1>
    %51 = vector.broadcast %50 : vector<32x1xi1> to vector<32x256xi1>
    %52 = vector.broadcast %cst_36 : f32 to vector<32x256xf32>
    %53 = arith.select %51, %47, %52 : vector<32x256xi1>, vector<32x256xf32>
    %c0_37 = arith.constant 0 : index
    %c0_38 = arith.constant 0 : index
    %54 = vector.load %arg13[%c0_37, %c0_38] : memref<256x128xf32, #tpu.memory_space<vmem>>, vector<256x128xf32>
    %c0_39 = arith.constant 0 : index
    %c0_40 = arith.constant 0 : index
    %55 = vector.load %arg14[%c0_39, %c0_40] : memref<256x128xf32, #tpu.memory_space<vmem>>, vector<256x128xf32>
    %c0_41 = arith.constant 0 : index
    %c0_42 = arith.constant 0 : index
    %56 = vector.load %arg15[%c0_41, %c0_42] : memref<1x128xf32, #tpu.memory_space<vmem>>, vector<1x128xf32>
    %cst_43 = arith.constant dense<0.000000e+00> : vector<32x256xf32>
    %57 = tpu.matmul %1, %53, %cst_43 {dimension_numbers = #tpu.dot_dimension_numbers<[1], [0], [0], [1], [0, 0, 1, 1], [], []>} : vector<32x32xf32>, vector<32x256xf32>, vector<32x256xf32> -> vector<32x256xf32>
    %cst_44 = arith.constant dense<0.000000e+00> : vector<32x128xf32>
    %58 = tpu.matmul %57, %54, %cst_44 {dimension_numbers = #tpu.dot_dimension_numbers<[1], [0], [0], [1], [0, 0, 1, 1], [], []>} : vector<32x256xf32>, vector<256x128xf32>, vector<32x128xf32> -> vector<32x128xf32>
    %cst_45 = arith.constant dense<0.000000e+00> : vector<32x128xf32>
    %59 = tpu.matmul %53, %55, %cst_45 {dimension_numbers = #tpu.dot_dimension_numbers<[1], [0], [0], [1], [0, 0, 1, 1], [], []>} : vector<32x256xf32>, vector<256x128xf32>, vector<32x128xf32> -> vector<32x128xf32>
    %60 = arith.addf %58, %59 : vector<32x128xf32>
    %61 = vector.broadcast %56 : vector<1x128xf32> to vector<32x128xf32>
    %62 = arith.addf %60, %61 : vector<32x128xf32>
    %cst_46 = arith.constant 0.000000e+00 : f32
    %63 = vector.broadcast %cst_46 : f32 to vector<32x128xf32>
    %64 = arith.maximumf %62, %63 : vector<32x128xf32>
    %c12_i32 = arith.constant 12 : i32
    %65 = vector.broadcast %c12_i32 : i32 to vector<32x1xi32>
    %66 = arith.cmpi slt, %2, %65 : vector<32x1xi32>
    %cst_47 = arith.constant 0.000000e+00 : f32
    %67 = vector.shape_cast %66 : vector<32x1xi1> to vector<32x1xi1>
    %68 = vector.broadcast %67 : vector<32x1xi1> to vector<32x128xi1>
    %69 = vector.broadcast %cst_47 : f32 to vector<32x128xf32>
    %70 = arith.select %68, %64, %69 : vector<32x128xi1>, vector<32x128xf32>
    %c0_48 = arith.constant 0 : index
    %c0_49 = arith.constant 0 : index
    %71 = vector.load %arg16[%c0_48, %c0_49] : memref<128x128xf32, #tpu.memory_space<vmem>>, vector<128x128xf32>
    %c0_50 = arith.constant 0 : index
    %c0_51 = arith.constant 0 : index
    %72 = vector.load %arg17[%c0_50, %c0_51] : memref<128x128xf32, #tpu.memory_space<vmem>>, vector<128x128xf32>
    %c0_52 = arith.constant 0 : index
    %c0_53 = arith.constant 0 : index
    %73 = vector.load %arg18[%c0_52, %c0_53] : memref<1x128xf32, #tpu.memory_space<vmem>>, vector<1x128xf32>
    %cst_54 = arith.constant dense<0.000000e+00> : vector<32x128xf32>
    %74 = tpu.matmul %1, %70, %cst_54 {dimension_numbers = #tpu.dot_dimension_numbers<[1], [0], [0], [1], [0, 0, 1, 1], [], []>} : vector<32x32xf32>, vector<32x128xf32>, vector<32x128xf32> -> vector<32x128xf32>
    %cst_55 = arith.constant dense<0.000000e+00> : vector<32x128xf32>
    %75 = tpu.matmul %74, %71, %cst_55 {dimension_numbers = #tpu.dot_dimension_numbers<[1], [0], [0], [1], [0, 0, 1, 1], [], []>} : vector<32x128xf32>, vector<128x128xf32>, vector<32x128xf32> -> vector<32x128xf32>
    %cst_56 = arith.constant dense<0.000000e+00> : vector<32x128xf32>
    %76 = tpu.matmul %70, %72, %cst_56 {dimension_numbers = #tpu.dot_dimension_numbers<[1], [0], [0], [1], [0, 0, 1, 1], [], []>} : vector<32x128xf32>, vector<128x128xf32>, vector<32x128xf32> -> vector<32x128xf32>
    %77 = arith.addf %75, %76 : vector<32x128xf32>
    %78 = vector.broadcast %73 : vector<1x128xf32> to vector<32x128xf32>
    %79 = arith.addf %77, %78 : vector<32x128xf32>
    %cst_57 = arith.constant 0.000000e+00 : f32
    %80 = vector.broadcast %cst_57 : f32 to vector<32x128xf32>
    %81 = arith.maximumf %79, %80 : vector<32x128xf32>
    %c13_i32 = arith.constant 13 : i32
    %82 = vector.broadcast %c13_i32 : i32 to vector<32x1xi32>
    %83 = arith.cmpi slt, %2, %82 : vector<32x1xi32>
    %cst_58 = arith.constant 0.000000e+00 : f32
    %84 = vector.shape_cast %83 : vector<32x1xi1> to vector<32x1xi1>
    %85 = vector.broadcast %84 : vector<32x1xi1> to vector<32x128xi1>
    %86 = vector.broadcast %cst_58 : f32 to vector<32x128xf32>
    %87 = arith.select %85, %81, %86 : vector<32x128xi1>, vector<32x128xf32>
    %c0_59 = arith.constant 0 : index
    %c0_60 = arith.constant 0 : index
    %88 = vector.load %arg3[%c0_59, %c0_60] : memref<2x32xf32, #tpu.memory_space<vmem>>, vector<2x32xf32>
    %cst_61 = arith.constant dense<0.000000e+00> : vector<2x128xf32>
    %89 = tpu.matmul %88, %87, %cst_61 {dimension_numbers = #tpu.dot_dimension_numbers<[1], [0], [0], [1], [0, 0, 1, 1], [], []>} : vector<2x32xf32>, vector<32x128xf32>, vector<2x128xf32> -> vector<2x128xf32>
    %c0_62 = arith.constant 0 : index
    %c0_63 = arith.constant 0 : index
    %90 = vector.load %arg19[%c0_62, %c0_63] : memref<128x1024xbf16, #tpu.memory_space<vmem>>, vector<128x1024xbf16>
    %c0_64 = arith.constant 0 : index
    %c0_65 = arith.constant 0 : index
    %91 = vector.load %arg20[%c0_64, %c0_65] : memref<1x1024xf32, #tpu.memory_space<vmem>>, vector<1x1024xf32>
    %c0_66 = arith.constant 0 : index
    %c0_67 = arith.constant 0 : index
    %92 = vector.load %arg21[%c0_66, %c0_67] : memref<1024x1024xbf16, #tpu.memory_space<vmem>>, vector<1024x1024xbf16>
    %c0_68 = arith.constant 0 : index
    %c0_69 = arith.constant 0 : index
    %93 = vector.load %arg22[%c0_68, %c0_69] : memref<1x1024xf32, #tpu.memory_space<vmem>>, vector<1x1024xf32>
    %c0_70 = arith.constant 0 : index
    %c0_71 = arith.constant 0 : index
    %94 = vector.load %arg23[%c0_70, %c0_71] : memref<1024x128xbf16, #tpu.memory_space<vmem>>, vector<1024x128xbf16>
    %c0_72 = arith.constant 0 : index
    %c0_73 = arith.constant 0 : index
    %95 = vector.load %arg24[%c0_72, %c0_73] : memref<1x128xf32, #tpu.memory_space<vmem>>, vector<1x128xf32>
    %96 = arith.truncf %89 : vector<2x128xf32> to vector<2x128xbf16>
    %cst_74 = arith.constant dense<0.000000e+00> : vector<2x1024xf32>
    %97 = tpu.matmul %96, %90, %cst_74 {dimension_numbers = #tpu.dot_dimension_numbers<[1], [0], [0], [1], [0, 0, 1, 1], [], []>} : vector<2x128xbf16>, vector<128x1024xbf16>, vector<2x1024xf32> -> vector<2x1024xf32>
    %98 = vector.broadcast %91 : vector<1x1024xf32> to vector<2x1024xf32>
    %99 = arith.addf %97, %98 : vector<2x1024xf32>
    %cst_75 = arith.constant 0.000000e+00 : f32
    %100 = vector.broadcast %cst_75 : f32 to vector<2x1024xf32>
    %101 = arith.maximumf %99, %100 : vector<2x1024xf32>
    %102 = arith.truncf %101 : vector<2x1024xf32> to vector<2x1024xbf16>
    %cst_76 = arith.constant dense<0.000000e+00> : vector<2x1024xf32>
    %103 = tpu.matmul %102, %92, %cst_76 {dimension_numbers = #tpu.dot_dimension_numbers<[1], [0], [0], [1], [0, 0, 1, 1], [], []>} : vector<2x1024xbf16>, vector<1024x1024xbf16>, vector<2x1024xf32> -> vector<2x1024xf32>
    %104 = vector.broadcast %93 : vector<1x1024xf32> to vector<2x1024xf32>
    %105 = arith.addf %103, %104 : vector<2x1024xf32>
    %cst_77 = arith.constant 0.000000e+00 : f32
    %106 = vector.broadcast %cst_77 : f32 to vector<2x1024xf32>
    %107 = arith.maximumf %105, %106 : vector<2x1024xf32>
    %108 = arith.truncf %107 : vector<2x1024xf32> to vector<2x1024xbf16>
    %cst_78 = arith.constant dense<0.000000e+00> : vector<2x128xf32>
    %109 = tpu.matmul %108, %94, %cst_78 {dimension_numbers = #tpu.dot_dimension_numbers<[1], [0], [0], [1], [0, 0, 1, 1], [], []>} : vector<2x1024xbf16>, vector<1024x128xbf16>, vector<2x128xf32> -> vector<2x128xf32>
    %110 = vector.broadcast %95 : vector<1x128xf32> to vector<2x128xf32>
    %111 = arith.addf %109, %110 : vector<2x128xf32>
    %c0_79 = arith.constant 0 : index
    %c0_80 = arith.constant 0 : index
    %112 = vector.load %arg31[%c0_79, %c0_80] : memref<2x128xf32, #tpu.memory_space<vmem>>, vector<2x128xf32>
    tpu.vector_store %arg31[%c0_79, %c0_80], %111 {strides = array<i32>} : memref<2x128xf32, #tpu.memory_space<vmem>>, vector<2x128xf32>,
    %c0_81 = arith.constant 0 : index
    %c0_82 = arith.constant 0 : index
    %113 = vector.load %arg25[%c0_81, %c0_82] : memref<128x1024xbf16, #tpu.memory_space<vmem>>, vector<128x1024xbf16>
    %c0_83 = arith.constant 0 : index
    %c0_84 = arith.constant 0 : index
    %114 = vector.load %arg26[%c0_83, %c0_84] : memref<1x1024xf32, #tpu.memory_space<vmem>>, vector<1x1024xf32>
    %c0_85 = arith.constant 0 : index
    %c0_86 = arith.constant 0 : index
    %115 = vector.load %arg27[%c0_85, %c0_86] : memref<1024x1024xbf16, #tpu.memory_space<vmem>>, vector<1024x1024xbf16>
    %c0_87 = arith.constant 0 : index
    %c0_88 = arith.constant 0 : index
    %116 = vector.load %arg28[%c0_87, %c0_88] : memref<1x1024xf32, #tpu.memory_space<vmem>>, vector<1x1024xf32>
    %c0_89 = arith.constant 0 : index
    %c0_90 = arith.constant 0 : index
    %117 = vector.load %arg29[%c0_89, %c0_90] : memref<1024x128xbf16, #tpu.memory_space<vmem>>, vector<1024x128xbf16>
    %c0_91 = arith.constant 0 : index
    %c0_92 = arith.constant 0 : index
    %118 = vector.load %arg30[%c0_91, %c0_92] : memref<1x128xf32, #tpu.memory_space<vmem>>, vector<1x128xf32>
    %119 = arith.truncf %89 : vector<2x128xf32> to vector<2x128xbf16>
    %cst_93 = arith.constant dense<0.000000e+00> : vector<2x1024xf32>
    %120 = tpu.matmul %119, %113, %cst_93 {dimension_numbers = #tpu.dot_dimension_numbers<[1], [0], [0], [1], [0, 0, 1, 1], [], []>} : vector<2x128xbf16>, vector<128x1024xbf16>, vector<2x1024xf32> -> vector<2x1024xf32>
    %121 = vector.broadcast %114 : vector<1x1024xf32> to vector<2x1024xf32>
    %122 = arith.addf %120, %121 : vector<2x1024xf32>
    %cst_94 = arith.constant 0.000000e+00 : f32
    %123 = vector.broadcast %cst_94 : f32 to vector<2x1024xf32>
    %124 = arith.maximumf %122, %123 : vector<2x1024xf32>
    %125 = arith.truncf %124 : vector<2x1024xf32> to vector<2x1024xbf16>
    %cst_95 = arith.constant dense<0.000000e+00> : vector<2x1024xf32>
    %126 = tpu.matmul %125, %115, %cst_95 {dimension_numbers = #tpu.dot_dimension_numbers<[1], [0], [0], [1], [0, 0, 1, 1], [], []>} : vector<2x1024xbf16>, vector<1024x1024xbf16>, vector<2x1024xf32> -> vector<2x1024xf32>
    %127 = vector.broadcast %116 : vector<1x1024xf32> to vector<2x1024xf32>
    %128 = arith.addf %126, %127 : vector<2x1024xf32>
    %cst_96 = arith.constant 0.000000e+00 : f32
    %129 = vector.broadcast %cst_96 : f32 to vector<2x1024xf32>
    %130 = arith.maximumf %128, %129 : vector<2x1024xf32>
    %131 = arith.truncf %130 : vector<2x1024xf32> to vector<2x1024xbf16>
    %cst_97 = arith.constant dense<0.000000e+00> : vector<2x128xf32>
    %132 = tpu.matmul %131, %117, %cst_97 {dimension_numbers = #tpu.dot_dimension_numbers<[1], [0], [0], [1], [0, 0, 1, 1], [], []>} : vector<2x1024xbf16>, vector<1024x128xbf16>, vector<2x128xf32> -> vector<2x128xf32>
    %133 = vector.broadcast %118 : vector<1x128xf32> to vector<2x128xf32>
    %134 = arith.addf %132, %133 : vector<2x128xf32>
    %c0_98 = arith.constant 0 : index
    %c0_99 = arith.constant 0 : index
    %135 = vector.load %arg32[%c0_98, %c0_99] : memref<2x128xf32, #tpu.memory_space<vmem>>, vector<2x128xf32>
    tpu.vector_store %arg32[%c0_98, %c0_99], %134 {strides = array<i32>} : memref<2x128xf32, #tpu.memory_space<vmem>>, vector<2x128xf32>,
    return
  }
}

</mosaic_0001>

<llo_original>
// kernel: alexnet_dann_forward.1
$region0: #{alexnet_dann_forward.1}
  #allocation0 [shape = 'u32[]', space=smem, size = 0x4, offset = 0x4, fixed_abs, tag = 'smem constant byte address 0x4 - core index']
  #allocation1 [shape = 'u32[72,128]{1,0:T(1,128)}', space=vmem, size = 0x9000, scoped, tag = 'internal scratch']
  %s0 = inlined_call_operand.smem [shape: u32[33], index: -1, kind: input, shape index: {}]
  %s1 = sld [smem:[%s0]]
  %s2 = scalar_lea.smem %s0, 1
  %s3 = sld [smem:[%s2]]
  %s4 = scalar_lea.smem %s0, 2
  %s5 = sld [smem:[%s4]]
  %s6 = scalar_lea.smem %s0, 3
  %s7 = sld [smem:[%s6]]
  %s8 = scalar_lea.smem %s0, 4
  %s9 = sld [smem:[%s8]]
  %s10 = scalar_lea.smem %s0, 5
  %s11 = sld [smem:[%s10]]
  %s12 = scalar_lea.smem %s0, 6
  %s13 = sld [smem:[%s12]]
  %s14 = scalar_lea.smem %s0, 7
  %s15 = sld [smem:[%s14]]
  %s16 = scalar_lea.smem %s0, 8
  %s17 = sld [smem:[%s16]]
  %s18 = scalar_lea.smem %s0, 9
  %s19 = sld [smem:[%s18]]
  %s20 = scalar_lea.smem %s0, 10
  %s21 = sld [smem:[%s20]]
  %s22 = scalar_lea.smem %s0, 11
  %s23 = sld [smem:[%s22]]
  %s24 = scalar_lea.smem %s0, 12
  %s25 = sld [smem:[%s24]]
  %s26 = scalar_lea.smem %s0, 13
  %s27 = sld [smem:[%s26]]
  %s28 = scalar_lea.smem %s0, 14
  %s29 = sld [smem:[%s28]]
  %s30 = scalar_lea.smem %s0, 15
  %s31 = sld [smem:[%s30]]
  %s32 = scalar_lea.smem %s0, 16
  %s33 = sld [smem:[%s32]]
  %s34 = scalar_lea.smem %s0, 17
  %s35 = sld [smem:[%s34]]
  %s36 = scalar_lea.smem %s0, 18
  %s37 = sld [smem:[%s36]]
  %s38 = scalar_lea.smem %s0, 19
  %s39 = sld [smem:[%s38]]
  %s40 = scalar_lea.smem %s0, 20
  %s41 = sld [smem:[%s40]]
  %s42 = scalar_lea.smem %s0, 21
  %s43 = sld [smem:[%s42]]
  %s44 = scalar_lea.smem %s0, 22
  %s45 = sld [smem:[%s44]]
  %s46 = scalar_lea.smem %s0, 23
  %s47 = sld [smem:[%s46]]
  %s48 = scalar_lea.smem %s0, 24
  %s49 = sld [smem:[%s48]]
  %s50 = scalar_lea.smem %s0, 25
  %s51 = sld [smem:[%s50]]
  %s52 = scalar_lea.smem %s0, 26
  %s53 = sld [smem:[%s52]]
  %s54 = scalar_lea.smem %s0, 27
  %s55 = sld [smem:[%s54]]
  %s56 = scalar_lea.smem %s0, 28
  %s57 = sld [smem:[%s56]]
  %s58 = scalar_lea.smem %s0, 29
  %s59 = sld [smem:[%s58]]
  %s60 = scalar_lea.smem %s0, 30
  %s61 = sld [smem:[%s60]]
  %s62 = scalar_lea.smem %s0, 31
  %s63 = sld [smem:[%s62]]
  %s64 = scalar_lea.smem %s0, 32
  %s65 = sld [smem:[%s64]]
  %66 = xla_tuple %s63, %s65
  %s67 = sld [smem:[#allocation0]]
  $region262: #{alexnet_dann_forward.1} parent=0
    _
  %s69 = ssub.s32 1, %s67
  %s70 = scalar_select 0, %s69, %s67
  $region1: #{alexnet_dann_forward.1} parent=0
    #allocation2 [shape = 'u8[16384]{0}', space=vmem, size = 0x4000, scoped, tag = 'input window, operand 1, single buffered']
    #allocation3 [shape = 's32[1]{0}', space=sflag, size = 0x4, scoped, tag = 'scoped memory for alexnet_dann_forward.1']
    #allocation4 [shape = 's32[1]{0}', space=sflag, size = 0x4, scoped, tag = 'scoped memory for alexnet_dann_forward.1']
    #allocation5 [shape = 'u8[16384]{0}', space=vmem, size = 0x4000, scoped, tag = 'input window, operand 2, single buffered']
    #allocation6 [shape = 's32[1]{0}', space=sflag, size = 0x4, scoped, tag = 'scoped memory for alexnet_dann_forward.1']
    #allocation7 [shape = 'u8[1024]{0}', space=vmem, size = 0x400, scoped, tag = 'input window, operand 3, single buffered']
    #allocation8 [shape = 'u8[2048]{0}', space=vmem, size = 0x800, scoped, tag = 'input window, operand 4, single buffered']
    #allocation9 [shape = 's32[1]{0}', space=sflag, size = 0x4, scoped, tag = 'scoped memory for alexnet_dann_forward.1']
    #allocation10 [shape = 'u8[2048]{0}', space=vmem, size = 0x800, scoped, tag = 'input window, operand 5, single buffered']
    #allocation11 [shape = 'u8[512]{0}', space=vmem, size = 0x400, scoped, tag = 'input window, operand 6, single buffered']
    #allocation12 [shape = 's32[1]{0}', space=sflag, size = 0x4, scoped, tag = 'scoped memory for alexnet_dann_forward.1']
    #allocation13 [shape = 'u8[32768]{0}', space=vmem, size = 0x8000, scoped, tag = 'input window, operand 7, single buffered']
    #allocation14 [shape = 'u8[32768]{0}', space=vmem, size = 0x8000, scoped, tag = 'input window, operand 8, single buffered']
    #allocation15 [shape = 's32[1]{0}', space=sflag, size = 0x4, scoped, tag = 'scoped memory for alexnet_dann_forward.1']
    #allocation16 [shape = 'u8[512]{0}', space=vmem, size = 0x400, scoped, tag = 'input window, operand 9, single buffered']
    #allocation17 [shape = 'u8[131072]{0}', space=vmem, size = 0x20000, scoped, tag = 'input window, operand 10, single buffered']
    #allocation18 [shape = 's32[1]{0}', space=sflag, size = 0x4, scoped, tag = 'scoped memory for alexnet_dann_forward.1']
    #allocation19 [shape = 'u8[131072]{0}', space=vmem, size = 0x20000, scoped, tag = 'input window, operand 11, single buffered']
    #allocation20 [shape = 'u8[1024]{0}', space=vmem, size = 0x400, scoped, tag = 'input window, operand 12, single buffered']
    #allocation21 [shape = 's32[1]{0}', space=sflag, size = 0x4, scoped, tag = 'scoped memory for alexnet_dann_forward.1']
    #allocation22 [shape = 'u8[131072]{0}', space=vmem, size = 0x20000, scoped, tag = 'input window, operand 13, single buffered']
    #allocation23 [shape = 'u8[131072]{0}', space=vmem, size = 0x20000, scoped, tag = 'input window, operand 14, single buffered']
    #allocation24 [shape = 's32[1]{0}', space=sflag, size = 0x4, scoped, tag = 'scoped memory for alexnet_dann_forward.1']
    #allocation25 [shape = 'u8[512]{0}', space=vmem, size = 0x400, scoped, tag = 'input window, operand 15, single buffered']
    #allocation26 [shape = 'u8[65536]{0}', space=vmem, size = 0x10000, scoped, tag = 'input window, operand 16, single buffered']
    #allocation27 [shape = 's32[1]{0}', space=sflag, size = 0x4, scoped, tag = 'scoped memory for alexnet_dann_forward.1']
    #allocation28 [shape = 'u8[65536]{0}', space=vmem, size = 0x10000, scoped, tag = 'input window, operand 17, single buffered']
    #allocation29 [shape = 'u8[512]{0}', space=vmem, size = 0x400, scoped, tag = 'input window, operand 18, single buffered']
    #allocation30 [shape = 's32[1]{0}', space=sflag, size = 0x4, scoped, tag = 'scoped memory for alexnet_dann_forward.1']
    #allocation31 [shape = 'u8[262144]{0}', space=vmem, size = 0x40000, scoped, tag = 'input window, operand 19, single buffered']
    #allocation32 [shape = 'u8[4096]{0}', space=vmem, size = 0x1000, scoped, tag = 'input window, operand 20, single buffered']
    #allocation33 [shape = 's32[1]{0}', space=sflag, size = 0x4, scoped, tag = 'scoped memory for alexnet_dann_forward.1']
    #allocation34 [shape = 'u8[2097152]{0}', space=vmem, size = 0x200000, scoped, tag = 'input window, operand 21, single buffered']
    #allocation35 [shape = 'u8[4096]{0}', space=vmem, size = 0x1000, scoped, tag = 'input window, operand 22, single buffered']
    #allocation36 [shape = 's32[1]{0}', space=sflag, size = 0x4, scoped, tag = 'scoped memory for alexnet_dann_forward.1']
    #allocation37 [shape = 'u8[262144]{0}', space=vmem, size = 0x40000, scoped, tag = 'input window, operand 23, single buffered']
    #allocation38 [shape = 'u8[512]{0}', space=vmem, size = 0x400, scoped, tag = 'input window, operand 24, single buffered']
    #allocation39 [shape = 's32[1]{0}', space=sflag, size = 0x4, scoped, tag = 'scoped memory for alexnet_dann_forward.1']
    #allocation40 [shape = 'u8[262144]{0}', space=vmem, size = 0x40000, scoped, tag = 'input window, operand 25, single buffered']
    #allocation41 [shape = 'u8[4096]{0}', space=vmem, size = 0x1000, scoped, tag = 'input window, operand 26, single buffered']
    #allocation42 [shape = 's32[1]{0}', space=sflag, size = 0x4, scoped, tag = 'scoped memory for alexnet_dann_forward.1']
    #allocation43 [shape = 'u8[2097152]{0}', space=vmem, size = 0x200000, scoped, tag = 'input window, operand 27, single buffered']
    #allocation44 [shape = 'u8[4096]{0}', space=vmem, size = 0x1000, scoped, tag = 'input window, operand 28, single buffered']
    #allocation45 [shape = 's32[1]{0}', space=sflag, size = 0x4, scoped, tag = 'scoped memory for alexnet_dann_forward.1']
    #allocation46 [shape = 'u8[262144]{0}', space=vmem, size = 0x40000, scoped, tag = 'input window, operand 29, single buffered']
    #allocation47 [shape = 'u8[512]{0}', space=vmem, size = 0x400, scoped, tag = 'input window, operand 30, single buffered']
    #allocation48 [shape = 's32[1]{0}', space=sflag, size = 0x4, scoped, tag = 'scoped memory for alexnet_dann_forward.1']
    #allocation49 [shape = 'u8[1024]{0}', space=vmem, size = 0x400, scoped, tag = 'output window, operand 0, single buffered']
    #allocation50 [shape = 'u8[1024]{0}', space=vmem, size = 0x400, scoped, tag = 'output window, operand 1, single buffered']
    #allocation51 [shape = 's32[1]{0}', space=sflag, size = 0x4, scoped, tag = 'scoped memory for alexnet_dann_forward.1']
    %71 = vsyncpa [#allocation3], 0
    %72 = vsyncpa [#allocation6], 0
    %73 = vsyncpa [#allocation9], 0
    %74 = vsyncpa [#allocation12], 0
    %75 = vsyncpa [#allocation15], 0
    %76 = vsyncpa [#allocation18], 0
    %77 = vsyncpa [#allocation21], 0
    %78 = vsyncpa [#allocation24], 0
    %79 = vsyncpa [#allocation27], 0
    %80 = vsyncpa [#allocation30], 0
    %81 = vsyncpa [#allocation33], 0
    %82 = vsyncpa [#allocation36], 0
    %83 = vsyncpa [#allocation39], 0
    %84 = vsyncpa [#allocation42], 0
    %85 = vsyncpa [#allocation45], 0
    %86 = vsyncpa [#allocation48], 0
    %87 = vsyncpa [#allocation4], 0
    %88 = vsyncpa [#allocation51], 0
    // Predicated region
    $region2: #{alexnet_dann_forward.1} parent=1 // pred_check
      _
    $region3: #{alexnet_dann_forward.1} parent=1 // pred_check_branch
      %90 = sbr.rel (0) target = $region5
    $region4: #{alexnet_dann_forward.1} parent=1 // pred_region
      _
    $region5: #{alexnet_dann_forward.1} parent=1 // pred_fallthru
      _
    // Predicated region
    $region6: #{alexnet_dann_forward.1} parent=1 // pred_check
      _
    $region7: #{alexnet_dann_forward.1} parent=1 // pred_check_branch
      %92 = sbr.rel (0) target = $region9
    $region8: #{alexnet_dann_forward.1} parent=1 // pred_region
      %94 = vsyncadd [#allocation3], 0
      %s95 = sshll.u32 %s3, 4
      %s96 = int_to_ptr.hbm [resolvable:$true] %s95
      %s97 = sshll.u32 [#allocation2], 4
      %s98 = int_to_ptr.vmem [resolvable:$true] %s97
      %103 = dma.hbm_to_vmem [thread:$0]  %s96, 512, %s98, [#allocation3], 128, 128, 8
    $region9: #{alexnet_dann_forward.1} parent=1 // pred_fallthru
      _
    // Predicated region
    $region10: #{alexnet_dann_forward.1} parent=1 // pred_check
      _
    $region11: #{alexnet_dann_forward.1} parent=1 // pred_check_branch
      %105 = sbr.rel (0) target = $region13
    $region12: #{alexnet_dann_forward.1} parent=1 // pred_region
      %107 = vsyncadd [#allocation6], 0
      %s108 = sshll.u32 %s5, 4
      %s109 = int_to_ptr.hbm [resolvable:$true] %s108
      %s110 = sshll.u32 [#allocation5], 4
      %s111 = int_to_ptr.vmem [resolvable:$true] %s110
      %116 = dma.hbm_to_vmem [thread:$0]  %s109, 512, %s111, [#allocation6], 128, 128, 8
    $region13: #{alexnet_dann_forward.1} parent=1 // pred_fallthru
      _
    // Predicated region
    $region14: #{alexnet_dann_forward.1} parent=1 // pred_check
      _
    $region15: #{alexnet_dann_forward.1} parent=1 // pred_check_branch
      %118 = sbr.rel (0) target = $region17
    $region16: #{alexnet_dann_forward.1} parent=1 // pred_region
      %120 = vsyncadd [#allocation6], 0
      %s122 = sshll.u32 %s7, 4
      %s123 = int_to_ptr.hbm [resolvable:$true] %s122
      %s124 = sshll.u32 [#allocation7], 4
      %s125 = int_to_ptr.vmem [resolvable:$true] %s124
      %127 = dma.hbm_to_vmem [thread:$0]  %s123, 32, %s125, [#allocation6]
    $region17: #{alexnet_dann_forward.1} parent=1 // pred_fallthru
      _
    // Predicated region
    $region18: #{alexnet_dann_forward.1} parent=1 // pred_check
      _
    $region19: #{alexnet_dann_forward.1} parent=1 // pred_check_branch
      %129 = sbr.rel (0) target = $region21
    $region20: #{alexnet_dann_forward.1} parent=1 // pred_region
      %131 = vsyncadd [#allocation9], 0
      %s133 = sshll.u32 %s9, 4
      %s134 = int_to_ptr.hbm [resolvable:$true] %s133
      %s135 = sshll.u32 [#allocation8], 4
      %s136 = int_to_ptr.vmem [resolvable:$true] %s135
      %138 = dma.hbm_to_vmem [thread:$0]  %s134, 64, %s136, [#allocation9]
    $region21: #{alexnet_dann_forward.1} parent=1 // pred_fallthru
      _
    // Predicated region
    $region22: #{alexnet_dann_forward.1} parent=1 // pred_check
      _
    $region23: #{alexnet_dann_forward.1} parent=1 // pred_check_branch
      %140 = sbr.rel (0) target = $region25
    $region24: #{alexnet_dann_forward.1} parent=1 // pred_region
      %142 = vsyncadd [#allocation9], 0
      %s144 = sshll.u32 %s11, 4
      %s145 = int_to_ptr.hbm [resolvable:$true] %s144
      %s146 = sshll.u32 [#allocation10], 4
      %s147 = int_to_ptr.vmem [resolvable:$true] %s146
      %149 = dma.hbm_to_vmem [thread:$0]  %s145, 64, %s147, [#allocation9]
    $region25: #{alexnet_dann_forward.1} parent=1 // pred_fallthru
      _
    // Predicated region
    $region26: #{alexnet_dann_forward.1} parent=1 // pred_check
      _
    $region27: #{alexnet_dann_forward.1} parent=1 // pred_check_branch
      %151 = sbr.rel (0) target = $region29
    $region28: #{alexnet_dann_forward.1} parent=1 // pred_region
      %153 = vsyncadd [#allocation12], 0
      %s155 = sshll.u32 %s13, 4
      %s156 = int_to_ptr.hbm [resolvable:$true] %s155
      %s157 = sshll.u32 [#allocation11], 4
      %s158 = int_to_ptr.vmem [resolvable:$true] %s157
      %160 = dma.hbm_to_vmem [thread:$0]  %s156, 16, %s158, [#allocation12]
    $region29: #{alexnet_dann_forward.1} parent=1 // pred_fallthru
      _
    // Predicated region
    $region30: #{alexnet_dann_forward.1} parent=1 // pred_check
      _
    $region31: #{alexnet_dann_forward.1} parent=1 // pred_check_branch
      %162 = sbr.rel (0) target = $region33
    $region32: #{alexnet_dann_forward.1} parent=1 // pred_region
      %164 = vsyncadd [#allocation12], 0
      %s165 = sshll.u32 %s15, 4
      %s166 = int_to_ptr.hbm [resolvable:$true] %s165
      %s167 = sshll.u32 [#allocation13], 4
      %s168 = int_to_ptr.vmem [resolvable:$true] %s167
      %173 = dma.hbm_to_vmem [thread:$0]  %s166, 1024, %s168, [#allocation12], 128, 128, 8
    $region33: #{alexnet_dann_forward.1} parent=1 // pred_fallthru
      _
    // Predicated region
    $region34: #{alexnet_dann_forward.1} parent=1 // pred_check
      _
    $region35: #{alexnet_dann_forward.1} parent=1 // pred_check_branch
      %175 = sbr.rel (0) target = $region37
    $region36: #{alexnet_dann_forward.1} parent=1 // pred_region
      %177 = vsyncadd [#allocation15], 0
      %s178 = sshll.u32 %s17, 4
      %s179 = int_to_ptr.hbm [resolvable:$true] %s178
      %s180 = sshll.u32 [#allocation14], 4
      %s181 = int_to_ptr.vmem [resolvable:$true] %s180
      %186 = dma.hbm_to_vmem [thread:$0]  %s179, 1024, %s181, [#allocation15], 128, 128, 8
    $region37: #{alexnet_dann_forward.1} parent=1 // pred_fallthru
      _
    // Predicated region
    $region38: #{alexnet_dann_forward.1} parent=1 // pred_check
      _
    $region39: #{alexnet_dann_forward.1} parent=1 // pred_check_branch
      %188 = sbr.rel (0) target = $region41
    $region40: #{alexnet_dann_forward.1} parent=1 // pred_region
      %190 = vsyncadd [#allocation15], 0
      %s192 = sshll.u32 %s19, 4
      %s193 = int_to_ptr.hbm [resolvable:$true] %s192
      %s194 = sshll.u32 [#allocation16], 4
      %s195 = int_to_ptr.vmem [resolvable:$true] %s194
      %197 = dma.hbm_to_vmem [thread:$0]  %s193, 16, %s195, [#allocation15]
    $region41: #{alexnet_dann_forward.1} parent=1 // pred_fallthru
      _
    // Predicated region
    $region42: #{alexnet_dann_forward.1} parent=1 // pred_check
      _
    $region43: #{alexnet_dann_forward.1} parent=1 // pred_check_branch
      %199 = sbr.rel (0) target = $region45
    $region44: #{alexnet_dann_forward.1} parent=1 // pred_region
      %201 = vsyncadd [#allocation18], 0
      %s202 = sshll.u32 %s21, 4
      %s203 = int_to_ptr.hbm [resolvable:$true] %s202
      %s204 = sshll.u32 [#allocation17], 4
      %s205 = int_to_ptr.vmem [resolvable:$true] %s204
      %210 = dma.hbm_to_vmem [thread:$0]  %s203, 4096, %s205, [#allocation18], 256, 256, 16
    $region45: #{alexnet_dann_forward.1} parent=1 // pred_fallthru
      _
    // Predicated region
    $region46: #{alexnet_dann_forward.1} parent=1 // pred_check
      _
    $region47: #{alexnet_dann_forward.1} parent=1 // pred_check_branch
      %212 = sbr.rel (0) target = $region49
    $region48: #{alexnet_dann_forward.1} parent=1 // pred_region
      %214 = vsyncadd [#allocation18], 0
      %s215 = sshll.u32 %s23, 4
      %s216 = int_to_ptr.hbm [resolvable:$true] %s215
      %s217 = sshll.u32 [#allocation19], 4
      %s218 = int_to_ptr.vmem [resolvable:$true] %s217
      %223 = dma.hbm_to_vmem [thread:$0]  %s216, 4096, %s218, [#allocation18], 256, 256, 16
    $region49: #{alexnet_dann_forward.1} parent=1 // pred_fallthru
      _
    // Predicated region
    $region50: #{alexnet_dann_forward.1} parent=1 // pred_check
      _
    $region51: #{alexnet_dann_forward.1} parent=1 // pred_check_branch
      %225 = sbr.rel (0) target = $region53
    $region52: #{alexnet_dann_forward.1} parent=1 // pred_region
      %227 = vsyncadd [#allocation21], 0
      %s229 = sshll.u32 %s25, 4
      %s230 = int_to_ptr.hbm [resolvable:$true] %s229
      %s231 = sshll.u32 [#allocation20], 4
      %s232 = int_to_ptr.vmem [resolvable:$true] %s231
      %234 = dma.hbm_to_vmem [thread:$0]  %s230, 32, %s232, [#allocation21]
    $region53: #{alexnet_dann_forward.1} parent=1 // pred_fallthru
      _
    // Predicated region
    $region54: #{alexnet_dann_forward.1} parent=1 // pred_check
      _
    $region55: #{alexnet_dann_forward.1} parent=1 // pred_check_branch
      %236 = sbr.rel (0) target = $region57
    $region56: #{alexnet_dann_forward.1} parent=1 // pred_region
      %238 = vsyncadd [#allocation21], 0
      %s239 = sshll.u32 %s27, 4
      %s240 = int_to_ptr.hbm [resolvable:$true] %s239
      %s241 = sshll.u32 [#allocation22], 4
      %s242 = int_to_ptr.vmem [resolvable:$true] %s241
      %247 = dma.hbm_to_vmem [thread:$0]  %s240, 4096, %s242, [#allocation21], 128, 128, 8
    $region57: #{alexnet_dann_forward.1} parent=1 // pred_fallthru
      _
    // Predicated region
    $region58: #{alexnet_dann_forward.1} parent=1 // pred_check
      _
    $region59: #{alexnet_dann_forward.1} parent=1 // pred_check_branch
      %249 = sbr.rel (0) target = $region61
    $region60: #{alexnet_dann_forward.1} parent=1 // pred_region
      %251 = vsyncadd [#allocation24], 0
      %s252 = sshll.u32 %s29, 4
      %s253 = int_to_ptr.hbm [resolvable:$true] %s252
      %s254 = sshll.u32 [#allocation23], 4
      %s255 = int_to_ptr.vmem [resolvable:$true] %s254
      %260 = dma.hbm_to_vmem [thread:$0]  %s253, 4096, %s255, [#allocation24], 128, 128, 8
    $region61: #{alexnet_dann_forward.1} parent=1 // pred_fallthru
      _
    // Predicated region
    $region62: #{alexnet_dann_forward.1} parent=1 // pred_check
      _
    $region63: #{alexnet_dann_forward.1} parent=1 // pred_check_branch
      %262 = sbr.rel (0) target = $region65
    $region64: #{alexnet_dann_forward.1} parent=1 // pred_region
      %264 = vsyncadd [#allocation24], 0
      %s266 = sshll.u32 %s31, 4
      %s267 = int_to_ptr.hbm [resolvable:$true] %s266
      %s268 = sshll.u32 [#allocation25], 4
      %s269 = int_to_ptr.vmem [resolvable:$true] %s268
      %271 = dma.hbm_to_vmem [thread:$0]  %s267, 16, %s269, [#allocation24]
    $region65: #{alexnet_dann_forward.1} parent=1 // pred_fallthru
      _
    // Predicated region
    $region66: #{alexnet_dann_forward.1} parent=1 // pred_check
      _
    $region67: #{alexnet_dann_forward.1} parent=1 // pred_check_branch
      %273 = sbr.rel (0) target = $region69
    $region68: #{alexnet_dann_forward.1} parent=1 // pred_region
      %275 = vsyncadd [#allocation27], 0
      %s276 = sshll.u32 %s33, 4
      %s277 = int_to_ptr.hbm [resolvable:$true] %s276
      %s278 = sshll.u32 [#allocation26], 4
      %s279 = int_to_ptr.vmem [resolvable:$true] %s278
      %284 = dma.hbm_to_vmem [thread:$0]  %s277, 2048, %s279, [#allocation27], 128, 128, 8
    $region69: #{alexnet_dann_forward.1} parent=1 // pred_fallthru
      _
    // Predicated region
    $region70: #{alexnet_dann_forward.1} parent=1 // pred_check
      _
    $region71: #{alexnet_dann_forward.1} parent=1 // pred_check_branch
      %286 = sbr.rel (0) target = $region73
    $region72: #{alexnet_dann_forward.1} parent=1 // pred_region
      %288 = vsyncadd [#allocation27], 0
      %s289 = sshll.u32 %s35, 4
      %s290 = int_to_ptr.hbm [resolvable:$true] %s289
      %s291 = sshll.u32 [#allocation28], 4
      %s292 = int_to_ptr.vmem [resolvable:$true] %s291
      %297 = dma.hbm_to_vmem [thread:$0]  %s290, 2048, %s292, [#allocation27], 128, 128, 8
    $region73: #{alexnet_dann_forward.1} parent=1 // pred_fallthru
      _
    // Predicated region
    $region74: #{alexnet_dann_forward.1} parent=1 // pred_check
      _
    $region75: #{alexnet_dann_forward.1} parent=1 // pred_check_branch
      %299 = sbr.rel (0) target = $region77
    $region76: #{alexnet_dann_forward.1} parent=1 // pred_region
      %301 = vsyncadd [#allocation30], 0
      %s303 = sshll.u32 %s37, 4
      %s304 = int_to_ptr.hbm [resolvable:$true] %s303
      %s305 = sshll.u32 [#allocation29], 4
      %s306 = int_to_ptr.vmem [resolvable:$true] %s305
      %308 = dma.hbm_to_vmem [thread:$0]  %s304, 16, %s306, [#allocation30]
    $region77: #{alexnet_dann_forward.1} parent=1 // pred_fallthru
      _
    // Predicated region
    $region78: #{alexnet_dann_forward.1} parent=1 // pred_check
      _
    $region79: #{alexnet_dann_forward.1} parent=1 // pred_check_branch
      %310 = sbr.rel (0) target = $region81
    $region80: #{alexnet_dann_forward.1} parent=1 // pred_region
      %312 = vsyncadd [#allocation30], 0
      %s313 = sshll.u32 %s39, 4
      %s314 = int_to_ptr.hbm [resolvable:$true] %s313
      %s315 = sshll.u32 [#allocation31], 4
      %s316 = int_to_ptr.vmem [resolvable:$true] %s315
      %321 = dma.hbm_to_vmem [thread:$0]  %s314, 8192, %s316, [#allocation30], 512, 512, 32
    $region81: #{alexnet_dann_forward.1} parent=1 // pred_fallthru
      _
    // Predicated region
    $region82: #{alexnet_dann_forward.1} parent=1 // pred_check
      _
    $region83: #{alexnet_dann_forward.1} parent=1 // pred_check_branch
      %323 = sbr.rel (0) target = $region85
    $region84: #{alexnet_dann_forward.1} parent=1 // pred_region
      %325 = vsyncadd [#allocation33], 0
      %s327 = sshll.u32 %s41, 4
      %s328 = int_to_ptr.hbm [resolvable:$true] %s327
      %s329 = sshll.u32 [#allocation32], 4
      %s330 = int_to_ptr.vmem [resolvable:$true] %s329
      %332 = dma.hbm_to_vmem [thread:$0]  %s328, 128, %s330, [#allocation33]
    $region85: #{alexnet_dann_forward.1} parent=1 // pred_fallthru
      _
    // Predicated region
    $region86: #{alexnet_dann_forward.1} parent=1 // pred_check
      _
    $region87: #{alexnet_dann_forward.1} parent=1 // pred_check_branch
      %334 = sbr.rel (0) target = $region89
    $region88: #{alexnet_dann_forward.1} parent=1 // pred_region
      %336 = vsyncadd [#allocation33], 0
      %s337 = sshll.u32 %s43, 4
      %s338 = int_to_ptr.hbm [resolvable:$true] %s337
      %s339 = sshll.u32 [#allocation34], 4
      %s340 = int_to_ptr.vmem [resolvable:$true] %s339
      %345 = dma.hbm_to_vmem [thread:$0]  %s338, 65536, %s340, [#allocation33], 512, 512, 32
    $region89: #{alexnet_dann_forward.1} parent=1 // pred_fallthru
      _
    // Predicated region
    $region90: #{alexnet_dann_forward.1} parent=1 // pred_check
      _
    $region91: #{alexnet_dann_forward.1} parent=1 // pred_check_branch
      %347 = sbr.rel (0) target = $region93
    $region92: #{alexnet_dann_forward.1} parent=1 // pred_region
      %349 = vsyncadd [#allocation36], 0
      %s351 = sshll.u32 %s45, 4
      %s352 = int_to_ptr.hbm [resolvable:$true] %s351
      %s353 = sshll.u32 [#allocation35], 4
      %s354 = int_to_ptr.vmem [resolvable:$true] %s353
      %356 = dma.hbm_to_vmem [thread:$0]  %s352, 128, %s354, [#allocation36]
    $region93: #{alexnet_dann_forward.1} parent=1 // pred_fallthru
      _
    // Predicated region
    $region94: #{alexnet_dann_forward.1} parent=1 // pred_check
      _
    $region95: #{alexnet_dann_forward.1} parent=1 // pred_check_branch
      %358 = sbr.rel (0) target = $region97
    $region96: #{alexnet_dann_forward.1} parent=1 // pred_region
      %360 = vsyncadd [#allocation36], 0
      %s361 = sshll.u32 %s47, 4
      %s362 = int_to_ptr.hbm [resolvable:$true] %s361
      %s363 = sshll.u32 [#allocation37], 4
      %s364 = int_to_ptr.vmem [resolvable:$true] %s363
      %369 = dma.hbm_to_vmem [thread:$0]  %s362, 8192, %s364, [#allocation36], 64, 64, 4
    $region97: #{alexnet_dann_forward.1} parent=1 // pred_fallthru
      _
    // Predicated region
    $region98: #{alexnet_dann_forward.1} parent=1 // pred_check
      _
    $region99: #{alexnet_dann_forward.1} parent=1 // pred_check_branch
      %371 = sbr.rel (0) target = $region101
    $region100: #{alexnet_dann_forward.1} parent=1 // pred_region
      %373 = vsyncadd [#allocation39], 0
      %s375 = sshll.u32 %s49, 4
      %s376 = int_to_ptr.hbm [resolvable:$true] %s375
      %s377 = sshll.u32 [#allocation38], 4
      %s378 = int_to_ptr.vmem [resolvable:$true] %s377
      %380 = dma.hbm_to_vmem [thread:$0]  %s376, 16, %s378, [#allocation39]
    $region101: #{alexnet_dann_forward.1} parent=1 // pred_fallthru
      _
    // Predicated region
    $region102: #{alexnet_dann_forward.1} parent=1 // pred_check
      _
    $region103: #{alexnet_dann_forward.1} parent=1 // pred_check_branch
      %382 = sbr.rel (0) target = $region105
    $region104: #{alexnet_dann_forward.1} parent=1 // pred_region
      %384 = vsyncadd [#allocation39], 0
      %s385 = sshll.u32 %s51, 4
      %s386 = int_to_ptr.hbm [resolvable:$true] %s385
      %s387 = sshll.u32 [#allocation40], 4
      %s388 = int_to_ptr.vmem [resolvable:$true] %s387
      %393 = dma.hbm_to_vmem [thread:$0]  %s386, 8192, %s388, [#allocation39], 512, 512, 32
    $region105: #{alexnet_dann_forward.1} parent=1 // pred_fallthru
      _
    // Predicated region
    $region106: #{alexnet_dann_forward.1} parent=1 // pred_check
      _
    $region107: #{alexnet_dann_forward.1} parent=1 // pred_check_branch
      %395 = sbr.rel (0) target = $region109
    $region108: #{alexnet_dann_forward.1} parent=1 // pred_region
      %397 = vsyncadd [#allocation42], 0
      %s399 = sshll.u32 %s53, 4
      %s400 = int_to_ptr.hbm [resolvable:$true] %s399
      %s401 = sshll.u32 [#allocation41], 4
      %s402 = int_to_ptr.vmem [resolvable:$true] %s401
      %404 = dma.hbm_to_vmem [thread:$0]  %s400, 128, %s402, [#allocation42]
    $region109: #{alexnet_dann_forward.1} parent=1 // pred_fallthru
      _
    // Predicated region
    $region110: #{alexnet_dann_forward.1} parent=1 // pred_check
      _
    $region111: #{alexnet_dann_forward.1} parent=1 // pred_check_branch
      %406 = sbr.rel (0) target = $region113
    $region112: #{alexnet_dann_forward.1} parent=1 // pred_region
      %408 = vsyncadd [#allocation42], 0
      %s409 = sshll.u32 %s55, 4
      %s410 = int_to_ptr.hbm [resolvable:$true] %s409
      %s411 = sshll.u32 [#allocation43], 4
      %s412 = int_to_ptr.vmem [resolvable:$true] %s411
      %417 = dma.hbm_to_vmem [thread:$0]  %s410, 65536, %s412, [#allocation42], 512, 512, 32
    $region113: #{alexnet_dann_forward.1} parent=1 // pred_fallthru
      _
    // Predicated region
    $region114: #{alexnet_dann_forward.1} parent=1 // pred_check
      _
    $region115: #{alexnet_dann_forward.1} parent=1 // pred_check_branch
      %419 = sbr.rel (0) target = $region117
    $region116: #{alexnet_dann_forward.1} parent=1 // pred_region
      %421 = vsyncadd [#allocation45], 0
      %s423 = sshll.u32 %s57, 4
      %s424 = int_to_ptr.hbm [resolvable:$true] %s423
      %s425 = sshll.u32 [#allocation44], 4
      %s426 = int_to_ptr.vmem [resolvable:$true] %s425
      %428 = dma.hbm_to_vmem [thread:$0]  %s424, 128, %s426, [#allocation45]
    $region117: #{alexnet_dann_forward.1} parent=1 // pred_fallthru
      _
    // Predicated region
    $region118: #{alexnet_dann_forward.1} parent=1 // pred_check
      _
    $region119: #{alexnet_dann_forward.1} parent=1 // pred_check_branch
      %430 = sbr.rel (0) target = $region121
    $region120: #{alexnet_dann_forward.1} parent=1 // pred_region
      %432 = vsyncadd [#allocation45], 0
      %s433 = sshll.u32 %s59, 4
      %s434 = int_to_ptr.hbm [resolvable:$true] %s433
      %s435 = sshll.u32 [#allocation46], 4
      %s436 = int_to_ptr.vmem [resolvable:$true] %s435
      %441 = dma.hbm_to_vmem [thread:$0]  %s434, 8192, %s436, [#allocation45], 64, 64, 4
    $region121: #{alexnet_dann_forward.1} parent=1 // pred_fallthru
      _
    // Predicated region
    $region122: #{alexnet_dann_forward.1} parent=1 // pred_check
      _
    $region123: #{alexnet_dann_forward.1} parent=1 // pred_check_branch
      %443 = sbr.rel (0) target = $region125
    $region124: #{alexnet_dann_forward.1} parent=1 // pred_region
      %445 = vsyncadd [#allocation48], 0
      %s447 = sshll.u32 %s61, 4
      %s448 = int_to_ptr.hbm [resolvable:$true] %s447
      %s449 = sshll.u32 [#allocation47], 4
      %s450 = int_to_ptr.vmem [resolvable:$true] %s449
      %452 = dma.hbm_to_vmem [thread:$0]  %s448, 16, %s450, [#allocation48]
    $region125: #{alexnet_dann_forward.1} parent=1 // pred_fallthru
      _
    // Predicated region
    $region126: #{alexnet_dann_forward.1} parent=1 // pred_check
      _
    $region127: #{alexnet_dann_forward.1} parent=1 // pred_check_branch
      %454 = sbr.rel (0) target = $region129
    $region128: #{alexnet_dann_forward.1} parent=1 // pred_region
      %456 = dma.done [#allocation3], 512
    $region129: #{alexnet_dann_forward.1} parent=1 // pred_fallthru
      _
    // Predicated region
    $region130: #{alexnet_dann_forward.1} parent=1 // pred_check
      _
    $region131: #{alexnet_dann_forward.1} parent=1 // pred_check_branch
      %458 = sbr.rel (0) target = $region133
    $region132: #{alexnet_dann_forward.1} parent=1 // pred_region
      %460 = dma.done [#allocation6], 512
    $region133: #{alexnet_dann_forward.1} parent=1 // pred_fallthru
      _
    // Predicated region
    $region134: #{alexnet_dann_forward.1} parent=1 // pred_check
      _
    $region135: #{alexnet_dann_forward.1} parent=1 // pred_check_branch
      %462 = sbr.rel (0) target = $region137
    $region136: #{alexnet_dann_forward.1} parent=1 // pred_region
      %464 = dma.done [#allocation6], 32
    $region137: #{alexnet_dann_forward.1} parent=1 // pred_fallthru
      _
    // Predicated region
    $region138: #{alexnet_dann_forward.1} parent=1 // pred_check
      _
    $region139: #{alexnet_dann_forward.1} parent=1 // pred_check_branch
      %466 = sbr.rel (0) target = $region141
    $region140: #{alexnet_dann_forward.1} parent=1 // pred_region
      %468 = dma.done [#allocation9], 64
    $region141: #{alexnet_dann_forward.1} parent=1 // pred_fallthru
      _
    // Predicated region
    $region142: #{alexnet_dann_forward.1} parent=1 // pred_check
      _
    $region143: #{alexnet_dann_forward.1} parent=1 // pred_check_branch
      %470 = sbr.rel (0) target = $region145
    $region144: #{alexnet_dann_forward.1} parent=1 // pred_region
      %472 = dma.done [#allocation9], 64
    $region145: #{alexnet_dann_forward.1} parent=1 // pred_fallthru
      _
    // Predicated region
    $region146: #{alexnet_dann_forward.1} parent=1 // pred_check
      _
    $region147: #{alexnet_dann_forward.1} parent=1 // pred_check_branch
      %474 = sbr.rel (0) target = $region149
    $region148: #{alexnet_dann_forward.1} parent=1 // pred_region
      %476 = dma.done [#allocation12], 16
    $region149: #{alexnet_dann_forward.1} parent=1 // pred_fallthru
      _
    // Predicated region
    $region150: #{alexnet_dann_forward.1} parent=1 // pred_check
      _
    $region151: #{alexnet_dann_forward.1} parent=1 // pred_check_branch
      %478 = sbr.rel (0) target = $region153
    $region152: #{alexnet_dann_forward.1} parent=1 // pred_region
      %480 = dma.done [#allocation12], 1024
    $region153: #{alexnet_dann_forward.1} parent=1 // pred_fallthru
      _
    // Predicated region
    $region154: #{alexnet_dann_forward.1} parent=1 // pred_check
      _
    $region155: #{alexnet_dann_forward.1} parent=1 // pred_check_branch
      %482 = sbr.rel (0) target = $region157
    $region156: #{alexnet_dann_forward.1} parent=1 // pred_region
      %484 = dma.done [#allocation15], 1024
    $region157: #{alexnet_dann_forward.1} parent=1 // pred_fallthru
      _
    // Predicated region
    $region158: #{alexnet_dann_forward.1} parent=1 // pred_check
      _
    $region159: #{alexnet_dann_forward.1} parent=1 // pred_check_branch
      %486 = sbr.rel (0) target = $region161
    $region160: #{alexnet_dann_forward.1} parent=1 // pred_region
      %488 = dma.done [#allocation15], 16
    $region161: #{alexnet_dann_forward.1} parent=1 // pred_fallthru
      _
    // Predicated region
    $region162: #{alexnet_dann_forward.1} parent=1 // pred_check
      _
    $region163: #{alexnet_dann_forward.1} parent=1 // pred_check_branch
      %490 = sbr.rel (0) target = $region165
    $region164: #{alexnet_dann_forward.1} parent=1 // pred_region
      %492 = dma.done [#allocation18], 4096
    $region165: #{alexnet_dann_forward.1} parent=1 // pred_fallthru
      _
    // Predicated region
    $region166: #{alexnet_dann_forward.1} parent=1 // pred_check
      _
    $region167: #{alexnet_dann_forward.1} parent=1 // pred_check_branch
      %494 = sbr.rel (0) target = $region169
    $region168: #{alexnet_dann_forward.1} parent=1 // pred_region
      %496 = dma.done [#allocation18], 4096
    $region169: #{alexnet_dann_forward.1} parent=1 // pred_fallthru
      _
    // Predicated region
    $region170: #{alexnet_dann_forward.1} parent=1 // pred_check
      _
    $region171: #{alexnet_dann_forward.1} parent=1 // pred_check_branch
      %498 = sbr.rel (0) target = $region173
    $region172: #{alexnet_dann_forward.1} parent=1 // pred_region
      %500 = dma.done [#allocation21], 32
    $region173: #{alexnet_dann_forward.1} parent=1 // pred_fallthru
      _
    // Predicated region
    $region174: #{alexnet_dann_forward.1} parent=1 // pred_check
      _
    $region175: #{alexnet_dann_forward.1} parent=1 // pred_check_branch
      %502 = sbr.rel (0) target = $region177
    $region176: #{alexnet_dann_forward.1} parent=1 // pred_region
      %504 = dma.done [#allocation21], 4096
    $region177: #{alexnet_dann_forward.1} parent=1 // pred_fallthru
      _
    // Predicated region
    $region178: #{alexnet_dann_forward.1} parent=1 // pred_check
      _
    $region179: #{alexnet_dann_forward.1} parent=1 // pred_check_branch
      %506 = sbr.rel (0) target = $region181
    $region180: #{alexnet_dann_forward.1} parent=1 // pred_region
      %508 = dma.done [#allocation24], 4096
    $region181: #{alexnet_dann_forward.1} parent=1 // pred_fallthru
      _
    // Predicated region
    $region182: #{alexnet_dann_forward.1} parent=1 // pred_check
      _
    $region183: #{alexnet_dann_forward.1} parent=1 // pred_check_branch
      %510 = sbr.rel (0) target = $region185
    $region184: #{alexnet_dann_forward.1} parent=1 // pred_region
      %512 = dma.done [#allocation24], 16
    $region185: #{alexnet_dann_forward.1} parent=1 // pred_fallthru
      _
    // Predicated region
    $region186: #{alexnet_dann_forward.1} parent=1 // pred_check
      _
    $region187: #{alexnet_dann_forward.1} parent=1 // pred_check_branch
      %514 = sbr.rel (0) target = $region189
    $region188: #{alexnet_dann_forward.1} parent=1 // pred_region
      %516 = dma.done [#allocation27], 2048
    $region189: #{alexnet_dann_forward.1} parent=1 // pred_fallthru
      _
    // Predicated region
    $region190: #{alexnet_dann_forward.1} parent=1 // pred_check
      _
    $region191: #{alexnet_dann_forward.1} parent=1 // pred_check_branch
      %518 = sbr.rel (0) target = $region193
    $region192: #{alexnet_dann_forward.1} parent=1 // pred_region
      %520 = dma.done [#allocation27], 2048
    $region193: #{alexnet_dann_forward.1} parent=1 // pred_fallthru
      _
    // Predicated region
    $region194: #{alexnet_dann_forward.1} parent=1 // pred_check
      _
    $region195: #{alexnet_dann_forward.1} parent=1 // pred_check_branch
      %522 = sbr.rel (0) target = $region197
    $region196: #{alexnet_dann_forward.1} parent=1 // pred_region
      %524 = dma.done [#allocation30], 16
    $region197: #{alexnet_dann_forward.1} parent=1 // pred_fallthru
      _
    // Predicated region
    $region198: #{alexnet_dann_forward.1} parent=1 // pred_check
      _
    $region199: #{alexnet_dann_forward.1} parent=1 // pred_check_branch
      %526 = sbr.rel (0) target = $region201
    $region200: #{alexnet_dann_forward.1} parent=1 // pred_region
      %528 = dma.done [#allocation30], 8192
    $region201: #{alexnet_dann_forward.1} parent=1 // pred_fallthru
      _
    // Predicated region
    $region202: #{alexnet_dann_forward.1} parent=1 // pred_check
      _
    $region203: #{alexnet_dann_forward.1} parent=1 // pred_check_branch
      %530 = sbr.rel (0) target = $region205
    $region204: #{alexnet_dann_forward.1} parent=1 // pred_region
      %532 = dma.done [#allocation33], 128
    $region205: #{alexnet_dann_forward.1} parent=1 // pred_fallthru
      _
    // Predicated region
    $region206: #{alexnet_dann_forward.1} parent=1 // pred_check
      _
    $region207: #{alexnet_dann_forward.1} parent=1 // pred_check_branch
      %534 = sbr.rel (0) target = $region209
    $region208: #{alexnet_dann_forward.1} parent=1 // pred_region
      %536 = dma.done [#allocation33], 65536
    $region209: #{alexnet_dann_forward.1} parent=1 // pred_fallthru
      _
    // Predicated region
    $region210: #{alexnet_dann_forward.1} parent=1 // pred_check
      _
    $region211: #{alexnet_dann_forward.1} parent=1 // pred_check_branch
      %538 = sbr.rel (0) target = $region213
    $region212: #{alexnet_dann_forward.1} parent=1 // pred_region
      %540 = dma.done [#allocation36], 128
    $region213: #{alexnet_dann_forward.1} parent=1 // pred_fallthru
      _
    // Predicated region
    $region214: #{alexnet_dann_forward.1} parent=1 // pred_check
      _
    $region215: #{alexnet_dann_forward.1} parent=1 // pred_check_branch
      %542 = sbr.rel (0) target = $region217
    $region216: #{alexnet_dann_forward.1} parent=1 // pred_region
      %544 = dma.done [#allocation36], 8192
    $region217: #{alexnet_dann_forward.1} parent=1 // pred_fallthru
      _
    // Predicated region
    $region218: #{alexnet_dann_forward.1} parent=1 // pred_check
      _
    $region219: #{alexnet_dann_forward.1} parent=1 // pred_check_branch
      %546 = sbr.rel (0) target = $region221
    $region220: #{alexnet_dann_forward.1} parent=1 // pred_region
      %548 = dma.done [#allocation39], 16
    $region221: #{alexnet_dann_forward.1} parent=1 // pred_fallthru
      _
    // Predicated region
    $region222: #{alexnet_dann_forward.1} parent=1 // pred_check
      _
    $region223: #{alexnet_dann_forward.1} parent=1 // pred_check_branch
      %550 = sbr.rel (0) target = $region225
    $region224: #{alexnet_dann_forward.1} parent=1 // pred_region
      %552 = dma.done [#allocation39], 8192
    $region225: #{alexnet_dann_forward.1} parent=1 // pred_fallthru
      _
    // Predicated region
    $region226: #{alexnet_dann_forward.1} parent=1 // pred_check
      _
    $region227: #{alexnet_dann_forward.1} parent=1 // pred_check_branch
      %554 = sbr.rel (0) target = $region229
    $region228: #{alexnet_dann_forward.1} parent=1 // pred_region
      %556 = dma.done [#allocation42], 128
    $region229: #{alexnet_dann_forward.1} parent=1 // pred_fallthru
      _
    // Predicated region
    $region230: #{alexnet_dann_forward.1} parent=1 // pred_check
      _
    $region231: #{alexnet_dann_forward.1} parent=1 // pred_check_branch
      %558 = sbr.rel (0) target = $region233
    $region232: #{alexnet_dann_forward.1} parent=1 // pred_region
      %560 = dma.done [#allocation42], 65536
    $region233: #{alexnet_dann_forward.1} parent=1 // pred_fallthru
      _
    // Predicated region
    $region234: #{alexnet_dann_forward.1} parent=1 // pred_check
      _
    $region235: #{alexnet_dann_forward.1} parent=1 // pred_check_branch
      %562 = sbr.rel (0) target = $region237
    $region236: #{alexnet_dann_forward.1} parent=1 // pred_region
      %564 = dma.done [#allocation45], 128
    $region237: #{alexnet_dann_forward.1} parent=1 // pred_fallthru
      _
    // Predicated region
    $region238: #{alexnet_dann_forward.1} parent=1 // pred_check
      _
    $region239: #{alexnet_dann_forward.1} parent=1 // pred_check_branch
      %566 = sbr.rel (0) target = $region241
    $region240: #{alexnet_dann_forward.1} parent=1 // pred_region
      %568 = dma.done [#allocation45], 8192
    $region241: #{alexnet_dann_forward.1} parent=1 // pred_fallthru
      _
    // Predicated region
    $region242: #{alexnet_dann_forward.1} parent=1 // pred_check
      _
    $region243: #{alexnet_dann_forward.1} parent=1 // pred_check_branch
      %570 = sbr.rel (0) target = $region245
    $region244: #{alexnet_dann_forward.1} parent=1 // pred_region
      %572 = dma.done [#allocation48], 16
    $region245: #{alexnet_dann_forward.1} parent=1 // pred_fallthru
      _
    %v573 = vld [vmem:[%s1] sm:$0xff]
    %v574 = vld [vmem:[%s1 + $0x8] sm:$0xff]
    %v575 = vld [vmem:[%s1 + $0x10] sm:$0xff]
    %v576 = vld [vmem:[%s1 + $0x18] sm:$0xff]
    %v577 = vld [vmem:[#allocation2] sm:$0xff]
    %v578 = vld [vmem:[#allocation2 + $0x8] sm:$0xff]
    %v579 = vld [vmem:[#allocation2 + $0x10] sm:$0xff]
    %v580 = vld [vmem:[#allocation2 + $0x18] sm:$0xff]
    %v581 = vld [vmem:[#allocation5] sm:$0xff]
    %v582 = vld [vmem:[#allocation5 + $0x8] sm:$0xff]
    %v583 = vld [vmem:[#allocation5 + $0x10] sm:$0xff]
    %v584 = vld [vmem:[#allocation5 + $0x18] sm:$0xff]
    %v585 = vld [vmem:[#allocation8] sm:$0xf]
    %v586 = vld [vmem:[#allocation10] sm:$0xf]
    %v587 = vld [vmem:[#allocation11] sm:$0x1]
    %vm588 = vcmask 261120
    %v590 = vsel %vm588, %v577, 0
    %v593 = vsel %vm588, %v578, 0
    %v596 = vsel %vm588, %v579, 0
    %v599 = vsel %vm588, %v580, 0
    %601 = vmatpush.msra.mxu0 0.0
    %602 = vmatpush.msra.mxu0 0.0
    %603 = vmatpush.msra.mxu0 0.0
    %604 = vmatpush.msra.mxu0 0.0
    %605 = vmatpush.msra.mxu0 0.0
    %606 = vmatpush.msra.mxu0 0.0
    %607 = vmatpush.msra.mxu0 0.0
    %608 = vmatpush.msra.mxu0 0.0
    %609 = vmatpush.msra.mxu0 0.0
    %610 = vmatpush.msra.mxu0 0.0
    %611 = vmatpush.msra.mxu0 0.0
    %612 = vmatpush.msra.mxu0 0.0
    %613 = vmatpush.msra.mxu0 %v576
    %614 = vmatpush.msra.mxu0 %v575
    %615 = vmatpush.msra.mxu0 %v574
    %616 = vmatpush.msra.mxu0 %v573
    %617 = vmatmul.f32.gmra.mxu0 %v590
    %v618 = vpop.f32.mrf.mxu0
    %v619 = vadd.f32 0.0, %v618
    %620 = vmatmul.f32.gmra.mxu0 %v593
    %v621 = vpop.f32.mrf.mxu0
    %v622 = vadd.f32 0.0, %v621
    %623 = vmatmul.f32.gmra.mxu0 %v596
    %v624 = vpop.f32.mrf.mxu0
    %v625 = vadd.f32 0.0, %v624
    %626 = vmatmul.f32.gmra.mxu0 %v599
    %v627 = vpop.f32.mrf.mxu0
    %v628 = vadd.f32 0.0, %v627
    %629 = vdwg.mxu0
    %vm630 = vcmask 31744
    %v632 = vsel %vm630, %v573, 0
    %v635 = vsel %vm630, %v574, 0
    %v638 = vsel %vm630, %v575, 0
    %v641 = vsel %vm630, %v576, 0
    %vm643 = vcmask 1043456
    %v645 = vsel %vm643, %v586, 0
    %647 = vmatpush.msra.mxu0 0.0
    %648 = vmatpush.msra.mxu0 0.0
    %649 = vmatpush.msra.mxu0 0.0
    %650 = vmatpush.msra.mxu0 0.0
    %651 = vmatpush.msra.mxu0 0.0
    %652 = vmatpush.msra.mxu0 0.0
    %653 = vmatpush.msra.mxu0 0.0
    %654 = vmatpush.msra.mxu0 0.0
    %655 = vmatpush.msra.mxu0 0.0
    %656 = vmatpush.msra.mxu0 0.0
    %657 = vmatpush.msra.mxu0 0.0
    %658 = vmatpush.msra.mxu0 0.0
    %659 = vmatpush.msra.mxu0 0.0
    %660 = vmatpush.msra.mxu0 0.0
    %661 = vmatpush.msra.mxu0 0.0
    %662 = vmatpush.msra.mxu0 %v645
    %663 = vmatmul.f32.gmra.mxu0 %v632
    %v664 = vpop.f32.mrf.mxu0
    %v665 = vadd.f32 0.0, %v664
    %666 = vmatmul.f32.gmra.mxu0 %v635
    %v667 = vpop.f32.mrf.mxu0
    %v668 = vadd.f32 0.0, %v667
    %669 = vmatmul.f32.gmra.mxu0 %v638
    %v670 = vpop.f32.mrf.mxu0
    %v671 = vadd.f32 0.0, %v670
    %672 = vmatmul.f32.gmra.mxu0 %v641
    %v673 = vpop.f32.mrf.mxu0
    %v674 = vadd.f32 0.0, %v673
    %675 = vdwg.mxu0
    %v677 = vsel %vm630, %v619, 0
    %v680 = vsel %vm630, %v622, 0
    %v683 = vsel %vm630, %v625, 0
    %v686 = vsel %vm630, %v628, 0
    %v689 = vsel %vm643, %v585, 0
    %691 = vmatpush.msra.mxu0 0.0
    %692 = vmatpush.msra.mxu0 0.0
    %693 = vmatpush.msra.mxu0 0.0
    %694 = vmatpush.msra.mxu0 0.0
    %695 = vmatpush.msra.mxu0 0.0
    %696 = vmatpush.msra.mxu0 0.0
    %697 = vmatpush.msra.mxu0 0.0
    %698 = vmatpush.msra.mxu0 0.0
    %699 = vmatpush.msra.mxu0 0.0
    %700 = vmatpush.msra.mxu0 0.0
    %701 = vmatpush.msra.mxu0 0.0
    %702 = vmatpush.msra.mxu0 0.0
    %703 = vmatpush.msra.mxu0 0.0
    %704 = vmatpush.msra.mxu0 0.0
    %705 = vmatpush.msra.mxu0 0.0
    %706 = vmatpush.msra.mxu0 %v689
    %707 = vmatmul.f32.gmra.mxu0 %v677
    %v708 = vpop.f32.mrf.mxu0
    %v709 = vadd.f32 %v665, %v708
    %710 = vmatmul.f32.gmra.mxu0 %v680
    %v711 = vpop.f32.mrf.mxu0
    %v712 = vadd.f32 %v668, %v711
    %713 = vmatmul.f32.gmra.mxu0 %v683
    %v714 = vpop.f32.mrf.mxu0
    %v715 = vadd.f32 %v671, %v714
    %716 = vmatmul.f32.gmra.mxu0 %v686
    %v717 = vpop.f32.mrf.mxu0
    %v718 = vadd.f32 %v674, %v717
    %719 = vdwg.mxu0
    %v721 = vperm.slane %v587, 0
    %v723 = vadd.f32 %v709, %v721
    %v724 = vadd.f32 %v712, %v721
    %v725 = vadd.f32 %v715, %v721
    %v726 = vadd.f32 %v718, %v721
    %v727 = vmax.f32 %v723, 0.0
    %v728 = vmax.f32 %v724, 0.0
    %v729 = vmax.f32 %v725, 0.0
    %v730 = vmax.f32 %v726, 0.0
    %vm731 = vcmp.lt.s32.totalorder %v581, 9
    %vm732 = vcmp.lt.s32.totalorder %v582, 9
    %vm733 = vcmp.lt.s32.totalorder %v583, 9
    %vm734 = vcmp.lt.s32.totalorder %v584, 9
    %v735 = vsel %vm731, 1, 0
    %v736 = vsel %vm732, 1, 0
    %v737 = vsel %vm733, 1, 0
    %v738 = vsel %vm734, 1, 0
    %739 = vset.pattern.permute.xlu0 0
    %740 = vperm.xlu0 %739, %v735
    %v741 = vpop.permute.xlu0 %740
    %742 = vset.pattern.permute.xlu0 0
    %743 = vperm.xlu0 %742, %v736
    %v744 = vpop.permute.xlu0 %743
    %745 = vset.pattern.permute.xlu0 0
    %746 = vperm.xlu0 %745, %v737
    %v747 = vpop.permute.xlu0 %746
    %748 = vset.pattern.permute.xlu0 0
    %749 = vperm.xlu0 %748, %v738
    %v750 = vpop.permute.xlu0 %749
    %vm751 = vcmp.eq.s32.totalorder %v741, 1
    %vm752 = vcmp.eq.s32.totalorder %v744, 1
    %vm753 = vcmp.eq.s32.totalorder %v747, 1
    %vm754 = vcmp.eq.s32.totalorder %v750, 1
    %v755 = vsel %vm751, %v727, 0.0
    %v756 = vsel %vm752, %v728, 0.0
    %v757 = vsel %vm753, %v729, 0.0
    %v758 = vsel %vm754, %v730, 0.0
    %v759 = vld [vmem:[#allocation13] sm:$0xff]
    %v760 = vld [vmem:[#allocation13 + $0x8] sm:$0xff]
    %v761 = vld [vmem:[#allocation13 + $0x10] sm:$0xff]
    %v762 = vld [vmem:[#allocation13 + $0x18] sm:$0xff]
    %v763 = vld [vmem:[#allocation13 + $0x20] sm:$0xff]
    %v764 = vld [vmem:[#allocation13 + $0x28] sm:$0xff]
    %v765 = vld [vmem:[#allocation13 + $0x30] sm:$0xff]
    %v766 = vld [vmem:[#allocation13 + $0x38] sm:$0xff]
    %v767 = vld [vmem:[#allocation14] sm:$0xff]
    %v768 = vld [vmem:[#allocation14 + $0x8] sm:$0xff]
    %v769 = vld [vmem:[#allocation14 + $0x10] sm:$0xff]
    %v770 = vld [vmem:[#allocation14 + $0x18] sm:$0xff]
    %v771 = vld [vmem:[#allocation14 + $0x20] sm:$0xff]
    %v772 = vld [vmem:[#allocation14 + $0x28] sm:$0xff]
    %v773 = vld [vmem:[#allocation14 + $0x30] sm:$0xff]
    %v774 = vld [vmem:[#allocation14 + $0x38] sm:$0xff]
    %v775 = vld [vmem:[#allocation16] sm:$0x1]
    %776 = vmatpush.msra.mxu0 0.0
    %777 = vmatpush.msra.mxu0 0.0
    %778 = vmatpush.msra.mxu0 0.0
    %779 = vmatpush.msra.mxu0 0.0
    %780 = vmatpush.msra.mxu0 0.0
    %781 = vmatpush.msra.mxu0 0.0
    %782 = vmatpush.msra.mxu0 0.0
    %783 = vmatpush.msra.mxu0 0.0
    %784 = vmatpush.msra.mxu0 0.0
    %785 = vmatpush.msra.mxu0 0.0
    %786 = vmatpush.msra.mxu0 0.0
    %787 = vmatpush.msra.mxu0 0.0
    %788 = vmatpush.msra.mxu0 %v758
    %789 = vmatpush.msra.mxu0 %v757
    %790 = vmatpush.msra.mxu0 %v756
    %791 = vmatpush.msra.mxu0 %v755
    %792 = vmatmul.f32.gmra.mxu0 %v590
    %v793 = vpop.f32.mrf.mxu0
    %v794 = vadd.f32 0.0, %v793
    %795 = vmatmul.f32.gmra.mxu0 %v593
    %v796 = vpop.f32.mrf.mxu0
    %v797 = vadd.f32 0.0, %v796
    %798 = vmatmul.f32.gmra.mxu0 %v596
    %v799 = vpop.f32.mrf.mxu0
    %v800 = vadd.f32 0.0, %v799
    %801 = vmatmul.f32.gmra.mxu0 %v599
    %v802 = vpop.f32.mrf.mxu0
    %v803 = vadd.f32 0.0, %v802
    %804 = vdwg.mxu0
    %vm805 = vcmask 523264
    %v807 = vsel %vm805, %v755, 0
    %v810 = vsel %vm805, %v756, 0
    %v813 = vsel %vm805, %v757, 0
    %v816 = vsel %vm805, %v758, 0
    %818 = vmatpush.msra.mxu0 0.0
    %819 = vmatpush.msra.mxu0 0.0
    %820 = vmatpush.msra.mxu0 0.0
    %821 = vmatpush.msra.mxu0 0.0
    %822 = vmatpush.msra.mxu0 0.0
    %823 = vmatpush.msra.mxu0 0.0
    %824 = vmatpush.msra.mxu0 0.0
    %825 = vmatpush.msra.mxu0 0.0
    %826 = vmatpush.msra.mxu0 %v774
    %827 = vmatpush.msra.mxu0 %v773
    %828 = vmatpush.msra.mxu0 %v772
    %829 = vmatpush.msra.mxu0 %v771
    %830 = vmatpush.msra.mxu0 %v770
    %831 = vmatpush.msra.mxu0 %v769
    %832 = vmatpush.msra.mxu0 %v768
    %833 = vmatpush.msra.mxu0 %v767
    %834 = vmatmul.f32.gmra.mxu0 %v807
    %v835 = vpop.f32.mrf.mxu0
    %v836 = vadd.f32 0.0, %v835
    %837 = vmatmul.f32.gmra.mxu0 %v810
    %v838 = vpop.f32.mrf.mxu0
    %v839 = vadd.f32 0.0, %v838
    %840 = vmatmul.f32.gmra.mxu0 %v813
    %v841 = vpop.f32.mrf.mxu0
    %v842 = vadd.f32 0.0, %v841
    %843 = vmatmul.f32.gmra.mxu0 %v816
    %v844 = vpop.f32.mrf.mxu0
    %v845 = vadd.f32 0.0, %v844
    %846 = vdwg.mxu0
    %v848 = vsel %vm805, %v794, 0
    %v851 = vsel %vm805, %v797, 0
    %v854 = vsel %vm805, %v800, 0
    %v857 = vsel %vm805, %v803, 0
    %859 = vmatpush.msra.mxu0 0.0
    %860 = vmatpush.msra.mxu0 0.0
    %861 = vmatpush.msra.mxu0 0.0
    %862 = vmatpush.msra.mxu0 0.0
    %863 = vmatpush.msra.mxu0 0.0
    %864 = vmatpush.msra.mxu0 0.0
    %865 = vmatpush.msra.mxu0 0.0
    %866 = vmatpush.msra.mxu0 0.0
    %867 = vmatpush.msra.mxu0 %v766
    %868 = vmatpush.msra.mxu0 %v765
    %869 = vmatpush.msra.mxu0 %v764
    %870 = vmatpush.msra.mxu0 %v763
    %871 = vmatpush.msra.mxu0 %v762
    %872 = vmatpush.msra.mxu0 %v761
    %873 = vmatpush.msra.mxu0 %v760
    %874 = vmatpush.msra.mxu0 %v759
    %875 = vmatmul.f32.gmra.mxu0 %v848
    %v876 = vpop.f32.mrf.mxu0
    %v877 = vadd.f32 %v836, %v876
    %878 = vmatmul.f32.gmra.mxu0 %v851
    %v879 = vpop.f32.mrf.mxu0
    %v880 = vadd.f32 %v839, %v879
    %881 = vmatmul.f32.gmra.mxu0 %v854
    %v882 = vpop.f32.mrf.mxu0
    %v883 = vadd.f32 %v842, %v882
    %884 = vmatmul.f32.gmra.mxu0 %v857
    %v885 = vpop.f32.mrf.mxu0
    %v886 = vadd.f32 %v845, %v885
    %887 = vdwg.mxu0
    %v889 = vperm.slane %v775, 0
    %v891 = vadd.f32 %v877, %v889
    %v892 = vadd.f32 %v880, %v889
    %v893 = vadd.f32 %v883, %v889
    %v894 = vadd.f32 %v886, %v889
    %v895 = vmax.f32 %v891, 0.0
    %v896 = vmax.f32 %v892, 0.0
    %v897 = vmax.f32 %v893, 0.0
    %v898 = vmax.f32 %v894, 0.0
    %vm899 = vcmp.lt.s32.totalorder %v581, 10
    %vm900 = vcmp.lt.s32.totalorder %v582, 10
    %vm901 = vcmp.lt.s32.totalorder %v583, 10
    %vm902 = vcmp.lt.s32.totalorder %v584, 10
    %v903 = vsel %vm899, 1, 0
    %v904 = vsel %vm900, 1, 0
    %v905 = vsel %vm901, 1, 0
    %v906 = vsel %vm902, 1, 0
    %907 = vset.pattern.permute.xlu0 0
    %908 = vperm.xlu0 %907, %v903
    %v909 = vpop.permute.xlu0 %908
    %910 = vset.pattern.permute.xlu0 0
    %911 = vperm.xlu0 %910, %v904
    %v912 = vpop.permute.xlu0 %911
    %913 = vset.pattern.permute.xlu0 0
    %914 = vperm.xlu0 %913, %v905
    %v915 = vpop.permute.xlu0 %914
    %916 = vset.pattern.permute.xlu0 0
    %917 = vperm.xlu0 %916, %v906
    %v918 = vpop.permute.xlu0 %917
    %vm919 = vcmp.eq.s32.totalorder %v909, 1
    %vm920 = vcmp.eq.s32.totalorder %v912, 1
    %vm921 = vcmp.eq.s32.totalorder %v915, 1
    %vm922 = vcmp.eq.s32.totalorder %v918, 1
    %v923 = vsel %vm919, %v895, 0.0
    %v924 = vsel %vm920, %v896, 0.0
    %v925 = vsel %vm921, %v897, 0.0
    %v926 = vsel %vm922, %v898, 0.0
    %v927 = vld [vmem:[#allocation17] sm:$0xff]
    %v928 = vld [vmem:[#allocation17 + $0x8] sm:$0xff]
    %v929 = vld [vmem:[#allocation17 + $0x10] sm:$0xff]
    %v930 = vld [vmem:[#allocation17 + $0x18] sm:$0xff]
    %v931 = vld [vmem:[#allocation17 + $0x20] sm:$0xff]
    %v932 = vld [vmem:[#allocation17 + $0x28] sm:$0xff]
    %v933 = vld [vmem:[#allocation17 + $0x30] sm:$0xff]
    %v934 = vld [vmem:[#allocation17 + $0x38] sm:$0xff]
    %v935 = vld [vmem:[#allocation17 + $0x40] sm:$0xff]
    %v936 = vld [vmem:[#allocation17 + $0x48] sm:$0xff]
    %v937 = vld [vmem:[#allocation17 + $0x50] sm:$0xff]
    %v938 = vld [vmem:[#allocation17 + $0x58] sm:$0xff]
    %v939 = vld [vmem:[#allocation17 + $0x60] sm:$0xff]
    %v940 = vld [vmem:[#allocation17 + $0x68] sm:$0xff]
    %v941 = vld [vmem:[#allocation17 + $0x70] sm:$0xff]
    %v942 = vld [vmem:[#allocation17 + $0x78] sm:$0xff]
    %v943 = vld [vmem:[#allocation17 + $0x80] sm:$0xff]
    %v944 = vld [vmem:[#allocation17 + $0x88] sm:$0xff]
    %v945 = vld [vmem:[#allocation17 + $0x90] sm:$0xff]
    %v946 = vld [vmem:[#allocation17 + $0x98] sm:$0xff]
    %v947 = vld [vmem:[#allocation17 + $0xa0] sm:$0xff]
    %v948 = vld [vmem:[#allocation17 + $0xa8] sm:$0xff]
    %v949 = vld [vmem:[#allocation17 + $0xb0] sm:$0xff]
    %v950 = vld [vmem:[#allocation17 + $0xb8] sm:$0xff]
    %v951 = vld [vmem:[#allocation17 + $0xc0] sm:$0xff]
    %v952 = vld [vmem:[#allocation17 + $0xc8] sm:$0xff]
    %v953 = vld [vmem:[#allocation17 + $0xd0] sm:$0xff]
    %v954 = vld [vmem:[#allocation17 + $0xd8] sm:$0xff]
    %v955 = vld [vmem:[#allocation17 + $0xe0] sm:$0xff]
    %v956 = vld [vmem:[#allocation17 + $0xe8] sm:$0xff]
    %v957 = vld [vmem:[#allocation17 + $0xf0] sm:$0xff]
    %v958 = vld [vmem:[#allocation17 + $0xf8] sm:$0xff]
    %v959 = vld [vmem:[#allocation19] sm:$0xff]
    %v960 = vld [vmem:[#allocation19 + $0x8] sm:$0xff]
    %v961 = vld [vmem:[#allocation19 + $0x10] sm:$0xff]
    %v962 = vld [vmem:[#allocation19 + $0x18] sm:$0xff]
    %v963 = vld [vmem:[#allocation19 + $0x20] sm:$0xff]
    %v964 = vld [vmem:[#allocation19 + $0x28] sm:$0xff]
    %v965 = vld [vmem:[#allocation19 + $0x30] sm:$0xff]
    %v966 = vld [vmem:[#allocation19 + $0x38] sm:$0xff]
    %v967 = vld [vmem:[#allocation19 + $0x40] sm:$0xff]
    %v968 = vld [vmem:[#allocation19 + $0x48] sm:$0xff]
    %v969 = vld [vmem:[#allocation19 + $0x50] sm:$0xff]
    %v970 = vld [vmem:[#allocation19 + $0x58] sm:$0xff]
    %v971 = vld [vmem:[#allocation19 + $0x60] sm:$0xff]
    %v972 = vld [vmem:[#allocation19 + $0x68] sm:$0xff]
    %v973 = vld [vmem:[#allocation19 + $0x70] sm:$0xff]
    %v974 = vld [vmem:[#allocation19 + $0x78] sm:$0xff]
    %v975 = vld [vmem:[#allocation19 + $0x80] sm:$0xff]
    %v976 = vld [vmem:[#allocation19 + $0x88] sm:$0xff]
    %v977 = vld [vmem:[#allocation19 + $0x90] sm:$0xff]
    %v978 = vld [vmem:[#allocation19 + $0x98] sm:$0xff]
    %v979 = vld [vmem:[#allocation19 + $0xa0] sm:$0xff]
    %v980 = vld [vmem:[#allocation19 + $0xa8] sm:$0xff]
    %v981 = vld [vmem:[#allocation19 + $0xb0] sm:$0xff]
    %v982 = vld [vmem:[#allocation19 + $0xb8] sm:$0xff]
    %v983 = vld [vmem:[#allocation19 + $0xc0] sm:$0xff]
    %v984 = vld [vmem:[#allocation19 + $0xc8] sm:$0xff]
    %v985 = vld [vmem:[#allocation19 + $0xd0] sm:$0xff]
    %v986 = vld [vmem:[#allocation19 + $0xd8] sm:$0xff]
    %v987 = vld [vmem:[#allocation19 + $0xe0] sm:$0xff]
    %v988 = vld [vmem:[#allocation19 + $0xe8] sm:$0xff]
    %v989 = vld [vmem:[#allocation19 + $0xf0] sm:$0xff]
    %v990 = vld [vmem:[#allocation19 + $0xf8] sm:$0xff]
    %v991 = vld [vmem:[#allocation20] sm:$0x3]
    %992 = vmatpush.msra.mxu0 0.0
    %993 = vmatpush.msra.mxu0 0.0
    %994 = vmatpush.msra.mxu0 0.0
    %995 = vmatpush.msra.mxu0 0.0
    %996 = vmatpush.msra.mxu0 0.0
    %997 = vmatpush.msra.mxu0 0.0
    %998 = vmatpush.msra.mxu0 0.0
    %999 = vmatpush.msra.mxu0 0.0
    %1000 = vmatpush.msra.mxu0 0.0
    %1001 = vmatpush.msra.mxu0 0.0
    %1002 = vmatpush.msra.mxu0 0.0
    %1003 = vmatpush.msra.mxu0 0.0
    %1004 = vmatpush.msra.mxu0 %v926
    %1005 = vmatpush.msra.mxu0 %v925
    %1006 = vmatpush.msra.mxu0 %v924
    %1007 = vmatpush.msra.mxu0 %v923
    %1008 = vmatmul.f32.gmra.mxu0 %v590
    %v1009 = vpop.f32.mrf.mxu0
    %v1010 = vadd.f32 0.0, %v1009
    %1011 = vmatmul.f32.gmra.mxu0 %v593
    %v1012 = vpop.f32.mrf.mxu0
    %v1013 = vadd.f32 0.0, %v1012
    %1014 = vmatmul.f32.gmra.mxu0 %v596
    %v1015 = vpop.f32.mrf.mxu0
    %v1016 = vadd.f32 0.0, %v1015
    %1017 = vmatmul.f32.gmra.mxu0 %v599
    %v1018 = vpop.f32.mrf.mxu0
    %v1019 = vadd.f32 0.0, %v1018
    %1020 = vdwg.mxu0
    %1021 = vmatpush.msra.mxu0 %v989
    %1022 = vmatpush.msra.mxu0 %v987
    %1023 = vmatpush.msra.mxu0 %v985
    %1024 = vmatpush.msra.mxu0 %v983
    %1025 = vmatpush.msra.mxu0 %v981
    %1026 = vmatpush.msra.mxu0 %v979
    %1027 = vmatpush.msra.mxu0 %v977
    %1028 = vmatpush.msra.mxu0 %v975
    %1029 = vmatpush.msra.mxu0 %v973
    %1030 = vmatpush.msra.mxu0 %v971
    %1031 = vmatpush.msra.mxu0 %v969
    %1032 = vmatpush.msra.mxu0 %v967
    %1033 = vmatpush.msra.mxu0 %v965
    %1034 = vmatpush.msra.mxu0 %v963
    %1035 = vmatpush.msra.mxu0 %v961
    %1036 = vmatpush.msra.mxu0 %v959
    %1037 = vmatmul.f32.gmra.mxu0 %v923
    %v1038 = vpop.f32.mrf.mxu0
    %v1039 = vadd.f32 0.0, %v1038
    %1040 = vmatmul.f32.gmra.mxu0 %v924
    %v1041 = vpop.f32.mrf.mxu0
    %v1042 = vadd.f32 0.0, %v1041
    %1043 = vmatmul.f32.gmra.mxu0 %v925
    %v1044 = vpop.f32.mrf.mxu0
    %v1045 = vadd.f32 0.0, %v1044
    %1046 = vmatmul.f32.gmra.mxu0 %v926
    %v1047 = vpop.f32.mrf.mxu0
    %v1048 = vadd.f32 0.0, %v1047
    %1049 = vdwg.mxu0
    %1050 = vmatpush.msra.mxu0 %v990
    %1051 = vmatpush.msra.mxu0 %v988
    %1052 = vmatpush.msra.mxu0 %v986
    %1053 = vmatpush.msra.mxu0 %v984
    %1054 = vmatpush.msra.mxu0 %v982
    %1055 = vmatpush.msra.mxu0 %v980
    %1056 = vmatpush.msra.mxu0 %v978
    %1057 = vmatpush.msra.mxu0 %v976
    %1058 = vmatpush.msra.mxu0 %v974
    %1059 = vmatpush.msra.mxu0 %v972
    %1060 = vmatpush.msra.mxu0 %v970
    %1061 = vmatpush.msra.mxu0 %v968
    %1062 = vmatpush.msra.mxu0 %v966
    %1063 = vmatpush.msra.mxu0 %v964
    %1064 = vmatpush.msra.mxu0 %v962
    %1065 = vmatpush.msra.mxu0 %v960
    %1066 = vmatmul.f32.gmra.mxu0 %v923
    %v1067 = vpop.f32.mrf.mxu0
    %v1068 = vadd.f32 0.0, %v1067
    %1069 = vmatmul.f32.gmra.mxu0 %v924
    %v1070 = vpop.f32.mrf.mxu0
    %v1071 = vadd.f32 0.0, %v1070
    %1072 = vmatmul.f32.gmra.mxu0 %v925
    %v1073 = vpop.f32.mrf.mxu0
    %v1074 = vadd.f32 0.0, %v1073
    %1075 = vmatmul.f32.gmra.mxu0 %v926
    %v1076 = vpop.f32.mrf.mxu0
    %v1077 = vadd.f32 0.0, %v1076
    %1078 = vdwg.mxu0
    %1079 = vmatpush.msra.mxu0 %v957
    %1080 = vmatpush.msra.mxu0 %v955
    %1081 = vmatpush.msra.mxu0 %v953
    %1082 = vmatpush.msra.mxu0 %v951
    %1083 = vmatpush.msra.mxu0 %v949
    %1084 = vmatpush.msra.mxu0 %v947
    %1085 = vmatpush.msra.mxu0 %v945
    %1086 = vmatpush.msra.mxu0 %v943
    %1087 = vmatpush.msra.mxu0 %v941
    %1088 = vmatpush.msra.mxu0 %v939
    %1089 = vmatpush.msra.mxu0 %v937
    %1090 = vmatpush.msra.mxu0 %v935
    %1091 = vmatpush.msra.mxu0 %v933
    %1092 = vmatpush.msra.mxu0 %v931
    %1093 = vmatpush.msra.mxu0 %v929
    %1094 = vmatpush.msra.mxu0 %v927
    %1095 = vmatmul.f32.gmra.mxu0 %v1010
    %v1096 = vpop.f32.mrf.mxu0
    %v1097 = vadd.f32 %v1039, %v1096
    %1098 = vmatmul.f32.gmra.mxu0 %v1013
    %v1099 = vpop.f32.mrf.mxu0
    %v1100 = vadd.f32 %v1042, %v1099
    %1101 = vmatmul.f32.gmra.mxu0 %v1016
    %v1102 = vpop.f32.mrf.mxu0
    %v1103 = vadd.f32 %v1045, %v1102
    %1104 = vmatmul.f32.gmra.mxu0 %v1019
    %v1105 = vpop.f32.mrf.mxu0
    %v1106 = vadd.f32 %v1048, %v1105
    %1107 = vdwg.mxu0
    %1108 = vmatpush.msra.mxu0 %v958
    %1109 = vmatpush.msra.mxu0 %v956
    %1110 = vmatpush.msra.mxu0 %v954
    %1111 = vmatpush.msra.mxu0 %v952
    %1112 = vmatpush.msra.mxu0 %v950
    %1113 = vmatpush.msra.mxu0 %v948
    %1114 = vmatpush.msra.mxu0 %v946
    %1115 = vmatpush.msra.mxu0 %v944
    %1116 = vmatpush.msra.mxu0 %v942
    %1117 = vmatpush.msra.mxu0 %v940
    %1118 = vmatpush.msra.mxu0 %v938
    %1119 = vmatpush.msra.mxu0 %v936
    %1120 = vmatpush.msra.mxu0 %v934
    %1121 = vmatpush.msra.mxu0 %v932
    %1122 = vmatpush.msra.mxu0 %v930
    %1123 = vmatpush.msra.mxu0 %v928
    %1124 = vmatmul.f32.gmra.mxu0 %v1010
    %v1125 = vpop.f32.mrf.mxu0
    %v1126 = vadd.f32 %v1068, %v1125
    %1127 = vmatmul.f32.gmra.mxu0 %v1013
    %v1128 = vpop.f32.mrf.mxu0
    %v1129 = vadd.f32 %v1071, %v1128
    %1130 = vmatmul.f32.gmra.mxu0 %v1016
    %v1131 = vpop.f32.mrf.mxu0
    %v1132 = vadd.f32 %v1074, %v1131
    %1133 = vmatmul.f32.gmra.mxu0 %v1019
    %v1134 = vpop.f32.mrf.mxu0
    %v1135 = vadd.f32 %v1077, %v1134
    %1136 = vdwg.mxu0
    %v1138 = vperm.slane %v991, 0
    %v1139 = vperm.slane %v991, 1
    %v1142 = vadd.f32 %v1097, %v1138
    %v1143 = vadd.f32 %v1126, %v1139
    %v1144 = vadd.f32 %v1100, %v1138
    %v1145 = vadd.f32 %v1129, %v1139
    %v1146 = vadd.f32 %v1103, %v1138
    %v1147 = vadd.f32 %v1132, %v1139
    %v1148 = vadd.f32 %v1106, %v1138
    %v1149 = vadd.f32 %v1135, %v1139
    %v1150 = vmax.f32 %v1142, 0.0
    %v1151 = vmax.f32 %v1143, 0.0
    %v1152 = vmax.f32 %v1144, 0.0
    %v1153 = vmax.f32 %v1145, 0.0
    %v1154 = vmax.f32 %v1146, 0.0
    %v1155 = vmax.f32 %v1147, 0.0
    %v1156 = vmax.f32 %v1148, 0.0
    %v1157 = vmax.f32 %v1149, 0.0
    %vm1158 = vcmp.lt.s32.totalorder %v581, 11
    %vm1159 = vcmp.lt.s32.totalorder %v582, 11
    %vm1160 = vcmp.lt.s32.totalorder %v583, 11
    %vm1161 = vcmp.lt.s32.totalorder %v584, 11
    %v1162 = vsel %vm1158, 1, 0
    %v1163 = vsel %vm1159, 1, 0
    %v1164 = vsel %vm1160, 1, 0
    %v1165 = vsel %vm1161, 1, 0
    %1166 = vset.pattern.permute.xlu0 0
    %1167 = vperm.xlu0 %1166, %v1162
    %v1168 = vpop.permute.xlu0 %1167
    %1169 = vset.pattern.permute.xlu0 0
    %1170 = vperm.xlu0 %1169, %v1163
    %v1171 = vpop.permute.xlu0 %1170
    %1172 = vset.pattern.permute.xlu0 0
    %1173 = vperm.xlu0 %1172, %v1164
    %v1174 = vpop.permute.xlu0 %1173
    %1175 = vset.pattern.permute.xlu0 0
    %1176 = vperm.xlu0 %1175, %v1165
    %v1177 = vpop.permute.xlu0 %1176
    %vm1178 = vcmp.eq.s32.totalorder %v1168, 1
    %vm1179 = vcmp.eq.s32.totalorder %v1171, 1
    %vm1180 = vcmp.eq.s32.totalorder %v1174, 1
    %vm1181 = vcmp.eq.s32.totalorder %v1177, 1
    %v1182 = vsel %vm1178, %v1150, 0.0
    %v1183 = vsel %vm1178, %v1151, 0.0
    %v1184 = vsel %vm1179, %v1152, 0.0
    %v1185 = vsel %vm1179, %v1153, 0.0
    %v1186 = vsel %vm1180, %v1154, 0.0
    %v1187 = vsel %vm1180, %v1155, 0.0
    %v1188 = vsel %vm1181, %v1156, 0.0
    %v1189 = vsel %vm1181, %v1157, 0.0
    %v1190 = vld [vmem:[#allocation22] sm:$0xff]
    %v1191 = vld [vmem:[#allocation22 + $0x8] sm:$0xff]
    %v1192 = vld [vmem:[#allocation22 + $0x10] sm:$0xff]
    %v1193 = vld [vmem:[#allocation22 + $0x18] sm:$0xff]
    %v1194 = vld [vmem:[#allocation22 + $0x20] sm:$0xff]
    %v1195 = vld [vmem:[#allocation22 + $0x28] sm:$0xff]
    %v1196 = vld [vmem:[#allocation22 + $0x30] sm:$0xff]
    %v1197 = vld [vmem:[#allocation22 + $0x38] sm:$0xff]
    %v1198 = vld [vmem:[#allocation22 + $0x40] sm:$0xff]
    %v1199 = vld [vmem:[#allocation22 + $0x48] sm:$0xff]
    %v1200 = vld [vmem:[#allocation22 + $0x50] sm:$0xff]
    %v1201 = vld [vmem:[#allocation22 + $0x58] sm:$0xff]
    %v1202 = vld [vmem:[#allocation22 + $0x60] sm:$0xff]
    %v1203 = vld [vmem:[#allocation22 + $0x68] sm:$0xff]
    %v1204 = vld [vmem:[#allocation22 + $0x70] sm:$0xff]
    %v1205 = vld [vmem:[#allocation22 + $0x78] sm:$0xff]
    %v1206 = vld [vmem:[#allocation22 + $0x80] sm:$0xff]
    %v1207 = vld [vmem:[#allocation22 + $0x88] sm:$0xff]
    %v1208 = vld [vmem:[#allocation22 + $0x90] sm:$0xff]
    %v1209 = vld [vmem:[#allocation22 + $0x98] sm:$0xff]
    %v1210 = vld [vmem:[#allocation22 + $0xa0] sm:$0xff]
    %v1211 = vld [vmem:[#allocation22 + $0xa8] sm:$0xff]
    %v1212 = vld [vmem:[#allocation22 + $0xb0] sm:$0xff]
    %v1213 = vld [vmem:[#allocation22 + $0xb8] sm:$0xff]
    %v1214 = vld [vmem:[#allocation22 + $0xc0] sm:$0xff]
    %v1215 = vld [vmem:[#allocation22 + $0xc8] sm:$0xff]
    %v1216 = vld [vmem:[#allocation22 + $0xd0] sm:$0xff]
    %v1217 = vld [vmem:[#allocation22 + $0xd8] sm:$0xff]
    %v1218 = vld [vmem:[#allocation22 + $0xe0] sm:$0xff]
    %v1219 = vld [vmem:[#allocation22 + $0xe8] sm:$0xff]
    %v1220 = vld [vmem:[#allocation22 + $0xf0] sm:$0xff]
    %v1221 = vld [vmem:[#allocation22 + $0xf8] sm:$0xff]
    %v1222 = vld [vmem:[#allocation23] sm:$0xff]
    %v1223 = vld [vmem:[#allocation23 + $0x8] sm:$0xff]
    %v1224 = vld [vmem:[#allocation23 + $0x10] sm:$0xff]
    %v1225 = vld [vmem:[#allocation23 + $0x18] sm:$0xff]
    %v1226 = vld [vmem:[#allocation23 + $0x20] sm:$0xff]
    %v1227 = vld [vmem:[#allocation23 + $0x28] sm:$0xff]
    %v1228 = vld [vmem:[#allocation23 + $0x30] sm:$0xff]
    %v1229 = vld [vmem:[#allocation23 + $0x38] sm:$0xff]
    %v1230 = vld [vmem:[#allocation23 + $0x40] sm:$0xff]
    %v1231 = vld [vmem:[#allocation23 + $0x48] sm:$0xff]
    %v1232 = vld [vmem:[#allocation23 + $0x50] sm:$0xff]
    %v1233 = vld [vmem:[#allocation23 + $0x58] sm:$0xff]
    %v1234 = vld [vmem:[#allocation23 + $0x60] sm:$0xff]
    %v1235 = vld [vmem:[#allocation23 + $0x68] sm:$0xff]
    %v1236 = vld [vmem:[#allocation23 + $0x70] sm:$0xff]
    %v1237 = vld [vmem:[#allocation23 + $0x78] sm:$0xff]
    %v1238 = vld [vmem:[#allocation23 + $0x80] sm:$0xff]
    %v1239 = vld [vmem:[#allocation23 + $0x88] sm:$0xff]
    %v1240 = vld [vmem:[#allocation23 + $0x90] sm:$0xff]
    %v1241 = vld [vmem:[#allocation23 + $0x98] sm:$0xff]
    %v1242 = vld [vmem:[#allocation23 + $0xa0] sm:$0xff]
    %v1243 = vld [vmem:[#allocation23 + $0xa8] sm:$0xff]
    %v1244 = vld [vmem:[#allocation23 + $0xb0] sm:$0xff]
    %v1245 = vld [vmem:[#allocation23 + $0xb8] sm:$0xff]
    %v1246 = vld [vmem:[#allocation23 + $0xc0] sm:$0xff]
    %v1247 = vld [vmem:[#allocation23 + $0xc8] sm:$0xff]
    %v1248 = vld [vmem:[#allocation23 + $0xd0] sm:$0xff]
    %v1249 = vld [vmem:[#allocation23 + $0xd8] sm:$0xff]
    %v1250 = vld [vmem:[#allocation23 + $0xe0] sm:$0xff]
    %v1251 = vld [vmem:[#allocation23 + $0xe8] sm:$0xff]
    %v1252 = vld [vmem:[#allocation23 + $0xf0] sm:$0xff]
    %v1253 = vld [vmem:[#allocation23 + $0xf8] sm:$0xff]
    %v1254 = vld [vmem:[#allocation25] sm:$0x1]
    %1255 = vmatpush.msra.mxu0 0.0
    %1256 = vmatpush.msra.mxu0 0.0
    %1257 = vmatpush.msra.mxu0 0.0
    %1258 = vmatpush.msra.mxu0 0.0
    %1259 = vmatpush.msra.mxu0 0.0
    %1260 = vmatpush.msra.mxu0 0.0
    %1261 = vmatpush.msra.mxu0 0.0
    %1262 = vmatpush.msra.mxu0 0.0
    %1263 = vmatpush.msra.mxu0 0.0
    %1264 = vmatpush.msra.mxu0 0.0
    %1265 = vmatpush.msra.mxu0 0.0
    %1266 = vmatpush.msra.mxu0 0.0
    %1267 = vmatpush.msra.mxu0 %v1188
    %1268 = vmatpush.msra.mxu0 %v1186
    %1269 = vmatpush.msra.mxu0 %v1184
    %1270 = vmatpush.msra.mxu0 %v1182
    %1271 = vmatmul.f32.gmra.mxu0 %v590
    %v1272 = vpop.f32.mrf.mxu0
    %v1273 = vadd.f32 0.0, %v1272
    %1274 = vmatmul.f32.gmra.mxu0 %v593
    %v1275 = vpop.f32.mrf.mxu0
    %v1276 = vadd.f32 0.0, %v1275
    %1277 = vmatmul.f32.gmra.mxu0 %v596
    %v1278 = vpop.f32.mrf.mxu0
    %v1279 = vadd.f32 0.0, %v1278
    %1280 = vmatmul.f32.gmra.mxu0 %v599
    %v1281 = vpop.f32.mrf.mxu0
    %v1282 = vadd.f32 0.0, %v1281
    %1283 = vdwg.mxu0
    %1284 = vmatpush.msra.mxu0 0.0
    %1285 = vmatpush.msra.mxu0 0.0
    %1286 = vmatpush.msra.mxu0 0.0
    %1287 = vmatpush.msra.mxu0 0.0
    %1288 = vmatpush.msra.mxu0 0.0
    %1289 = vmatpush.msra.mxu0 0.0
    %1290 = vmatpush.msra.mxu0 0.0
    %1291 = vmatpush.msra.mxu0 0.0
    %1292 = vmatpush.msra.mxu0 0.0
    %1293 = vmatpush.msra.mxu0 0.0
    %1294 = vmatpush.msra.mxu0 0.0
    %1295 = vmatpush.msra.mxu0 0.0
    %1296 = vmatpush.msra.mxu0 %v1189
    %1297 = vmatpush.msra.mxu0 %v1187
    %1298 = vmatpush.msra.mxu0 %v1185
    %1299 = vmatpush.msra.mxu0 %v1183
    %1300 = vmatmul.f32.gmra.mxu0 %v590
    %v1301 = vpop.f32.mrf.mxu0
    %v1302 = vadd.f32 0.0, %v1301
    %1303 = vmatmul.f32.gmra.mxu0 %v593
    %v1304 = vpop.f32.mrf.mxu0
    %v1305 = vadd.f32 0.0, %v1304
    %1306 = vmatmul.f32.gmra.mxu0 %v596
    %v1307 = vpop.f32.mrf.mxu0
    %v1308 = vadd.f32 0.0, %v1307
    %1309 = vmatmul.f32.gmra.mxu0 %v599
    %v1310 = vpop.f32.mrf.mxu0
    %v1311 = vadd.f32 0.0, %v1310
    %1312 = vdwg.mxu0
    %1313 = vmatpush.msra.mxu0 %v1237
    %1314 = vmatpush.msra.mxu0 %v1236
    %1315 = vmatpush.msra.mxu0 %v1235
    %1316 = vmatpush.msra.mxu0 %v1234
    %1317 = vmatpush.msra.mxu0 %v1233
    %1318 = vmatpush.msra.mxu0 %v1232
    %1319 = vmatpush.msra.mxu0 %v1231
    %1320 = vmatpush.msra.mxu0 %v1230
    %1321 = vmatpush.msra.mxu0 %v1229
    %1322 = vmatpush.msra.mxu0 %v1228
    %1323 = vmatpush.msra.mxu0 %v1227
    %1324 = vmatpush.msra.mxu0 %v1226
    %1325 = vmatpush.msra.mxu0 %v1225
    %1326 = vmatpush.msra.mxu0 %v1224
    %1327 = vmatpush.msra.mxu0 %v1223
    %1328 = vmatpush.msra.mxu0 %v1222
    %1329 = vmatmul.f32.gmra.mxu0 %v1182
    %v1330 = vpop.f32.mrf.mxu0
    %v1331 = vadd.f32 0.0, %v1330
    %1332 = vmatmul.f32.gmra.mxu0 %v1184
    %v1333 = vpop.f32.mrf.mxu0
    %v1334 = vadd.f32 0.0, %v1333
    %1335 = vmatmul.f32.gmra.mxu0 %v1186
    %v1336 = vpop.f32.mrf.mxu0
    %v1337 = vadd.f32 0.0, %v1336
    %1338 = vmatmul.f32.gmra.mxu0 %v1188
    %v1339 = vpop.f32.mrf.mxu0
    %v1340 = vadd.f32 0.0, %v1339
    %1341 = vdwg.mxu0
    %1342 = vmatpush.msra.mxu0 %v1253
    %1343 = vmatpush.msra.mxu0 %v1252
    %1344 = vmatpush.msra.mxu0 %v1251
    %1345 = vmatpush.msra.mxu0 %v1250
    %1346 = vmatpush.msra.mxu0 %v1249
    %1347 = vmatpush.msra.mxu0 %v1248
    %1348 = vmatpush.msra.mxu0 %v1247
    %1349 = vmatpush.msra.mxu0 %v1246
    %1350 = vmatpush.msra.mxu0 %v1245
    %1351 = vmatpush.msra.mxu0 %v1244
    %1352 = vmatpush.msra.mxu0 %v1243
    %1353 = vmatpush.msra.mxu0 %v1242
    %1354 = vmatpush.msra.mxu0 %v1241
    %1355 = vmatpush.msra.mxu0 %v1240
    %1356 = vmatpush.msra.mxu0 %v1239
    %1357 = vmatpush.msra.mxu0 %v1238
    %1358 = vmatmul.f32.gmra.mxu0 %v1183
    %v1359 = vpop.f32.mrf.mxu0
    %v1360 = vadd.f32 %v1331, %v1359
    %1361 = vmatmul.f32.gmra.mxu0 %v1185
    %v1362 = vpop.f32.mrf.mxu0
    %v1363 = vadd.f32 %v1334, %v1362
    %1364 = vmatmul.f32.gmra.mxu0 %v1187
    %v1365 = vpop.f32.mrf.mxu0
    %v1366 = vadd.f32 %v1337, %v1365
    %1367 = vmatmul.f32.gmra.mxu0 %v1189
    %v1368 = vpop.f32.mrf.mxu0
    %v1369 = vadd.f32 %v1340, %v1368
    %1370 = vdwg.mxu0
    %1371 = vmatpush.msra.mxu0 %v1205
    %1372 = vmatpush.msra.mxu0 %v1204
    %1373 = vmatpush.msra.mxu0 %v1203
    %1374 = vmatpush.msra.mxu0 %v1202
    %1375 = vmatpush.msra.mxu0 %v1201
    %1376 = vmatpush.msra.mxu0 %v1200
    %1377 = vmatpush.msra.mxu0 %v1199
    %1378 = vmatpush.msra.mxu0 %v1198
    %1379 = vmatpush.msra.mxu0 %v1197
    %1380 = vmatpush.msra.mxu0 %v1196
    %1381 = vmatpush.msra.mxu0 %v1195
    %1382 = vmatpush.msra.mxu0 %v1194
    %1383 = vmatpush.msra.mxu0 %v1193
    %1384 = vmatpush.msra.mxu0 %v1192
    %1385 = vmatpush.msra.mxu0 %v1191
    %1386 = vmatpush.msra.mxu0 %v1190
    %1387 = vmatmul.f32.gmra.mxu0 %v1273
    %v1388 = vpop.f32.mrf.mxu0
    %v1389 = vadd.f32 %v1360, %v1388
    %1390 = vmatmul.f32.gmra.mxu0 %v1276
    %v1391 = vpop.f32.mrf.mxu0
    %v1392 = vadd.f32 %v1363, %v1391
    %1393 = vmatmul.f32.gmra.mxu0 %v1279
    %v1394 = vpop.f32.mrf.mxu0
    %v1395 = vadd.f32 %v1366, %v1394
    %1396 = vmatmul.f32.gmra.mxu0 %v1282
    %v1397 = vpop.f32.mrf.mxu0
    %v1398 = vadd.f32 %v1369, %v1397
    %1399 = vdwg.mxu0
    %1400 = vmatpush.msra.mxu0 %v1221
    %1401 = vmatpush.msra.mxu0 %v1220
    %1402 = vmatpush.msra.mxu0 %v1219
    %1403 = vmatpush.msra.mxu0 %v1218
    %1404 = vmatpush.msra.mxu0 %v1217
    %1405 = vmatpush.msra.mxu0 %v1216
    %1406 = vmatpush.msra.mxu0 %v1215
    %1407 = vmatpush.msra.mxu0 %v1214
    %1408 = vmatpush.msra.mxu0 %v1213
    %1409 = vmatpush.msra.mxu0 %v1212
    %1410 = vmatpush.msra.mxu0 %v1211
    %1411 = vmatpush.msra.mxu0 %v1210
    %1412 = vmatpush.msra.mxu0 %v1209
    %1413 = vmatpush.msra.mxu0 %v1208
    %1414 = vmatpush.msra.mxu0 %v1207
    %1415 = vmatpush.msra.mxu0 %v1206
    %1416 = vmatmul.f32.gmra.mxu0 %v1302
    %v1417 = vpop.f32.mrf.mxu0
    %v1418 = vadd.f32 %v1389, %v1417
    %1419 = vmatmul.f32.gmra.mxu0 %v1305
    %v1420 = vpop.f32.mrf.mxu0
    %v1421 = vadd.f32 %v1392, %v1420
    %1422 = vmatmul.f32.gmra.mxu0 %v1308
    %v1423 = vpop.f32.mrf.mxu0
    %v1424 = vadd.f32 %v1395, %v1423
    %1425 = vmatmul.f32.gmra.mxu0 %v1311
    %v1426 = vpop.f32.mrf.mxu0
    %v1427 = vadd.f32 %v1398, %v1426
    %1428 = vdwg.mxu0
    %v1430 = vperm.slane %v1254, 0
    %v1432 = vadd.f32 %v1418, %v1430
    %v1433 = vadd.f32 %v1421, %v1430
    %v1434 = vadd.f32 %v1424, %v1430
    %v1435 = vadd.f32 %v1427, %v1430
    %v1436 = vmax.f32 %v1432, 0.0
    %v1437 = vmax.f32 %v1433, 0.0
    %v1438 = vmax.f32 %v1434, 0.0
    %v1439 = vmax.f32 %v1435, 0.0
    %vm1440 = vcmp.lt.s32.totalorder %v581, 12
    %vm1441 = vcmp.lt.s32.totalorder %v582, 12
    %vm1442 = vcmp.lt.s32.totalorder %v583, 12
    %vm1443 = vcmp.lt.s32.totalorder %v584, 12
    %v1444 = vsel %vm1440, 1, 0
    %v1445 = vsel %vm1441, 1, 0
    %v1446 = vsel %vm1442, 1, 0
    %v1447 = vsel %vm1443, 1, 0
    %1448 = vset.pattern.permute.xlu0 0
    %1449 = vperm.xlu0 %1448, %v1444
    %v1450 = vpop.permute.xlu0 %1449
    %1451 = vset.pattern.permute.xlu0 0
    %1452 = vperm.xlu0 %1451, %v1445
    %v1453 = vpop.permute.xlu0 %1452
    %1454 = vset.pattern.permute.xlu0 0
    %1455 = vperm.xlu0 %1454, %v1446
    %v1456 = vpop.permute.xlu0 %1455
    %1457 = vset.pattern.permute.xlu0 0
    %1458 = vperm.xlu0 %1457, %v1447
    %v1459 = vpop.permute.xlu0 %1458
    %vm1460 = vcmp.eq.s32.totalorder %v1450, 1
    %vm1461 = vcmp.eq.s32.totalorder %v1453, 1
    %vm1462 = vcmp.eq.s32.totalorder %v1456, 1
    %vm1463 = vcmp.eq.s32.totalorder %v1459, 1
    %v1464 = vsel %vm1460, %v1436, 0.0
    %v1465 = vsel %vm1461, %v1437, 0.0
    %v1466 = vsel %vm1462, %v1438, 0.0
    %v1467 = vsel %vm1463, %v1439, 0.0
    %v1468 = vld [vmem:[#allocation26] sm:$0xff]
    %v1469 = vld [vmem:[#allocation26 + $0x8] sm:$0xff]
    %v1470 = vld [vmem:[#allocation26 + $0x10] sm:$0xff]
    %v1471 = vld [vmem:[#allocation26 + $0x18] sm:$0xff]
    %v1472 = vld [vmem:[#allocation26 + $0x20] sm:$0xff]
    %v1473 = vld [vmem:[#allocation26 + $0x28] sm:$0xff]
    %v1474 = vld [vmem:[#allocation26 + $0x30] sm:$0xff]
    %v1475 = vld [vmem:[#allocation26 + $0x38] sm:$0xff]
    %v1476 = vld [vmem:[#allocation26 + $0x40] sm:$0xff]
    %v1477 = vld [vmem:[#allocation26 + $0x48] sm:$0xff]
    %v1478 = vld [vmem:[#allocation26 + $0x50] sm:$0xff]
    %v1479 = vld [vmem:[#allocation26 + $0x58] sm:$0xff]
    %v1480 = vld [vmem:[#allocation26 + $0x60] sm:$0xff]
    %v1481 = vld [vmem:[#allocation26 + $0x68] sm:$0xff]
    %v1482 = vld [vmem:[#allocation26 + $0x70] sm:$0xff]
    %v1483 = vld [vmem:[#allocation26 + $0x78] sm:$0xff]
    %v1484 = vld [vmem:[#allocation28] sm:$0xff]
    %v1485 = vld [vmem:[#allocation28 + $0x8] sm:$0xff]
    %v1486 = vld [vmem:[#allocation28 + $0x10] sm:$0xff]
    %v1487 = vld [vmem:[#allocation28 + $0x18] sm:$0xff]
    %v1488 = vld [vmem:[#allocation28 + $0x20] sm:$0xff]
    %v1489 = vld [vmem:[#allocation28 + $0x28] sm:$0xff]
    %v1490 = vld [vmem:[#allocation28 + $0x30] sm:$0xff]
    %v1491 = vld [vmem:[#allocation28 + $0x38] sm:$0xff]
    %v1492 = vld [vmem:[#allocation28 + $0x40] sm:$0xff]
    %v1493 = vld [vmem:[#allocation28 + $0x48] sm:$0xff]
    %v1494 = vld [vmem:[#allocation28 + $0x50] sm:$0xff]
    %v1495 = vld [vmem:[#allocation28 + $0x58] sm:$0xff]
    %v1496 = vld [vmem:[#allocation28 + $0x60] sm:$0xff]
    %v1497 = vld [vmem:[#allocation28 + $0x68] sm:$0xff]
    %v1498 = vld [vmem:[#allocation28 + $0x70] sm:$0xff]
    %v1499 = vld [vmem:[#allocation28 + $0x78] sm:$0xff]
    %v1500 = vld [vmem:[#allocation29] sm:$0x1]
    %1501 = vmatpush.msra.mxu0 0.0
    %1502 = vmatpush.msra.mxu0 0.0
    %1503 = vmatpush.msra.mxu0 0.0
    %1504 = vmatpush.msra.mxu0 0.0
    %1505 = vmatpush.msra.mxu0 0.0
    %1506 = vmatpush.msra.mxu0 0.0
    %1507 = vmatpush.msra.mxu0 0.0
    %1508 = vmatpush.msra.mxu0 0.0
    %1509 = vmatpush.msra.mxu0 0.0
    %1510 = vmatpush.msra.mxu0 0.0
    %1511 = vmatpush.msra.mxu0 0.0
    %1512 = vmatpush.msra.mxu0 0.0
    %1513 = vmatpush.msra.mxu0 %v1467
    %1514 = vmatpush.msra.mxu0 %v1466
    %1515 = vmatpush.msra.mxu0 %v1465
    %1516 = vmatpush.msra.mxu0 %v1464
    %1517 = vmatmul.f32.gmra.mxu0 %v590
    %v1518 = vpop.f32.mrf.mxu0
    %v1519 = vadd.f32 0.0, %v1518
    %1520 = vmatmul.f32.gmra.mxu0 %v593
    %v1521 = vpop.f32.mrf.mxu0
    %v1522 = vadd.f32 0.0, %v1521
    %1523 = vmatmul.f32.gmra.mxu0 %v596
    %v1524 = vpop.f32.mrf.mxu0
    %v1525 = vadd.f32 0.0, %v1524
    %1526 = vmatmul.f32.gmra.mxu0 %v599
    %v1527 = vpop.f32.mrf.mxu0
    %v1528 = vadd.f32 0.0, %v1527
    %1529 = vdwg.mxu0
    %1530 = vmatpush.msra.mxu0 %v1499
    %1531 = vmatpush.msra.mxu0 %v1498
    %1532 = vmatpush.msra.mxu0 %v1497
    %1533 = vmatpush.msra.mxu0 %v1496
    %1534 = vmatpush.msra.mxu0 %v1495
    %1535 = vmatpush.msra.mxu0 %v1494
    %1536 = vmatpush.msra.mxu0 %v1493
    %1537 = vmatpush.msra.mxu0 %v1492
    %1538 = vmatpush.msra.mxu0 %v1491
    %1539 = vmatpush.msra.mxu0 %v1490
    %1540 = vmatpush.msra.mxu0 %v1489
    %1541 = vmatpush.msra.mxu0 %v1488
    %1542 = vmatpush.msra.mxu0 %v1487
    %1543 = vmatpush.msra.mxu0 %v1486
    %1544 = vmatpush.msra.mxu0 %v1485
    %1545 = vmatpush.msra.mxu0 %v1484
    %1546 = vmatmul.f32.gmra.mxu0 %v1464
    %v1547 = vpop.f32.mrf.mxu0
    %v1548 = vadd.f32 0.0, %v1547
    %1549 = vmatmul.f32.gmra.mxu0 %v1465
    %v1550 = vpop.f32.mrf.mxu0
    %v1551 = vadd.f32 0.0, %v1550
    %1552 = vmatmul.f32.gmra.mxu0 %v1466
    %v1553 = vpop.f32.mrf.mxu0
    %v1554 = vadd.f32 0.0, %v1553
    %1555 = vmatmul.f32.gmra.mxu0 %v1467
    %v1556 = vpop.f32.mrf.mxu0
    %v1557 = vadd.f32 0.0, %v1556
    %1558 = vdwg.mxu0
    %1559 = vmatpush.msra.mxu0 %v1483
    %1560 = vmatpush.msra.mxu0 %v1482
    %1561 = vmatpush.msra.mxu0 %v1481
    %1562 = vmatpush.msra.mxu0 %v1480
    %1563 = vmatpush.msra.mxu0 %v1479
    %1564 = vmatpush.msra.mxu0 %v1478
    %1565 = vmatpush.msra.mxu0 %v1477
    %1566 = vmatpush.msra.mxu0 %v1476
    %1567 = vmatpush.msra.mxu0 %v1475
    %1568 = vmatpush.msra.mxu0 %v1474
    %1569 = vmatpush.msra.mxu0 %v1473
    %1570 = vmatpush.msra.mxu0 %v1472
    %1571 = vmatpush.msra.mxu0 %v1471
    %1572 = vmatpush.msra.mxu0 %v1470
    %1573 = vmatpush.msra.mxu0 %v1469
    %1574 = vmatpush.msra.mxu0 %v1468
    %1575 = vmatmul.f32.gmra.mxu0 %v1519
    %v1576 = vpop.f32.mrf.mxu0
    %v1577 = vadd.f32 %v1548, %v1576
    %1578 = vmatmul.f32.gmra.mxu0 %v1522
    %v1579 = vpop.f32.mrf.mxu0
    %v1580 = vadd.f32 %v1551, %v1579
    %1581 = vmatmul.f32.gmra.mxu0 %v1525
    %v1582 = vpop.f32.mrf.mxu0
    %v1583 = vadd.f32 %v1554, %v1582
    %1584 = vmatmul.f32.gmra.mxu0 %v1528
    %v1585 = vpop.f32.mrf.mxu0
    %v1586 = vadd.f32 %v1557, %v1585
    %1587 = vdwg.mxu0
    %v1589 = vperm.slane %v1500, 0
    %v1591 = vadd.f32 %v1577, %v1589
    %v1592 = vadd.f32 %v1580, %v1589
    %v1593 = vadd.f32 %v1583, %v1589
    %v1594 = vadd.f32 %v1586, %v1589
    %v1595 = vmax.f32 %v1591, 0.0
    %v1596 = vmax.f32 %v1592, 0.0
    %v1597 = vmax.f32 %v1593, 0.0
    %v1598 = vmax.f32 %v1594, 0.0
    %vm1599 = vcmp.lt.s32.totalorder %v581, 13
    %vm1600 = vcmp.lt.s32.totalorder %v582, 13
    %vm1601 = vcmp.lt.s32.totalorder %v583, 13
    %vm1602 = vcmp.lt.s32.totalorder %v584, 13
    %v1603 = vsel %vm1599, 1, 0
    %v1604 = vsel %vm1600, 1, 0
    %v1605 = vsel %vm1601, 1, 0
    %v1606 = vsel %vm1602, 1, 0
    %1607 = vset.pattern.permute.xlu0 0
    %1608 = vperm.xlu0 %1607, %v1603
    %v1609 = vpop.permute.xlu0 %1608
    %1610 = vset.pattern.permute.xlu0 0
    %1611 = vperm.xlu0 %1610, %v1604
    %v1612 = vpop.permute.xlu0 %1611
    %1613 = vset.pattern.permute.xlu0 0
    %1614 = vperm.xlu0 %1613, %v1605
    %v1615 = vpop.permute.xlu0 %1614
    %1616 = vset.pattern.permute.xlu0 0
    %1617 = vperm.xlu0 %1616, %v1606
    %v1618 = vpop.permute.xlu0 %1617
    %vm1619 = vcmp.eq.s32.totalorder %v1609, 1
    %vm1620 = vcmp.eq.s32.totalorder %v1612, 1
    %vm1621 = vcmp.eq.s32.totalorder %v1615, 1
    %vm1622 = vcmp.eq.s32.totalorder %v1618, 1
    %v1623 = vsel %vm1619, %v1595, 0.0
    %v1624 = vsel %vm1620, %v1596, 0.0
    %v1625 = vsel %vm1621, %v1597, 0.0
    %v1626 = vsel %vm1622, %v1598, 0.0
    %v1627 = vld [vmem:[#allocation7] sm:$0x3]
    %v1629 = vsel %vm588, %v1627, 0
    %1631 = vmatpush.msra.mxu0 0.0
    %1632 = vmatpush.msra.mxu0 0.0
    %1633 = vmatpush.msra.mxu0 0.0
    %1634 = vmatpush.msra.mxu0 0.0
    %1635 = vmatpush.msra.mxu0 0.0
    %1636 = vmatpush.msra.mxu0 0.0
    %1637 = vmatpush.msra.mxu0 0.0
    %1638 = vmatpush.msra.mxu0 0.0
    %1639 = vmatpush.msra.mxu0 0.0
    %1640 = vmatpush.msra.mxu0 0.0
    %1641 = vmatpush.msra.mxu0 0.0
    %1642 = vmatpush.msra.mxu0 0.0
    %1643 = vmatpush.msra.mxu0 %v1626
    %1644 = vmatpush.msra.mxu0 %v1625
    %1645 = vmatpush.msra.mxu0 %v1624
    %1646 = vmatpush.msra.mxu0 %v1623
    %1647 = vmatmul.f32.gmra.mxu0 %v1629
    %v1648 = vpop.f32.mrf.mxu0
    %v1649 = vadd.f32 0.0, %v1648
    %1650 = vdwg.mxu0
    %v1651 = vld [vmem:[#allocation31] sm:$0xff]
    %v1652 = vld [vmem:[#allocation31 + $0x8] sm:$0xff]
    %v1653 = vld [vmem:[#allocation31 + $0x10] sm:$0xff]
    %v1654 = vld [vmem:[#allocation31 + $0x18] sm:$0xff]
    %v1655 = vld [vmem:[#allocation31 + $0x20] sm:$0xff]
    %v1656 = vld [vmem:[#allocation31 + $0x28] sm:$0xff]
    %v1657 = vld [vmem:[#allocation31 + $0x30] sm:$0xff]
    %v1658 = vld [vmem:[#allocation31 + $0x38] sm:$0xff]
    %v1659 = vld [vmem:[#allocation31 + $0x40] sm:$0xff]
    %v1660 = vld [vmem:[#allocation31 + $0x48] sm:$0xff]
    %v1661 = vld [vmem:[#allocation31 + $0x50] sm:$0xff]
    %v1662 = vld [vmem:[#allocation31 + $0x58] sm:$0xff]
    %v1663 = vld [vmem:[#allocation31 + $0x60] sm:$0xff]
    %v1664 = vld [vmem:[#allocation31 + $0x68] sm:$0xff]
    %v1665 = vld [vmem:[#allocation31 + $0x70] sm:$0xff]
    %v1666 = vld [vmem:[#allocation31 + $0x78] sm:$0xff]
    %v1667 = vld [vmem:[#allocation31 + $0x80] sm:$0xff]
    %v1668 = vld [vmem:[#allocation31 + $0x88] sm:$0xff]
    %v1669 = vld [vmem:[#allocation31 + $0x90] sm:$0xff]
    %v1670 = vld [vmem:[#allocation31 + $0x98] sm:$0xff]
    %v1671 = vld [vmem:[#allocation31 + $0xa0] sm:$0xff]
    %v1672 = vld [vmem:[#allocation31 + $0xa8] sm:$0xff]
    %v1673 = vld [vmem:[#allocation31 + $0xb0] sm:$0xff]
    %v1674 = vld [vmem:[#allocation31 + $0xb8] sm:$0xff]
    %v1675 = vld [vmem:[#allocation31 + $0xc0] sm:$0xff]
    %v1676 = vld [vmem:[#allocation31 + $0xc8] sm:$0xff]
    %v1677 = vld [vmem:[#allocation31 + $0xd0] sm:$0xff]
    %v1678 = vld [vmem:[#allocation31 + $0xd8] sm:$0xff]
    %v1679 = vld [vmem:[#allocation31 + $0xe0] sm:$0xff]
    %v1680 = vld [vmem:[#allocation31 + $0xe8] sm:$0xff]
    %v1681 = vld [vmem:[#allocation31 + $0xf0] sm:$0xff]
    %v1682 = vld [vmem:[#allocation31 + $0xf8] sm:$0xff]
    %v1683 = vld [vmem:[#allocation31 + $0x100] sm:$0xff]
    %v1684 = vld [vmem:[#allocation31 + $0x108] sm:$0xff]
    %v1685 = vld [vmem:[#allocation31 + $0x110] sm:$0xff]
    %v1686 = vld [vmem:[#allocation31 + $0x118] sm:$0xff]
    %v1687 = vld [vmem:[#allocation31 + $0x120] sm:$0xff]
    %v1688 = vld [vmem:[#allocation31 + $0x128] sm:$0xff]
    %v1689 = vld [vmem:[#allocation31 + $0x130] sm:$0xff]
    %v1690 = vld [vmem:[#allocation31 + $0x138] sm:$0xff]
    %v1691 = vld [vmem:[#allocation31 + $0x140] sm:$0xff]
    %v1692 = vld [vmem:[#allocation31 + $0x148] sm:$0xff]
    %v1693 = vld [vmem:[#allocation31 + $0x150] sm:$0xff]
    %v1694 = vld [vmem:[#allocation31 + $0x158] sm:$0xff]
    %v1695 = vld [vmem:[#allocation31 + $0x160] sm:$0xff]
    %v1696 = vld [vmem:[#allocation31 + $0x168] sm:$0xff]
    %v1697 = vld [vmem:[#allocation31 + $0x170] sm:$0xff]
    %v1698 = vld [vmem:[#allocation31 + $0x178] sm:$0xff]
    %v1699 = vld [vmem:[#allocation31 + $0x180] sm:$0xff]
    %v1700 = vld [vmem:[#allocation31 + $0x188] sm:$0xff]
    %v1701 = vld [vmem:[#allocation31 + $0x190] sm:$0xff]
    %v1702 = vld [vmem:[#allocation31 + $0x198] sm:$0xff]
    %v1703 = vld [vmem:[#allocation31 + $0x1a0] sm:$0xff]
    %v1704 = vld [vmem:[#allocation31 + $0x1a8] sm:$0xff]
    %v1705 = vld [vmem:[#allocation31 + $0x1b0] sm:$0xff]
    %v1706 = vld [vmem:[#allocation31 + $0x1b8] sm:$0xff]
    %v1707 = vld [vmem:[#allocation31 + $0x1c0] sm:$0xff]
    %v1708 = vld [vmem:[#allocation31 + $0x1c8] sm:$0xff]
    %v1709 = vld [vmem:[#allocation31 + $0x1d0] sm:$0xff]
    %v1710 = vld [vmem:[#allocation31 + $0x1d8] sm:$0xff]
    %v1711 = vld [vmem:[#allocation31 + $0x1e0] sm:$0xff]
    %v1712 = vld [vmem:[#allocation31 + $0x1e8] sm:$0xff]
    %v1713 = vld [vmem:[#allocation31 + $0x1f0] sm:$0xff]
    %v1714 = vld [vmem:[#allocation31 + $0x1f8] sm:$0xff]
    %v1715 = vld [vmem:[#allocation32] sm:$0xff]
    %v1716 = vld [vmem:[#allocation34] sm:$0xff]
    %v1717 = vld [vmem:[#allocation34 + $0x8] sm:$0xff]
    %v1718 = vld [vmem:[#allocation34 + $0x10] sm:$0xff]
    %v1719 = vld [vmem:[#allocation34 + $0x18] sm:$0xff]
    %v1720 = vld [vmem:[#allocation34 + $0x20] sm:$0xff]
    %v1721 = vld [vmem:[#allocation34 + $0x28] sm:$0xff]
    %v1722 = vld [vmem:[#allocation34 + $0x30] sm:$0xff]
    %v1723 = vld [vmem:[#allocation34 + $0x38] sm:$0xff]
    %v1724 = vld [vmem:[#allocation34 + $0x40] sm:$0xff]
    %v1725 = vld [vmem:[#allocation34 + $0x48] sm:$0xff]
    %v1726 = vld [vmem:[#allocation34 + $0x50] sm:$0xff]
    %v1727 = vld [vmem:[#allocation34 + $0x58] sm:$0xff]
    %v1728 = vld [vmem:[#allocation34 + $0x60] sm:$0xff]
    %v1729 = vld [vmem:[#allocation34 + $0x68] sm:$0xff]
    %v1730 = vld [vmem:[#allocation34 + $0x70] sm:$0xff]
    %v1731 = vld [vmem:[#allocation34 + $0x78] sm:$0xff]
    %v1732 = vld [vmem:[#allocation34 + $0x80] sm:$0xff]
    %v1733 = vld [vmem:[#allocation34 + $0x88] sm:$0xff]
    %v1734 = vld [vmem:[#allocation34 + $0x90] sm:$0xff]
    %v1735 = vld [vmem:[#allocation34 + $0x98] sm:$0xff]
    %v1736 = vld [vmem:[#allocation34 + $0xa0] sm:$0xff]
    %v1737 = vld [vmem:[#allocation34 + $0xa8] sm:$0xff]
    %v1738 = vld [vmem:[#allocation34 + $0xb0] sm:$0xff]
    %v1739 = vld [vmem:[#allocation34 + $0xb8] sm:$0xff]
    %v1740 = vld [vmem:[#allocation34 + $0xc0] sm:$0xff]
    %v1741 = vld [vmem:[#allocation34 + $0xc8] sm:$0xff]
    %v1742 = vld [vmem:[#allocation34 + $0xd0] sm:$0xff]
    %v1743 = vld [vmem:[#allocation34 + $0xd8] sm:$0xff]
    %v1744 = vld [vmem:[#allocation34 + $0xe0] sm:$0xff]
    %v1745 = vld [vmem:[#allocation34 + $0xe8] sm:$0xff]
    %v1746 = vld [vmem:[#allocation34 + $0xf0] sm:$0xff]
    %v1747 = vld [vmem:[#allocation34 + $0xf8] sm:$0xff]
    %v1748 = vld [vmem:[#allocation34 + $0x100] sm:$0xff]
    %v1749 = vld [vmem:[#allocation34 + $0x108] sm:$0xff]
    %v1750 = vld [vmem:[#allocation34 + $0x110] sm:$0xff]
    %v1751 = vld [vmem:[#allocation34 + $0x118] sm:$0xff]
    %v1752 = vld [vmem:[#allocation34 + $0x120] sm:$0xff]
    %v1753 = vld [vmem:[#allocation34 + $0x128] sm:$0xff]
    %v1754 = vld [vmem:[#allocation34 + $0x130] sm:$0xff]
    %v1755 = vld [vmem:[#allocation34 + $0x138] sm:$0xff]
    %v1756 = vld [vmem:[#allocation34 + $0x140] sm:$0xff]
    %v1757 = vld [vmem:[#allocation34 + $0x148] sm:$0xff]
    %v1758 = vld [vmem:[#allocation34 + $0x150] sm:$0xff]
    %v1759 = vld [vmem:[#allocation34 + $0x158] sm:$0xff]
    %v1760 = vld [vmem:[#allocation34 + $0x160] sm:$0xff]
    %v1761 = vld [vmem:[#allocation34 + $0x168] sm:$0xff]
    %v1762 = vld [vmem:[#allocation34 + $0x170] sm:$0xff]
    %v1763 = vld [vmem:[#allocation34 + $0x178] sm:$0xff]
    %v1764 = vld [vmem:[#allocation34 + $0x180] sm:$0xff]
    %v1765 = vld [vmem:[#allocation34 + $0x188] sm:$0xff]
    %v1766 = vld [vmem:[#allocation34 + $0x190] sm:$0xff]
    %v1767 = vld [vmem:[#allocation34 + $0x198] sm:$0xff]
    %v1768 = vld [vmem:[#allocation34 + $0x1a0] sm:$0xff]
    %v1769 = vld [vmem:[#allocation34 + $0x1a8] sm:$0xff]
    %v1770 = vld [vmem:[#allocation34 + $0x1b0] sm:$0xff]
    %v1771 = vld [vmem:[#allocation34 + $0x1b8] sm:$0xff]
    %v1772 = vld [vmem:[#allocation34 + $0x1c0] sm:$0xff]
    %v1773 = vld [vmem:[#allocation34 + $0x1c8] sm:$0xff]
    %v1774 = vld [vmem:[#allocation34 + $0x1d0] sm:$0xff]
    %v1775 = vld [vmem:[#allocation34 + $0x1d8] sm:$0xff]
    %v1776 = vld [vmem:[#allocation34 + $0x1e0] sm:$0xff]
    %v1777 = vld [vmem:[#allocation34 + $0x1e8] sm:$0xff]
    %v1778 = vld [vmem:[#allocation34 + $0x1f0] sm:$0xff]
    %v1779 = vld [vmem:[#allocation34 + $0x1f8] sm:$0xff]
    %v1780 = vld [vmem:[#allocation34 + $0x200] sm:$0xff]
    %v1781 = vld [vmem:[#allocation34 + $0x208] sm:$0xff]
    %v1782 = vld [vmem:[#allocation34 + $0x210] sm:$0xff]
    %v1783 = vld [vmem:[#allocation34 + $0x218] sm:$0xff]
    %v1784 = vld [vmem:[#allocation34 + $0x220] sm:$0xff]
    %v1785 = vld [vmem:[#allocation34 + $0x228] sm:$0xff]
    %v1786 = vld [vmem:[#allocation34 + $0x230] sm:$0xff]
    %v1787 = vld [vmem:[#allocation34 + $0x238] sm:$0xff]
    %v1788 = vld [vmem:[#allocation34 + $0x240] sm:$0xff]
    %v1789 = vld [vmem:[#allocation34 + $0x248] sm:$0xff]
    %v1790 = vld [vmem:[#allocation34 + $0x250] sm:$0xff]
    %v1791 = vld [vmem:[#allocation34 + $0x258] sm:$0xff]
    %v1792 = vld [vmem:[#allocation34 + $0x260] sm:$0xff]
    %v1793 = vld [vmem:[#allocation34 + $0x268] sm:$0xff]
    %v1794 = vld [vmem:[#allocation34 + $0x270] sm:$0xff]
    %v1795 = vld [vmem:[#allocation34 + $0x278] sm:$0xff]
    %v1796 = vld [vmem:[#allocation34 + $0x280] sm:$0xff]
    %v1797 = vld [vmem:[#allocation34 + $0x288] sm:$0xff]
    %v1798 = vld [vmem:[#allocation34 + $0x290] sm:$0xff]
    %v1799 = vld [vmem:[#allocation34 + $0x298] sm:$0xff]
    %v1800 = vld [vmem:[#allocation34 + $0x2a0] sm:$0xff]
    %v1801 = vld [vmem:[#allocation34 + $0x2a8] sm:$0xff]
    %v1802 = vld [vmem:[#allocation34 + $0x2b0] sm:$0xff]
    %v1803 = vld [vmem:[#allocation34 + $0x2b8] sm:$0xff]
    %v1804 = vld [vmem:[#allocation34 + $0x2c0] sm:$0xff]
    %v1805 = vld [vmem:[#allocation34 + $0x2c8] sm:$0xff]
    %v1806 = vld [vmem:[#allocation34 + $0x2d0] sm:$0xff]
    %v1807 = vld [vmem:[#allocation34 + $0x2d8] sm:$0xff]
    %v1808 = vld [vmem:[#allocation34 + $0x2e0] sm:$0xff]
    %v1809 = vld [vmem:[#allocation34 + $0x2e8] sm:$0xff]
    %v1810 = vld [vmem:[#allocation34 + $0x2f0] sm:$0xff]
    %v1811 = vld [vmem:[#allocation34 + $0x2f8] sm:$0xff]
    %v1812 = vld [vmem:[#allocation34 + $0x300] sm:$0xff]
    %v1813 = vld [vmem:[#allocation34 + $0x308] sm:$0xff]
    %v1814 = vld [vmem:[#allocation34 + $0x310] sm:$0xff]
    %v1815 = vld [vmem:[#allocation34 + $0x318] sm:$0xff]
    %v1816 = vld [vmem:[#allocation34 + $0x320] sm:$0xff]
    %v1817 = vld [vmem:[#allocation34 + $0x328] sm:$0xff]
    %v1818 = vld [vmem:[#allocation34 + $0x330] sm:$0xff]
    %v1819 = vld [vmem:[#allocation34 + $0x338] sm:$0xff]
    %v1820 = vld [vmem:[#allocation34 + $0x340] sm:$0xff]
    %v1821 = vld [vmem:[#allocation34 + $0x348] sm:$0xff]
    %v1822 = vld [vmem:[#allocation34 + $0x350] sm:$0xff]
    %v1823 = vld [vmem:[#allocation34 + $0x358] sm:$0xff]
    %v1824 = vld [vmem:[#allocation34 + $0x360] sm:$0xff]
    %v1825 = vld [vmem:[#allocation34 + $0x368] sm:$0xff]
    %v1826 = vld [vmem:[#allocation34 + $0x370] sm:$0xff]
    %v1827 = vld [vmem:[#allocation34 + $0x378] sm:$0xff]
    %v1828 = vld [vmem:[#allocation34 + $0x380] sm:$0xff]
    %v1829 = vld [vmem:[#allocation34 + $0x388] sm:$0xff]
    %v1830 = vld [vmem:[#allocation34 + $0x390] sm:$0xff]
    %v1831 = vld [vmem:[#allocation34 + $0x398] sm:$0xff]
    %v1832 = vld [vmem:[#allocation34 + $0x3a0] sm:$0xff]
    %v1833 = vld [vmem:[#allocation34 + $0x3a8] sm:$0xff]
    %v1834 = vld [vmem:[#allocation34 + $0x3b0] sm:$0xff]
    %v1835 = vld [vmem:[#allocation34 + $0x3b8] sm:$0xff]
    %v1836 = vld [vmem:[#allocation34 + $0x3c0] sm:$0xff]
    %v1837 = vld [vmem:[#allocation34 + $0x3c8] sm:$0xff]
    %v1838 = vld [vmem:[#allocation34 + $0x3d0] sm:$0xff]
    %v1839 = vld [vmem:[#allocation34 + $0x3d8] sm:$0xff]
    %v1840 = vld [vmem:[#allocation34 + $0x3e0] sm:$0xff]
    %v1841 = vld [vmem:[#allocation34 + $0x3e8] sm:$0xff]
    %v1842 = vld [vmem:[#allocation34 + $0x3f0] sm:$0xff]
    %v1843 = vld [vmem:[#allocation34 + $0x3f8] sm:$0xff]
    %v1844 = vld [vmem:[#allocation34 + $0x400] sm:$0xff]
    %v1845 = vld [vmem:[#allocation34 + $0x408] sm:$0xff]
    %v1846 = vld [vmem:[#allocation34 + $0x410] sm:$0xff]
    %v1847 = vld [vmem:[#allocation34 + $0x418] sm:$0xff]
    %v1848 = vld [vmem:[#allocation34 + $0x420] sm:$0xff]
    %v1849 = vld [vmem:[#allocation34 + $0x428] sm:$0xff]
    %v1850 = vld [vmem:[#allocation34 + $0x430] sm:$0xff]
    %v1851 = vld [vmem:[#allocation34 + $0x438] sm:$0xff]
    %v1852 = vld [vmem:[#allocation34 + $0x440] sm:$0xff]
    %v1853 = vld [vmem:[#allocation34 + $0x448] sm:$0xff]
    %v1854 = vld [vmem:[#allocation34 + $0x450] sm:$0xff]
    %v1855 = vld [vmem:[#allocation34 + $0x458] sm:$0xff]
    %v1856 = vld [vmem:[#allocation34 + $0x460] sm:$0xff]
    %v1857 = vld [vmem:[#allocation34 + $0x468] sm:$0xff]
    %v1858 = vld [vmem:[#allocation34 + $0x470] sm:$0xff]
    %v1859 = vld [vmem:[#allocation34 + $0x478] sm:$0xff]
    %v1860 = vld [vmem:[#allocation34 + $0x480] sm:$0xff]
    %v1861 = vld [vmem:[#allocation34 + $0x488] sm:$0xff]
    %v1862 = vld [vmem:[#allocation34 + $0x490] sm:$0xff]
    %v1863 = vld [vmem:[#allocation34 + $0x498] sm:$0xff]
    %v1864 = vld [vmem:[#allocation34 + $0x4a0] sm:$0xff]
    %v1865 = vld [vmem:[#allocation34 + $0x4a8] sm:$0xff]
    %v1866 = vld [vmem:[#allocation34 + $0x4b0] sm:$0xff]
    %v1867 = vld [vmem:[#allocation34 + $0x4b8] sm:$0xff]
    %v1868 = vld [vmem:[#allocation34 + $0x4c0] sm:$0xff]
    %v1869 = vld [vmem:[#allocation34 + $0x4c8] sm:$0xff]
    %v1870 = vld [vmem:[#allocation34 + $0x4d0] sm:$0xff]
    %v1871 = vld [vmem:[#allocation34 + $0x4d8] sm:$0xff]
    %v1872 = vld [vmem:[#allocation34 + $0x4e0] sm:$0xff]
    %v1873 = vld [vmem:[#allocation34 + $0x4e8] sm:$0xff]
    %v1874 = vld [vmem:[#allocation34 + $0x4f0] sm:$0xff]
    %v1875 = vld [vmem:[#allocation34 + $0x4f8] sm:$0xff]
    %v1876 = vld [vmem:[#allocation34 + $0x500] sm:$0xff]
    %v1877 = vld [vmem:[#allocation34 + $0x508] sm:$0xff]
    %v1878 = vld [vmem:[#allocation34 + $0x510] sm:$0xff]
    %v1879 = vld [vmem:[#allocation34 + $0x518] sm:$0xff]
    %v1880 = vld [vmem:[#allocation34 + $0x520] sm:$0xff]
    %v1881 = vld [vmem:[#allocation34 + $0x528] sm:$0xff]
    %v1882 = vld [vmem:[#allocation34 + $0x530] sm:$0xff]
    %v1883 = vld [vmem:[#allocation34 + $0x538] sm:$0xff]
    %v1884 = vld [vmem:[#allocation34 + $0x540] sm:$0xff]
    %v1885 = vld [vmem:[#allocation34 + $0x548] sm:$0xff]
    %v1886 = vld [vmem:[#allocation34 + $0x550] sm:$0xff]
    %v1887 = vld [vmem:[#allocation34 + $0x558] sm:$0xff]
    %v1888 = vld [vmem:[#allocation34 + $0x560] sm:$0xff]
    %v1889 = vld [vmem:[#allocation34 + $0x568] sm:$0xff]
    %v1890 = vld [vmem:[#allocation34 + $0x570] sm:$0xff]
    %v1891 = vld [vmem:[#allocation34 + $0x578] sm:$0xff]
    %v1892 = vld [vmem:[#allocation34 + $0x580] sm:$0xff]
    %v1893 = vld [vmem:[#allocation34 + $0x588] sm:$0xff]
    %v1894 = vld [vmem:[#allocation34 + $0x590] sm:$0xff]
    %v1895 = vld [vmem:[#allocation34 + $0x598] sm:$0xff]
    %v1896 = vld [vmem:[#allocation34 + $0x5a0] sm:$0xff]
    %v1897 = vld [vmem:[#allocation34 + $0x5a8] sm:$0xff]
    %v1898 = vld [vmem:[#allocation34 + $0x5b0] sm:$0xff]
    %v1899 = vld [vmem:[#allocation34 + $0x5b8] sm:$0xff]
    %v1900 = vld [vmem:[#allocation34 + $0x5c0] sm:$0xff]
    %v1901 = vld [vmem:[#allocation34 + $0x5c8] sm:$0xff]
    %v1902 = vld [vmem:[#allocation34 + $0x5d0] sm:$0xff]
    %v1903 = vld [vmem:[#allocation34 + $0x5d8] sm:$0xff]
    %v1904 = vld [vmem:[#allocation34 + $0x5e0] sm:$0xff]
    %v1905 = vld [vmem:[#allocation34 + $0x5e8] sm:$0xff]
    %v1906 = vld [vmem:[#allocation34 + $0x5f0] sm:$0xff]
    %v1907 = vld [vmem:[#allocation34 + $0x5f8] sm:$0xff]
    %v1908 = vld [vmem:[#allocation34 + $0x600] sm:$0xff]
    %v1909 = vld [vmem:[#allocation34 + $0x608] sm:$0xff]
    %v1910 = vld [vmem:[#allocation34 + $0x610] sm:$0xff]
    %v1911 = vld [vmem:[#allocation34 + $0x618] sm:$0xff]
    %v1912 = vld [vmem:[#allocation34 + $0x620] sm:$0xff]
    %v1913 = vld [vmem:[#allocation34 + $0x628] sm:$0xff]
    %v1914 = vld [vmem:[#allocation34 + $0x630] sm:$0xff]
    %v1915 = vld [vmem:[#allocation34 + $0x638] sm:$0xff]
    %v1916 = vld [vmem:[#allocation34 + $0x640] sm:$0xff]
    %v1917 = vld [vmem:[#allocation34 + $0x648] sm:$0xff]
    %v1918 = vld [vmem:[#allocation34 + $0x650] sm:$0xff]
    %v1919 = vld [vmem:[#allocation34 + $0x658] sm:$0xff]
    %v1920 = vld [vmem:[#allocation34 + $0x660] sm:$0xff]
    %v1921 = vld [vmem:[#allocation34 + $0x668] sm:$0xff]
    %v1922 = vld [vmem:[#allocation34 + $0x670] sm:$0xff]
    %v1923 = vld [vmem:[#allocation34 + $0x678] sm:$0xff]
    %v1924 = vld [vmem:[#allocation34 + $0x680] sm:$0xff]
    %v1925 = vld [vmem:[#allocation34 + $0x688] sm:$0xff]
    %v1926 = vld [vmem:[#allocation34 + $0x690] sm:$0xff]
    %v1927 = vld [vmem:[#allocation34 + $0x698] sm:$0xff]
    %v1928 = vld [vmem:[#allocation34 + $0x6a0] sm:$0xff]
    %v1929 = vld [vmem:[#allocation34 + $0x6a8] sm:$0xff]
    %v1930 = vld [vmem:[#allocation34 + $0x6b0] sm:$0xff]
    %v1931 = vld [vmem:[#allocation34 + $0x6b8] sm:$0xff]
    %v1932 = vld [vmem:[#allocation34 + $0x6c0] sm:$0xff]
    %v1933 = vld [vmem:[#allocation34 + $0x6c8] sm:$0xff]
    %v1934 = vld [vmem:[#allocation34 + $0x6d0] sm:$0xff]
    %v1935 = vld [vmem:[#allocation34 + $0x6d8] sm:$0xff]
    %v1936 = vld [vmem:[#allocation34 + $0x6e0] sm:$0xff]
    %v1937 = vld [vmem:[#allocation34 + $0x6e8] sm:$0xff]
    %v1938 = vld [vmem:[#allocation34 + $0x6f0] sm:$0xff]
    %v1939 = vld [vmem:[#allocation34 + $0x6f8] sm:$0xff]
    %v1940 = vld [vmem:[#allocation34 + $0x700] sm:$0xff]
    %v1941 = vld [vmem:[#allocation34 + $0x708] sm:$0xff]
    %v1942 = vld [vmem:[#allocation34 + $0x710] sm:$0xff]
    %v1943 = vld [vmem:[#allocation34 + $0x718] sm:$0xff]
    %v1944 = vld [vmem:[#allocation34 + $0x720] sm:$0xff]
    %v1945 = vld [vmem:[#allocation34 + $0x728] sm:$0xff]
    %v1946 = vld [vmem:[#allocation34 + $0x730] sm:$0xff]
    %v1947 = vld [vmem:[#allocation34 + $0x738] sm:$0xff]
    %v1948 = vld [vmem:[#allocation34 + $0x740] sm:$0xff]
    %v1949 = vld [vmem:[#allocation34 + $0x748] sm:$0xff]
    %v1950 = vld [vmem:[#allocation34 + $0x750] sm:$0xff]
    %v1951 = vld [vmem:[#allocation34 + $0x758] sm:$0xff]
    %v1952 = vld [vmem:[#allocation34 + $0x760] sm:$0xff]
    %v1953 = vld [vmem:[#allocation34 + $0x768] sm:$0xff]
    %v1954 = vld [vmem:[#allocation34 + $0x770] sm:$0xff]
    %v1955 = vld [vmem:[#allocation34 + $0x778] sm:$0xff]
    %v1956 = vld [vmem:[#allocation34 + $0x780] sm:$0xff]
    %v1957 = vld [vmem:[#allocation34 + $0x788] sm:$0xff]
    %v1958 = vld [vmem:[#allocation34 + $0x790] sm:$0xff]
    %v1959 = vld [vmem:[#allocation34 + $0x798] sm:$0xff]
    %v1960 = vld [vmem:[#allocation34 + $0x7a0] sm:$0xff]
    %v1961 = vld [vmem:[#allocation34 + $0x7a8] sm:$0xff]
    %v1962 = vld [vmem:[#allocation34 + $0x7b0] sm:$0xff]
    %v1963 = vld [vmem:[#allocation34 + $0x7b8] sm:$0xff]
    %v1964 = vld [vmem:[#allocation34 + $0x7c0] sm:$0xff]
    %v1965 = vld [vmem:[#allocation34 + $0x7c8] sm:$0xff]
    %v1966 = vld [vmem:[#allocation34 + $0x7d0] sm:$0xff]
    %v1967 = vld [vmem:[#allocation34 + $0x7d8] sm:$0xff]
    %v1968 = vld [vmem:[#allocation34 + $0x7e0] sm:$0xff]
    %v1969 = vld [vmem:[#allocation34 + $0x7e8] sm:$0xff]
    %v1970 = vld [vmem:[#allocation34 + $0x7f0] sm:$0xff]
    %v1971 = vld [vmem:[#allocation34 + $0x7f8] sm:$0xff]
    %v1972 = vld [vmem:[#allocation34 + $0x800] sm:$0xff]
    %v1973 = vld [vmem:[#allocation34 + $0x808] sm:$0xff]
    %v1974 = vld [vmem:[#allocation34 + $0x810] sm:$0xff]
    %v1975 = vld [vmem:[#allocation34 + $0x818] sm:$0xff]
    %v1976 = vld [vmem:[#allocation34 + $0x820] sm:$0xff]
    %v1977 = vld [vmem:[#allocation34 + $0x828] sm:$0xff]
    %v1978 = vld [vmem:[#allocation34 + $0x830] sm:$0xff]
    %v1979 = vld [vmem:[#allocation34 + $0x838] sm:$0xff]
    %v1980 = vld [vmem:[#allocation34 + $0x840] sm:$0xff]
    %v1981 = vld [vmem:[#allocation34 + $0x848] sm:$0xff]
    %v1982 = vld [vmem:[#allocation34 + $0x850] sm:$0xff]
    %v1983 = vld [vmem:[#allocation34 + $0x858] sm:$0xff]
    %v1984 = vld [vmem:[#allocation34 + $0x860] sm:$0xff]
    %v1985 = vld [vmem:[#allocation34 + $0x868] sm:$0xff]
    %v1986 = vld [vmem:[#allocation34 + $0x870] sm:$0xff]
    %v1987 = vld [vmem:[#allocation34 + $0x878] sm:$0xff]
    %v1988 = vld [vmem:[#allocation34 + $0x880] sm:$0xff]
    %v1989 = vld [vmem:[#allocation34 + $0x888] sm:$0xff]
    %v1990 = vld [vmem:[#allocation34 + $0x890] sm:$0xff]
    %v1991 = vld [vmem:[#allocation34 + $0x898] sm:$0xff]
    %v1992 = vld [vmem:[#allocation34 + $0x8a0] sm:$0xff]
    %v1993 = vld [vmem:[#allocation34 + $0x8a8] sm:$0xff]
    %v1994 = vld [vmem:[#allocation34 + $0x8b0] sm:$0xff]
    %v1995 = vld [vmem:[#allocation34 + $0x8b8] sm:$0xff]
    %v1996 = vld [vmem:[#allocation34 + $0x8c0] sm:$0xff]
    %v1997 = vld [vmem:[#allocation34 + $0x8c8] sm:$0xff]
    %v1998 = vld [vmem:[#allocation34 + $0x8d0] sm:$0xff]
    %v1999 = vld [vmem:[#allocation34 + $0x8d8] sm:$0xff]
    %v2000 = vld [vmem:[#allocation34 + $0x8e0] sm:$0xff]
    %v2001 = vld [vmem:[#allocation34 + $0x8e8] sm:$0xff]
    %v2002 = vld [vmem:[#allocation34 + $0x8f0] sm:$0xff]
    %v2003 = vld [vmem:[#allocation34 + $0x8f8] sm:$0xff]
    %v2004 = vld [vmem:[#allocation34 + $0x900] sm:$0xff]
    %v2005 = vld [vmem:[#allocation34 + $0x908] sm:$0xff]
    %v2006 = vld [vmem:[#allocation34 + $0x910] sm:$0xff]
    %v2007 = vld [vmem:[#allocation34 + $0x918] sm:$0xff]
    %v2008 = vld [vmem:[#allocation34 + $0x920] sm:$0xff]
    %v2009 = vld [vmem:[#allocation34 + $0x928] sm:$0xff]
    %v2010 = vld [vmem:[#allocation34 + $0x930] sm:$0xff]
    %v2011 = vld [vmem:[#allocation34 + $0x938] sm:$0xff]
    %v2012 = vld [vmem:[#allocation34 + $0x940] sm:$0xff]
    %v2013 = vld [vmem:[#allocation34 + $0x948] sm:$0xff]
    %v2014 = vld [vmem:[#allocation34 + $0x950] sm:$0xff]
    %v2015 = vld [vmem:[#allocation34 + $0x958] sm:$0xff]
    %v2016 = vld [vmem:[#allocation34 + $0x960] sm:$0xff]
    %v2017 = vld [vmem:[#allocation34 + $0x968] sm:$0xff]
    %v2018 = vld [vmem:[#allocation34 + $0x970] sm:$0xff]
    %v2019 = vld [vmem:[#allocation34 + $0x978] sm:$0xff]
    %v2020 = vld [vmem:[#allocation34 + $0x980] sm:$0xff]
    %v2021 = vld [vmem:[#allocation34 + $0x988] sm:$0xff]
    %v2022 = vld [vmem:[#allocation34 + $0x990] sm:$0xff]
    %v2023 = vld [vmem:[#allocation34 + $0x998] sm:$0xff]
    %v2024 = vld [vmem:[#allocation34 + $0x9a0] sm:$0xff]
    %v2025 = vld [vmem:[#allocation34 + $0x9a8] sm:$0xff]
    %v2026 = vld [vmem:[#allocation34 + $0x9b0] sm:$0xff]
    %v2027 = vld [vmem:[#allocation34 + $0x9b8] sm:$0xff]
    %v2028 = vld [vmem:[#allocation34 + $0x9c0] sm:$0xff]
    %v2029 = vld [vmem:[#allocation34 + $0x9c8] sm:$0xff]
    %v2030 = vld [vmem:[#allocation34 + $0x9d0] sm:$0xff]
    %v2031 = vld [vmem:[#allocation34 + $0x9d8] sm:$0xff]
    %v2032 = vld [vmem:[#allocation34 + $0x9e0] sm:$0xff]
    %v2033 = vld [vmem:[#allocation34 + $0x9e8] sm:$0xff]
    %v2034 = vld [vmem:[#allocation34 + $0x9f0] sm:$0xff]
    %v2035 = vld [vmem:[#allocation34 + $0x9f8] sm:$0xff]
    %v2036 = vld [vmem:[#allocation34 + $0xa00] sm:$0xff]
    %v2037 = vld [vmem:[#allocation34 + $0xa08] sm:$0xff]
    %v2038 = vld [vmem:[#allocation34 + $0xa10] sm:$0xff]
    %v2039 = vld [vmem:[#allocation34 + $0xa18] sm:$0xff]
    %v2040 = vld [vmem:[#allocation34 + $0xa20] sm:$0xff]
    %v2041 = vld [vmem:[#allocation34 + $0xa28] sm:$0xff]
    %v2042 = vld [vmem:[#allocation34 + $0xa30] sm:$0xff]
    %v2043 = vld [vmem:[#allocation34 + $0xa38] sm:$0xff]
    %v2044 = vld [vmem:[#allocation34 + $0xa40] sm:$0xff]
    %v2045 = vld [vmem:[#allocation34 + $0xa48] sm:$0xff]
    %v2046 = vld [vmem:[#allocation34 + $0xa50] sm:$0xff]
    %v2047 = vld [vmem:[#allocation34 + $0xa58] sm:$0xff]
    %v2048 = vld [vmem:[#allocation34 + $0xa60] sm:$0xff]
    %v2049 = vld [vmem:[#allocation34 + $0xa68] sm:$0xff]
    %v2050 = vld [vmem:[#allocation34 + $0xa70] sm:$0xff]
    %v2051 = vld [vmem:[#allocation34 + $0xa78] sm:$0xff]
    %v2052 = vld [vmem:[#allocation34 + $0xa80] sm:$0xff]
    %v2053 = vld [vmem:[#allocation34 + $0xa88] sm:$0xff]
    %v2054 = vld [vmem:[#allocation34 + $0xa90] sm:$0xff]
    %v2055 = vld [vmem:[#allocation34 + $0xa98] sm:$0xff]
    %v2056 = vld [vmem:[#allocation34 + $0xaa0] sm:$0xff]
    %v2057 = vld [vmem:[#allocation34 + $0xaa8] sm:$0xff]
    %v2058 = vld [vmem:[#allocation34 + $0xab0] sm:$0xff]
    %v2059 = vld [vmem:[#allocation34 + $0xab8] sm:$0xff]
    %v2060 = vld [vmem:[#allocation34 + $0xac0] sm:$0xff]
    %v2061 = vld [vmem:[#allocation34 + $0xac8] sm:$0xff]
    %v2062 = vld [vmem:[#allocation34 + $0xad0] sm:$0xff]
    %v2063 = vld [vmem:[#allocation34 + $0xad8] sm:$0xff]
    %v2064 = vld [vmem:[#allocation34 + $0xae0] sm:$0xff]
    %v2065 = vld [vmem:[#allocation34 + $0xae8] sm:$0xff]
    %v2066 = vld [vmem:[#allocation34 + $0xaf0] sm:$0xff]
    %v2067 = vld [vmem:[#allocation34 + $0xaf8] sm:$0xff]
    %v2068 = vld [vmem:[#allocation34 + $0xb00] sm:$0xff]
    %v2069 = vld [vmem:[#allocation34 + $0xb08] sm:$0xff]
    %v2070 = vld [vmem:[#allocation34 + $0xb10] sm:$0xff]
    %v2071 = vld [vmem:[#allocation34 + $0xb18] sm:$0xff]
    %v2072 = vld [vmem:[#allocation34 + $0xb20] sm:$0xff]
    %v2073 = vld [vmem:[#allocation34 + $0xb28] sm:$0xff]
    %v2074 = vld [vmem:[#allocation34 + $0xb30] sm:$0xff]
    %v2075 = vld [vmem:[#allocation34 + $0xb38] sm:$0xff]
    %v2076 = vld [vmem:[#allocation34 + $0xb40] sm:$0xff]
    %v2077 = vld [vmem:[#allocation34 + $0xb48] sm:$0xff]
    %v2078 = vld [vmem:[#allocation34 + $0xb50] sm:$0xff]
    %v2079 = vld [vmem:[#allocation34 + $0xb58] sm:$0xff]
    %v2080 = vld [vmem:[#allocation34 + $0xb60] sm:$0xff]
    %v2081 = vld [vmem:[#allocation34 + $0xb68] sm:$0xff]
    %v2082 = vld [vmem:[#allocation34 + $0xb70] sm:$0xff]
    %v2083 = vld [vmem:[#allocation34 + $0xb78] sm:$0xff]
    %v2084 = vld [vmem:[#allocation34 + $0xb80] sm:$0xff]
    %v2085 = vld [vmem:[#allocation34 + $0xb88] sm:$0xff]
    %v2086 = vld [vmem:[#allocation34 + $0xb90] sm:$0xff]
    %v2087 = vld [vmem:[#allocation34 + $0xb98] sm:$0xff]
    %v2088 = vld [vmem:[#allocation34 + $0xba0] sm:$0xff]
    %v2089 = vld [vmem:[#allocation34 + $0xba8] sm:$0xff]
    %v2090 = vld [vmem:[#allocation34 + $0xbb0] sm:$0xff]
    %v2091 = vld [vmem:[#allocation34 + $0xbb8] sm:$0xff]
    %v2092 = vld [vmem:[#allocation34 + $0xbc0] sm:$0xff]
    %v2093 = vld [vmem:[#allocation34 + $0xbc8] sm:$0xff]
    %v2094 = vld [vmem:[#allocation34 + $0xbd0] sm:$0xff]
    %v2095 = vld [vmem:[#allocation34 + $0xbd8] sm:$0xff]
    %v2096 = vld [vmem:[#allocation34 + $0xbe0] sm:$0xff]
    %v2097 = vld [vmem:[#allocation34 + $0xbe8] sm:$0xff]
    %v2098 = vld [vmem:[#allocation34 + $0xbf0] sm:$0xff]
    %v2099 = vld [vmem:[#allocation34 + $0xbf8] sm:$0xff]
    %v2100 = vld [vmem:[#allocation34 + $0xc00] sm:$0xff]
    %v2101 = vld [vmem:[#allocation34 + $0xc08] sm:$0xff]
    %v2102 = vld [vmem:[#allocation34 + $0xc10] sm:$0xff]
    %v2103 = vld [vmem:[#allocation34 + $0xc18] sm:$0xff]
    %v2104 = vld [vmem:[#allocation34 + $0xc20] sm:$0xff]
    %v2105 = vld [vmem:[#allocation34 + $0xc28] sm:$0xff]
    %v2106 = vld [vmem:[#allocation34 + $0xc30] sm:$0xff]
    %v2107 = vld [vmem:[#allocation34 + $0xc38] sm:$0xff]
    %v2108 = vld [vmem:[#allocation34 + $0xc40] sm:$0xff]
    %v2109 = vld [vmem:[#allocation34 + $0xc48] sm:$0xff]
    %v2110 = vld [vmem:[#allocation34 + $0xc50] sm:$0xff]
    %v2111 = vld [vmem:[#allocation34 + $0xc58] sm:$0xff]
    %v2112 = vld [vmem:[#allocation34 + $0xc60] sm:$0xff]
    %v2113 = vld [vmem:[#allocation34 + $0xc68] sm:$0xff]
    %v2114 = vld [vmem:[#allocation34 + $0xc70] sm:$0xff]
    %v2115 = vld [vmem:[#allocation34 + $0xc78] sm:$0xff]
    %v2116 = vld [vmem:[#allocation34 + $0xc80] sm:$0xff]
    %v2117 = vld [vmem:[#allocation34 + $0xc88] sm:$0xff]
    %v2118 = vld [vmem:[#allocation34 + $0xc90] sm:$0xff]
    %v2119 = vld [vmem:[#allocation34 + $0xc98] sm:$0xff]
    %v2120 = vld [vmem:[#allocation34 + $0xca0] sm:$0xff]
    %v2121 = vld [vmem:[#allocation34 + $0xca8] sm:$0xff]
    %v2122 = vld [vmem:[#allocation34 + $0xcb0] sm:$0xff]
    %v2123 = vld [vmem:[#allocation34 + $0xcb8] sm:$0xff]
    %v2124 = vld [vmem:[#allocation34 + $0xcc0] sm:$0xff]
    %v2125 = vld [vmem:[#allocation34 + $0xcc8] sm:$0xff]
    %v2126 = vld [vmem:[#allocation34 + $0xcd0] sm:$0xff]
    %v2127 = vld [vmem:[#allocation34 + $0xcd8] sm:$0xff]
    %v2128 = vld [vmem:[#allocation34 + $0xce0] sm:$0xff]
    %v2129 = vld [vmem:[#allocation34 + $0xce8] sm:$0xff]
    %v2130 = vld [vmem:[#allocation34 + $0xcf0] sm:$0xff]
    %v2131 = vld [vmem:[#allocation34 + $0xcf8] sm:$0xff]
    %v2132 = vld [vmem:[#allocation34 + $0xd00] sm:$0xff]
    %v2133 = vld [vmem:[#allocation34 + $0xd08] sm:$0xff]
    %v2134 = vld [vmem:[#allocation34 + $0xd10] sm:$0xff]
    %v2135 = vld [vmem:[#allocation34 + $0xd18] sm:$0xff]
    %v2136 = vld [vmem:[#allocation34 + $0xd20] sm:$0xff]
    %v2137 = vld [vmem:[#allocation34 + $0xd28] sm:$0xff]
    %v2138 = vld [vmem:[#allocation34 + $0xd30] sm:$0xff]
    %v2139 = vld [vmem:[#allocation34 + $0xd38] sm:$0xff]
    %v2140 = vld [vmem:[#allocation34 + $0xd40] sm:$0xff]
    %v2141 = vld [vmem:[#allocation34 + $0xd48] sm:$0xff]
    %v2142 = vld [vmem:[#allocation34 + $0xd50] sm:$0xff]
    %v2143 = vld [vmem:[#allocation34 + $0xd58] sm:$0xff]
    %v2144 = vld [vmem:[#allocation34 + $0xd60] sm:$0xff]
    %v2145 = vld [vmem:[#allocation34 + $0xd68] sm:$0xff]
    %v2146 = vld [vmem:[#allocation34 + $0xd70] sm:$0xff]
    %v2147 = vld [vmem:[#allocation34 + $0xd78] sm:$0xff]
    %v2148 = vld [vmem:[#allocation34 + $0xd80] sm:$0xff]
    %v2149 = vld [vmem:[#allocation34 + $0xd88] sm:$0xff]
    %v2150 = vld [vmem:[#allocation34 + $0xd90] sm:$0xff]
    %v2151 = vld [vmem:[#allocation34 + $0xd98] sm:$0xff]
    %v2152 = vld [vmem:[#allocation34 + $0xda0] sm:$0xff]
    %v2153 = vld [vmem:[#allocation34 + $0xda8] sm:$0xff]
    %v2154 = vld [vmem:[#allocation34 + $0xdb0] sm:$0xff]
    %v2155 = vld [vmem:[#allocation34 + $0xdb8] sm:$0xff]
    %v2156 = vld [vmem:[#allocation34 + $0xdc0] sm:$0xff]
    %v2157 = vld [vmem:[#allocation34 + $0xdc8] sm:$0xff]
    %v2158 = vld [vmem:[#allocation34 + $0xdd0] sm:$0xff]
    %v2159 = vld [vmem:[#allocation34 + $0xdd8] sm:$0xff]
    %v2160 = vld [vmem:[#allocation34 + $0xde0] sm:$0xff]
    %v2161 = vld [vmem:[#allocation34 + $0xde8] sm:$0xff]
    %v2162 = vld [vmem:[#allocation34 + $0xdf0] sm:$0xff]
    %v2163 = vld [vmem:[#allocation34 + $0xdf8] sm:$0xff]
    %v2164 = vld [vmem:[#allocation34 + $0xe00] sm:$0xff]
    %v2165 = vld [vmem:[#allocation34 + $0xe08] sm:$0xff]
    %v2166 = vld [vmem:[#allocation34 + $0xe10] sm:$0xff]
    %v2167 = vld [vmem:[#allocation34 + $0xe18] sm:$0xff]
    %v2168 = vld [vmem:[#allocation34 + $0xe20] sm:$0xff]
    %v2169 = vld [vmem:[#allocation34 + $0xe28] sm:$0xff]
    %v2170 = vld [vmem:[#allocation34 + $0xe30] sm:$0xff]
    %v2171 = vld [vmem:[#allocation34 + $0xe38] sm:$0xff]
    %v2172 = vld [vmem:[#allocation34 + $0xe40] sm:$0xff]
    %v2173 = vld [vmem:[#allocation34 + $0xe48] sm:$0xff]
    %v2174 = vld [vmem:[#allocation34 + $0xe50] sm:$0xff]
    %v2175 = vld [vmem:[#allocation34 + $0xe58] sm:$0xff]
    %v2176 = vld [vmem:[#allocation34 + $0xe60] sm:$0xff]
    %v2177 = vld [vmem:[#allocation34 + $0xe68] sm:$0xff]
    %v2178 = vld [vmem:[#allocation34 + $0xe70] sm:$0xff]
    %v2179 = vld [vmem:[#allocation34 + $0xe78] sm:$0xff]
    %v2180 = vld [vmem:[#allocation34 + $0xe80] sm:$0xff]
    %v2181 = vld [vmem:[#allocation34 + $0xe88] sm:$0xff]
    %v2182 = vld [vmem:[#allocation34 + $0xe90] sm:$0xff]
    %v2183 = vld [vmem:[#allocation34 + $0xe98] sm:$0xff]
    %v2184 = vld [vmem:[#allocation34 + $0xea0] sm:$0xff]
    %v2185 = vld [vmem:[#allocation34 + $0xea8] sm:$0xff]
    %v2186 = vld [vmem:[#allocation34 + $0xeb0] sm:$0xff]
    %v2187 = vld [vmem:[#allocation34 + $0xeb8] sm:$0xff]
    %v2188 = vld [vmem:[#allocation34 + $0xec0] sm:$0xff]
    %v2189 = vld [vmem:[#allocation34 + $0xec8] sm:$0xff]
    %v2190 = vld [vmem:[#allocation34 + $0xed0] sm:$0xff]
    %v2191 = vld [vmem:[#allocation34 + $0xed8] sm:$0xff]
    %v2192 = vld [vmem:[#allocation34 + $0xee0] sm:$0xff]
    %v2193 = vld [vmem:[#allocation34 + $0xee8] sm:$0xff]
    %v2194 = vld [vmem:[#allocation34 + $0xef0] sm:$0xff]
    %v2195 = vld [vmem:[#allocation34 + $0xef8] sm:$0xff]
    %v2196 = vld [vmem:[#allocation34 + $0xf00] sm:$0xff]
    %v2197 = vld [vmem:[#allocation34 + $0xf08] sm:$0xff]
    %v2198 = vld [vmem:[#allocation34 + $0xf10] sm:$0xff]
    %v2199 = vld [vmem:[#allocation34 + $0xf18] sm:$0xff]
    %v2200 = vld [vmem:[#allocation34 + $0xf20] sm:$0xff]
    %v2201 = vld [vmem:[#allocation34 + $0xf28] sm:$0xff]
    %v2202 = vld [vmem:[#allocation34 + $0xf30] sm:$0xff]
    %v2203 = vld [vmem:[#allocation34 + $0xf38] sm:$0xff]
    %v2204 = vld [vmem:[#allocation34 + $0xf40] sm:$0xff]
    %v2205 = vld [vmem:[#allocation34 + $0xf48] sm:$0xff]
    %v2206 = vld [vmem:[#allocation34 + $0xf50] sm:$0xff]
    %v2207 = vld [vmem:[#allocation34 + $0xf58] sm:$0xff]
    %v2208 = vld [vmem:[#allocation34 + $0xf60] sm:$0xff]
    %v2209 = vld [vmem:[#allocation34 + $0xf68] sm:$0xff]
    %v2210 = vld [vmem:[#allocation34 + $0xf70] sm:$0xff]
    %v2211 = vld [vmem:[#allocation34 + $0xf78] sm:$0xff]
    %v2212 = vld [vmem:[#allocation34 + $0xf80] sm:$0xff]
    %v2213 = vld [vmem:[#allocation34 + $0xf88] sm:$0xff]
    %v2214 = vld [vmem:[#allocation34 + $0xf90] sm:$0xff]
    %v2215 = vld [vmem:[#allocation34 + $0xf98] sm:$0xff]
    %v2216 = vld [vmem:[#allocation34 + $0xfa0] sm:$0xff]
    %v2217 = vld [vmem:[#allocation34 + $0xfa8] sm:$0xff]
    %v2218 = vld [vmem:[#allocation34 + $0xfb0] sm:$0xff]
    %v2219 = vld [vmem:[#allocation34 + $0xfb8] sm:$0xff]
    %v2220 = vld [vmem:[#allocation34 + $0xfc0] sm:$0xff]
    %v2221 = vld [vmem:[#allocation34 + $0xfc8] sm:$0xff]
    %v2222 = vld [vmem:[#allocation34 + $0xfd0] sm:$0xff]
    %v2223 = vld [vmem:[#allocation34 + $0xfd8] sm:$0xff]
    %v2224 = vld [vmem:[#allocation34 + $0xfe0] sm:$0xff]
    %v2225 = vld [vmem:[#allocation34 + $0xfe8] sm:$0xff]
    %v2226 = vld [vmem:[#allocation34 + $0xff0] sm:$0xff]
    %v2227 = vld [vmem:[#allocation34 + $0xff8] sm:$0xff]
    %v2228 = vld [vmem:[#allocation35] sm:$0xff]
    %v2229 = vld [vmem:[#allocation37] sm:$0xf]
    %v2230 = vld [vmem:[#allocation37 + $0x4] sm:$0xf]
    %v2231 = vld [vmem:[#allocation37 + $0x8] sm:$0xf]
    %v2232 = vld [vmem:[#allocation37 + $0xc] sm:$0xf]
    %v2233 = vld [vmem:[#allocation37 + $0x10] sm:$0xf]
    %v2234 = vld [vmem:[#allocation37 + $0x14] sm:$0xf]
    %v2235 = vld [vmem:[#allocation37 + $0x18] sm:$0xf]
    %v2236 = vld [vmem:[#allocation37 + $0x1c] sm:$0xf]
    %v2237 = vld [vmem:[#allocation37 + $0x20] sm:$0xf]
    %v2238 = vld [vmem:[#allocation37 + $0x24] sm:$0xf]
    %v2239 = vld [vmem:[#allocation37 + $0x28] sm:$0xf]
    %v2240 = vld [vmem:[#allocation37 + $0x2c] sm:$0xf]
    %v2241 = vld [vmem:[#allocation37 + $0x30] sm:$0xf]
    %v2242 = vld [vmem:[#allocation37 + $0x34] sm:$0xf]
    %v2243 = vld [vmem:[#allocation37 + $0x38] sm:$0xf]
    %v2244 = vld [vmem:[#allocation37 + $0x3c] sm:$0xf]
    %v2245 = vld [vmem:[#allocation37 + $0x40] sm:$0xf]
    %v2246 = vld [vmem:[#allocation37 + $0x44] sm:$0xf]
    %v2247 = vld [vmem:[#allocation37 + $0x48] sm:$0xf]
    %v2248 = vld [vmem:[#allocation37 + $0x4c] sm:$0xf]
    %v2249 = vld [vmem:[#allocation37 + $0x50] sm:$0xf]
    %v2250 = vld [vmem:[#allocation37 + $0x54] sm:$0xf]
    %v2251 = vld [vmem:[#allocation37 + $0x58] sm:$0xf]
    %v2252 = vld [vmem:[#allocation37 + $0x5c] sm:$0xf]
    %v2253 = vld [vmem:[#allocation37 + $0x60] sm:$0xf]
    %v2254 = vld [vmem:[#allocation37 + $0x64] sm:$0xf]
    %v2255 = vld [vmem:[#allocation37 + $0x68] sm:$0xf]
    %v2256 = vld [vmem:[#allocation37 + $0x6c] sm:$0xf]
    %v2257 = vld [vmem:[#allocation37 + $0x70] sm:$0xf]
    %v2258 = vld [vmem:[#allocation37 + $0x74] sm:$0xf]
    %v2259 = vld [vmem:[#allocation37 + $0x78] sm:$0xf]
    %v2260 = vld [vmem:[#allocation37 + $0x7c] sm:$0xf]
    %v2261 = vld [vmem:[#allocation37 + $0x80] sm:$0xf]
    %v2262 = vld [vmem:[#allocation37 + $0x84] sm:$0xf]
    %v2263 = vld [vmem:[#allocation37 + $0x88] sm:$0xf]
    %v2264 = vld [vmem:[#allocation37 + $0x8c] sm:$0xf]
    %v2265 = vld [vmem:[#allocation37 + $0x90] sm:$0xf]
    %v2266 = vld [vmem:[#allocation37 + $0x94] sm:$0xf]
    %v2267 = vld [vmem:[#allocation37 + $0x98] sm:$0xf]
    %v2268 = vld [vmem:[#allocation37 + $0x9c] sm:$0xf]
    %v2269 = vld [vmem:[#allocation37 + $0xa0] sm:$0xf]
    %v2270 = vld [vmem:[#allocation37 + $0xa4] sm:$0xf]
    %v2271 = vld [vmem:[#allocation37 + $0xa8] sm:$0xf]
    %v2272 = vld [vmem:[#allocation37 + $0xac] sm:$0xf]
    %v2273 = vld [vmem:[#allocation37 + $0xb0] sm:$0xf]
    %v2274 = vld [vmem:[#allocation37 + $0xb4] sm:$0xf]
    %v2275 = vld [vmem:[#allocation37 + $0xb8] sm:$0xf]
    %v2276 = vld [vmem:[#allocation37 + $0xbc] sm:$0xf]
    %v2277 = vld [vmem:[#allocation37 + $0xc0] sm:$0xf]
    %v2278 = vld [vmem:[#allocation37 + $0xc4] sm:$0xf]
    %v2279 = vld [vmem:[#allocation37 + $0xc8] sm:$0xf]
    %v2280 = vld [vmem:[#allocation37 + $0xcc] sm:$0xf]
    %v2281 = vld [vmem:[#allocation37 + $0xd0] sm:$0xf]
    %v2282 = vld [vmem:[#allocation37 + $0xd4] sm:$0xf]
    %v2283 = vld [vmem:[#allocation37 + $0xd8] sm:$0xf]
    %v2284 = vld [vmem:[#allocation37 + $0xdc] sm:$0xf]
    %v2285 = vld [vmem:[#allocation37 + $0xe0] sm:$0xf]
    %v2286 = vld [vmem:[#allocation37 + $0xe4] sm:$0xf]
    %v2287 = vld [vmem:[#allocation37 + $0xe8] sm:$0xf]
    %v2288 = vld [vmem:[#allocation37 + $0xec] sm:$0xf]
    %v2289 = vld [vmem:[#allocation37 + $0xf0] sm:$0xf]
    %v2290 = vld [vmem:[#allocation37 + $0xf4] sm:$0xf]
    %v2291 = vld [vmem:[#allocation37 + $0xf8] sm:$0xf]
    %v2292 = vld [vmem:[#allocation37 + $0xfc] sm:$0xf]
    %v2293 = vld [vmem:[#allocation37 + $0x100] sm:$0xf]
    %v2294 = vld [vmem:[#allocation37 + $0x104] sm:$0xf]
    %v2295 = vld [vmem:[#allocation37 + $0x108] sm:$0xf]
    %v2296 = vld [vmem:[#allocation37 + $0x10c] sm:$0xf]
    %v2297 = vld [vmem:[#allocation37 + $0x110] sm:$0xf]
    %v2298 = vld [vmem:[#allocation37 + $0x114] sm:$0xf]
    %v2299 = vld [vmem:[#allocation37 + $0x118] sm:$0xf]
    %v2300 = vld [vmem:[#allocation37 + $0x11c] sm:$0xf]
    %v2301 = vld [vmem:[#allocation37 + $0x120] sm:$0xf]
    %v2302 = vld [vmem:[#allocation37 + $0x124] sm:$0xf]
    %v2303 = vld [vmem:[#allocation37 + $0x128] sm:$0xf]
    %v2304 = vld [vmem:[#allocation37 + $0x12c] sm:$0xf]
    %v2305 = vld [vmem:[#allocation37 + $0x130] sm:$0xf]
    %v2306 = vld [vmem:[#allocation37 + $0x134] sm:$0xf]
    %v2307 = vld [vmem:[#allocation37 + $0x138] sm:$0xf]
    %v2308 = vld [vmem:[#allocation37 + $0x13c] sm:$0xf]
    %v2309 = vld [vmem:[#allocation37 + $0x140] sm:$0xf]
    %v2310 = vld [vmem:[#allocation37 + $0x144] sm:$0xf]
    %v2311 = vld [vmem:[#allocation37 + $0x148] sm:$0xf]
    %v2312 = vld [vmem:[#allocation37 + $0x14c] sm:$0xf]
    %v2313 = vld [vmem:[#allocation37 + $0x150] sm:$0xf]
    %v2314 = vld [vmem:[#allocation37 + $0x154] sm:$0xf]
    %v2315 = vld [vmem:[#allocation37 + $0x158] sm:$0xf]
    %v2316 = vld [vmem:[#allocation37 + $0x15c] sm:$0xf]
    %v2317 = vld [vmem:[#allocation37 + $0x160] sm:$0xf]
    %v2318 = vld [vmem:[#allocation37 + $0x164] sm:$0xf]
    %v2319 = vld [vmem:[#allocation37 + $0x168] sm:$0xf]
    %v2320 = vld [vmem:[#allocation37 + $0x16c] sm:$0xf]
    %v2321 = vld [vmem:[#allocation37 + $0x170] sm:$0xf]
    %v2322 = vld [vmem:[#allocation37 + $0x174] sm:$0xf]
    %v2323 = vld [vmem:[#allocation37 + $0x178] sm:$0xf]
    %v2324 = vld [vmem:[#allocation37 + $0x17c] sm:$0xf]
    %v2325 = vld [vmem:[#allocation37 + $0x180] sm:$0xf]
    %v2326 = vld [vmem:[#allocation37 + $0x184] sm:$0xf]
    %v2327 = vld [vmem:[#allocation37 + $0x188] sm:$0xf]
    %v2328 = vld [vmem:[#allocation37 + $0x18c] sm:$0xf]
    %v2329 = vld [vmem:[#allocation37 + $0x190] sm:$0xf]
    %v2330 = vld [vmem:[#allocation37 + $0x194] sm:$0xf]
    %v2331 = vld [vmem:[#allocation37 + $0x198] sm:$0xf]
    %v2332 = vld [vmem:[#allocation37 + $0x19c] sm:$0xf]
    %v2333 = vld [vmem:[#allocation37 + $0x1a0] sm:$0xf]
    %v2334 = vld [vmem:[#allocation37 + $0x1a4] sm:$0xf]
    %v2335 = vld [vmem:[#allocation37 + $0x1a8] sm:$0xf]
    %v2336 = vld [vmem:[#allocation37 + $0x1ac] sm:$0xf]
    %v2337 = vld [vmem:[#allocation37 + $0x1b0] sm:$0xf]
    %v2338 = vld [vmem:[#allocation37 + $0x1b4] sm:$0xf]
    %v2339 = vld [vmem:[#allocation37 + $0x1b8] sm:$0xf]
    %v2340 = vld [vmem:[#allocation37 + $0x1bc] sm:$0xf]
    %v2341 = vld [vmem:[#allocation37 + $0x1c0] sm:$0xf]
    %v2342 = vld [vmem:[#allocation37 + $0x1c4] sm:$0xf]
    %v2343 = vld [vmem:[#allocation37 + $0x1c8] sm:$0xf]
    %v2344 = vld [vmem:[#allocation37 + $0x1cc] sm:$0xf]
    %v2345 = vld [vmem:[#allocation37 + $0x1d0] sm:$0xf]
    %v2346 = vld [vmem:[#allocation37 + $0x1d4] sm:$0xf]
    %v2347 = vld [vmem:[#allocation37 + $0x1d8] sm:$0xf]
    %v2348 = vld [vmem:[#allocation37 + $0x1dc] sm:$0xf]
    %v2349 = vld [vmem:[#allocation37 + $0x1e0] sm:$0xf]
    %v2350 = vld [vmem:[#allocation37 + $0x1e4] sm:$0xf]
    %v2351 = vld [vmem:[#allocation37 + $0x1e8] sm:$0xf]
    %v2352 = vld [vmem:[#allocation37 + $0x1ec] sm:$0xf]
    %v2353 = vld [vmem:[#allocation37 + $0x1f0] sm:$0xf]
    %v2354 = vld [vmem:[#allocation37 + $0x1f4] sm:$0xf]
    %v2355 = vld [vmem:[#allocation37 + $0x1f8] sm:$0xf]
    %v2356 = vld [vmem:[#allocation37 + $0x1fc] sm:$0xf]
    %v2357 = vld [vmem:[#allocation38] sm:$0x1]
    %v2358 = vpack.c.bf16 %v1649, %v1649
    %v2360 = vperm.slane %v1715, 0
    %v2361 = vperm.slane %v1715, 1
    %v2362 = vperm.slane %v1715, 2
    %v2363 = vperm.slane %v1715, 3
    %v2364 = vperm.slane %v1715, 4
    %v2365 = vperm.slane %v1715, 5
    %v2366 = vperm.slane %v1715, 6
    %v2367 = vperm.slane %v1715, 7
    %v2440 = vunpack.c.l.b16 %v1651
    %v2441 = vunpack.c.h.b16 %v1651
    %v2442 = vunpack.c.l.b16 %v1652
    %v2443 = vunpack.c.h.b16 %v1652
    %v2444 = vunpack.c.l.b16 %v1653
    %v2445 = vunpack.c.h.b16 %v1653
    %v2446 = vunpack.c.l.b16 %v1654
    %v2447 = vunpack.c.h.b16 %v1654
    %v2448 = vunpack.c.l.b16 %v1655
    %v2449 = vunpack.c.h.b16 %v1655
    %v2450 = vunpack.c.l.b16 %v1656
    %v2451 = vunpack.c.h.b16 %v1656
    %v2452 = vunpack.c.l.b16 %v1657
    %v2453 = vunpack.c.h.b16 %v1657
    %v2454 = vunpack.c.l.b16 %v1658
    %v2455 = vunpack.c.h.b16 %v1658
    %v2456 = vunpack.c.l.b16 %v1659
    %v2457 = vunpack.c.h.b16 %v1659
    %v2458 = vunpack.c.l.b16 %v1660
    %v2459 = vunpack.c.h.b16 %v1660
    %v2460 = vunpack.c.l.b16 %v1661
    %v2461 = vunpack.c.h.b16 %v1661
    %v2462 = vunpack.c.l.b16 %v1662
    %v2463 = vunpack.c.h.b16 %v1662
    %v2464 = vunpack.c.l.b16 %v1663
    %v2465 = vunpack.c.h.b16 %v1663
    %v2466 = vunpack.c.l.b16 %v1664
    %v2467 = vunpack.c.h.b16 %v1664
    %v2468 = vunpack.c.l.b16 %v1665
    %v2469 = vunpack.c.h.b16 %v1665
    %v2470 = vunpack.c.l.b16 %v1666
    %v2471 = vunpack.c.h.b16 %v1666
    %v2472 = vunpack.c.l.b16 %v1667
    %v2473 = vunpack.c.h.b16 %v1667
    %v2474 = vunpack.c.l.b16 %v1668
    %v2475 = vunpack.c.h.b16 %v1668
    %v2476 = vunpack.c.l.b16 %v1669
    %v2477 = vunpack.c.h.b16 %v1669
    %v2478 = vunpack.c.l.b16 %v1670
    %v2479 = vunpack.c.h.b16 %v1670
    %v2480 = vunpack.c.l.b16 %v1671
    %v2481 = vunpack.c.h.b16 %v1671
    %v2482 = vunpack.c.l.b16 %v1672
    %v2483 = vunpack.c.h.b16 %v1672
    %v2484 = vunpack.c.l.b16 %v1673
    %v2485 = vunpack.c.h.b16 %v1673
    %v2486 = vunpack.c.l.b16 %v1674
    %v2487 = vunpack.c.h.b16 %v1674
    %v2488 = vunpack.c.l.b16 %v1675
    %v2489 = vunpack.c.h.b16 %v1675
    %v2490 = vunpack.c.l.b16 %v1676
    %v2491 = vunpack.c.h.b16 %v1676
    %v2492 = vunpack.c.l.b16 %v1677
    %v2493 = vunpack.c.h.b16 %v1677
    %v2494 = vunpack.c.l.b16 %v1678
    %v2495 = vunpack.c.h.b16 %v1678
    %v2496 = vunpack.c.l.b16 %v1679
    %v2497 = vunpack.c.h.b16 %v1679
    %v2498 = vunpack.c.l.b16 %v1680
    %v2499 = vunpack.c.h.b16 %v1680
    %v2500 = vunpack.c.l.b16 %v1681
    %v2501 = vunpack.c.h.b16 %v1681
    %v2502 = vunpack.c.l.b16 %v1682
    %v2503 = vunpack.c.h.b16 %v1682
    %v2504 = vunpack.c.l.b16 %v1683
    %v2505 = vunpack.c.h.b16 %v1683
    %v2506 = vunpack.c.l.b16 %v1684
    %v2507 = vunpack.c.h.b16 %v1684
    %v2508 = vunpack.c.l.b16 %v1685
    %v2509 = vunpack.c.h.b16 %v1685
    %v2510 = vunpack.c.l.b16 %v1686
    %v2511 = vunpack.c.h.b16 %v1686
    %v2512 = vunpack.c.l.b16 %v1687
    %v2513 = vunpack.c.h.b16 %v1687
    %v2514 = vunpack.c.l.b16 %v1688
    %v2515 = vunpack.c.h.b16 %v1688
    %v2516 = vunpack.c.l.b16 %v1689
    %v2517 = vunpack.c.h.b16 %v1689
    %v2518 = vunpack.c.l.b16 %v1690
    %v2519 = vunpack.c.h.b16 %v1690
    %v2520 = vunpack.c.l.b16 %v1691
    %v2521 = vunpack.c.h.b16 %v1691
    %v2522 = vunpack.c.l.b16 %v1692
    %v2523 = vunpack.c.h.b16 %v1692
    %v2524 = vunpack.c.l.b16 %v1693
    %v2525 = vunpack.c.h.b16 %v1693
    %v2526 = vunpack.c.l.b16 %v1694
    %v2527 = vunpack.c.h.b16 %v1694
    %v2528 = vunpack.c.l.b16 %v1695
    %v2529 = vunpack.c.h.b16 %v1695
    %v2530 = vunpack.c.l.b16 %v1696
    %v2531 = vunpack.c.h.b16 %v1696
    %v2532 = vunpack.c.l.b16 %v1697
    %v2533 = vunpack.c.h.b16 %v1697
    %v2534 = vunpack.c.l.b16 %v1698
    %v2535 = vunpack.c.h.b16 %v1698
    %v2536 = vunpack.c.l.b16 %v1699
    %v2537 = vunpack.c.h.b16 %v1699
    %v2538 = vunpack.c.l.b16 %v1700
    %v2539 = vunpack.c.h.b16 %v1700
    %v2540 = vunpack.c.l.b16 %v1701
    %v2541 = vunpack.c.h.b16 %v1701
    %v2542 = vunpack.c.l.b16 %v1702
    %v2543 = vunpack.c.h.b16 %v1702
    %v2544 = vunpack.c.l.b16 %v1703
    %v2545 = vunpack.c.h.b16 %v1703
    %v2546 = vunpack.c.l.b16 %v1704
    %v2547 = vunpack.c.h.b16 %v1704
    %v2548 = vunpack.c.l.b16 %v1705
    %v2549 = vunpack.c.h.b16 %v1705
    %v2550 = vunpack.c.l.b16 %v1706
    %v2551 = vunpack.c.h.b16 %v1706
    %v2552 = vunpack.c.l.b16 %v1707
    %v2553 = vunpack.c.h.b16 %v1707
    %v2554 = vunpack.c.l.b16 %v1708
    %v2555 = vunpack.c.h.b16 %v1708
    %v2556 = vunpack.c.l.b16 %v1709
    %v2557 = vunpack.c.h.b16 %v1709
    %v2558 = vunpack.c.l.b16 %v1710
    %v2559 = vunpack.c.h.b16 %v1710
    %v2560 = vunpack.c.l.b16 %v1711
    %v2561 = vunpack.c.h.b16 %v1711
    %v2562 = vunpack.c.l.b16 %v1712
    %v2563 = vunpack.c.h.b16 %v1712
    %v2564 = vunpack.c.l.b16 %v1713
    %v2565 = vunpack.c.h.b16 %v1713
    %v2566 = vunpack.c.l.b16 %v1714
    %v2567 = vunpack.c.h.b16 %v1714
    %v2568 = vpack.c.b16 %v2448, %v2440
    %v2569 = vpack.c.b16 %v2449, %v2441
    %v2570 = vpack.c.b16 %v2450, %v2442
    %v2571 = vpack.c.b16 %v2451, %v2443
    %v2572 = vpack.c.b16 %v2452, %v2444
    %v2573 = vpack.c.b16 %v2453, %v2445
    %v2574 = vpack.c.b16 %v2454, %v2446
    %v2575 = vpack.c.b16 %v2455, %v2447
    %v2576 = vpack.c.b16 %v2464, %v2456
    %v2577 = vpack.c.b16 %v2465, %v2457
    %v2578 = vpack.c.b16 %v2466, %v2458
    %v2579 = vpack.c.b16 %v2467, %v2459
    %v2580 = vpack.c.b16 %v2468, %v2460
    %v2581 = vpack.c.b16 %v2469, %v2461
    %v2582 = vpack.c.b16 %v2470, %v2462
    %v2583 = vpack.c.b16 %v2471, %v2463
    %v2584 = vpack.c.b16 %v2480, %v2472
    %v2585 = vpack.c.b16 %v2481, %v2473
    %v2586 = vpack.c.b16 %v2482, %v2474
    %v2587 = vpack.c.b16 %v2483, %v2475
    %v2588 = vpack.c.b16 %v2484, %v2476
    %v2589 = vpack.c.b16 %v2485, %v2477
    %v2590 = vpack.c.b16 %v2486, %v2478
    %v2591 = vpack.c.b16 %v2487, %v2479
    %v2592 = vpack.c.b16 %v2496, %v2488
    %v2593 = vpack.c.b16 %v2497, %v2489
    %v2594 = vpack.c.b16 %v2498, %v2490
    %v2595 = vpack.c.b16 %v2499, %v2491
    %v2596 = vpack.c.b16 %v2500, %v2492
    %v2597 = vpack.c.b16 %v2501, %v2493
    %v2598 = vpack.c.b16 %v2502, %v2494
    %v2599 = vpack.c.b16 %v2503, %v2495
    %v2600 = vpack.c.b16 %v2512, %v2504
    %v2601 = vpack.c.b16 %v2513, %v2505
    %v2602 = vpack.c.b16 %v2514, %v2506
    %v2603 = vpack.c.b16 %v2515, %v2507
    %v2604 = vpack.c.b16 %v2516, %v2508
    %v2605 = vpack.c.b16 %v2517, %v2509
    %v2606 = vpack.c.b16 %v2518, %v2510
    %v2607 = vpack.c.b16 %v2519, %v2511
    %v2608 = vpack.c.b16 %v2528, %v2520
    %v2609 = vpack.c.b16 %v2529, %v2521
    %v2610 = vpack.c.b16 %v2530, %v2522
    %v2611 = vpack.c.b16 %v2531, %v2523
    %v2612 = vpack.c.b16 %v2532, %v2524
    %v2613 = vpack.c.b16 %v2533, %v2525
    %v2614 = vpack.c.b16 %v2534, %v2526
    %v2615 = vpack.c.b16 %v2535, %v2527
    %v2616 = vpack.c.b16 %v2544, %v2536
    %v2617 = vpack.c.b16 %v2545, %v2537
    %v2618 = vpack.c.b16 %v2546, %v2538
    %v2619 = vpack.c.b16 %v2547, %v2539
    %v2620 = vpack.c.b16 %v2548, %v2540
    %v2621 = vpack.c.b16 %v2549, %v2541
    %v2622 = vpack.c.b16 %v2550, %v2542
    %v2623 = vpack.c.b16 %v2551, %v2543
    %v2624 = vpack.c.b16 %v2560, %v2552
    %v2625 = vpack.c.b16 %v2561, %v2553
    %v2626 = vpack.c.b16 %v2562, %v2554
    %v2627 = vpack.c.b16 %v2563, %v2555
    %v2628 = vpack.c.b16 %v2564, %v2556
    %v2629 = vpack.c.b16 %v2565, %v2557
    %v2630 = vpack.c.b16 %v2566, %v2558
    %v2631 = vpack.c.b16 %v2567, %v2559
    %2696 = vmatpush.bf16.msra.mxu0 %v2624
    %2697 = vmatpush.bf16.msra.mxu0 %v2616
    %2698 = vmatpush.bf16.msra.mxu0 %v2608
    %2699 = vmatpush.bf16.msra.mxu0 %v2600
    %2700 = vmatpush.bf16.msra.mxu0 %v2592
    %2701 = vmatpush.bf16.msra.mxu0 %v2584
    %2702 = vmatpush.bf16.msra.mxu0 %v2576
    %2703 = vmatpush.bf16.msra.mxu0 %v2568
    %2704 = vmatmul.bf16.gmra.mxu0 %v2358
    %v2705 = vpop.f32.mrf.mxu0
    %v2706 = vadd.f32 %v2360, %v2705
    %v2707 = vpop.f32.mrf.mxu0
    %2708 = vdwg.mxu0
    %2709 = vmatpush.bf16.msra.mxu0 %v2625
    %2710 = vmatpush.bf16.msra.mxu0 %v2617
    %2711 = vmatpush.bf16.msra.mxu0 %v2609
    %2712 = vmatpush.bf16.msra.mxu0 %v2601
    %2713 = vmatpush.bf16.msra.mxu0 %v2593
    %2714 = vmatpush.bf16.msra.mxu0 %v2585
    %2715 = vmatpush.bf16.msra.mxu0 %v2577
    %2716 = vmatpush.bf16.msra.mxu0 %v2569
    %2717 = vmatmul.bf16.gmra.mxu0 %v2358
    %v2718 = vpop.f32.mrf.mxu0
    %v2719 = vadd.f32 %v2361, %v2718
    %v2720 = vpop.f32.mrf.mxu0
    %2721 = vdwg.mxu0
    %2722 = vmatpush.bf16.msra.mxu0 %v2626
    %2723 = vmatpush.bf16.msra.mxu0 %v2618
    %2724 = vmatpush.bf16.msra.mxu0 %v2610
    %2725 = vmatpush.bf16.msra.mxu0 %v2602
    %2726 = vmatpush.bf16.msra.mxu0 %v2594
    %2727 = vmatpush.bf16.msra.mxu0 %v2586
    %2728 = vmatpush.bf16.msra.mxu0 %v2578
    %2729 = vmatpush.bf16.msra.mxu0 %v2570
    %2730 = vmatmul.bf16.gmra.mxu0 %v2358
    %v2731 = vpop.f32.mrf.mxu0
    %v2732 = vadd.f32 %v2362, %v2731
    %v2733 = vpop.f32.mrf.mxu0
    %2734 = vdwg.mxu0
    %2735 = vmatpush.bf16.msra.mxu0 %v2627
    %2736 = vmatpush.bf16.msra.mxu0 %v2619
    %2737 = vmatpush.bf16.msra.mxu0 %v2611
    %2738 = vmatpush.bf16.msra.mxu0 %v2603
    %2739 = vmatpush.bf16.msra.mxu0 %v2595
    %2740 = vmatpush.bf16.msra.mxu0 %v2587
    %2741 = vmatpush.bf16.msra.mxu0 %v2579
    %2742 = vmatpush.bf16.msra.mxu0 %v2571
    %2743 = vmatmul.bf16.gmra.mxu0 %v2358
    %v2744 = vpop.f32.mrf.mxu0
    %v2745 = vadd.f32 %v2363, %v2744
    %v2746 = vpop.f32.mrf.mxu0
    %2747 = vdwg.mxu0
    %2748 = vmatpush.bf16.msra.mxu0 %v2628
    %2749 = vmatpush.bf16.msra.mxu0 %v2620
    %2750 = vmatpush.bf16.msra.mxu0 %v2612
    %2751 = vmatpush.bf16.msra.mxu0 %v2604
    %2752 = vmatpush.bf16.msra.mxu0 %v2596
    %2753 = vmatpush.bf16.msra.mxu0 %v2588
    %2754 = vmatpush.bf16.msra.mxu0 %v2580
    %2755 = vmatpush.bf16.msra.mxu0 %v2572
    %2756 = vmatmul.bf16.gmra.mxu0 %v2358
    %v2757 = vpop.f32.mrf.mxu0
    %v2758 = vadd.f32 %v2364, %v2757
    %v2759 = vpop.f32.mrf.mxu0
    %2760 = vdwg.mxu0
    %2761 = vmatpush.bf16.msra.mxu0 %v2629
    %2762 = vmatpush.bf16.msra.mxu0 %v2621
    %2763 = vmatpush.bf16.msra.mxu0 %v2613
    %2764 = vmatpush.bf16.msra.mxu0 %v2605
    %2765 = vmatpush.bf16.msra.mxu0 %v2597
    %2766 = vmatpush.bf16.msra.mxu0 %v2589
    %2767 = vmatpush.bf16.msra.mxu0 %v2581
    %2768 = vmatpush.bf16.msra.mxu0 %v2573
    %2769 = vmatmul.bf16.gmra.mxu0 %v2358
    %v2770 = vpop.f32.mrf.mxu0
    %v2771 = vadd.f32 %v2365, %v2770
    %v2772 = vpop.f32.mrf.mxu0
    %2773 = vdwg.mxu0
    %2774 = vmatpush.bf16.msra.mxu0 %v2630
    %2775 = vmatpush.bf16.msra.mxu0 %v2622
    %2776 = vmatpush.bf16.msra.mxu0 %v2614
    %2777 = vmatpush.bf16.msra.mxu0 %v2606
    %2778 = vmatpush.bf16.msra.mxu0 %v2598
    %2779 = vmatpush.bf16.msra.mxu0 %v2590
    %2780 = vmatpush.bf16.msra.mxu0 %v2582
    %2781 = vmatpush.bf16.msra.mxu0 %v2574
    %2782 = vmatmul.bf16.gmra.mxu0 %v2358
    %v2783 = vpop.f32.mrf.mxu0
    %v2784 = vadd.f32 %v2366, %v2783
    %v2785 = vpop.f32.mrf.mxu0
    %2786 = vdwg.mxu0
    %2787 = vmatpush.bf16.msra.mxu0 %v2631
    %2788 = vmatpush.bf16.msra.mxu0 %v2623
    %2789 = vmatpush.bf16.msra.mxu0 %v2615
    %2790 = vmatpush.bf16.msra.mxu0 %v2607
    %2791 = vmatpush.bf16.msra.mxu0 %v2599
    %2792 = vmatpush.bf16.msra.mxu0 %v2591
    %2793 = vmatpush.bf16.msra.mxu0 %v2583
    %2794 = vmatpush.bf16.msra.mxu0 %v2575
    %2795 = vmatmul.bf16.gmra.mxu0 %v2358
    %v2796 = vpop.f32.mrf.mxu0
    %v2797 = vadd.f32 %v2367, %v2796
    %v2798 = vpop.f32.mrf.mxu0
    %2799 = vdwg.mxu0
    %v2800 = vmax.f32 %v2706, 0.0
    %v2801 = vmax.f32 %v2719, 0.0
    %v2802 = vmax.f32 %v2732, 0.0
    %v2803 = vmax.f32 %v2745, 0.0
    %v2804 = vmax.f32 %v2758, 0.0
    %v2805 = vmax.f32 %v2771, 0.0
    %v2806 = vmax.f32 %v2784, 0.0
    %v2807 = vmax.f32 %v2797, 0.0
    %v2808 = vpack.c.bf16 %v2800, %v2800
    %v2809 = vpack.c.bf16 %v2801, %v2801
    %v2810 = vpack.c.bf16 %v2802, %v2802
    %v2811 = vpack.c.bf16 %v2803, %v2803
    %v2812 = vpack.c.bf16 %v2804, %v2804
    %v2813 = vpack.c.bf16 %v2805, %v2805
    %v2814 = vpack.c.bf16 %v2806, %v2806
    %v2815 = vpack.c.bf16 %v2807, %v2807
    %v2817 = vperm.slane %v2228, 0
    %v2818 = vperm.slane %v2228, 1
    %v2819 = vperm.slane %v2228, 2
    %v2820 = vperm.slane %v2228, 3
    %v2821 = vperm.slane %v2228, 4
    %v2822 = vperm.slane %v2228, 5
    %v2823 = vperm.slane %v2228, 6
    %v2824 = vperm.slane %v2228, 7
    %v3345 = vunpack.c.l.b16 %v1716
    %v3346 = vunpack.c.h.b16 %v1716
    %v3347 = vunpack.c.l.b16 %v1717
    %v3348 = vunpack.c.h.b16 %v1717
    %v3349 = vunpack.c.l.b16 %v1718
    %v3350 = vunpack.c.h.b16 %v1718
    %v3351 = vunpack.c.l.b16 %v1719
    %v3352 = vunpack.c.h.b16 %v1719
    %v3353 = vunpack.c.l.b16 %v1720
    %v3354 = vunpack.c.h.b16 %v1720
    %v3355 = vunpack.c.l.b16 %v1721
    %v3356 = vunpack.c.h.b16 %v1721
    %v3357 = vunpack.c.l.b16 %v1722
    %v3358 = vunpack.c.h.b16 %v1722
    %v3359 = vunpack.c.l.b16 %v1723
    %v3360 = vunpack.c.h.b16 %v1723
    %v3361 = vunpack.c.l.b16 %v1724
    %v3362 = vunpack.c.h.b16 %v1724
    %v3363 = vunpack.c.l.b16 %v1725
    %v3364 = vunpack.c.h.b16 %v1725
    %v3365 = vunpack.c.l.b16 %v1726
    %v3366 = vunpack.c.h.b16 %v1726
    %v3367 = vunpack.c.l.b16 %v1727
    %v3368 = vunpack.c.h.b16 %v1727
    %v3369 = vunpack.c.l.b16 %v1728
    %v3370 = vunpack.c.h.b16 %v1728
    %v3371 = vunpack.c.l.b16 %v1729
    %v3372 = vunpack.c.h.b16 %v1729
    %v3373 = vunpack.c.l.b16 %v1730
    %v3374 = vunpack.c.h.b16 %v1730
    %v3375 = vunpack.c.l.b16 %v1731
    %v3376 = vunpack.c.h.b16 %v1731
    %v3377 = vunpack.c.l.b16 %v1732
    %v3378 = vunpack.c.h.b16 %v1732
    %v3379 = vunpack.c.l.b16 %v1733
    %v3380 = vunpack.c.h.b16 %v1733
    %v3381 = vunpack.c.l.b16 %v1734
    %v3382 = vunpack.c.h.b16 %v1734
    %v3383 = vunpack.c.l.b16 %v1735
    %v3384 = vunpack.c.h.b16 %v1735
    %v3385 = vunpack.c.l.b16 %v1736
    %v3386 = vunpack.c.h.b16 %v1736
    %v3387 = vunpack.c.l.b16 %v1737
    %v3388 = vunpack.c.h.b16 %v1737
    %v3389 = vunpack.c.l.b16 %v1738
    %v3390 = vunpack.c.h.b16 %v1738
    %v3391 = vunpack.c.l.b16 %v1739
    %v3392 = vunpack.c.h.b16 %v1739
    %v3393 = vunpack.c.l.b16 %v1740
    %v3394 = vunpack.c.h.b16 %v1740
    %v3395 = vunpack.c.l.b16 %v1741
    %v3396 = vunpack.c.h.b16 %v1741
    %v3397 = vunpack.c.l.b16 %v1742
    %v3398 = vunpack.c.h.b16 %v1742
    %v3399 = vunpack.c.l.b16 %v1743
    %v3400 = vunpack.c.h.b16 %v1743
    %v3401 = vunpack.c.l.b16 %v1744
    %v3402 = vunpack.c.h.b16 %v1744
    %v3403 = vunpack.c.l.b16 %v1745
    %v3404 = vunpack.c.h.b16 %v1745
    %v3405 = vunpack.c.l.b16 %v1746
    %v3406 = vunpack.c.h.b16 %v1746
    %v3407 = vunpack.c.l.b16 %v1747
    %v3408 = vunpack.c.h.b16 %v1747
    %v3409 = vunpack.c.l.b16 %v1748
    %v3410 = vunpack.c.h.b16 %v1748
    %v3411 = vunpack.c.l.b16 %v1749
    %v3412 = vunpack.c.h.b16 %v1749
    %v3413 = vunpack.c.l.b16 %v1750
    %v3414 = vunpack.c.h.b16 %v1750
    %v3415 = vunpack.c.l.b16 %v1751
    %v3416 = vunpack.c.h.b16 %v1751
    %v3417 = vunpack.c.l.b16 %v1752
    %v3418 = vunpack.c.h.b16 %v1752
    %v3419 = vunpack.c.l.b16 %v1753
    %v3420 = vunpack.c.h.b16 %v1753
    %v3421 = vunpack.c.l.b16 %v1754
    %v3422 = vunpack.c.h.b16 %v1754
    %v3423 = vunpack.c.l.b16 %v1755
    %v3424 = vunpack.c.h.b16 %v1755
    %v3425 = vunpack.c.l.b16 %v1756
    %v3426 = vunpack.c.h.b16 %v1756
    %v3427 = vunpack.c.l.b16 %v1757
    %v3428 = vunpack.c.h.b16 %v1757
    %v3429 = vunpack.c.l.b16 %v1758
    %v3430 = vunpack.c.h.b16 %v1758
    %v3431 = vunpack.c.l.b16 %v1759
    %v3432 = vunpack.c.h.b16 %v1759
    %v3433 = vunpack.c.l.b16 %v1760
    %v3434 = vunpack.c.h.b16 %v1760
    %v3435 = vunpack.c.l.b16 %v1761
    %v3436 = vunpack.c.h.b16 %v1761
    %v3437 = vunpack.c.l.b16 %v1762
    %v3438 = vunpack.c.h.b16 %v1762
    %v3439 = vunpack.c.l.b16 %v1763
    %v3440 = vunpack.c.h.b16 %v1763
    %v3441 = vunpack.c.l.b16 %v1764
    %v3442 = vunpack.c.h.b16 %v1764
    %v3443 = vunpack.c.l.b16 %v1765
    %v3444 = vunpack.c.h.b16 %v1765
    %v3445 = vunpack.c.l.b16 %v1766
    %v3446 = vunpack.c.h.b16 %v1766
    %v3447 = vunpack.c.l.b16 %v1767
    %v3448 = vunpack.c.h.b16 %v1767
    %v3449 = vunpack.c.l.b16 %v1768
    %v3450 = vunpack.c.h.b16 %v1768
    %v3451 = vunpack.c.l.b16 %v1769
    %v3452 = vunpack.c.h.b16 %v1769
    %v3453 = vunpack.c.l.b16 %v1770
    %v3454 = vunpack.c.h.b16 %v1770
    %v3455 = vunpack.c.l.b16 %v1771
    %v3456 = vunpack.c.h.b16 %v1771
    %v3457 = vunpack.c.l.b16 %v1772
    %v3458 = vunpack.c.h.b16 %v1772
    %v3459 = vunpack.c.l.b16 %v1773
    %v3460 = vunpack.c.h.b16 %v1773
    %v3461 = vunpack.c.l.b16 %v1774
    %v3462 = vunpack.c.h.b16 %v1774
    %v3463 = vunpack.c.l.b16 %v1775
    %v3464 = vunpack.c.h.b16 %v1775
    %v3465 = vunpack.c.l.b16 %v1776
    %v3466 = vunpack.c.h.b16 %v1776
    %v3467 = vunpack.c.l.b16 %v1777
    %v3468 = vunpack.c.h.b16 %v1777
    %v3469 = vunpack.c.l.b16 %v1778
    %v3470 = vunpack.c.h.b16 %v1778
    %v3471 = vunpack.c.l.b16 %v1779
    %v3472 = vunpack.c.h.b16 %v1779
    %v3473 = vunpack.c.l.b16 %v1780
    %v3474 = vunpack.c.h.b16 %v1780
    %v3475 = vunpack.c.l.b16 %v1781
    %v3476 = vunpack.c.h.b16 %v1781
    %v3477 = vunpack.c.l.b16 %v1782
    %v3478 = vunpack.c.h.b16 %v1782
    %v3479 = vunpack.c.l.b16 %v1783
    %v3480 = vunpack.c.h.b16 %v1783
    %v3481 = vunpack.c.l.b16 %v1784
    %v3482 = vunpack.c.h.b16 %v1784
    %v3483 = vunpack.c.l.b16 %v1785
    %v3484 = vunpack.c.h.b16 %v1785
    %v3485 = vunpack.c.l.b16 %v1786
    %v3486 = vunpack.c.h.b16 %v1786
    %v3487 = vunpack.c.l.b16 %v1787
    %v3488 = vunpack.c.h.b16 %v1787
    %v3489 = vunpack.c.l.b16 %v1788
    %v3490 = vunpack.c.h.b16 %v1788
    %v3491 = vunpack.c.l.b16 %v1789
    %v3492 = vunpack.c.h.b16 %v1789
    %v3493 = vunpack.c.l.b16 %v1790
    %v3494 = vunpack.c.h.b16 %v1790
    %v3495 = vunpack.c.l.b16 %v1791
    %v3496 = vunpack.c.h.b16 %v1791
    %v3497 = vunpack.c.l.b16 %v1792
    %v3498 = vunpack.c.h.b16 %v1792
    %v3499 = vunpack.c.l.b16 %v1793
    %v3500 = vunpack.c.h.b16 %v1793
    %v3501 = vunpack.c.l.b16 %v1794
    %v3502 = vunpack.c.h.b16 %v1794
    %v3503 = vunpack.c.l.b16 %v1795
    %v3504 = vunpack.c.h.b16 %v1795
    %v3505 = vunpack.c.l.b16 %v1796
    %v3506 = vunpack.c.h.b16 %v1796
    %v3507 = vunpack.c.l.b16 %v1797
    %v3508 = vunpack.c.h.b16 %v1797
    %v3509 = vunpack.c.l.b16 %v1798
    %v3510 = vunpack.c.h.b16 %v1798
    %v3511 = vunpack.c.l.b16 %v1799
    %v3512 = vunpack.c.h.b16 %v1799
    %v3513 = vunpack.c.l.b16 %v1800
    %v3514 = vunpack.c.h.b16 %v1800
    %v3515 = vunpack.c.l.b16 %v1801
    %v3516 = vunpack.c.h.b16 %v1801
    %v3517 = vunpack.c.l.b16 %v1802
    %v3518 = vunpack.c.h.b16 %v1802
    %v3519 = vunpack.c.l.b16 %v1803
    %v3520 = vunpack.c.h.b16 %v1803
    %v3521 = vunpack.c.l.b16 %v1804
    %v3522 = vunpack.c.h.b16 %v1804
    %v3523 = vunpack.c.l.b16 %v1805
    %v3524 = vunpack.c.h.b16 %v1805
    %v3525 = vunpack.c.l.b16 %v1806
    %v3526 = vunpack.c.h.b16 %v1806
    %v3527 = vunpack.c.l.b16 %v1807
    %v3528 = vunpack.c.h.b16 %v1807
    %v3529 = vunpack.c.l.b16 %v1808
    %v3530 = vunpack.c.h.b16 %v1808
    %v3531 = vunpack.c.l.b16 %v1809
    %v3532 = vunpack.c.h.b16 %v1809
    %v3533 = vunpack.c.l.b16 %v1810
    %v3534 = vunpack.c.h.b16 %v1810
    %v3535 = vunpack.c.l.b16 %v1811
    %v3536 = vunpack.c.h.b16 %v1811
    %v3537 = vunpack.c.l.b16 %v1812
    %v3538 = vunpack.c.h.b16 %v1812
    %v3539 = vunpack.c.l.b16 %v1813
    %v3540 = vunpack.c.h.b16 %v1813
    %v3541 = vunpack.c.l.b16 %v1814
    %v3542 = vunpack.c.h.b16 %v1814
    %v3543 = vunpack.c.l.b16 %v1815
    %v3544 = vunpack.c.h.b16 %v1815
    %v3545 = vunpack.c.l.b16 %v1816
    %v3546 = vunpack.c.h.b16 %v1816
    %v3547 = vunpack.c.l.b16 %v1817
    %v3548 = vunpack.c.h.b16 %v1817
    %v3549 = vunpack.c.l.b16 %v1818
    %v3550 = vunpack.c.h.b16 %v1818
    %v3551 = vunpack.c.l.b16 %v1819
    %v3552 = vunpack.c.h.b16 %v1819
    %v3553 = vunpack.c.l.b16 %v1820
    %v3554 = vunpack.c.h.b16 %v1820
    %v3555 = vunpack.c.l.b16 %v1821
    %v3556 = vunpack.c.h.b16 %v1821
    %v3557 = vunpack.c.l.b16 %v1822
    %v3558 = vunpack.c.h.b16 %v1822
    %v3559 = vunpack.c.l.b16 %v1823
    %v3560 = vunpack.c.h.b16 %v1823
    %v3561 = vunpack.c.l.b16 %v1824
    %v3562 = vunpack.c.h.b16 %v1824
    %v3563 = vunpack.c.l.b16 %v1825
    %v3564 = vunpack.c.h.b16 %v1825
    %v3565 = vunpack.c.l.b16 %v1826
    %v3566 = vunpack.c.h.b16 %v1826
    %v3567 = vunpack.c.l.b16 %v1827
    %v3568 = vunpack.c.h.b16 %v1827
    %v3569 = vunpack.c.l.b16 %v1828
    %v3570 = vunpack.c.h.b16 %v1828
    %v3571 = vunpack.c.l.b16 %v1829
    %v3572 = vunpack.c.h.b16 %v1829
    %v3573 = vunpack.c.l.b16 %v1830
    %v3574 = vunpack.c.h.b16 %v1830
    %v3575 = vunpack.c.l.b16 %v1831
    %v3576 = vunpack.c.h.b16 %v1831
    %v3577 = vunpack.c.l.b16 %v1832
    %v3578 = vunpack.c.h.b16 %v1832
    %v3579 = vunpack.c.l.b16 %v1833
    %v3580 = vunpack.c.h.b16 %v1833
    %v3581 = vunpack.c.l.b16 %v1834
    %v3582 = vunpack.c.h.b16 %v1834
    %v3583 = vunpack.c.l.b16 %v1835
    %v3584 = vunpack.c.h.b16 %v1835
    %v3585 = vunpack.c.l.b16 %v1836
    %v3586 = vunpack.c.h.b16 %v1836
    %v3587 = vunpack.c.l.b16 %v1837
    %v3588 = vunpack.c.h.b16 %v1837
    %v3589 = vunpack.c.l.b16 %v1838
    %v3590 = vunpack.c.h.b16 %v1838
    %v3591 = vunpack.c.l.b16 %v1839
    %v3592 = vunpack.c.h.b16 %v1839
    %v3593 = vunpack.c.l.b16 %v1840
    %v3594 = vunpack.c.h.b16 %v1840
    %v3595 = vunpack.c.l.b16 %v1841
    %v3596 = vunpack.c.h.b16 %v1841
    %v3597 = vunpack.c.l.b16 %v1842
    %v3598 = vunpack.c.h.b16 %v1842
    %v3599 = vunpack.c.l.b16 %v1843
    %v3600 = vunpack.c.h.b16 %v1843
    %v3601 = vunpack.c.l.b16 %v1844
    %v3602 = vunpack.c.h.b16 %v1844
    %v3603 = vunpack.c.l.b16 %v1845
    %v3604 = vunpack.c.h.b16 %v1845
    %v3605 = vunpack.c.l.b16 %v1846
    %v3606 = vunpack.c.h.b16 %v1846
    %v3607 = vunpack.c.l.b16 %v1847
    %v3608 = vunpack.c.h.b16 %v1847
    %v3609 = vunpack.c.l.b16 %v1848
    %v3610 = vunpack.c.h.b16 %v1848
    %v3611 = vunpack.c.l.b16 %v1849
    %v3612 = vunpack.c.h.b16 %v1849
    %v3613 = vunpack.c.l.b16 %v1850
    %v3614 = vunpack.c.h.b16 %v1850
    %v3615 = vunpack.c.l.b16 %v1851
    %v3616 = vunpack.c.h.b16 %v1851
    %v3617 = vunpack.c.l.b16 %v1852
    %v3618 = vunpack.c.h.b16 %v1852
    %v3619 = vunpack.c.l.b16 %v1853
    %v3620 = vunpack.c.h.b16 %v1853
    %v3621 = vunpack.c.l.b16 %v1854
    %v3622 = vunpack.c.h.b16 %v1854
    %v3623 = vunpack.c.l.b16 %v1855
    %v3624 = vunpack.c.h.b16 %v1855
    %v3625 = vunpack.c.l.b16 %v1856
    %v3626 = vunpack.c.h.b16 %v1856
    %v3627 = vunpack.c.l.b16 %v1857
    %v3628 = vunpack.c.h.b16 %v1857
    %v3629 = vunpack.c.l.b16 %v1858
    %v3630 = vunpack.c.h.b16 %v1858
    %v3631 = vunpack.c.l.b16 %v1859
    %v3632 = vunpack.c.h.b16 %v1859
    %v3633 = vunpack.c.l.b16 %v1860
    %v3634 = vunpack.c.h.b16 %v1860
    %v3635 = vunpack.c.l.b16 %v1861
    %v3636 = vunpack.c.h.b16 %v1861
    %v3637 = vunpack.c.l.b16 %v1862
    %v3638 = vunpack.c.h.b16 %v1862
    %v3639 = vunpack.c.l.b16 %v1863
    %v3640 = vunpack.c.h.b16 %v1863
    %v3641 = vunpack.c.l.b16 %v1864
    %v3642 = vunpack.c.h.b16 %v1864
    %v3643 = vunpack.c.l.b16 %v1865
    %v3644 = vunpack.c.h.b16 %v1865
    %v3645 = vunpack.c.l.b16 %v1866
    %v3646 = vunpack.c.h.b16 %v1866
    %v3647 = vunpack.c.l.b16 %v1867
    %v3648 = vunpack.c.h.b16 %v1867
    %v3649 = vunpack.c.l.b16 %v1868
    %v3650 = vunpack.c.h.b16 %v1868
    %v3651 = vunpack.c.l.b16 %v1869
    %v3652 = vunpack.c.h.b16 %v1869
    %v3653 = vunpack.c.l.b16 %v1870
    %v3654 = vunpack.c.h.b16 %v1870
    %v3655 = vunpack.c.l.b16 %v1871
    %v3656 = vunpack.c.h.b16 %v1871
    %v3657 = vunpack.c.l.b16 %v1872
    %v3658 = vunpack.c.h.b16 %v1872
    %v3659 = vunpack.c.l.b16 %v1873
    %v3660 = vunpack.c.h.b16 %v1873
    %v3661 = vunpack.c.l.b16 %v1874
    %v3662 = vunpack.c.h.b16 %v1874
    %v3663 = vunpack.c.l.b16 %v1875
    %v3664 = vunpack.c.h.b16 %v1875
    %v3665 = vunpack.c.l.b16 %v1876
    %v3666 = vunpack.c.h.b16 %v1876
    %v3667 = vunpack.c.l.b16 %v1877
    %v3668 = vunpack.c.h.b16 %v1877
    %v3669 = vunpack.c.l.b16 %v1878
    %v3670 = vunpack.c.h.b16 %v1878
    %v3671 = vunpack.c.l.b16 %v1879
    %v3672 = vunpack.c.h.b16 %v1879
    %v3673 = vunpack.c.l.b16 %v1880
    %v3674 = vunpack.c.h.b16 %v1880
    %v3675 = vunpack.c.l.b16 %v1881
    %v3676 = vunpack.c.h.b16 %v1881
    %v3677 = vunpack.c.l.b16 %v1882
    %v3678 = vunpack.c.h.b16 %v1882
    %v3679 = vunpack.c.l.b16 %v1883
    %v3680 = vunpack.c.h.b16 %v1883
    %v3681 = vunpack.c.l.b16 %v1884
    %v3682 = vunpack.c.h.b16 %v1884
    %v3683 = vunpack.c.l.b16 %v1885
    %v3684 = vunpack.c.h.b16 %v1885
    %v3685 = vunpack.c.l.b16 %v1886
    %v3686 = vunpack.c.h.b16 %v1886
    %v3687 = vunpack.c.l.b16 %v1887
    %v3688 = vunpack.c.h.b16 %v1887
    %v3689 = vunpack.c.l.b16 %v1888
    %v3690 = vunpack.c.h.b16 %v1888
    %v3691 = vunpack.c.l.b16 %v1889
    %v3692 = vunpack.c.h.b16 %v1889
    %v3693 = vunpack.c.l.b16 %v1890
    %v3694 = vunpack.c.h.b16 %v1890
    %v3695 = vunpack.c.l.b16 %v1891
    %v3696 = vunpack.c.h.b16 %v1891
    %v3697 = vunpack.c.l.b16 %v1892
    %v3698 = vunpack.c.h.b16 %v1892
    %v3699 = vunpack.c.l.b16 %v1893
    %v3700 = vunpack.c.h.b16 %v1893
    %v3701 = vunpack.c.l.b16 %v1894
    %v3702 = vunpack.c.h.b16 %v1894
    %v3703 = vunpack.c.l.b16 %v1895
    %v3704 = vunpack.c.h.b16 %v1895
    %v3705 = vunpack.c.l.b16 %v1896
    %v3706 = vunpack.c.h.b16 %v1896
    %v3707 = vunpack.c.l.b16 %v1897
    %v3708 = vunpack.c.h.b16 %v1897
    %v3709 = vunpack.c.l.b16 %v1898
    %v3710 = vunpack.c.h.b16 %v1898
    %v3711 = vunpack.c.l.b16 %v1899
    %v3712 = vunpack.c.h.b16 %v1899
    %v3713 = vunpack.c.l.b16 %v1900
    %v3714 = vunpack.c.h.b16 %v1900
    %v3715 = vunpack.c.l.b16 %v1901
    %v3716 = vunpack.c.h.b16 %v1901
    %v3717 = vunpack.c.l.b16 %v1902
    %v3718 = vunpack.c.h.b16 %v1902
    %v3719 = vunpack.c.l.b16 %v1903
    %v3720 = vunpack.c.h.b16 %v1903
    %v3721 = vunpack.c.l.b16 %v1904
    %v3722 = vunpack.c.h.b16 %v1904
    %v3723 = vunpack.c.l.b16 %v1905
    %v3724 = vunpack.c.h.b16 %v1905
    %v3725 = vunpack.c.l.b16 %v1906
    %v3726 = vunpack.c.h.b16 %v1906
    %v3727 = vunpack.c.l.b16 %v1907
    %v3728 = vunpack.c.h.b16 %v1907
    %v3729 = vunpack.c.l.b16 %v1908
    %v3730 = vunpack.c.h.b16 %v1908
    %v3731 = vunpack.c.l.b16 %v1909
    %v3732 = vunpack.c.h.b16 %v1909
    %v3733 = vunpack.c.l.b16 %v1910
    %v3734 = vunpack.c.h.b16 %v1910
    %v3735 = vunpack.c.l.b16 %v1911
    %v3736 = vunpack.c.h.b16 %v1911
    %v3737 = vunpack.c.l.b16 %v1912
    %v3738 = vunpack.c.h.b16 %v1912
    %v3739 = vunpack.c.l.b16 %v1913
    %v3740 = vunpack.c.h.b16 %v1913
    %v3741 = vunpack.c.l.b16 %v1914
    %v3742 = vunpack.c.h.b16 %v1914
    %v3743 = vunpack.c.l.b16 %v1915
    %v3744 = vunpack.c.h.b16 %v1915
    %v3745 = vunpack.c.l.b16 %v1916
    %v3746 = vunpack.c.h.b16 %v1916
    %v3747 = vunpack.c.l.b16 %v1917
    %v3748 = vunpack.c.h.b16 %v1917
    %v3749 = vunpack.c.l.b16 %v1918
    %v3750 = vunpack.c.h.b16 %v1918
    %v3751 = vunpack.c.l.b16 %v1919
    %v3752 = vunpack.c.h.b16 %v1919
    %v3753 = vunpack.c.l.b16 %v1920
    %v3754 = vunpack.c.h.b16 %v1920
    %v3755 = vunpack.c.l.b16 %v1921
    %v3756 = vunpack.c.h.b16 %v1921
    %v3757 = vunpack.c.l.b16 %v1922
    %v3758 = vunpack.c.h.b16 %v1922
    %v3759 = vunpack.c.l.b16 %v1923
    %v3760 = vunpack.c.h.b16 %v1923
    %v3761 = vunpack.c.l.b16 %v1924
    %v3762 = vunpack.c.h.b16 %v1924
    %v3763 = vunpack.c.l.b16 %v1925
    %v3764 = vunpack.c.h.b16 %v1925
    %v3765 = vunpack.c.l.b16 %v1926
    %v3766 = vunpack.c.h.b16 %v1926
    %v3767 = vunpack.c.l.b16 %v1927
    %v3768 = vunpack.c.h.b16 %v1927
    %v3769 = vunpack.c.l.b16 %v1928
    %v3770 = vunpack.c.h.b16 %v1928
    %v3771 = vunpack.c.l.b16 %v1929
    %v3772 = vunpack.c.h.b16 %v1929
    %v3773 = vunpack.c.l.b16 %v1930
    %v3774 = vunpack.c.h.b16 %v1930
    %v3775 = vunpack.c.l.b16 %v1931
    %v3776 = vunpack.c.h.b16 %v1931
    %v3777 = vunpack.c.l.b16 %v1932
    %v3778 = vunpack.c.h.b16 %v1932
    %v3779 = vunpack.c.l.b16 %v1933
    %v3780 = vunpack.c.h.b16 %v1933
    %v3781 = vunpack.c.l.b16 %v1934
    %v3782 = vunpack.c.h.b16 %v1934
    %v3783 = vunpack.c.l.b16 %v1935
    %v3784 = vunpack.c.h.b16 %v1935
    %v3785 = vunpack.c.l.b16 %v1936
    %v3786 = vunpack.c.h.b16 %v1936
    %v3787 = vunpack.c.l.b16 %v1937
    %v3788 = vunpack.c.h.b16 %v1937
    %v3789 = vunpack.c.l.b16 %v1938
    %v3790 = vunpack.c.h.b16 %v1938
    %v3791 = vunpack.c.l.b16 %v1939
    %v3792 = vunpack.c.h.b16 %v1939
    %v3793 = vunpack.c.l.b16 %v1940
    %v3794 = vunpack.c.h.b16 %v1940
    %v3795 = vunpack.c.l.b16 %v1941
    %v3796 = vunpack.c.h.b16 %v1941
    %v3797 = vunpack.c.l.b16 %v1942
    %v3798 = vunpack.c.h.b16 %v1942
    %v3799 = vunpack.c.l.b16 %v1943
    %v3800 = vunpack.c.h.b16 %v1943
    %v3801 = vunpack.c.l.b16 %v1944
    %v3802 = vunpack.c.h.b16 %v1944
    %v3803 = vunpack.c.l.b16 %v1945
    %v3804 = vunpack.c.h.b16 %v1945
    %v3805 = vunpack.c.l.b16 %v1946
    %v3806 = vunpack.c.h.b16 %v1946
    %v3807 = vunpack.c.l.b16 %v1947
    %v3808 = vunpack.c.h.b16 %v1947
    %v3809 = vunpack.c.l.b16 %v1948
    %v3810 = vunpack.c.h.b16 %v1948
    %v3811 = vunpack.c.l.b16 %v1949
    %v3812 = vunpack.c.h.b16 %v1949
    %v3813 = vunpack.c.l.b16 %v1950
    %v3814 = vunpack.c.h.b16 %v1950
    %v3815 = vunpack.c.l.b16 %v1951
    %v3816 = vunpack.c.h.b16 %v1951
    %v3817 = vunpack.c.l.b16 %v1952
    %v3818 = vunpack.c.h.b16 %v1952
    %v3819 = vunpack.c.l.b16 %v1953
    %v3820 = vunpack.c.h.b16 %v1953
    %v3821 = vunpack.c.l.b16 %v1954
    %v3822 = vunpack.c.h.b16 %v1954
    %v3823 = vunpack.c.l.b16 %v1955
    %v3824 = vunpack.c.h.b16 %v1955
    %v3825 = vunpack.c.l.b16 %v1956
    %v3826 = vunpack.c.h.b16 %v1956
    %v3827 = vunpack.c.l.b16 %v1957
    %v3828 = vunpack.c.h.b16 %v1957
    %v3829 = vunpack.c.l.b16 %v1958
    %v3830 = vunpack.c.h.b16 %v1958
    %v3831 = vunpack.c.l.b16 %v1959
    %v3832 = vunpack.c.h.b16 %v1959
    %v3833 = vunpack.c.l.b16 %v1960
    %v3834 = vunpack.c.h.b16 %v1960
    %v3835 = vunpack.c.l.b16 %v1961
    %v3836 = vunpack.c.h.b16 %v1961
    %v3837 = vunpack.c.l.b16 %v1962
    %v3838 = vunpack.c.h.b16 %v1962
    %v3839 = vunpack.c.l.b16 %v1963
    %v3840 = vunpack.c.h.b16 %v1963
    %v3841 = vunpack.c.l.b16 %v1964
    %v3842 = vunpack.c.h.b16 %v1964
    %v3843 = vunpack.c.l.b16 %v1965
    %v3844 = vunpack.c.h.b16 %v1965
    %v3845 = vunpack.c.l.b16 %v1966
    %v3846 = vunpack.c.h.b16 %v1966
    %v3847 = vunpack.c.l.b16 %v1967
    %v3848 = vunpack.c.h.b16 %v1967
    %v3849 = vunpack.c.l.b16 %v1968
    %v3850 = vunpack.c.h.b16 %v1968
    %v3851 = vunpack.c.l.b16 %v1969
    %v3852 = vunpack.c.h.b16 %v1969
    %v3853 = vunpack.c.l.b16 %v1970
    %v3854 = vunpack.c.h.b16 %v1970
    %v3855 = vunpack.c.l.b16 %v1971
    %v3856 = vunpack.c.h.b16 %v1971
    %v3857 = vunpack.c.l.b16 %v1972
    %v3858 = vunpack.c.h.b16 %v1972
    %v3859 = vunpack.c.l.b16 %v1973
    %v3860 = vunpack.c.h.b16 %v1973
    %v3861 = vunpack.c.l.b16 %v1974
    %v3862 = vunpack.c.h.b16 %v1974
    %v3863 = vunpack.c.l.b16 %v1975
    %v3864 = vunpack.c.h.b16 %v1975
    %v3865 = vunpack.c.l.b16 %v1976
    %v3866 = vunpack.c.h.b16 %v1976
    %v3867 = vunpack.c.l.b16 %v1977
    %v3868 = vunpack.c.h.b16 %v1977
    %v3869 = vunpack.c.l.b16 %v1978
    %v3870 = vunpack.c.h.b16 %v1978
    %v3871 = vunpack.c.l.b16 %v1979
    %v3872 = vunpack.c.h.b16 %v1979
    %v3873 = vunpack.c.l.b16 %v1980
    %v3874 = vunpack.c.h.b16 %v1980
    %v3875 = vunpack.c.l.b16 %v1981
    %v3876 = vunpack.c.h.b16 %v1981
    %v3877 = vunpack.c.l.b16 %v1982
    %v3878 = vunpack.c.h.b16 %v1982
    %v3879 = vunpack.c.l.b16 %v1983
    %v3880 = vunpack.c.h.b16 %v1983
    %v3881 = vunpack.c.l.b16 %v1984
    %v3882 = vunpack.c.h.b16 %v1984
    %v3883 = vunpack.c.l.b16 %v1985
    %v3884 = vunpack.c.h.b16 %v1985
    %v3885 = vunpack.c.l.b16 %v1986
    %v3886 = vunpack.c.h.b16 %v1986
    %v3887 = vunpack.c.l.b16 %v1987
    %v3888 = vunpack.c.h.b16 %v1987
    %v3889 = vunpack.c.l.b16 %v1988
    %v3890 = vunpack.c.h.b16 %v1988
    %v3891 = vunpack.c.l.b16 %v1989
    %v3892 = vunpack.c.h.b16 %v1989
    %v3893 = vunpack.c.l.b16 %v1990
    %v3894 = vunpack.c.h.b16 %v1990
    %v3895 = vunpack.c.l.b16 %v1991
    %v3896 = vunpack.c.h.b16 %v1991
    %v3897 = vunpack.c.l.b16 %v1992
    %v3898 = vunpack.c.h.b16 %v1992
    %v3899 = vunpack.c.l.b16 %v1993
    %v3900 = vunpack.c.h.b16 %v1993
    %v3901 = vunpack.c.l.b16 %v1994
    %v3902 = vunpack.c.h.b16 %v1994
    %v3903 = vunpack.c.l.b16 %v1995
    %v3904 = vunpack.c.h.b16 %v1995
    %v3905 = vunpack.c.l.b16 %v1996
    %v3906 = vunpack.c.h.b16 %v1996
    %v3907 = vunpack.c.l.b16 %v1997
    %v3908 = vunpack.c.h.b16 %v1997
    %v3909 = vunpack.c.l.b16 %v1998
    %v3910 = vunpack.c.h.b16 %v1998
    %v3911 = vunpack.c.l.b16 %v1999
    %v3912 = vunpack.c.h.b16 %v1999
    %v3913 = vunpack.c.l.b16 %v2000
    %v3914 = vunpack.c.h.b16 %v2000
    %v3915 = vunpack.c.l.b16 %v2001
    %v3916 = vunpack.c.h.b16 %v2001
    %v3917 = vunpack.c.l.b16 %v2002
    %v3918 = vunpack.c.h.b16 %v2002
    %v3919 = vunpack.c.l.b16 %v2003
    %v3920 = vunpack.c.h.b16 %v2003
    %v3921 = vunpack.c.l.b16 %v2004
    %v3922 = vunpack.c.h.b16 %v2004
    %v3923 = vunpack.c.l.b16 %v2005
    %v3924 = vunpack.c.h.b16 %v2005
    %v3925 = vunpack.c.l.b16 %v2006
    %v3926 = vunpack.c.h.b16 %v2006
    %v3927 = vunpack.c.l.b16 %v2007
    %v3928 = vunpack.c.h.b16 %v2007
    %v3929 = vunpack.c.l.b16 %v2008
    %v3930 = vunpack.c.h.b16 %v2008
    %v3931 = vunpack.c.l.b16 %v2009
    %v3932 = vunpack.c.h.b16 %v2009
    %v3933 = vunpack.c.l.b16 %v2010
    %v3934 = vunpack.c.h.b16 %v2010
    %v3935 = vunpack.c.l.b16 %v2011
    %v3936 = vunpack.c.h.b16 %v2011
    %v3937 = vunpack.c.l.b16 %v2012
    %v3938 = vunpack.c.h.b16 %v2012
    %v3939 = vunpack.c.l.b16 %v2013
    %v3940 = vunpack.c.h.b16 %v2013
    %v3941 = vunpack.c.l.b16 %v2014
    %v3942 = vunpack.c.h.b16 %v2014
    %v3943 = vunpack.c.l.b16 %v2015
    %v3944 = vunpack.c.h.b16 %v2015
    %v3945 = vunpack.c.l.b16 %v2016
    %v3946 = vunpack.c.h.b16 %v2016
    %v3947 = vunpack.c.l.b16 %v2017
    %v3948 = vunpack.c.h.b16 %v2017
    %v3949 = vunpack.c.l.b16 %v2018
    %v3950 = vunpack.c.h.b16 %v2018
    %v3951 = vunpack.c.l.b16 %v2019
    %v3952 = vunpack.c.h.b16 %v2019
    %v3953 = vunpack.c.l.b16 %v2020
    %v3954 = vunpack.c.h.b16 %v2020
    %v3955 = vunpack.c.l.b16 %v2021
    %v3956 = vunpack.c.h.b16 %v2021
    %v3957 = vunpack.c.l.b16 %v2022
    %v3958 = vunpack.c.h.b16 %v2022
    %v3959 = vunpack.c.l.b16 %v2023
    %v3960 = vunpack.c.h.b16 %v2023
    %v3961 = vunpack.c.l.b16 %v2024
    %v3962 = vunpack.c.h.b16 %v2024
    %v3963 = vunpack.c.l.b16 %v2025
    %v3964 = vunpack.c.h.b16 %v2025
    %v3965 = vunpack.c.l.b16 %v2026
    %v3966 = vunpack.c.h.b16 %v2026
    %v3967 = vunpack.c.l.b16 %v2027
    %v3968 = vunpack.c.h.b16 %v2027
    %v3969 = vunpack.c.l.b16 %v2028
    %v3970 = vunpack.c.h.b16 %v2028
    %v3971 = vunpack.c.l.b16 %v2029
    %v3972 = vunpack.c.h.b16 %v2029
    %v3973 = vunpack.c.l.b16 %v2030
    %v3974 = vunpack.c.h.b16 %v2030
    %v3975 = vunpack.c.l.b16 %v2031
    %v3976 = vunpack.c.h.b16 %v2031
    %v3977 = vunpack.c.l.b16 %v2032
    %v3978 = vunpack.c.h.b16 %v2032
    %v3979 = vunpack.c.l.b16 %v2033
    %v3980 = vunpack.c.h.b16 %v2033
    %v3981 = vunpack.c.l.b16 %v2034
    %v3982 = vunpack.c.h.b16 %v2034
    %v3983 = vunpack.c.l.b16 %v2035
    %v3984 = vunpack.c.h.b16 %v2035
    %v3985 = vunpack.c.l.b16 %v2036
    %v3986 = vunpack.c.h.b16 %v2036
    %v3987 = vunpack.c.l.b16 %v2037
    %v3988 = vunpack.c.h.b16 %v2037
    %v3989 = vunpack.c.l.b16 %v2038
    %v3990 = vunpack.c.h.b16 %v2038
    %v3991 = vunpack.c.l.b16 %v2039
    %v3992 = vunpack.c.h.b16 %v2039
    %v3993 = vunpack.c.l.b16 %v2040
    %v3994 = vunpack.c.h.b16 %v2040
    %v3995 = vunpack.c.l.b16 %v2041
    %v3996 = vunpack.c.h.b16 %v2041
    %v3997 = vunpack.c.l.b16 %v2042
    %v3998 = vunpack.c.h.b16 %v2042
    %v3999 = vunpack.c.l.b16 %v2043
    %v4000 = vunpack.c.h.b16 %v2043
    %v4001 = vunpack.c.l.b16 %v2044
    %v4002 = vunpack.c.h.b16 %v2044
    %v4003 = vunpack.c.l.b16 %v2045
    %v4004 = vunpack.c.h.b16 %v2045
    %v4005 = vunpack.c.l.b16 %v2046
    %v4006 = vunpack.c.h.b16 %v2046
    %v4007 = vunpack.c.l.b16 %v2047
    %v4008 = vunpack.c.h.b16 %v2047
    %v4009 = vunpack.c.l.b16 %v2048
    %v4010 = vunpack.c.h.b16 %v2048
    %v4011 = vunpack.c.l.b16 %v2049
    %v4012 = vunpack.c.h.b16 %v2049
    %v4013 = vunpack.c.l.b16 %v2050
    %v4014 = vunpack.c.h.b16 %v2050
    %v4015 = vunpack.c.l.b16 %v2051
    %v4016 = vunpack.c.h.b16 %v2051
    %v4017 = vunpack.c.l.b16 %v2052
    %v4018 = vunpack.c.h.b16 %v2052
    %v4019 = vunpack.c.l.b16 %v2053
    %v4020 = vunpack.c.h.b16 %v2053
    %v4021 = vunpack.c.l.b16 %v2054
    %v4022 = vunpack.c.h.b16 %v2054
    %v4023 = vunpack.c.l.b16 %v2055
    %v4024 = vunpack.c.h.b16 %v2055
    %v4025 = vunpack.c.l.b16 %v2056
    %v4026 = vunpack.c.h.b16 %v2056
    %v4027 = vunpack.c.l.b16 %v2057
    %v4028 = vunpack.c.h.b16 %v2057
    %v4029 = vunpack.c.l.b16 %v2058
    %v4030 = vunpack.c.h.b16 %v2058
    %v4031 = vunpack.c.l.b16 %v2059
    %v4032 = vunpack.c.h.b16 %v2059
    %v4033 = vunpack.c.l.b16 %v2060
    %v4034 = vunpack.c.h.b16 %v2060
    %v4035 = vunpack.c.l.b16 %v2061
    %v4036 = vunpack.c.h.b16 %v2061
    %v4037 = vunpack.c.l.b16 %v2062
    %v4038 = vunpack.c.h.b16 %v2062
    %v4039 = vunpack.c.l.b16 %v2063
    %v4040 = vunpack.c.h.b16 %v2063
    %v4041 = vunpack.c.l.b16 %v2064
    %v4042 = vunpack.c.h.b16 %v2064
    %v4043 = vunpack.c.l.b16 %v2065
    %v4044 = vunpack.c.h.b16 %v2065
    %v4045 = vunpack.c.l.b16 %v2066
    %v4046 = vunpack.c.h.b16 %v2066
    %v4047 = vunpack.c.l.b16 %v2067
    %v4048 = vunpack.c.h.b16 %v2067
    %v4049 = vunpack.c.l.b16 %v2068
    %v4050 = vunpack.c.h.b16 %v2068
    %v4051 = vunpack.c.l.b16 %v2069
    %v4052 = vunpack.c.h.b16 %v2069
    %v4053 = vunpack.c.l.b16 %v2070
    %v4054 = vunpack.c.h.b16 %v2070
    %v4055 = vunpack.c.l.b16 %v2071
    %v4056 = vunpack.c.h.b16 %v2071
    %v4057 = vunpack.c.l.b16 %v2072
    %v4058 = vunpack.c.h.b16 %v2072
    %v4059 = vunpack.c.l.b16 %v2073
    %v4060 = vunpack.c.h.b16 %v2073
    %v4061 = vunpack.c.l.b16 %v2074
    %v4062 = vunpack.c.h.b16 %v2074
    %v4063 = vunpack.c.l.b16 %v2075
    %v4064 = vunpack.c.h.b16 %v2075
    %v4065 = vunpack.c.l.b16 %v2076
    %v4066 = vunpack.c.h.b16 %v2076
    %v4067 = vunpack.c.l.b16 %v2077
    %v4068 = vunpack.c.h.b16 %v2077
    %v4069 = vunpack.c.l.b16 %v2078
    %v4070 = vunpack.c.h.b16 %v2078
    %v4071 = vunpack.c.l.b16 %v2079
    %v4072 = vunpack.c.h.b16 %v2079
    %v4073 = vunpack.c.l.b16 %v2080
    %v4074 = vunpack.c.h.b16 %v2080
    %v4075 = vunpack.c.l.b16 %v2081
    %v4076 = vunpack.c.h.b16 %v2081
    %v4077 = vunpack.c.l.b16 %v2082
    %v4078 = vunpack.c.h.b16 %v2082
    %v4079 = vunpack.c.l.b16 %v2083
    %v4080 = vunpack.c.h.b16 %v2083
    %v4081 = vunpack.c.l.b16 %v2084
    %v4082 = vunpack.c.h.b16 %v2084
    %v4083 = vunpack.c.l.b16 %v2085
    %v4084 = vunpack.c.h.b16 %v2085
    %v4085 = vunpack.c.l.b16 %v2086
    %v4086 = vunpack.c.h.b16 %v2086
    %v4087 = vunpack.c.l.b16 %v2087
    %v4088 = vunpack.c.h.b16 %v2087
    %v4089 = vunpack.c.l.b16 %v2088
    %v4090 = vunpack.c.h.b16 %v2088
    %v4091 = vunpack.c.l.b16 %v2089
    %v4092 = vunpack.c.h.b16 %v2089
    %v4093 = vunpack.c.l.b16 %v2090
    %v4094 = vunpack.c.h.b16 %v2090
    %v4095 = vunpack.c.l.b16 %v2091
    %v4096 = vunpack.c.h.b16 %v2091
    %v4097 = vunpack.c.l.b16 %v2092
    %v4098 = vunpack.c.h.b16 %v2092
    %v4099 = vunpack.c.l.b16 %v2093
    %v4100 = vunpack.c.h.b16 %v2093
    %v4101 = vunpack.c.l.b16 %v2094
    %v4102 = vunpack.c.h.b16 %v2094
    %v4103 = vunpack.c.l.b16 %v2095
    %v4104 = vunpack.c.h.b16 %v2095
    %v4105 = vunpack.c.l.b16 %v2096
    %v4106 = vunpack.c.h.b16 %v2096
    %v4107 = vunpack.c.l.b16 %v2097
    %v4108 = vunpack.c.h.b16 %v2097
    %v4109 = vunpack.c.l.b16 %v2098
    %v4110 = vunpack.c.h.b16 %v2098
    %v4111 = vunpack.c.l.b16 %v2099
    %v4112 = vunpack.c.h.b16 %v2099
    %v4113 = vunpack.c.l.b16 %v2100
    %v4114 = vunpack.c.h.b16 %v2100
    %v4115 = vunpack.c.l.b16 %v2101
    %v4116 = vunpack.c.h.b16 %v2101
    %v4117 = vunpack.c.l.b16 %v2102
    %v4118 = vunpack.c.h.b16 %v2102
    %v4119 = vunpack.c.l.b16 %v2103
    %v4120 = vunpack.c.h.b16 %v2103
    %v4121 = vunpack.c.l.b16 %v2104
    %v4122 = vunpack.c.h.b16 %v2104
    %v4123 = vunpack.c.l.b16 %v2105
    %v4124 = vunpack.c.h.b16 %v2105
    %v4125 = vunpack.c.l.b16 %v2106
    %v4126 = vunpack.c.h.b16 %v2106
    %v4127 = vunpack.c.l.b16 %v2107
    %v4128 = vunpack.c.h.b16 %v2107
    %v4129 = vunpack.c.l.b16 %v2108
    %v4130 = vunpack.c.h.b16 %v2108
    %v4131 = vunpack.c.l.b16 %v2109
    %v4132 = vunpack.c.h.b16 %v2109
    %v4133 = vunpack.c.l.b16 %v2110
    %v4134 = vunpack.c.h.b16 %v2110
    %v4135 = vunpack.c.l.b16 %v2111
    %v4136 = vunpack.c.h.b16 %v2111
    %v4137 = vunpack.c.l.b16 %v2112
    %v4138 = vunpack.c.h.b16 %v2112
    %v4139 = vunpack.c.l.b16 %v2113
    %v4140 = vunpack.c.h.b16 %v2113
    %v4141 = vunpack.c.l.b16 %v2114
    %v4142 = vunpack.c.h.b16 %v2114
    %v4143 = vunpack.c.l.b16 %v2115
    %v4144 = vunpack.c.h.b16 %v2115
    %v4145 = vunpack.c.l.b16 %v2116
    %v4146 = vunpack.c.h.b16 %v2116
    %v4147 = vunpack.c.l.b16 %v2117
    %v4148 = vunpack.c.h.b16 %v2117
    %v4149 = vunpack.c.l.b16 %v2118
    %v4150 = vunpack.c.h.b16 %v2118
    %v4151 = vunpack.c.l.b16 %v2119
    %v4152 = vunpack.c.h.b16 %v2119
    %v4153 = vunpack.c.l.b16 %v2120
    %v4154 = vunpack.c.h.b16 %v2120
    %v4155 = vunpack.c.l.b16 %v2121
    %v4156 = vunpack.c.h.b16 %v2121
    %v4157 = vunpack.c.l.b16 %v2122
    %v4158 = vunpack.c.h.b16 %v2122
    %v4159 = vunpack.c.l.b16 %v2123
    %v4160 = vunpack.c.h.b16 %v2123
    %v4161 = vunpack.c.l.b16 %v2124
    %v4162 = vunpack.c.h.b16 %v2124
    %v4163 = vunpack.c.l.b16 %v2125
    %v4164 = vunpack.c.h.b16 %v2125
    %v4165 = vunpack.c.l.b16 %v2126
    %v4166 = vunpack.c.h.b16 %v2126
    %v4167 = vunpack.c.l.b16 %v2127
    %v4168 = vunpack.c.h.b16 %v2127
    %v4169 = vunpack.c.l.b16 %v2128
    %v4170 = vunpack.c.h.b16 %v2128
    %v4171 = vunpack.c.l.b16 %v2129
    %v4172 = vunpack.c.h.b16 %v2129
    %v4173 = vunpack.c.l.b16 %v2130
    %v4174 = vunpack.c.h.b16 %v2130
    %v4175 = vunpack.c.l.b16 %v2131
    %v4176 = vunpack.c.h.b16 %v2131
    %v4177 = vunpack.c.l.b16 %v2132
    %v4178 = vunpack.c.h.b16 %v2132
    %v4179 = vunpack.c.l.b16 %v2133
    %v4180 = vunpack.c.h.b16 %v2133
    %v4181 = vunpack.c.l.b16 %v2134
    %v4182 = vunpack.c.h.b16 %v2134
    %v4183 = vunpack.c.l.b16 %v2135
    %v4184 = vunpack.c.h.b16 %v2135
    %v4185 = vunpack.c.l.b16 %v2136
    %v4186 = vunpack.c.h.b16 %v2136
    %v4187 = vunpack.c.l.b16 %v2137
    %v4188 = vunpack.c.h.b16 %v2137
    %v4189 = vunpack.c.l.b16 %v2138
    %v4190 = vunpack.c.h.b16 %v2138
    %v4191 = vunpack.c.l.b16 %v2139
    %v4192 = vunpack.c.h.b16 %v2139
    %v4193 = vunpack.c.l.b16 %v2140
    %v4194 = vunpack.c.h.b16 %v2140
    %v4195 = vunpack.c.l.b16 %v2141
    %v4196 = vunpack.c.h.b16 %v2141
    %v4197 = vunpack.c.l.b16 %v2142
    %v4198 = vunpack.c.h.b16 %v2142
    %v4199 = vunpack.c.l.b16 %v2143
    %v4200 = vunpack.c.h.b16 %v2143
    %v4201 = vunpack.c.l.b16 %v2144
    %v4202 = vunpack.c.h.b16 %v2144
    %v4203 = vunpack.c.l.b16 %v2145
    %v4204 = vunpack.c.h.b16 %v2145
    %v4205 = vunpack.c.l.b16 %v2146
    %v4206 = vunpack.c.h.b16 %v2146
    %v4207 = vunpack.c.l.b16 %v2147
    %v4208 = vunpack.c.h.b16 %v2147
    %v4209 = vunpack.c.l.b16 %v2148
    %v4210 = vunpack.c.h.b16 %v2148
    %v4211 = vunpack.c.l.b16 %v2149
    %v4212 = vunpack.c.h.b16 %v2149
    %v4213 = vunpack.c.l.b16 %v2150
    %v4214 = vunpack.c.h.b16 %v2150
    %v4215 = vunpack.c.l.b16 %v2151
    %v4216 = vunpack.c.h.b16 %v2151
    %v4217 = vunpack.c.l.b16 %v2152
    %v4218 = vunpack.c.h.b16 %v2152
    %v4219 = vunpack.c.l.b16 %v2153
    %v4220 = vunpack.c.h.b16 %v2153
    %v4221 = vunpack.c.l.b16 %v2154
    %v4222 = vunpack.c.h.b16 %v2154
    %v4223 = vunpack.c.l.b16 %v2155
    %v4224 = vunpack.c.h.b16 %v2155
    %v4225 = vunpack.c.l.b16 %v2156
    %v4226 = vunpack.c.h.b16 %v2156
    %v4227 = vunpack.c.l.b16 %v2157
    %v4228 = vunpack.c.h.b16 %v2157
    %v4229 = vunpack.c.l.b16 %v2158
    %v4230 = vunpack.c.h.b16 %v2158
    %v4231 = vunpack.c.l.b16 %v2159
    %v4232 = vunpack.c.h.b16 %v2159
    %v4233 = vunpack.c.l.b16 %v2160
    %v4234 = vunpack.c.h.b16 %v2160
    %v4235 = vunpack.c.l.b16 %v2161
    %v4236 = vunpack.c.h.b16 %v2161
    %v4237 = vunpack.c.l.b16 %v2162
    %v4238 = vunpack.c.h.b16 %v2162
    %v4239 = vunpack.c.l.b16 %v2163
    %v4240 = vunpack.c.h.b16 %v2163
    %v4241 = vunpack.c.l.b16 %v2164
    %v4242 = vunpack.c.h.b16 %v2164
    %v4243 = vunpack.c.l.b16 %v2165
    %v4244 = vunpack.c.h.b16 %v2165
    %v4245 = vunpack.c.l.b16 %v2166
    %v4246 = vunpack.c.h.b16 %v2166
    %v4247 = vunpack.c.l.b16 %v2167
    %v4248 = vunpack.c.h.b16 %v2167
    %v4249 = vunpack.c.l.b16 %v2168
    %v4250 = vunpack.c.h.b16 %v2168
    %v4251 = vunpack.c.l.b16 %v2169
    %v4252 = vunpack.c.h.b16 %v2169
    %v4253 = vunpack.c.l.b16 %v2170
    %v4254 = vunpack.c.h.b16 %v2170
    %v4255 = vunpack.c.l.b16 %v2171
    %v4256 = vunpack.c.h.b16 %v2171
    %v4257 = vunpack.c.l.b16 %v2172
    %v4258 = vunpack.c.h.b16 %v2172
    %v4259 = vunpack.c.l.b16 %v2173
    %v4260 = vunpack.c.h.b16 %v2173
    %v4261 = vunpack.c.l.b16 %v2174
    %v4262 = vunpack.c.h.b16 %v2174
    %v4263 = vunpack.c.l.b16 %v2175
    %v4264 = vunpack.c.h.b16 %v2175
    %v4265 = vunpack.c.l.b16 %v2176
    %v4266 = vunpack.c.h.b16 %v2176
    %v4267 = vunpack.c.l.b16 %v2177
    %v4268 = vunpack.c.h.b16 %v2177
    %v4269 = vunpack.c.l.b16 %v2178
    %v4270 = vunpack.c.h.b16 %v2178
    %v4271 = vunpack.c.l.b16 %v2179
    %v4272 = vunpack.c.h.b16 %v2179
    %v4273 = vunpack.c.l.b16 %v2180
    %v4274 = vunpack.c.h.b16 %v2180
    %v4275 = vunpack.c.l.b16 %v2181
    %v4276 = vunpack.c.h.b16 %v2181
    %v4277 = vunpack.c.l.b16 %v2182
    %v4278 = vunpack.c.h.b16 %v2182
    %v4279 = vunpack.c.l.b16 %v2183
    %v4280 = vunpack.c.h.b16 %v2183
    %v4281 = vunpack.c.l.b16 %v2184
    %v4282 = vunpack.c.h.b16 %v2184
    %v4283 = vunpack.c.l.b16 %v2185
    %v4284 = vunpack.c.h.b16 %v2185
    %v4285 = vunpack.c.l.b16 %v2186
    %v4286 = vunpack.c.h.b16 %v2186
    %v4287 = vunpack.c.l.b16 %v2187
    %v4288 = vunpack.c.h.b16 %v2187
    %v4289 = vunpack.c.l.b16 %v2188
    %v4290 = vunpack.c.h.b16 %v2188
    %v4291 = vunpack.c.l.b16 %v2189
    %v4292 = vunpack.c.h.b16 %v2189
    %v4293 = vunpack.c.l.b16 %v2190
    %v4294 = vunpack.c.h.b16 %v2190
    %v4295 = vunpack.c.l.b16 %v2191
    %v4296 = vunpack.c.h.b16 %v2191
    %v4297 = vunpack.c.l.b16 %v2192
    %v4298 = vunpack.c.h.b16 %v2192
    %v4299 = vunpack.c.l.b16 %v2193
    %v4300 = vunpack.c.h.b16 %v2193
    %v4301 = vunpack.c.l.b16 %v2194
    %v4302 = vunpack.c.h.b16 %v2194
    %v4303 = vunpack.c.l.b16 %v2195
    %v4304 = vunpack.c.h.b16 %v2195
    %v4305 = vunpack.c.l.b16 %v2196
    %v4306 = vunpack.c.h.b16 %v2196
    %v4307 = vunpack.c.l.b16 %v2197
    %v4308 = vunpack.c.h.b16 %v2197
    %v4309 = vunpack.c.l.b16 %v2198
    %v4310 = vunpack.c.h.b16 %v2198
    %v4311 = vunpack.c.l.b16 %v2199
    %v4312 = vunpack.c.h.b16 %v2199
    %v4313 = vunpack.c.l.b16 %v2200
    %v4314 = vunpack.c.h.b16 %v2200
    %v4315 = vunpack.c.l.b16 %v2201
    %v4316 = vunpack.c.h.b16 %v2201
    %v4317 = vunpack.c.l.b16 %v2202
    %v4318 = vunpack.c.h.b16 %v2202
    %v4319 = vunpack.c.l.b16 %v2203
    %v4320 = vunpack.c.h.b16 %v2203
    %v4321 = vunpack.c.l.b16 %v2204
    %v4322 = vunpack.c.h.b16 %v2204
    %v4323 = vunpack.c.l.b16 %v2205
    %v4324 = vunpack.c.h.b16 %v2205
    %v4325 = vunpack.c.l.b16 %v2206
    %v4326 = vunpack.c.h.b16 %v2206
    %v4327 = vunpack.c.l.b16 %v2207
    %v4328 = vunpack.c.h.b16 %v2207
    %v4329 = vunpack.c.l.b16 %v2208
    %v4330 = vunpack.c.h.b16 %v2208
    %v4331 = vunpack.c.l.b16 %v2209
    %v4332 = vunpack.c.h.b16 %v2209
    %v4333 = vunpack.c.l.b16 %v2210
    %v4334 = vunpack.c.h.b16 %v2210
    %v4335 = vunpack.c.l.b16 %v2211
    %v4336 = vunpack.c.h.b16 %v2211
    %v4337 = vunpack.c.l.b16 %v2212
    %v4338 = vunpack.c.h.b16 %v2212
    %v4339 = vunpack.c.l.b16 %v2213
    %v4340 = vunpack.c.h.b16 %v2213
    %v4341 = vunpack.c.l.b16 %v2214
    %v4342 = vunpack.c.h.b16 %v2214
    %v4343 = vunpack.c.l.b16 %v2215
    %v4344 = vunpack.c.h.b16 %v2215
    %v4345 = vunpack.c.l.b16 %v2216
    %v4346 = vunpack.c.h.b16 %v2216
    %v4347 = vunpack.c.l.b16 %v2217
    %v4348 = vunpack.c.h.b16 %v2217
    %v4349 = vunpack.c.l.b16 %v2218
    %v4350 = vunpack.c.h.b16 %v2218
    %v4351 = vunpack.c.l.b16 %v2219
    %v4352 = vunpack.c.h.b16 %v2219
    %v4353 = vunpack.c.l.b16 %v2220
    %v4354 = vunpack.c.h.b16 %v2220
    %v4355 = vunpack.c.l.b16 %v2221
    %v4356 = vunpack.c.h.b16 %v2221
    %v4357 = vunpack.c.l.b16 %v2222
    %v4358 = vunpack.c.h.b16 %v2222
    %v4359 = vunpack.c.l.b16 %v2223
    %v4360 = vunpack.c.h.b16 %v2223
    %v4361 = vunpack.c.l.b16 %v2224
    %v4362 = vunpack.c.h.b16 %v2224
    %v4363 = vunpack.c.l.b16 %v2225
    %v4364 = vunpack.c.h.b16 %v2225
    %v4365 = vunpack.c.l.b16 %v2226
    %v4366 = vunpack.c.h.b16 %v2226
    %v4367 = vunpack.c.l.b16 %v2227
    %v4368 = vunpack.c.h.b16 %v2227
    %v4369 = vpack.c.b16 %v3353, %v3345
    %v4370 = vpack.c.b16 %v3354, %v3346
    %v4371 = vpack.c.b16 %v3355, %v3347
    %v4372 = vpack.c.b16 %v3356, %v3348
    %v4373 = vpack.c.b16 %v3357, %v3349
    %v4374 = vpack.c.b16 %v3358, %v3350
    %v4375 = vpack.c.b16 %v3359, %v3351
    %v4376 = vpack.c.b16 %v3360, %v3352
    %v4377 = vpack.c.b16 %v3369, %v3361
    %v4378 = vpack.c.b16 %v3370, %v3362
    %v4379 = vpack.c.b16 %v3371, %v3363
    %v4380 = vpack.c.b16 %v3372, %v3364
    %v4381 = vpack.c.b16 %v3373, %v3365
    %v4382 = vpack.c.b16 %v3374, %v3366
    %v4383 = vpack.c.b16 %v3375, %v3367
    %v4384 = vpack.c.b16 %v3376, %v3368
    %v4385 = vpack.c.b16 %v3385, %v3377
    %v4386 = vpack.c.b16 %v3386, %v3378
    %v4387 = vpack.c.b16 %v3387, %v3379
    %v4388 = vpack.c.b16 %v3388, %v3380
    %v4389 = vpack.c.b16 %v3389, %v3381
    %v4390 = vpack.c.b16 %v3390, %v3382
    %v4391 = vpack.c.b16 %v3391, %v3383
    %v4392 = vpack.c.b16 %v3392, %v3384
    %v4393 = vpack.c.b16 %v3401, %v3393
    %v4394 = vpack.c.b16 %v3402, %v3394
    %v4395 = vpack.c.b16 %v3403, %v3395
    %v4396 = vpack.c.b16 %v3404, %v3396
    %v4397 = vpack.c.b16 %v3405, %v3397
    %v4398 = vpack.c.b16 %v3406, %v3398
    %v4399 = vpack.c.b16 %v3407, %v3399
    %v4400 = vpack.c.b16 %v3408, %v3400
    %v4401 = vpack.c.b16 %v3417, %v3409
    %v4402 = vpack.c.b16 %v3418, %v3410
    %v4403 = vpack.c.b16 %v3419, %v3411
    %v4404 = vpack.c.b16 %v3420, %v3412
    %v4405 = vpack.c.b16 %v3421, %v3413
    %v4406 = vpack.c.b16 %v3422, %v3414
    %v4407 = vpack.c.b16 %v3423, %v3415
    %v4408 = vpack.c.b16 %v3424, %v3416
    %v4409 = vpack.c.b16 %v3433, %v3425
    %v4410 = vpack.c.b16 %v3434, %v3426
    %v4411 = vpack.c.b16 %v3435, %v3427
    %v4412 = vpack.c.b16 %v3436, %v3428
    %v4413 = vpack.c.b16 %v3437, %v3429
    %v4414 = vpack.c.b16 %v3438, %v3430
    %v4415 = vpack.c.b16 %v3439, %v3431
    %v4416 = vpack.c.b16 %v3440, %v3432
    %v4417 = vpack.c.b16 %v3449, %v3441
    %v4418 = vpack.c.b16 %v3450, %v3442
    %v4419 = vpack.c.b16 %v3451, %v3443
    %v4420 = vpack.c.b16 %v3452, %v3444
    %v4421 = vpack.c.b16 %v3453, %v3445
    %v4422 = vpack.c.b16 %v3454, %v3446
    %v4423 = vpack.c.b16 %v3455, %v3447
    %v4424 = vpack.c.b16 %v3456, %v3448
    %v4425 = vpack.c.b16 %v3465, %v3457
    %v4426 = vpack.c.b16 %v3466, %v3458
    %v4427 = vpack.c.b16 %v3467, %v3459
    %v4428 = vpack.c.b16 %v3468, %v3460
    %v4429 = vpack.c.b16 %v3469, %v3461
    %v4430 = vpack.c.b16 %v3470, %v3462
    %v4431 = vpack.c.b16 %v3471, %v3463
    %v4432 = vpack.c.b16 %v3472, %v3464
    %v4433 = vpack.c.b16 %v3481, %v3473
    %v4434 = vpack.c.b16 %v3482, %v3474
    %v4435 = vpack.c.b16 %v3483, %v3475
    %v4436 = vpack.c.b16 %v3484, %v3476
    %v4437 = vpack.c.b16 %v3485, %v3477
    %v4438 = vpack.c.b16 %v3486, %v3478
    %v4439 = vpack.c.b16 %v3487, %v3479
    %v4440 = vpack.c.b16 %v3488, %v3480
    %v4441 = vpack.c.b16 %v3497, %v3489
    %v4442 = vpack.c.b16 %v3498, %v3490
    %v4443 = vpack.c.b16 %v3499, %v3491
    %v4444 = vpack.c.b16 %v3500, %v3492
    %v4445 = vpack.c.b16 %v3501, %v3493
    %v4446 = vpack.c.b16 %v3502, %v3494
    %v4447 = vpack.c.b16 %v3503, %v3495
    %v4448 = vpack.c.b16 %v3504, %v3496
    %v4449 = vpack.c.b16 %v3513, %v3505
    %v4450 = vpack.c.b16 %v3514, %v3506
    %v4451 = vpack.c.b16 %v3515, %v3507
    %v4452 = vpack.c.b16 %v3516, %v3508
    %v4453 = vpack.c.b16 %v3517, %v3509
    %v4454 = vpack.c.b16 %v3518, %v3510
    %v4455 = vpack.c.b16 %v3519, %v3511
    %v4456 = vpack.c.b16 %v3520, %v3512
    %v4457 = vpack.c.b16 %v3529, %v3521
    %v4458 = vpack.c.b16 %v3530, %v3522
    %v4459 = vpack.c.b16 %v3531, %v3523
    %v4460 = vpack.c.b16 %v3532, %v3524
    %v4461 = vpack.c.b16 %v3533, %v3525
    %v4462 = vpack.c.b16 %v3534, %v3526
    %v4463 = vpack.c.b16 %v3535, %v3527
    %v4464 = vpack.c.b16 %v3536, %v3528
    %v4465 = vpack.c.b16 %v3545, %v3537
    %v4466 = vpack.c.b16 %v3546, %v3538
    %v4467 = vpack.c.b16 %v3547, %v3539
    %v4468 = vpack.c.b16 %v3548, %v3540
    %v4469 = vpack.c.b16 %v3549, %v3541
    %v4470 = vpack.c.b16 %v3550, %v3542
    %v4471 = vpack.c.b16 %v3551, %v3543
    %v4472 = vpack.c.b16 %v3552, %v3544
    %v4473 = vpack.c.b16 %v3561, %v3553
    %v4474 = vpack.c.b16 %v3562, %v3554
    %v4475 = vpack.c.b16 %v3563, %v3555
    %v4476 = vpack.c.b16 %v3564, %v3556
    %v4477 = vpack.c.b16 %v3565, %v3557
    %v4478 = vpack.c.b16 %v3566, %v3558
    %v4479 = vpack.c.b16 %v3567, %v3559
    %v4480 = vpack.c.b16 %v3568, %v3560
    %v4481 = vpack.c.b16 %v3577, %v3569
    %v4482 = vpack.c.b16 %v3578, %v3570
    %v4483 = vpack.c.b16 %v3579, %v3571
    %v4484 = vpack.c.b16 %v3580, %v3572
    %v4485 = vpack.c.b16 %v3581, %v3573
    %v4486 = vpack.c.b16 %v3582, %v3574
    %v4487 = vpack.c.b16 %v3583, %v3575
    %v4488 = vpack.c.b16 %v3584, %v3576
    %v4489 = vpack.c.b16 %v3593, %v3585
    %v4490 = vpack.c.b16 %v3594, %v3586
    %v4491 = vpack.c.b16 %v3595, %v3587
    %v4492 = vpack.c.b16 %v3596, %v3588
    %v4493 = vpack.c.b16 %v3597, %v3589
    %v4494 = vpack.c.b16 %v3598, %v3590
    %v4495 = vpack.c.b16 %v3599, %v3591
    %v4496 = vpack.c.b16 %v3600, %v3592
    %v4497 = vpack.c.b16 %v3609, %v3601
    %v4498 = vpack.c.b16 %v3610, %v3602
    %v4499 = vpack.c.b16 %v3611, %v3603
    %v4500 = vpack.c.b16 %v3612, %v3604
    %v4501 = vpack.c.b16 %v3613, %v3605
    %v4502 = vpack.c.b16 %v3614, %v3606
    %v4503 = vpack.c.b16 %v3615, %v3607
    %v4504 = vpack.c.b16 %v3616, %v3608
    %v4505 = vpack.c.b16 %v3625, %v3617
    %v4506 = vpack.c.b16 %v3626, %v3618
    %v4507 = vpack.c.b16 %v3627, %v3619
    %v4508 = vpack.c.b16 %v3628, %v3620
    %v4509 = vpack.c.b16 %v3629, %v3621
    %v4510 = vpack.c.b16 %v3630, %v3622
    %v4511 = vpack.c.b16 %v3631, %v3623
    %v4512 = vpack.c.b16 %v3632, %v3624
    %v4513 = vpack.c.b16 %v3641, %v3633
    %v4514 = vpack.c.b16 %v3642, %v3634
    %v4515 = vpack.c.b16 %v3643, %v3635
    %v4516 = vpack.c.b16 %v3644, %v3636
    %v4517 = vpack.c.b16 %v3645, %v3637
    %v4518 = vpack.c.b16 %v3646, %v3638
    %v4519 = vpack.c.b16 %v3647, %v3639
    %v4520 = vpack.c.b16 %v3648, %v3640
    %v4521 = vpack.c.b16 %v3657, %v3649
    %v4522 = vpack.c.b16 %v3658, %v3650
    %v4523 = vpack.c.b16 %v3659, %v3651
    %v4524 = vpack.c.b16 %v3660, %v3652
    %v4525 = vpack.c.b16 %v3661, %v3653
    %v4526 = vpack.c.b16 %v3662, %v3654
    %v4527 = vpack.c.b16 %v3663, %v3655
    %v4528 = vpack.c.b16 %v3664, %v3656
    %v4529 = vpack.c.b16 %v3673, %v3665
    %v4530 = vpack.c.b16 %v3674, %v3666
    %v4531 = vpack.c.b16 %v3675, %v3667
    %v4532 = vpack.c.b16 %v3676, %v3668
    %v4533 = vpack.c.b16 %v3677, %v3669
    %v4534 = vpack.c.b16 %v3678, %v3670
    %v4535 = vpack.c.b16 %v3679, %v3671
    %v4536 = vpack.c.b16 %v3680, %v3672
    %v4537 = vpack.c.b16 %v3689, %v3681
    %v4538 = vpack.c.b16 %v3690, %v3682
    %v4539 = vpack.c.b16 %v3691, %v3683
    %v4540 = vpack.c.b16 %v3692, %v3684
    %v4541 = vpack.c.b16 %v3693, %v3685
    %v4542 = vpack.c.b16 %v3694, %v3686
    %v4543 = vpack.c.b16 %v3695, %v3687
    %v4544 = vpack.c.b16 %v3696, %v3688
    %v4545 = vpack.c.b16 %v3705, %v3697
    %v4546 = vpack.c.b16 %v3706, %v3698
    %v4547 = vpack.c.b16 %v3707, %v3699
    %v4548 = vpack.c.b16 %v3708, %v3700
    %v4549 = vpack.c.b16 %v3709, %v3701
    %v4550 = vpack.c.b16 %v3710, %v3702
    %v4551 = vpack.c.b16 %v3711, %v3703
    %v4552 = vpack.c.b16 %v3712, %v3704
    %v4553 = vpack.c.b16 %v3721, %v3713
    %v4554 = vpack.c.b16 %v3722, %v3714
    %v4555 = vpack.c.b16 %v3723, %v3715
    %v4556 = vpack.c.b16 %v3724, %v3716
    %v4557 = vpack.c.b16 %v3725, %v3717
    %v4558 = vpack.c.b16 %v3726, %v3718
    %v4559 = vpack.c.b16 %v3727, %v3719
    %v4560 = vpack.c.b16 %v3728, %v3720
    %v4561 = vpack.c.b16 %v3737, %v3729
    %v4562 = vpack.c.b16 %v3738, %v3730
    %v4563 = vpack.c.b16 %v3739, %v3731
    %v4564 = vpack.c.b16 %v3740, %v3732
    %v4565 = vpack.c.b16 %v3741, %v3733
    %v4566 = vpack.c.b16 %v3742, %v3734
    %v4567 = vpack.c.b16 %v3743, %v3735
    %v4568 = vpack.c.b16 %v3744, %v3736
    %v4569 = vpack.c.b16 %v3753, %v3745
    %v4570 = vpack.c.b16 %v3754, %v3746
    %v4571 = vpack.c.b16 %v3755, %v3747
    %v4572 = vpack.c.b16 %v3756, %v3748
    %v4573 = vpack.c.b16 %v3757, %v3749
    %v4574 = vpack.c.b16 %v3758, %v3750
    %v4575 = vpack.c.b16 %v3759, %v3751
    %v4576 = vpack.c.b16 %v3760, %v3752
    %v4577 = vpack.c.b16 %v3769, %v3761
    %v4578 = vpack.c.b16 %v3770, %v3762
    %v4579 = vpack.c.b16 %v3771, %v3763
    %v4580 = vpack.c.b16 %v3772, %v3764
    %v4581 = vpack.c.b16 %v3773, %v3765
    %v4582 = vpack.c.b16 %v3774, %v3766
    %v4583 = vpack.c.b16 %v3775, %v3767
    %v4584 = vpack.c.b16 %v3776, %v3768
    %v4585 = vpack.c.b16 %v3785, %v3777
    %v4586 = vpack.c.b16 %v3786, %v3778
    %v4587 = vpack.c.b16 %v3787, %v3779
    %v4588 = vpack.c.b16 %v3788, %v3780
    %v4589 = vpack.c.b16 %v3789, %v3781
    %v4590 = vpack.c.b16 %v3790, %v3782
    %v4591 = vpack.c.b16 %v3791, %v3783
    %v4592 = vpack.c.b16 %v3792, %v3784
    %v4593 = vpack.c.b16 %v3801, %v3793
    %v4594 = vpack.c.b16 %v3802, %v3794
    %v4595 = vpack.c.b16 %v3803, %v3795
    %v4596 = vpack.c.b16 %v3804, %v3796
    %v4597 = vpack.c.b16 %v3805, %v3797
    %v4598 = vpack.c.b16 %v3806, %v3798
    %v4599 = vpack.c.b16 %v3807, %v3799
    %v4600 = vpack.c.b16 %v3808, %v3800
    %v4601 = vpack.c.b16 %v3817, %v3809
    %v4602 = vpack.c.b16 %v3818, %v3810
    %v4603 = vpack.c.b16 %v3819, %v3811
    %v4604 = vpack.c.b16 %v3820, %v3812
    %v4605 = vpack.c.b16 %v3821, %v3813
    %v4606 = vpack.c.b16 %v3822, %v3814
    %v4607 = vpack.c.b16 %v3823, %v3815
    %v4608 = vpack.c.b16 %v3824, %v3816
    %v4609 = vpack.c.b16 %v3833, %v3825
    %v4610 = vpack.c.b16 %v3834, %v3826
    %v4611 = vpack.c.b16 %v3835, %v3827
    %v4612 = vpack.c.b16 %v3836, %v3828
    %v4613 = vpack.c.b16 %v3837, %v3829
    %v4614 = vpack.c.b16 %v3838, %v3830
    %v4615 = vpack.c.b16 %v3839, %v3831
    %v4616 = vpack.c.b16 %v3840, %v3832
    %v4617 = vpack.c.b16 %v3849, %v3841
    %v4618 = vpack.c.b16 %v3850, %v3842
    %v4619 = vpack.c.b16 %v3851, %v3843
    %v4620 = vpack.c.b16 %v3852, %v3844
    %v4621 = vpack.c.b16 %v3853, %v3845
    %v4622 = vpack.c.b16 %v3854, %v3846
    %v4623 = vpack.c.b16 %v3855, %v3847
    %v4624 = vpack.c.b16 %v3856, %v3848
    %v4625 = vpack.c.b16 %v3865, %v3857
    %v4626 = vpack.c.b16 %v3866, %v3858
    %v4627 = vpack.c.b16 %v3867, %v3859
    %v4628 = vpack.c.b16 %v3868, %v3860
    %v4629 = vpack.c.b16 %v3869, %v3861
    %v4630 = vpack.c.b16 %v3870, %v3862
    %v4631 = vpack.c.b16 %v3871, %v3863
    %v4632 = vpack.c.b16 %v3872, %v3864
    %v4633 = vpack.c.b16 %v3881, %v3873
    %v4634 = vpack.c.b16 %v3882, %v3874
    %v4635 = vpack.c.b16 %v3883, %v3875
    %v4636 = vpack.c.b16 %v3884, %v3876
    %v4637 = vpack.c.b16 %v3885, %v3877
    %v4638 = vpack.c.b16 %v3886, %v3878
    %v4639 = vpack.c.b16 %v3887, %v3879
    %v4640 = vpack.c.b16 %v3888, %v3880
    %v4641 = vpack.c.b16 %v3897, %v3889
    %v4642 = vpack.c.b16 %v3898, %v3890
    %v4643 = vpack.c.b16 %v3899, %v3891
    %v4644 = vpack.c.b16 %v3900, %v3892
    %v4645 = vpack.c.b16 %v3901, %v3893
    %v4646 = vpack.c.b16 %v3902, %v3894
    %v4647 = vpack.c.b16 %v3903, %v3895
    %v4648 = vpack.c.b16 %v3904, %v3896
    %v4649 = vpack.c.b16 %v3913, %v3905
    %v4650 = vpack.c.b16 %v3914, %v3906
    %v4651 = vpack.c.b16 %v3915, %v3907
    %v4652 = vpack.c.b16 %v3916, %v3908
    %v4653 = vpack.c.b16 %v3917, %v3909
    %v4654 = vpack.c.b16 %v3918, %v3910
    %v4655 = vpack.c.b16 %v3919, %v3911
    %v4656 = vpack.c.b16 %v3920, %v3912
    %v4657 = vpack.c.b16 %v3929, %v3921
    %v4658 = vpack.c.b16 %v3930, %v3922
    %v4659 = vpack.c.b16 %v3931, %v3923
    %v4660 = vpack.c.b16 %v3932, %v3924
    %v4661 = vpack.c.b16 %v3933, %v3925
    %v4662 = vpack.c.b16 %v3934, %v3926
    %v4663 = vpack.c.b16 %v3935, %v3927
    %v4664 = vpack.c.b16 %v3936, %v3928
    %v4665 = vpack.c.b16 %v3945, %v3937
    %v4666 = vpack.c.b16 %v3946, %v3938
    %v4667 = vpack.c.b16 %v3947, %v3939
    %v4668 = vpack.c.b16 %v3948, %v3940
    %v4669 = vpack.c.b16 %v3949, %v3941
    %v4670 = vpack.c.b16 %v3950, %v3942
    %v4671 = vpack.c.b16 %v3951, %v3943
    %v4672 = vpack.c.b16 %v3952, %v3944
    %v4673 = vpack.c.b16 %v3961, %v3953
    %v4674 = vpack.c.b16 %v3962, %v3954
    %v4675 = vpack.c.b16 %v3963, %v3955
    %v4676 = vpack.c.b16 %v3964, %v3956
    %v4677 = vpack.c.b16 %v3965, %v3957
    %v4678 = vpack.c.b16 %v3966, %v3958
    %v4679 = vpack.c.b16 %v3967, %v3959
    %v4680 = vpack.c.b16 %v3968, %v3960
    %v4681 = vpack.c.b16 %v3977, %v3969
    %v4682 = vpack.c.b16 %v3978, %v3970
    %v4683 = vpack.c.b16 %v3979, %v3971
    %v4684 = vpack.c.b16 %v3980, %v3972
    %v4685 = vpack.c.b16 %v3981, %v3973
    %v4686 = vpack.c.b16 %v3982, %v3974
    %v4687 = vpack.c.b16 %v3983, %v3975
    %v4688 = vpack.c.b16 %v3984, %v3976
    %v4689 = vpack.c.b16 %v3993, %v3985
    %v4690 = vpack.c.b16 %v3994, %v3986
    %v4691 = vpack.c.b16 %v3995, %v3987
    %v4692 = vpack.c.b16 %v3996, %v3988
    %v4693 = vpack.c.b16 %v3997, %v3989
    %v4694 = vpack.c.b16 %v3998, %v3990
    %v4695 = vpack.c.b16 %v3999, %v3991
    %v4696 = vpack.c.b16 %v4000, %v3992
    %v4697 = vpack.c.b16 %v4009, %v4001
    %v4698 = vpack.c.b16 %v4010, %v4002
    %v4699 = vpack.c.b16 %v4011, %v4003
    %v4700 = vpack.c.b16 %v4012, %v4004
    %v4701 = vpack.c.b16 %v4013, %v4005
    %v4702 = vpack.c.b16 %v4014, %v4006
    %v4703 = vpack.c.b16 %v4015, %v4007
    %v4704 = vpack.c.b16 %v4016, %v4008
    %v4705 = vpack.c.b16 %v4025, %v4017
    %v4706 = vpack.c.b16 %v4026, %v4018
    %v4707 = vpack.c.b16 %v4027, %v4019
    %v4708 = vpack.c.b16 %v4028, %v4020
    %v4709 = vpack.c.b16 %v4029, %v4021
    %v4710 = vpack.c.b16 %v4030, %v4022
    %v4711 = vpack.c.b16 %v4031, %v4023
    %v4712 = vpack.c.b16 %v4032, %v4024
    %v4713 = vpack.c.b16 %v4041, %v4033
    %v4714 = vpack.c.b16 %v4042, %v4034
    %v4715 = vpack.c.b16 %v4043, %v4035
    %v4716 = vpack.c.b16 %v4044, %v4036
    %v4717 = vpack.c.b16 %v4045, %v4037
    %v4718 = vpack.c.b16 %v4046, %v4038
    %v4719 = vpack.c.b16 %v4047, %v4039
    %v4720 = vpack.c.b16 %v4048, %v4040
    %v4721 = vpack.c.b16 %v4057, %v4049
    %v4722 = vpack.c.b16 %v4058, %v4050
    %v4723 = vpack.c.b16 %v4059, %v4051
    %v4724 = vpack.c.b16 %v4060, %v4052
    %v4725 = vpack.c.b16 %v4061, %v4053
    %v4726 = vpack.c.b16 %v4062, %v4054
    %v4727 = vpack.c.b16 %v4063, %v4055
    %v4728 = vpack.c.b16 %v4064, %v4056
    %v4729 = vpack.c.b16 %v4073, %v4065
    %v4730 = vpack.c.b16 %v4074, %v4066
    %v4731 = vpack.c.b16 %v4075, %v4067
    %v4732 = vpack.c.b16 %v4076, %v4068
    %v4733 = vpack.c.b16 %v4077, %v4069
    %v4734 = vpack.c.b16 %v4078, %v4070
    %v4735 = vpack.c.b16 %v4079, %v4071
    %v4736 = vpack.c.b16 %v4080, %v4072
    %v4737 = vpack.c.b16 %v4089, %v4081
    %v4738 = vpack.c.b16 %v4090, %v4082
    %v4739 = vpack.c.b16 %v4091, %v4083
    %v4740 = vpack.c.b16 %v4092, %v4084
    %v4741 = vpack.c.b16 %v4093, %v4085
    %v4742 = vpack.c.b16 %v4094, %v4086
    %v4743 = vpack.c.b16 %v4095, %v4087
    %v4744 = vpack.c.b16 %v4096, %v4088
    %v4745 = vpack.c.b16 %v4105, %v4097
    %v4746 = vpack.c.b16 %v4106, %v4098
    %v4747 = vpack.c.b16 %v4107, %v4099
    %v4748 = vpack.c.b16 %v4108, %v4100
    %v4749 = vpack.c.b16 %v4109, %v4101
    %v4750 = vpack.c.b16 %v4110, %v4102
    %v4751 = vpack.c.b16 %v4111, %v4103
    %v4752 = vpack.c.b16 %v4112, %v4104
    %v4753 = vpack.c.b16 %v4121, %v4113
    %v4754 = vpack.c.b16 %v4122, %v4114
    %v4755 = vpack.c.b16 %v4123, %v4115
    %v4756 = vpack.c.b16 %v4124, %v4116
    %v4757 = vpack.c.b16 %v4125, %v4117
    %v4758 = vpack.c.b16 %v4126, %v4118
    %v4759 = vpack.c.b16 %v4127, %v4119
    %v4760 = vpack.c.b16 %v4128, %v4120
    %v4761 = vpack.c.b16 %v4137, %v4129
    %v4762 = vpack.c.b16 %v4138, %v4130
    %v4763 = vpack.c.b16 %v4139, %v4131
    %v4764 = vpack.c.b16 %v4140, %v4132
    %v4765 = vpack.c.b16 %v4141, %v4133
    %v4766 = vpack.c.b16 %v4142, %v4134
    %v4767 = vpack.c.b16 %v4143, %v4135
    %v4768 = vpack.c.b16 %v4144, %v4136
    %v4769 = vpack.c.b16 %v4153, %v4145
    %v4770 = vpack.c.b16 %v4154, %v4146
    %v4771 = vpack.c.b16 %v4155, %v4147
    %v4772 = vpack.c.b16 %v4156, %v4148
    %v4773 = vpack.c.b16 %v4157, %v4149
    %v4774 = vpack.c.b16 %v4158, %v4150
    %v4775 = vpack.c.b16 %v4159, %v4151
    %v4776 = vpack.c.b16 %v4160, %v4152
    %v4777 = vpack.c.b16 %v4169, %v4161
    %v4778 = vpack.c.b16 %v4170, %v4162
    %v4779 = vpack.c.b16 %v4171, %v4163
    %v4780 = vpack.c.b16 %v4172, %v4164
    %v4781 = vpack.c.b16 %v4173, %v4165
    %v4782 = vpack.c.b16 %v4174, %v4166
    %v4783 = vpack.c.b16 %v4175, %v4167
    %v4784 = vpack.c.b16 %v4176, %v4168
    %v4785 = vpack.c.b16 %v4185, %v4177
    %v4786 = vpack.c.b16 %v4186, %v4178
    %v4787 = vpack.c.b16 %v4187, %v4179
    %v4788 = vpack.c.b16 %v4188, %v4180
    %v4789 = vpack.c.b16 %v4189, %v4181
    %v4790 = vpack.c.b16 %v4190, %v4182
    %v4791 = vpack.c.b16 %v4191, %v4183
    %v4792 = vpack.c.b16 %v4192, %v4184
    %v4793 = vpack.c.b16 %v4201, %v4193
    %v4794 = vpack.c.b16 %v4202, %v4194
    %v4795 = vpack.c.b16 %v4203, %v4195
    %v4796 = vpack.c.b16 %v4204, %v4196
    %v4797 = vpack.c.b16 %v4205, %v4197
    %v4798 = vpack.c.b16 %v4206, %v4198
    %v4799 = vpack.c.b16 %v4207, %v4199
    %v4800 = vpack.c.b16 %v4208, %v4200
    %v4801 = vpack.c.b16 %v4217, %v4209
    %v4802 = vpack.c.b16 %v4218, %v4210
    %v4803 = vpack.c.b16 %v4219, %v4211
    %v4804 = vpack.c.b16 %v4220, %v4212
    %v4805 = vpack.c.b16 %v4221, %v4213
    %v4806 = vpack.c.b16 %v4222, %v4214
    %v4807 = vpack.c.b16 %v4223, %v4215
    %v4808 = vpack.c.b16 %v4224, %v4216
    %v4809 = vpack.c.b16 %v4233, %v4225
    %v4810 = vpack.c.b16 %v4234, %v4226
    %v4811 = vpack.c.b16 %v4235, %v4227
    %v4812 = vpack.c.b16 %v4236, %v4228
    %v4813 = vpack.c.b16 %v4237, %v4229
    %v4814 = vpack.c.b16 %v4238, %v4230
    %v4815 = vpack.c.b16 %v4239, %v4231
    %v4816 = vpack.c.b16 %v4240, %v4232
    %v4817 = vpack.c.b16 %v4249, %v4241
    %v4818 = vpack.c.b16 %v4250, %v4242
    %v4819 = vpack.c.b16 %v4251, %v4243
    %v4820 = vpack.c.b16 %v4252, %v4244
    %v4821 = vpack.c.b16 %v4253, %v4245
    %v4822 = vpack.c.b16 %v4254, %v4246
    %v4823 = vpack.c.b16 %v4255, %v4247
    %v4824 = vpack.c.b16 %v4256, %v4248
    %v4825 = vpack.c.b16 %v4265, %v4257
    %v4826 = vpack.c.b16 %v4266, %v4258
    %v4827 = vpack.c.b16 %v4267, %v4259
    %v4828 = vpack.c.b16 %v4268, %v4260
    %v4829 = vpack.c.b16 %v4269, %v4261
    %v4830 = vpack.c.b16 %v4270, %v4262
    %v4831 = vpack.c.b16 %v4271, %v4263
    %v4832 = vpack.c.b16 %v4272, %v4264
    %v4833 = vpack.c.b16 %v4281, %v4273
    %v4834 = vpack.c.b16 %v4282, %v4274
    %v4835 = vpack.c.b16 %v4283, %v4275
    %v4836 = vpack.c.b16 %v4284, %v4276
    %v4837 = vpack.c.b16 %v4285, %v4277
    %v4838 = vpack.c.b16 %v4286, %v4278
    %v4839 = vpack.c.b16 %v4287, %v4279
    %v4840 = vpack.c.b16 %v4288, %v4280
    %v4841 = vpack.c.b16 %v4297, %v4289
    %v4842 = vpack.c.b16 %v4298, %v4290
    %v4843 = vpack.c.b16 %v4299, %v4291
    %v4844 = vpack.c.b16 %v4300, %v4292
    %v4845 = vpack.c.b16 %v4301, %v4293
    %v4846 = vpack.c.b16 %v4302, %v4294
    %v4847 = vpack.c.b16 %v4303, %v4295
    %v4848 = vpack.c.b16 %v4304, %v4296
    %v4849 = vpack.c.b16 %v4313, %v4305
    %v4850 = vpack.c.b16 %v4314, %v4306
    %v4851 = vpack.c.b16 %v4315, %v4307
    %v4852 = vpack.c.b16 %v4316, %v4308
    %v4853 = vpack.c.b16 %v4317, %v4309
    %v4854 = vpack.c.b16 %v4318, %v4310
    %v4855 = vpack.c.b16 %v4319, %v4311
    %v4856 = vpack.c.b16 %v4320, %v4312
    %v4857 = vpack.c.b16 %v4329, %v4321
    %v4858 = vpack.c.b16 %v4330, %v4322
    %v4859 = vpack.c.b16 %v4331, %v4323
    %v4860 = vpack.c.b16 %v4332, %v4324
    %v4861 = vpack.c.b16 %v4333, %v4325
    %v4862 = vpack.c.b16 %v4334, %v4326
    %v4863 = vpack.c.b16 %v4335, %v4327
    %v4864 = vpack.c.b16 %v4336, %v4328
    %v4865 = vpack.c.b16 %v4345, %v4337
    %v4866 = vpack.c.b16 %v4346, %v4338
    %v4867 = vpack.c.b16 %v4347, %v4339
    %v4868 = vpack.c.b16 %v4348, %v4340
    %v4869 = vpack.c.b16 %v4349, %v4341
    %v4870 = vpack.c.b16 %v4350, %v4342
    %v4871 = vpack.c.b16 %v4351, %v4343
    %v4872 = vpack.c.b16 %v4352, %v4344
    %v4873 = vpack.c.b16 %v4361, %v4353
    %v4874 = vpack.c.b16 %v4362, %v4354
    %v4875 = vpack.c.b16 %v4363, %v4355
    %v4876 = vpack.c.b16 %v4364, %v4356
    %v4877 = vpack.c.b16 %v4365, %v4357
    %v4878 = vpack.c.b16 %v4366, %v4358
    %v4879 = vpack.c.b16 %v4367, %v4359
    %v4880 = vpack.c.b16 %v4368, %v4360
    %5393 = vmatpush.bf16.msra.mxu0 %v4425
    %5394 = vmatpush.bf16.msra.mxu0 %v4417
    %5395 = vmatpush.bf16.msra.mxu0 %v4409
    %5396 = vmatpush.bf16.msra.mxu0 %v4401
    %5397 = vmatpush.bf16.msra.mxu0 %v4393
    %5398 = vmatpush.bf16.msra.mxu0 %v4385
    %5399 = vmatpush.bf16.msra.mxu0 %v4377
    %5400 = vmatpush.bf16.msra.mxu0 %v4369
    %5401 = vmatmul.bf16.gmra.mxu0 %v2808
    %v5402 = vpop.f32.mrf.mxu0
    %v5403 = vadd.f32 %v2817, %v5402
    %v5404 = vpop.f32.mrf.mxu0
    %5405 = vdwg.mxu0
    %5406 = vmatpush.bf16.msra.mxu0 %v4489
    %5407 = vmatpush.bf16.msra.mxu0 %v4481
    %5408 = vmatpush.bf16.msra.mxu0 %v4473
    %5409 = vmatpush.bf16.msra.mxu0 %v4465
    %5410 = vmatpush.bf16.msra.mxu0 %v4457
    %5411 = vmatpush.bf16.msra.mxu0 %v4449
    %5412 = vmatpush.bf16.msra.mxu0 %v4441
    %5413 = vmatpush.bf16.msra.mxu0 %v4433
    %5414 = vmatmul.bf16.gmra.mxu0 %v2809
    %v5415 = vpop.f32.mrf.mxu0
    %v5416 = vadd.f32 %v5403, %v5415
    %v5417 = vpop.f32.mrf.mxu0
    %5418 = vdwg.mxu0
    %5419 = vmatpush.bf16.msra.mxu0 %v4553
    %5420 = vmatpush.bf16.msra.mxu0 %v4545
    %5421 = vmatpush.bf16.msra.mxu0 %v4537
    %5422 = vmatpush.bf16.msra.mxu0 %v4529
    %5423 = vmatpush.bf16.msra.mxu0 %v4521
    %5424 = vmatpush.bf16.msra.mxu0 %v4513
    %5425 = vmatpush.bf16.msra.mxu0 %v4505
    %5426 = vmatpush.bf16.msra.mxu0 %v4497
    %5427 = vmatmul.bf16.gmra.mxu0 %v2810
    %v5428 = vpop.f32.mrf.mxu0
    %v5429 = vadd.f32 %v5416, %v5428
    %v5430 = vpop.f32.mrf.mxu0
    %5431 = vdwg.mxu0
    %5432 = vmatpush.bf16.msra.mxu0 %v4617
    %5433 = vmatpush.bf16.msra.mxu0 %v4609
    %5434 = vmatpush.bf16.msra.mxu0 %v4601
    %5435 = vmatpush.bf16.msra.mxu0 %v4593
    %5436 = vmatpush.bf16.msra.mxu0 %v4585
    %5437 = vmatpush.bf16.msra.mxu0 %v4577
    %5438 = vmatpush.bf16.msra.mxu0 %v4569
    %5439 = vmatpush.bf16.msra.mxu0 %v4561
    %5440 = vmatmul.bf16.gmra.mxu0 %v2811
    %v5441 = vpop.f32.mrf.mxu0
    %v5442 = vadd.f32 %v5429, %v5441
    %v5443 = vpop.f32.mrf.mxu0
    %5444 = vdwg.mxu0
    %5445 = vmatpush.bf16.msra.mxu0 %v4681
    %5446 = vmatpush.bf16.msra.mxu0 %v4673
    %5447 = vmatpush.bf16.msra.mxu0 %v4665
    %5448 = vmatpush.bf16.msra.mxu0 %v4657
    %5449 = vmatpush.bf16.msra.mxu0 %v4649
    %5450 = vmatpush.bf16.msra.mxu0 %v4641
    %5451 = vmatpush.bf16.msra.mxu0 %v4633
    %5452 = vmatpush.bf16.msra.mxu0 %v4625
    %5453 = vmatmul.bf16.gmra.mxu0 %v2812
    %v5454 = vpop.f32.mrf.mxu0
    %v5455 = vadd.f32 %v5442, %v5454
    %v5456 = vpop.f32.mrf.mxu0
    %5457 = vdwg.mxu0
    %5458 = vmatpush.bf16.msra.mxu0 %v4745
    %5459 = vmatpush.bf16.msra.mxu0 %v4737
    %5460 = vmatpush.bf16.msra.mxu0 %v4729
    %5461 = vmatpush.bf16.msra.mxu0 %v4721
    %5462 = vmatpush.bf16.msra.mxu0 %v4713
    %5463 = vmatpush.bf16.msra.mxu0 %v4705
    %5464 = vmatpush.bf16.msra.mxu0 %v4697
    %5465 = vmatpush.bf16.msra.mxu0 %v4689
    %5466 = vmatmul.bf16.gmra.mxu0 %v2813
    %v5467 = vpop.f32.mrf.mxu0
    %v5468 = vadd.f32 %v5455, %v5467
    %v5469 = vpop.f32.mrf.mxu0
    %5470 = vdwg.mxu0
    %5471 = vmatpush.bf16.msra.mxu0 %v4809
    %5472 = vmatpush.bf16.msra.mxu0 %v4801
    %5473 = vmatpush.bf16.msra.mxu0 %v4793
    %5474 = vmatpush.bf16.msra.mxu0 %v4785
    %5475 = vmatpush.bf16.msra.mxu0 %v4777
    %5476 = vmatpush.bf16.msra.mxu0 %v4769
    %5477 = vmatpush.bf16.msra.mxu0 %v4761
    %5478 = vmatpush.bf16.msra.mxu0 %v4753
    %5479 = vmatmul.bf16.gmra.mxu0 %v2814
    %v5480 = vpop.f32.mrf.mxu0
    %v5481 = vadd.f32 %v5468, %v5480
    %v5482 = vpop.f32.mrf.mxu0
    %5483 = vdwg.mxu0
    %5484 = vmatpush.bf16.msra.mxu0 %v4873
    %5485 = vmatpush.bf16.msra.mxu0 %v4865
    %5486 = vmatpush.bf16.msra.mxu0 %v4857
    %5487 = vmatpush.bf16.msra.mxu0 %v4849
    %5488 = vmatpush.bf16.msra.mxu0 %v4841
    %5489 = vmatpush.bf16.msra.mxu0 %v4833
    %5490 = vmatpush.bf16.msra.mxu0 %v4825
    %5491 = vmatpush.bf16.msra.mxu0 %v4817
    %5492 = vmatmul.bf16.gmra.mxu0 %v2815
    %v5493 = vpop.f32.mrf.mxu0
    %v5494 = vadd.f32 %v5481, %v5493
    %v5495 = vpop.f32.mrf.mxu0
    %5496 = vdwg.mxu0
    %5497 = vmatpush.bf16.msra.mxu0 %v4426
    %5498 = vmatpush.bf16.msra.mxu0 %v4418
    %5499 = vmatpush.bf16.msra.mxu0 %v4410
    %5500 = vmatpush.bf16.msra.mxu0 %v4402
    %5501 = vmatpush.bf16.msra.mxu0 %v4394
    %5502 = vmatpush.bf16.msra.mxu0 %v4386
    %5503 = vmatpush.bf16.msra.mxu0 %v4378
    %5504 = vmatpush.bf16.msra.mxu0 %v4370
    %5505 = vmatmul.bf16.gmra.mxu0 %v2808
    %v5506 = vpop.f32.mrf.mxu0
    %v5507 = vadd.f32 %v2818, %v5506
    %v5508 = vpop.f32.mrf.mxu0
    %5509 = vdwg.mxu0
    %5510 = vmatpush.bf16.msra.mxu0 %v4490
    %5511 = vmatpush.bf16.msra.mxu0 %v4482
    %5512 = vmatpush.bf16.msra.mxu0 %v4474
    %5513 = vmatpush.bf16.msra.mxu0 %v4466
    %5514 = vmatpush.bf16.msra.mxu0 %v4458
    %5515 = vmatpush.bf16.msra.mxu0 %v4450
    %5516 = vmatpush.bf16.msra.mxu0 %v4442
    %5517 = vmatpush.bf16.msra.mxu0 %v4434
    %5518 = vmatmul.bf16.gmra.mxu0 %v2809
    %v5519 = vpop.f32.mrf.mxu0
    %v5520 = vadd.f32 %v5507, %v5519
    %v5521 = vpop.f32.mrf.mxu0
    %5522 = vdwg.mxu0
    %5523 = vmatpush.bf16.msra.mxu0 %v4554
    %5524 = vmatpush.bf16.msra.mxu0 %v4546
    %5525 = vmatpush.bf16.msra.mxu0 %v4538
    %5526 = vmatpush.bf16.msra.mxu0 %v4530
    %5527 = vmatpush.bf16.msra.mxu0 %v4522
    %5528 = vmatpush.bf16.msra.mxu0 %v4514
    %5529 = vmatpush.bf16.msra.mxu0 %v4506
    %5530 = vmatpush.bf16.msra.mxu0 %v4498
    %5531 = vmatmul.bf16.gmra.mxu0 %v2810
    %v5532 = vpop.f32.mrf.mxu0
    %v5533 = vadd.f32 %v5520, %v5532
    %v5534 = vpop.f32.mrf.mxu0
    %5535 = vdwg.mxu0
    %5536 = vmatpush.bf16.msra.mxu0 %v4618
    %5537 = vmatpush.bf16.msra.mxu0 %v4610
    %5538 = vmatpush.bf16.msra.mxu0 %v4602
    %5539 = vmatpush.bf16.msra.mxu0 %v4594
    %5540 = vmatpush.bf16.msra.mxu0 %v4586
    %5541 = vmatpush.bf16.msra.mxu0 %v4578
    %5542 = vmatpush.bf16.msra.mxu0 %v4570
    %5543 = vmatpush.bf16.msra.mxu0 %v4562
    %5544 = vmatmul.bf16.gmra.mxu0 %v2811
    %v5545 = vpop.f32.mrf.mxu0
    %v5546 = vadd.f32 %v5533, %v5545
    %v5547 = vpop.f32.mrf.mxu0
    %5548 = vdwg.mxu0
    %5549 = vmatpush.bf16.msra.mxu0 %v4682
    %5550 = vmatpush.bf16.msra.mxu0 %v4674
    %5551 = vmatpush.bf16.msra.mxu0 %v4666
    %5552 = vmatpush.bf16.msra.mxu0 %v4658
    %5553 = vmatpush.bf16.msra.mxu0 %v4650
    %5554 = vmatpush.bf16.msra.mxu0 %v4642
    %5555 = vmatpush.bf16.msra.mxu0 %v4634
    %5556 = vmatpush.bf16.msra.mxu0 %v4626
    %5557 = vmatmul.bf16.gmra.mxu0 %v2812
    %v5558 = vpop.f32.mrf.mxu0
    %v5559 = vadd.f32 %v5546, %v5558
    %v5560 = vpop.f32.mrf.mxu0
    %5561 = vdwg.mxu0
    %5562 = vmatpush.bf16.msra.mxu0 %v4746
    %5563 = vmatpush.bf16.msra.mxu0 %v4738
    %5564 = vmatpush.bf16.msra.mxu0 %v4730
    %5565 = vmatpush.bf16.msra.mxu0 %v4722
    %5566 = vmatpush.bf16.msra.mxu0 %v4714
    %5567 = vmatpush.bf16.msra.mxu0 %v4706
    %5568 = vmatpush.bf16.msra.mxu0 %v4698
    %5569 = vmatpush.bf16.msra.mxu0 %v4690
    %5570 = vmatmul.bf16.gmra.mxu0 %v2813
    %v5571 = vpop.f32.mrf.mxu0
    %v5572 = vadd.f32 %v5559, %v5571
    %v5573 = vpop.f32.mrf.mxu0
    %5574 = vdwg.mxu0
    %5575 = vmatpush.bf16.msra.mxu0 %v4810
    %5576 = vmatpush.bf16.msra.mxu0 %v4802
    %5577 = vmatpush.bf16.msra.mxu0 %v4794
    %5578 = vmatpush.bf16.msra.mxu0 %v4786
    %5579 = vmatpush.bf16.msra.mxu0 %v4778
    %5580 = vmatpush.bf16.msra.mxu0 %v4770
    %5581 = vmatpush.bf16.msra.mxu0 %v4762
    %5582 = vmatpush.bf16.msra.mxu0 %v4754
    %5583 = vmatmul.bf16.gmra.mxu0 %v2814
    %v5584 = vpop.f32.mrf.mxu0
    %v5585 = vadd.f32 %v5572, %v5584
    %v5586 = vpop.f32.mrf.mxu0
    %5587 = vdwg.mxu0
    %5588 = vmatpush.bf16.msra.mxu0 %v4874
    %5589 = vmatpush.bf16.msra.mxu0 %v4866
    %5590 = vmatpush.bf16.msra.mxu0 %v4858
    %5591 = vmatpush.bf16.msra.mxu0 %v4850
    %5592 = vmatpush.bf16.msra.mxu0 %v4842
    %5593 = vmatpush.bf16.msra.mxu0 %v4834
    %5594 = vmatpush.bf16.msra.mxu0 %v4826
    %5595 = vmatpush.bf16.msra.mxu0 %v4818
    %5596 = vmatmul.bf16.gmra.mxu0 %v2815
    %v5597 = vpop.f32.mrf.mxu0
    %v5598 = vadd.f32 %v5585, %v5597
    %v5599 = vpop.f32.mrf.mxu0
    %5600 = vdwg.mxu0
    %5601 = vmatpush.bf16.msra.mxu0 %v4427
    %5602 = vmatpush.bf16.msra.mxu0 %v4419
    %5603 = vmatpush.bf16.msra.mxu0 %v4411
    %5604 = vmatpush.bf16.msra.mxu0 %v4403
    %5605 = vmatpush.bf16.msra.mxu0 %v4395
    %5606 = vmatpush.bf16.msra.mxu0 %v4387
    %5607 = vmatpush.bf16.msra.mxu0 %v4379
    %5608 = vmatpush.bf16.msra.mxu0 %v4371
    %5609 = vmatmul.bf16.gmra.mxu0 %v2808
    %v5610 = vpop.f32.mrf.mxu0
    %v5611 = vadd.f32 %v2819, %v5610
    %v5612 = vpop.f32.mrf.mxu0
    %5613 = vdwg.mxu0
    %5614 = vmatpush.bf16.msra.mxu0 %v4491
    %5615 = vmatpush.bf16.msra.mxu0 %v4483
    %5616 = vmatpush.bf16.msra.mxu0 %v4475
    %5617 = vmatpush.bf16.msra.mxu0 %v4467
    %5618 = vmatpush.bf16.msra.mxu0 %v4459
    %5619 = vmatpush.bf16.msra.mxu0 %v4451
    %5620 = vmatpush.bf16.msra.mxu0 %v4443
    %5621 = vmatpush.bf16.msra.mxu0 %v4435
    %5622 = vmatmul.bf16.gmra.mxu0 %v2809
    %v5623 = vpop.f32.mrf.mxu0
    %v5624 = vadd.f32 %v5611, %v5623
    %v5625 = vpop.f32.mrf.mxu0
    %5626 = vdwg.mxu0
    %5627 = vmatpush.bf16.msra.mxu0 %v4555
    %5628 = vmatpush.bf16.msra.mxu0 %v4547
    %5629 = vmatpush.bf16.msra.mxu0 %v4539
    %5630 = vmatpush.bf16.msra.mxu0 %v4531
    %5631 = vmatpush.bf16.msra.mxu0 %v4523
    %5632 = vmatpush.bf16.msra.mxu0 %v4515
    %5633 = vmatpush.bf16.msra.mxu0 %v4507
    %5634 = vmatpush.bf16.msra.mxu0 %v4499
    %5635 = vmatmul.bf16.gmra.mxu0 %v2810
    %v5636 = vpop.f32.mrf.mxu0
    %v5637 = vadd.f32 %v5624, %v5636
    %v5638 = vpop.f32.mrf.mxu0
    %5639 = vdwg.mxu0
    %5640 = vmatpush.bf16.msra.mxu0 %v4619
    %5641 = vmatpush.bf16.msra.mxu0 %v4611
    %5642 = vmatpush.bf16.msra.mxu0 %v4603
    %5643 = vmatpush.bf16.msra.mxu0 %v4595
    %5644 = vmatpush.bf16.msra.mxu0 %v4587
    %5645 = vmatpush.bf16.msra.mxu0 %v4579
    %5646 = vmatpush.bf16.msra.mxu0 %v4571
    %5647 = vmatpush.bf16.msra.mxu0 %v4563
    %5648 = vmatmul.bf16.gmra.mxu0 %v2811
    %v5649 = vpop.f32.mrf.mxu0
    %v5650 = vadd.f32 %v5637, %v5649
    %v5651 = vpop.f32.mrf.mxu0
    %5652 = vdwg.mxu0
    %5653 = vmatpush.bf16.msra.mxu0 %v4683
    %5654 = vmatpush.bf16.msra.mxu0 %v4675
    %5655 = vmatpush.bf16.msra.mxu0 %v4667
    %5656 = vmatpush.bf16.msra.mxu0 %v4659
    %5657 = vmatpush.bf16.msra.mxu0 %v4651
    %5658 = vmatpush.bf16.msra.mxu0 %v4643
    %5659 = vmatpush.bf16.msra.mxu0 %v4635
    %5660 = vmatpush.bf16.msra.mxu0 %v4627
    %5661 = vmatmul.bf16.gmra.mxu0 %v2812
    %v5662 = vpop.f32.mrf.mxu0
    %v5663 = vadd.f32 %v5650, %v5662
    %v5664 = vpop.f32.mrf.mxu0
    %5665 = vdwg.mxu0
    %5666 = vmatpush.bf16.msra.mxu0 %v4747
    %5667 = vmatpush.bf16.msra.mxu0 %v4739
    %5668 = vmatpush.bf16.msra.mxu0 %v4731
    %5669 = vmatpush.bf16.msra.mxu0 %v4723
    %5670 = vmatpush.bf16.msra.mxu0 %v4715
    %5671 = vmatpush.bf16.msra.mxu0 %v4707
    %5672 = vmatpush.bf16.msra.mxu0 %v4699
    %5673 = vmatpush.bf16.msra.mxu0 %v4691
    %5674 = vmatmul.bf16.gmra.mxu0 %v2813
    %v5675 = vpop.f32.mrf.mxu0
    %v5676 = vadd.f32 %v5663, %v5675
    %v5677 = vpop.f32.mrf.mxu0
    %5678 = vdwg.mxu0
    %5679 = vmatpush.bf16.msra.mxu0 %v4811
    %5680 = vmatpush.bf16.msra.mxu0 %v4803
    %5681 = vmatpush.bf16.msra.mxu0 %v4795
    %5682 = vmatpush.bf16.msra.mxu0 %v4787
    %5683 = vmatpush.bf16.msra.mxu0 %v4779
    %5684 = vmatpush.bf16.msra.mxu0 %v4771
    %5685 = vmatpush.bf16.msra.mxu0 %v4763
    %5686 = vmatpush.bf16.msra.mxu0 %v4755
    %5687 = vmatmul.bf16.gmra.mxu0 %v2814
    %v5688 = vpop.f32.mrf.mxu0
    %v5689 = vadd.f32 %v5676, %v5688
    %v5690 = vpop.f32.mrf.mxu0
    %5691 = vdwg.mxu0
    %5692 = vmatpush.bf16.msra.mxu0 %v4875
    %5693 = vmatpush.bf16.msra.mxu0 %v4867
    %5694 = vmatpush.bf16.msra.mxu0 %v4859
    %5695 = vmatpush.bf16.msra.mxu0 %v4851
    %5696 = vmatpush.bf16.msra.mxu0 %v4843
    %5697 = vmatpush.bf16.msra.mxu0 %v4835
    %5698 = vmatpush.bf16.msra.mxu0 %v4827
    %5699 = vmatpush.bf16.msra.mxu0 %v4819
    %5700 = vmatmul.bf16.gmra.mxu0 %v2815
    %v5701 = vpop.f32.mrf.mxu0
    %v5702 = vadd.f32 %v5689, %v5701
    %v5703 = vpop.f32.mrf.mxu0
    %5704 = vdwg.mxu0
    %5705 = vmatpush.bf16.msra.mxu0 %v4428
    %5706 = vmatpush.bf16.msra.mxu0 %v4420
    %5707 = vmatpush.bf16.msra.mxu0 %v4412
    %5708 = vmatpush.bf16.msra.mxu0 %v4404
    %5709 = vmatpush.bf16.msra.mxu0 %v4396
    %5710 = vmatpush.bf16.msra.mxu0 %v4388
    %5711 = vmatpush.bf16.msra.mxu0 %v4380
    %5712 = vmatpush.bf16.msra.mxu0 %v4372
    %5713 = vmatmul.bf16.gmra.mxu0 %v2808
    %v5714 = vpop.f32.mrf.mxu0
    %v5715 = vadd.f32 %v2820, %v5714
    %v5716 = vpop.f32.mrf.mxu0
    %5717 = vdwg.mxu0
    %5718 = vmatpush.bf16.msra.mxu0 %v4492
    %5719 = vmatpush.bf16.msra.mxu0 %v4484
    %5720 = vmatpush.bf16.msra.mxu0 %v4476
    %5721 = vmatpush.bf16.msra.mxu0 %v4468
    %5722 = vmatpush.bf16.msra.mxu0 %v4460
    %5723 = vmatpush.bf16.msra.mxu0 %v4452
    %5724 = vmatpush.bf16.msra.mxu0 %v4444
    %5725 = vmatpush.bf16.msra.mxu0 %v4436
    %5726 = vmatmul.bf16.gmra.mxu0 %v2809
    %v5727 = vpop.f32.mrf.mxu0
    %v5728 = vadd.f32 %v5715, %v5727
    %v5729 = vpop.f32.mrf.mxu0
    %5730 = vdwg.mxu0
    %5731 = vmatpush.bf16.msra.mxu0 %v4556
    %5732 = vmatpush.bf16.msra.mxu0 %v4548
    %5733 = vmatpush.bf16.msra.mxu0 %v4540
    %5734 = vmatpush.bf16.msra.mxu0 %v4532
    %5735 = vmatpush.bf16.msra.mxu0 %v4524
    %5736 = vmatpush.bf16.msra.mxu0 %v4516
    %5737 = vmatpush.bf16.msra.mxu0 %v4508
    %5738 = vmatpush.bf16.msra.mxu0 %v4500
    %5739 = vmatmul.bf16.gmra.mxu0 %v2810
    %v5740 = vpop.f32.mrf.mxu0
    %v5741 = vadd.f32 %v5728, %v5740
    %v5742 = vpop.f32.mrf.mxu0
    %5743 = vdwg.mxu0
    %5744 = vmatpush.bf16.msra.mxu0 %v4620
    %5745 = vmatpush.bf16.msra.mxu0 %v4612
    %5746 = vmatpush.bf16.msra.mxu0 %v4604
    %5747 = vmatpush.bf16.msra.mxu0 %v4596
    %5748 = vmatpush.bf16.msra.mxu0 %v4588
    %5749 = vmatpush.bf16.msra.mxu0 %v4580
    %5750 = vmatpush.bf16.msra.mxu0 %v4572
    %5751 = vmatpush.bf16.msra.mxu0 %v4564
    %5752 = vmatmul.bf16.gmra.mxu0 %v2811
    %v5753 = vpop.f32.mrf.mxu0
    %v5754 = vadd.f32 %v5741, %v5753
    %v5755 = vpop.f32.mrf.mxu0
    %5756 = vdwg.mxu0
    %5757 = vmatpush.bf16.msra.mxu0 %v4684
    %5758 = vmatpush.bf16.msra.mxu0 %v4676
    %5759 = vmatpush.bf16.msra.mxu0 %v4668
    %5760 = vmatpush.bf16.msra.mxu0 %v4660
    %5761 = vmatpush.bf16.msra.mxu0 %v4652
    %5762 = vmatpush.bf16.msra.mxu0 %v4644
    %5763 = vmatpush.bf16.msra.mxu0 %v4636
    %5764 = vmatpush.bf16.msra.mxu0 %v4628
    %5765 = vmatmul.bf16.gmra.mxu0 %v2812
    %v5766 = vpop.f32.mrf.mxu0
    %v5767 = vadd.f32 %v5754, %v5766
    %v5768 = vpop.f32.mrf.mxu0
    %5769 = vdwg.mxu0
    %5770 = vmatpush.bf16.msra.mxu0 %v4748
    %5771 = vmatpush.bf16.msra.mxu0 %v4740
    %5772 = vmatpush.bf16.msra.mxu0 %v4732
    %5773 = vmatpush.bf16.msra.mxu0 %v4724
    %5774 = vmatpush.bf16.msra.mxu0 %v4716
    %5775 = vmatpush.bf16.msra.mxu0 %v4708
    %5776 = vmatpush.bf16.msra.mxu0 %v4700
    %5777 = vmatpush.bf16.msra.mxu0 %v4692
    %5778 = vmatmul.bf16.gmra.mxu0 %v2813
    %v5779 = vpop.f32.mrf.mxu0
    %v5780 = vadd.f32 %v5767, %v5779
    %v5781 = vpop.f32.mrf.mxu0
    %5782 = vdwg.mxu0
    %5783 = vmatpush.bf16.msra.mxu0 %v4812
    %5784 = vmatpush.bf16.msra.mxu0 %v4804
    %5785 = vmatpush.bf16.msra.mxu0 %v4796
    %5786 = vmatpush.bf16.msra.mxu0 %v4788
    %5787 = vmatpush.bf16.msra.mxu0 %v4780
    %5788 = vmatpush.bf16.msra.mxu0 %v4772
    %5789 = vmatpush.bf16.msra.mxu0 %v4764
    %5790 = vmatpush.bf16.msra.mxu0 %v4756
    %5791 = vmatmul.bf16.gmra.mxu0 %v2814
    %v5792 = vpop.f32.mrf.mxu0
    %v5793 = vadd.f32 %v5780, %v5792
    %v5794 = vpop.f32.mrf.mxu0
    %5795 = vdwg.mxu0
    %5796 = vmatpush.bf16.msra.mxu0 %v4876
    %5797 = vmatpush.bf16.msra.mxu0 %v4868
    %5798 = vmatpush.bf16.msra.mxu0 %v4860
    %5799 = vmatpush.bf16.msra.mxu0 %v4852
    %5800 = vmatpush.bf16.msra.mxu0 %v4844
    %5801 = vmatpush.bf16.msra.mxu0 %v4836
    %5802 = vmatpush.bf16.msra.mxu0 %v4828
    %5803 = vmatpush.bf16.msra.mxu0 %v4820
    %5804 = vmatmul.bf16.gmra.mxu0 %v2815
    %v5805 = vpop.f32.mrf.mxu0
    %v5806 = vadd.f32 %v5793, %v5805
    %v5807 = vpop.f32.mrf.mxu0
    %5808 = vdwg.mxu0
    %5809 = vmatpush.bf16.msra.mxu0 %v4429
    %5810 = vmatpush.bf16.msra.mxu0 %v4421
    %5811 = vmatpush.bf16.msra.mxu0 %v4413
    %5812 = vmatpush.bf16.msra.mxu0 %v4405
    %5813 = vmatpush.bf16.msra.mxu0 %v4397
    %5814 = vmatpush.bf16.msra.mxu0 %v4389
    %5815 = vmatpush.bf16.msra.mxu0 %v4381
    %5816 = vmatpush.bf16.msra.mxu0 %v4373
    %5817 = vmatmul.bf16.gmra.mxu0 %v2808
    %v5818 = vpop.f32.mrf.mxu0
    %v5819 = vadd.f32 %v2821, %v5818
    %v5820 = vpop.f32.mrf.mxu0
    %5821 = vdwg.mxu0
    %5822 = vmatpush.bf16.msra.mxu0 %v4493
    %5823 = vmatpush.bf16.msra.mxu0 %v4485
    %5824 = vmatpush.bf16.msra.mxu0 %v4477
    %5825 = vmatpush.bf16.msra.mxu0 %v4469
    %5826 = vmatpush.bf16.msra.mxu0 %v4461
    %5827 = vmatpush.bf16.msra.mxu0 %v4453
    %5828 = vmatpush.bf16.msra.mxu0 %v4445
    %5829 = vmatpush.bf16.msra.mxu0 %v4437
    %5830 = vmatmul.bf16.gmra.mxu0 %v2809
    %v5831 = vpop.f32.mrf.mxu0
    %v5832 = vadd.f32 %v5819, %v5831
    %v5833 = vpop.f32.mrf.mxu0
    %5834 = vdwg.mxu0
    %5835 = vmatpush.bf16.msra.mxu0 %v4557
    %5836 = vmatpush.bf16.msra.mxu0 %v4549
    %5837 = vmatpush.bf16.msra.mxu0 %v4541
    %5838 = vmatpush.bf16.msra.mxu0 %v4533
    %5839 = vmatpush.bf16.msra.mxu0 %v4525
    %5840 = vmatpush.bf16.msra.mxu0 %v4517
    %5841 = vmatpush.bf16.msra.mxu0 %v4509
    %5842 = vmatpush.bf16.msra.mxu0 %v4501
    %5843 = vmatmul.bf16.gmra.mxu0 %v2810
    %v5844 = vpop.f32.mrf.mxu0
    %v5845 = vadd.f32 %v5832, %v5844
    %v5846 = vpop.f32.mrf.mxu0
    %5847 = vdwg.mxu0
    %5848 = vmatpush.bf16.msra.mxu0 %v4621
    %5849 = vmatpush.bf16.msra.mxu0 %v4613
    %5850 = vmatpush.bf16.msra.mxu0 %v4605
    %5851 = vmatpush.bf16.msra.mxu0 %v4597
    %5852 = vmatpush.bf16.msra.mxu0 %v4589
    %5853 = vmatpush.bf16.msra.mxu0 %v4581
    %5854 = vmatpush.bf16.msra.mxu0 %v4573
    %5855 = vmatpush.bf16.msra.mxu0 %v4565
    %5856 = vmatmul.bf16.gmra.mxu0 %v2811
    %v5857 = vpop.f32.mrf.mxu0
    %v5858 = vadd.f32 %v5845, %v5857
    %v5859 = vpop.f32.mrf.mxu0
    %5860 = vdwg.mxu0
    %5861 = vmatpush.bf16.msra.mxu0 %v4685
    %5862 = vmatpush.bf16.msra.mxu0 %v4677
    %5863 = vmatpush.bf16.msra.mxu0 %v4669
    %5864 = vmatpush.bf16.msra.mxu0 %v4661
    %5865 = vmatpush.bf16.msra.mxu0 %v4653
    %5866 = vmatpush.bf16.msra.mxu0 %v4645
    %5867 = vmatpush.bf16.msra.mxu0 %v4637
    %5868 = vmatpush.bf16.msra.mxu0 %v4629
    %5869 = vmatmul.bf16.gmra.mxu0 %v2812
    %v5870 = vpop.f32.mrf.mxu0
    %v5871 = vadd.f32 %v5858, %v5870
    %v5872 = vpop.f32.mrf.mxu0
    %5873 = vdwg.mxu0
    %5874 = vmatpush.bf16.msra.mxu0 %v4749
    %5875 = vmatpush.bf16.msra.mxu0 %v4741
    %5876 = vmatpush.bf16.msra.mxu0 %v4733
    %5877 = vmatpush.bf16.msra.mxu0 %v4725
    %5878 = vmatpush.bf16.msra.mxu0 %v4717
    %5879 = vmatpush.bf16.msra.mxu0 %v4709
    %5880 = vmatpush.bf16.msra.mxu0 %v4701
    %5881 = vmatpush.bf16.msra.mxu0 %v4693
    %5882 = vmatmul.bf16.gmra.mxu0 %v2813
    %v5883 = vpop.f32.mrf.mxu0
    %v5884 = vadd.f32 %v5871, %v5883
    %v5885 = vpop.f32.mrf.mxu0
    %5886 = vdwg.mxu0
    %5887 = vmatpush.bf16.msra.mxu0 %v4813
    %5888 = vmatpush.bf16.msra.mxu0 %v4805
    %5889 = vmatpush.bf16.msra.mxu0 %v4797
    %5890 = vmatpush.bf16.msra.mxu0 %v4789
    %5891 = vmatpush.bf16.msra.mxu0 %v4781
    %5892 = vmatpush.bf16.msra.mxu0 %v4773
    %5893 = vmatpush.bf16.msra.mxu0 %v4765
    %5894 = vmatpush.bf16.msra.mxu0 %v4757
    %5895 = vmatmul.bf16.gmra.mxu0 %v2814
    %v5896 = vpop.f32.mrf.mxu0
    %v5897 = vadd.f32 %v5884, %v5896
    %v5898 = vpop.f32.mrf.mxu0
    %5899 = vdwg.mxu0
    %5900 = vmatpush.bf16.msra.mxu0 %v4877
    %5901 = vmatpush.bf16.msra.mxu0 %v4869
    %5902 = vmatpush.bf16.msra.mxu0 %v4861
    %5903 = vmatpush.bf16.msra.mxu0 %v4853
    %5904 = vmatpush.bf16.msra.mxu0 %v4845
    %5905 = vmatpush.bf16.msra.mxu0 %v4837
    %5906 = vmatpush.bf16.msra.mxu0 %v4829
    %5907 = vmatpush.bf16.msra.mxu0 %v4821
    %5908 = vmatmul.bf16.gmra.mxu0 %v2815
    %v5909 = vpop.f32.mrf.mxu0
    %v5910 = vadd.f32 %v5897, %v5909
    %v5911 = vpop.f32.mrf.mxu0
    %5912 = vdwg.mxu0
    %5913 = vmatpush.bf16.msra.mxu0 %v4430
    %5914 = vmatpush.bf16.msra.mxu0 %v4422
    %5915 = vmatpush.bf16.msra.mxu0 %v4414
    %5916 = vmatpush.bf16.msra.mxu0 %v4406
    %5917 = vmatpush.bf16.msra.mxu0 %v4398
    %5918 = vmatpush.bf16.msra.mxu0 %v4390
    %5919 = vmatpush.bf16.msra.mxu0 %v4382
    %5920 = vmatpush.bf16.msra.mxu0 %v4374
    %5921 = vmatmul.bf16.gmra.mxu0 %v2808
    %v5922 = vpop.f32.mrf.mxu0
    %v5923 = vadd.f32 %v2822, %v5922
    %v5924 = vpop.f32.mrf.mxu0
    %5925 = vdwg.mxu0
    %5926 = vmatpush.bf16.msra.mxu0 %v4494
    %5927 = vmatpush.bf16.msra.mxu0 %v4486
    %5928 = vmatpush.bf16.msra.mxu0 %v4478
    %5929 = vmatpush.bf16.msra.mxu0 %v4470
    %5930 = vmatpush.bf16.msra.mxu0 %v4462
    %5931 = vmatpush.bf16.msra.mxu0 %v4454
    %5932 = vmatpush.bf16.msra.mxu0 %v4446
    %5933 = vmatpush.bf16.msra.mxu0 %v4438
    %5934 = vmatmul.bf16.gmra.mxu0 %v2809
    %v5935 = vpop.f32.mrf.mxu0
    %v5936 = vadd.f32 %v5923, %v5935
    %v5937 = vpop.f32.mrf.mxu0
    %5938 = vdwg.mxu0
    %5939 = vmatpush.bf16.msra.mxu0 %v4558
    %5940 = vmatpush.bf16.msra.mxu0 %v4550
    %5941 = vmatpush.bf16.msra.mxu0 %v4542
    %5942 = vmatpush.bf16.msra.mxu0 %v4534
    %5943 = vmatpush.bf16.msra.mxu0 %v4526
    %5944 = vmatpush.bf16.msra.mxu0 %v4518
    %5945 = vmatpush.bf16.msra.mxu0 %v4510
    %5946 = vmatpush.bf16.msra.mxu0 %v4502
    %5947 = vmatmul.bf16.gmra.mxu0 %v2810
    %v5948 = vpop.f32.mrf.mxu0
    %v5949 = vadd.f32 %v5936, %v5948
    %v5950 = vpop.f32.mrf.mxu0
    %5951 = vdwg.mxu0
    %5952 = vmatpush.bf16.msra.mxu0 %v4622
    %5953 = vmatpush.bf16.msra.mxu0 %v4614
    %5954 = vmatpush.bf16.msra.mxu0 %v4606
    %5955 = vmatpush.bf16.msra.mxu0 %v4598
    %5956 = vmatpush.bf16.msra.mxu0 %v4590
    %5957 = vmatpush.bf16.msra.mxu0 %v4582
    %5958 = vmatpush.bf16.msra.mxu0 %v4574
    %5959 = vmatpush.bf16.msra.mxu0 %v4566
    %5960 = vmatmul.bf16.gmra.mxu0 %v2811
    %v5961 = vpop.f32.mrf.mxu0
    %v5962 = vadd.f32 %v5949, %v5961
    %v5963 = vpop.f32.mrf.mxu0
    %5964 = vdwg.mxu0
    %5965 = vmatpush.bf16.msra.mxu0 %v4686
    %5966 = vmatpush.bf16.msra.mxu0 %v4678
    %5967 = vmatpush.bf16.msra.mxu0 %v4670
    %5968 = vmatpush.bf16.msra.mxu0 %v4662
    %5969 = vmatpush.bf16.msra.mxu0 %v4654
    %5970 = vmatpush.bf16.msra.mxu0 %v4646
    %5971 = vmatpush.bf16.msra.mxu0 %v4638
    %5972 = vmatpush.bf16.msra.mxu0 %v4630
    %5973 = vmatmul.bf16.gmra.mxu0 %v2812
    %v5974 = vpop.f32.mrf.mxu0
    %v5975 = vadd.f32 %v5962, %v5974
    %v5976 = vpop.f32.mrf.mxu0
    %5977 = vdwg.mxu0
    %5978 = vmatpush.bf16.msra.mxu0 %v4750
    %5979 = vmatpush.bf16.msra.mxu0 %v4742
    %5980 = vmatpush.bf16.msra.mxu0 %v4734
    %5981 = vmatpush.bf16.msra.mxu0 %v4726
    %5982 = vmatpush.bf16.msra.mxu0 %v4718
    %5983 = vmatpush.bf16.msra.mxu0 %v4710
    %5984 = vmatpush.bf16.msra.mxu0 %v4702
    %5985 = vmatpush.bf16.msra.mxu0 %v4694
    %5986 = vmatmul.bf16.gmra.mxu0 %v2813
    %v5987 = vpop.f32.mrf.mxu0
    %v5988 = vadd.f32 %v5975, %v5987
    %v5989 = vpop.f32.mrf.mxu0
    %5990 = vdwg.mxu0
    %5991 = vmatpush.bf16.msra.mxu0 %v4814
    %5992 = vmatpush.bf16.msra.mxu0 %v4806
    %5993 = vmatpush.bf16.msra.mxu0 %v4798
    %5994 = vmatpush.bf16.msra.mxu0 %v4790
    %5995 = vmatpush.bf16.msra.mxu0 %v4782
    %5996 = vmatpush.bf16.msra.mxu0 %v4774
    %5997 = vmatpush.bf16.msra.mxu0 %v4766
    %5998 = vmatpush.bf16.msra.mxu0 %v4758
    %5999 = vmatmul.bf16.gmra.mxu0 %v2814
    %v6000 = vpop.f32.mrf.mxu0
    %v6001 = vadd.f32 %v5988, %v6000
    %v6002 = vpop.f32.mrf.mxu0
    %6003 = vdwg.mxu0
    %6004 = vmatpush.bf16.msra.mxu0 %v4878
    %6005 = vmatpush.bf16.msra.mxu0 %v4870
    %6006 = vmatpush.bf16.msra.mxu0 %v4862
    %6007 = vmatpush.bf16.msra.mxu0 %v4854
    %6008 = vmatpush.bf16.msra.mxu0 %v4846
    %6009 = vmatpush.bf16.msra.mxu0 %v4838
    %6010 = vmatpush.bf16.msra.mxu0 %v4830
    %6011 = vmatpush.bf16.msra.mxu0 %v4822
    %6012 = vmatmul.bf16.gmra.mxu0 %v2815
    %v6013 = vpop.f32.mrf.mxu0
    %v6014 = vadd.f32 %v6001, %v6013
    %v6015 = vpop.f32.mrf.mxu0
    %6016 = vdwg.mxu0
    %6017 = vmatpush.bf16.msra.mxu0 %v4431
    %6018 = vmatpush.bf16.msra.mxu0 %v4423
    %6019 = vmatpush.bf16.msra.mxu0 %v4415
    %6020 = vmatpush.bf16.msra.mxu0 %v4407
    %6021 = vmatpush.bf16.msra.mxu0 %v4399
    %6022 = vmatpush.bf16.msra.mxu0 %v4391
    %6023 = vmatpush.bf16.msra.mxu0 %v4383
    %6024 = vmatpush.bf16.msra.mxu0 %v4375
    %6025 = vmatmul.bf16.gmra.mxu0 %v2808
    %v6026 = vpop.f32.mrf.mxu0
    %v6027 = vadd.f32 %v2823, %v6026
    %v6028 = vpop.f32.mrf.mxu0
    %6029 = vdwg.mxu0
    %6030 = vmatpush.bf16.msra.mxu0 %v4495
    %6031 = vmatpush.bf16.msra.mxu0 %v4487
    %6032 = vmatpush.bf16.msra.mxu0 %v4479
    %6033 = vmatpush.bf16.msra.mxu0 %v4471
    %6034 = vmatpush.bf16.msra.mxu0 %v4463
    %6035 = vmatpush.bf16.msra.mxu0 %v4455
    %6036 = vmatpush.bf16.msra.mxu0 %v4447
    %6037 = vmatpush.bf16.msra.mxu0 %v4439
    %6038 = vmatmul.bf16.gmra.mxu0 %v2809
    %v6039 = vpop.f32.mrf.mxu0
    %v6040 = vadd.f32 %v6027, %v6039
    %v6041 = vpop.f32.mrf.mxu0
    %6042 = vdwg.mxu0
    %6043 = vmatpush.bf16.msra.mxu0 %v4559
    %6044 = vmatpush.bf16.msra.mxu0 %v4551
    %6045 = vmatpush.bf16.msra.mxu0 %v4543
    %6046 = vmatpush.bf16.msra.mxu0 %v4535
    %6047 = vmatpush.bf16.msra.mxu0 %v4527
    %6048 = vmatpush.bf16.msra.mxu0 %v4519
    %6049 = vmatpush.bf16.msra.mxu0 %v4511
    %6050 = vmatpush.bf16.msra.mxu0 %v4503
    %6051 = vmatmul.bf16.gmra.mxu0 %v2810
    %v6052 = vpop.f32.mrf.mxu0
    %v6053 = vadd.f32 %v6040, %v6052
    %v6054 = vpop.f32.mrf.mxu0
    %6055 = vdwg.mxu0
    %6056 = vmatpush.bf16.msra.mxu0 %v4623
    %6057 = vmatpush.bf16.msra.mxu0 %v4615
    %6058 = vmatpush.bf16.msra.mxu0 %v4607
    %6059 = vmatpush.bf16.msra.mxu0 %v4599
    %6060 = vmatpush.bf16.msra.mxu0 %v4591
    %6061 = vmatpush.bf16.msra.mxu0 %v4583
    %6062 = vmatpush.bf16.msra.mxu0 %v4575
    %6063 = vmatpush.bf16.msra.mxu0 %v4567
    %6064 = vmatmul.bf16.gmra.mxu0 %v2811
    %v6065 = vpop.f32.mrf.mxu0
    %v6066 = vadd.f32 %v6053, %v6065
    %v6067 = vpop.f32.mrf.mxu0
    %6068 = vdwg.mxu0
    %6069 = vmatpush.bf16.msra.mxu0 %v4687
    %6070 = vmatpush.bf16.msra.mxu0 %v4679
    %6071 = vmatpush.bf16.msra.mxu0 %v4671
    %6072 = vmatpush.bf16.msra.mxu0 %v4663
    %6073 = vmatpush.bf16.msra.mxu0 %v4655
    %6074 = vmatpush.bf16.msra.mxu0 %v4647
    %6075 = vmatpush.bf16.msra.mxu0 %v4639
    %6076 = vmatpush.bf16.msra.mxu0 %v4631
    %6077 = vmatmul.bf16.gmra.mxu0 %v2812
    %v6078 = vpop.f32.mrf.mxu0
    %v6079 = vadd.f32 %v6066, %v6078
    %v6080 = vpop.f32.mrf.mxu0
    %6081 = vdwg.mxu0
    %6082 = vmatpush.bf16.msra.mxu0 %v4751
    %6083 = vmatpush.bf16.msra.mxu0 %v4743
    %6084 = vmatpush.bf16.msra.mxu0 %v4735
    %6085 = vmatpush.bf16.msra.mxu0 %v4727
    %6086 = vmatpush.bf16.msra.mxu0 %v4719
    %6087 = vmatpush.bf16.msra.mxu0 %v4711
    %6088 = vmatpush.bf16.msra.mxu0 %v4703
    %6089 = vmatpush.bf16.msra.mxu0 %v4695
    %6090 = vmatmul.bf16.gmra.mxu0 %v2813
    %v6091 = vpop.f32.mrf.mxu0
    %v6092 = vadd.f32 %v6079, %v6091
    %v6093 = vpop.f32.mrf.mxu0
    %6094 = vdwg.mxu0
    %6095 = vmatpush.bf16.msra.mxu0 %v4815
    %6096 = vmatpush.bf16.msra.mxu0 %v4807
    %6097 = vmatpush.bf16.msra.mxu0 %v4799
    %6098 = vmatpush.bf16.msra.mxu0 %v4791
    %6099 = vmatpush.bf16.msra.mxu0 %v4783
    %6100 = vmatpush.bf16.msra.mxu0 %v4775
    %6101 = vmatpush.bf16.msra.mxu0 %v4767
    %6102 = vmatpush.bf16.msra.mxu0 %v4759
    %6103 = vmatmul.bf16.gmra.mxu0 %v2814
    %v6104 = vpop.f32.mrf.mxu0
    %v6105 = vadd.f32 %v6092, %v6104
    %v6106 = vpop.f32.mrf.mxu0
    %6107 = vdwg.mxu0
    %6108 = vmatpush.bf16.msra.mxu0 %v4879
    %6109 = vmatpush.bf16.msra.mxu0 %v4871
    %6110 = vmatpush.bf16.msra.mxu0 %v4863
    %6111 = vmatpush.bf16.msra.mxu0 %v4855
    %6112 = vmatpush.bf16.msra.mxu0 %v4847
    %6113 = vmatpush.bf16.msra.mxu0 %v4839
    %6114 = vmatpush.bf16.msra.mxu0 %v4831
    %6115 = vmatpush.bf16.msra.mxu0 %v4823
    %6116 = vmatmul.bf16.gmra.mxu0 %v2815
    %v6117 = vpop.f32.mrf.mxu0
    %v6118 = vadd.f32 %v6105, %v6117
    %v6119 = vpop.f32.mrf.mxu0
    %6120 = vdwg.mxu0
    %6121 = vmatpush.bf16.msra.mxu0 %v4432
    %6122 = vmatpush.bf16.msra.mxu0 %v4424
    %6123 = vmatpush.bf16.msra.mxu0 %v4416
    %6124 = vmatpush.bf16.msra.mxu0 %v4408
    %6125 = vmatpush.bf16.msra.mxu0 %v4400
    %6126 = vmatpush.bf16.msra.mxu0 %v4392
    %6127 = vmatpush.bf16.msra.mxu0 %v4384
    %6128 = vmatpush.bf16.msra.mxu0 %v4376
    %6129 = vmatmul.bf16.gmra.mxu0 %v2808
    %v6130 = vpop.f32.mrf.mxu0
    %v6131 = vadd.f32 %v2824, %v6130
    %v6132 = vpop.f32.mrf.mxu0
    %6133 = vdwg.mxu0
    %6134 = vmatpush.bf16.msra.mxu0 %v4496
    %6135 = vmatpush.bf16.msra.mxu0 %v4488
    %6136 = vmatpush.bf16.msra.mxu0 %v4480
    %6137 = vmatpush.bf16.msra.mxu0 %v4472
    %6138 = vmatpush.bf16.msra.mxu0 %v4464
    %6139 = vmatpush.bf16.msra.mxu0 %v4456
    %6140 = vmatpush.bf16.msra.mxu0 %v4448
    %6141 = vmatpush.bf16.msra.mxu0 %v4440
    %6142 = vmatmul.bf16.gmra.mxu0 %v2809
    %v6143 = vpop.f32.mrf.mxu0
    %v6144 = vadd.f32 %v6131, %v6143
    %v6145 = vpop.f32.mrf.mxu0
    %6146 = vdwg.mxu0
    %6147 = vmatpush.bf16.msra.mxu0 %v4560
    %6148 = vmatpush.bf16.msra.mxu0 %v4552
    %6149 = vmatpush.bf16.msra.mxu0 %v4544
    %6150 = vmatpush.bf16.msra.mxu0 %v4536
    %6151 = vmatpush.bf16.msra.mxu0 %v4528
    %6152 = vmatpush.bf16.msra.mxu0 %v4520
    %6153 = vmatpush.bf16.msra.mxu0 %v4512
    %6154 = vmatpush.bf16.msra.mxu0 %v4504
    %6155 = vmatmul.bf16.gmra.mxu0 %v2810
    %v6156 = vpop.f32.mrf.mxu0
    %v6157 = vadd.f32 %v6144, %v6156
    %v6158 = vpop.f32.mrf.mxu0
    %6159 = vdwg.mxu0
    %6160 = vmatpush.bf16.msra.mxu0 %v4624
    %6161 = vmatpush.bf16.msra.mxu0 %v4616
    %6162 = vmatpush.bf16.msra.mxu0 %v4608
    %6163 = vmatpush.bf16.msra.mxu0 %v4600
    %6164 = vmatpush.bf16.msra.mxu0 %v4592
    %6165 = vmatpush.bf16.msra.mxu0 %v4584
    %6166 = vmatpush.bf16.msra.mxu0 %v4576
    %6167 = vmatpush.bf16.msra.mxu0 %v4568
    %6168 = vmatmul.bf16.gmra.mxu0 %v2811
    %v6169 = vpop.f32.mrf.mxu0
    %v6170 = vadd.f32 %v6157, %v6169
    %v6171 = vpop.f32.mrf.mxu0
    %6172 = vdwg.mxu0
    %6173 = vmatpush.bf16.msra.mxu0 %v4688
    %6174 = vmatpush.bf16.msra.mxu0 %v4680
    %6175 = vmatpush.bf16.msra.mxu0 %v4672
    %6176 = vmatpush.bf16.msra.mxu0 %v4664
    %6177 = vmatpush.bf16.msra.mxu0 %v4656
    %6178 = vmatpush.bf16.msra.mxu0 %v4648
    %6179 = vmatpush.bf16.msra.mxu0 %v4640
    %6180 = vmatpush.bf16.msra.mxu0 %v4632
    %6181 = vmatmul.bf16.gmra.mxu0 %v2812
    %v6182 = vpop.f32.mrf.mxu0
    %v6183 = vadd.f32 %v6170, %v6182
    %v6184 = vpop.f32.mrf.mxu0
    %6185 = vdwg.mxu0
    %6186 = vmatpush.bf16.msra.mxu0 %v4752
    %6187 = vmatpush.bf16.msra.mxu0 %v4744
    %6188 = vmatpush.bf16.msra.mxu0 %v4736
    %6189 = vmatpush.bf16.msra.mxu0 %v4728
    %6190 = vmatpush.bf16.msra.mxu0 %v4720
    %6191 = vmatpush.bf16.msra.mxu0 %v4712
    %6192 = vmatpush.bf16.msra.mxu0 %v4704
    %6193 = vmatpush.bf16.msra.mxu0 %v4696
    %6194 = vmatmul.bf16.gmra.mxu0 %v2813
    %v6195 = vpop.f32.mrf.mxu0
    %v6196 = vadd.f32 %v6183, %v6195
    %v6197 = vpop.f32.mrf.mxu0
    %6198 = vdwg.mxu0
    %6199 = vmatpush.bf16.msra.mxu0 %v4816
    %6200 = vmatpush.bf16.msra.mxu0 %v4808
    %6201 = vmatpush.bf16.msra.mxu0 %v4800
    %6202 = vmatpush.bf16.msra.mxu0 %v4792
    %6203 = vmatpush.bf16.msra.mxu0 %v4784
    %6204 = vmatpush.bf16.msra.mxu0 %v4776
    %6205 = vmatpush.bf16.msra.mxu0 %v4768
    %6206 = vmatpush.bf16.msra.mxu0 %v4760
    %6207 = vmatmul.bf16.gmra.mxu0 %v2814
    %v6208 = vpop.f32.mrf.mxu0
    %v6209 = vadd.f32 %v6196, %v6208
    %v6210 = vpop.f32.mrf.mxu0
    %6211 = vdwg.mxu0
    %6212 = vmatpush.bf16.msra.mxu0 %v4880
    %6213 = vmatpush.bf16.msra.mxu0 %v4872
    %6214 = vmatpush.bf16.msra.mxu0 %v4864
    %6215 = vmatpush.bf16.msra.mxu0 %v4856
    %6216 = vmatpush.bf16.msra.mxu0 %v4848
    %6217 = vmatpush.bf16.msra.mxu0 %v4840
    %6218 = vmatpush.bf16.msra.mxu0 %v4832
    %6219 = vmatpush.bf16.msra.mxu0 %v4824
    %6220 = vmatmul.bf16.gmra.mxu0 %v2815
    %v6221 = vpop.f32.mrf.mxu0
    %v6222 = vadd.f32 %v6209, %v6221
    %v6223 = vpop.f32.mrf.mxu0
    %6224 = vdwg.mxu0
    %v6225 = vmax.f32 %v5494, 0.0
    %v6226 = vmax.f32 %v5598, 0.0
    %v6227 = vmax.f32 %v5702, 0.0
    %v6228 = vmax.f32 %v5806, 0.0
    %v6229 = vmax.f32 %v5910, 0.0
    %v6230 = vmax.f32 %v6014, 0.0
    %v6231 = vmax.f32 %v6118, 0.0
    %v6232 = vmax.f32 %v6222, 0.0
    %v6233 = vpack.c.bf16 %v6225, %v6225
    %v6234 = vpack.c.bf16 %v6226, %v6226
    %v6235 = vpack.c.bf16 %v6227, %v6227
    %v6236 = vpack.c.bf16 %v6228, %v6228
    %v6237 = vpack.c.bf16 %v6229, %v6229
    %v6238 = vpack.c.bf16 %v6230, %v6230
    %v6239 = vpack.c.bf16 %v6231, %v6231
    %v6240 = vpack.c.bf16 %v6232, %v6232
    %v6242 = vperm.slane %v2357, 0
    %v6372 = vunpack.c.l.b16 %v2229
    %v6373 = vunpack.c.l.b16 %v2230
    %v6374 = vunpack.c.l.b16 %v2231
    %v6375 = vunpack.c.l.b16 %v2232
    %v6376 = vunpack.c.l.b16 %v2233
    %v6377 = vunpack.c.l.b16 %v2234
    %v6378 = vunpack.c.l.b16 %v2235
    %v6379 = vunpack.c.l.b16 %v2236
    %v6380 = vunpack.c.l.b16 %v2237
    %v6381 = vunpack.c.l.b16 %v2238
    %v6382 = vunpack.c.l.b16 %v2239
    %v6383 = vunpack.c.l.b16 %v2240
    %v6384 = vunpack.c.l.b16 %v2241
    %v6385 = vunpack.c.l.b16 %v2242
    %v6386 = vunpack.c.l.b16 %v2243
    %v6387 = vunpack.c.l.b16 %v2244
    %v6388 = vunpack.c.l.b16 %v2245
    %v6389 = vunpack.c.l.b16 %v2246
    %v6390 = vunpack.c.l.b16 %v2247
    %v6391 = vunpack.c.l.b16 %v2248
    %v6392 = vunpack.c.l.b16 %v2249
    %v6393 = vunpack.c.l.b16 %v2250
    %v6394 = vunpack.c.l.b16 %v2251
    %v6395 = vunpack.c.l.b16 %v2252
    %v6396 = vunpack.c.l.b16 %v2253
    %v6397 = vunpack.c.l.b16 %v2254
    %v6398 = vunpack.c.l.b16 %v2255
    %v6399 = vunpack.c.l.b16 %v2256
    %v6400 = vunpack.c.l.b16 %v2257
    %v6401 = vunpack.c.l.b16 %v2258
    %v6402 = vunpack.c.l.b16 %v2259
    %v6403 = vunpack.c.l.b16 %v2260
    %v6404 = vunpack.c.l.b16 %v2261
    %v6405 = vunpack.c.l.b16 %v2262
    %v6406 = vunpack.c.l.b16 %v2263
    %v6407 = vunpack.c.l.b16 %v2264
    %v6408 = vunpack.c.l.b16 %v2265
    %v6409 = vunpack.c.l.b16 %v2266
    %v6410 = vunpack.c.l.b16 %v2267
    %v6411 = vunpack.c.l.b16 %v2268
    %v6412 = vunpack.c.l.b16 %v2269
    %v6413 = vunpack.c.l.b16 %v2270
    %v6414 = vunpack.c.l.b16 %v2271
    %v6415 = vunpack.c.l.b16 %v2272
    %v6416 = vunpack.c.l.b16 %v2273
    %v6417 = vunpack.c.l.b16 %v2274
    %v6418 = vunpack.c.l.b16 %v2275
    %v6419 = vunpack.c.l.b16 %v2276
    %v6420 = vunpack.c.l.b16 %v2277
    %v6421 = vunpack.c.l.b16 %v2278
    %v6422 = vunpack.c.l.b16 %v2279
    %v6423 = vunpack.c.l.b16 %v2280
    %v6424 = vunpack.c.l.b16 %v2281
    %v6425 = vunpack.c.l.b16 %v2282
    %v6426 = vunpack.c.l.b16 %v2283
    %v6427 = vunpack.c.l.b16 %v2284
    %v6428 = vunpack.c.l.b16 %v2285
    %v6429 = vunpack.c.l.b16 %v2286
    %v6430 = vunpack.c.l.b16 %v2287
    %v6431 = vunpack.c.l.b16 %v2288
    %v6432 = vunpack.c.l.b16 %v2289
    %v6433 = vunpack.c.l.b16 %v2290
    %v6434 = vunpack.c.l.b16 %v2291
    %v6435 = vunpack.c.l.b16 %v2292
    %v6436 = vunpack.c.l.b16 %v2293
    %v6437 = vunpack.c.l.b16 %v2294
    %v6438 = vunpack.c.l.b16 %v2295
    %v6439 = vunpack.c.l.b16 %v2296
    %v6440 = vunpack.c.l.b16 %v2297
    %v6441 = vunpack.c.l.b16 %v2298
    %v6442 = vunpack.c.l.b16 %v2299
    %v6443 = vunpack.c.l.b16 %v2300
    %v6444 = vunpack.c.l.b16 %v2301
    %v6445 = vunpack.c.l.b16 %v2302
    %v6446 = vunpack.c.l.b16 %v2303
    %v6447 = vunpack.c.l.b16 %v2304
    %v6448 = vunpack.c.l.b16 %v2305
    %v6449 = vunpack.c.l.b16 %v2306
    %v6450 = vunpack.c.l.b16 %v2307
    %v6451 = vunpack.c.l.b16 %v2308
    %v6452 = vunpack.c.l.b16 %v2309
    %v6453 = vunpack.c.l.b16 %v2310
    %v6454 = vunpack.c.l.b16 %v2311
    %v6455 = vunpack.c.l.b16 %v2312
    %v6456 = vunpack.c.l.b16 %v2313
    %v6457 = vunpack.c.l.b16 %v2314
    %v6458 = vunpack.c.l.b16 %v2315
    %v6459 = vunpack.c.l.b16 %v2316
    %v6460 = vunpack.c.l.b16 %v2317
    %v6461 = vunpack.c.l.b16 %v2318
    %v6462 = vunpack.c.l.b16 %v2319
    %v6463 = vunpack.c.l.b16 %v2320
    %v6464 = vunpack.c.l.b16 %v2321
    %v6465 = vunpack.c.l.b16 %v2322
    %v6466 = vunpack.c.l.b16 %v2323
    %v6467 = vunpack.c.l.b16 %v2324
    %v6468 = vunpack.c.l.b16 %v2325
    %v6469 = vunpack.c.l.b16 %v2326
    %v6470 = vunpack.c.l.b16 %v2327
    %v6471 = vunpack.c.l.b16 %v2328
    %v6472 = vunpack.c.l.b16 %v2329
    %v6473 = vunpack.c.l.b16 %v2330
    %v6474 = vunpack.c.l.b16 %v2331
    %v6475 = vunpack.c.l.b16 %v2332
    %v6476 = vunpack.c.l.b16 %v2333
    %v6477 = vunpack.c.l.b16 %v2334
    %v6478 = vunpack.c.l.b16 %v2335
    %v6479 = vunpack.c.l.b16 %v2336
    %v6480 = vunpack.c.l.b16 %v2337
    %v6481 = vunpack.c.l.b16 %v2338
    %v6482 = vunpack.c.l.b16 %v2339
    %v6483 = vunpack.c.l.b16 %v2340
    %v6484 = vunpack.c.l.b16 %v2341
    %v6485 = vunpack.c.l.b16 %v2342
    %v6486 = vunpack.c.l.b16 %v2343
    %v6487 = vunpack.c.l.b16 %v2344
    %v6488 = vunpack.c.l.b16 %v2345
    %v6489 = vunpack.c.l.b16 %v2346
    %v6490 = vunpack.c.l.b16 %v2347
    %v6491 = vunpack.c.l.b16 %v2348
    %v6492 = vunpack.c.l.b16 %v2349
    %v6493 = vunpack.c.l.b16 %v2350
    %v6494 = vunpack.c.l.b16 %v2351
    %v6495 = vunpack.c.l.b16 %v2352
    %v6496 = vunpack.c.l.b16 %v2353
    %v6497 = vunpack.c.l.b16 %v2354
    %v6498 = vunpack.c.l.b16 %v2355
    %v6499 = vunpack.c.l.b16 %v2356
    %v6500 = vpack.c.b16 %v6373, %v6372
    %v6501 = vpack.c.b16 %v6375, %v6374
    %v6502 = vpack.c.b16 %v6377, %v6376
    %v6503 = vpack.c.b16 %v6379, %v6378
    %v6504 = vpack.c.b16 %v6381, %v6380
    %v6505 = vpack.c.b16 %v6383, %v6382
    %v6506 = vpack.c.b16 %v6385, %v6384
    %v6507 = vpack.c.b16 %v6387, %v6386
    %v6508 = vpack.c.b16 %v6389, %v6388
    %v6509 = vpack.c.b16 %v6391, %v6390
    %v6510 = vpack.c.b16 %v6393, %v6392
    %v6511 = vpack.c.b16 %v6395, %v6394
    %v6512 = vpack.c.b16 %v6397, %v6396
    %v6513 = vpack.c.b16 %v6399, %v6398
    %v6514 = vpack.c.b16 %v6401, %v6400
    %v6515 = vpack.c.b16 %v6403, %v6402
    %v6516 = vpack.c.b16 %v6405, %v6404
    %v6517 = vpack.c.b16 %v6407, %v6406
    %v6518 = vpack.c.b16 %v6409, %v6408
    %v6519 = vpack.c.b16 %v6411, %v6410
    %v6520 = vpack.c.b16 %v6413, %v6412
    %v6521 = vpack.c.b16 %v6415, %v6414
    %v6522 = vpack.c.b16 %v6417, %v6416
    %v6523 = vpack.c.b16 %v6419, %v6418
    %v6524 = vpack.c.b16 %v6421, %v6420
    %v6525 = vpack.c.b16 %v6423, %v6422
    %v6526 = vpack.c.b16 %v6425, %v6424
    %v6527 = vpack.c.b16 %v6427, %v6426
    %v6528 = vpack.c.b16 %v6429, %v6428
    %v6529 = vpack.c.b16 %v6431, %v6430
    %v6530 = vpack.c.b16 %v6433, %v6432
    %v6531 = vpack.c.b16 %v6435, %v6434
    %v6532 = vpack.c.b16 %v6437, %v6436
    %v6533 = vpack.c.b16 %v6439, %v6438
    %v6534 = vpack.c.b16 %v6441, %v6440
    %v6535 = vpack.c.b16 %v6443, %v6442
    %v6536 = vpack.c.b16 %v6445, %v6444
    %v6537 = vpack.c.b16 %v6447, %v6446
    %v6538 = vpack.c.b16 %v6449, %v6448
    %v6539 = vpack.c.b16 %v6451, %v6450
    %v6540 = vpack.c.b16 %v6453, %v6452
    %v6541 = vpack.c.b16 %v6455, %v6454
    %v6542 = vpack.c.b16 %v6457, %v6456
    %v6543 = vpack.c.b16 %v6459, %v6458
    %v6544 = vpack.c.b16 %v6461, %v6460
    %v6545 = vpack.c.b16 %v6463, %v6462
    %v6546 = vpack.c.b16 %v6465, %v6464
    %v6547 = vpack.c.b16 %v6467, %v6466
    %v6548 = vpack.c.b16 %v6469, %v6468
    %v6549 = vpack.c.b16 %v6471, %v6470
    %v6550 = vpack.c.b16 %v6473, %v6472
    %v6551 = vpack.c.b16 %v6475, %v6474
    %v6552 = vpack.c.b16 %v6477, %v6476
    %v6553 = vpack.c.b16 %v6479, %v6478
    %v6554 = vpack.c.b16 %v6481, %v6480
    %v6555 = vpack.c.b16 %v6483, %v6482
    %v6556 = vpack.c.b16 %v6485, %v6484
    %v6557 = vpack.c.b16 %v6487, %v6486
    %v6558 = vpack.c.b16 %v6489, %v6488
    %v6559 = vpack.c.b16 %v6491, %v6490
    %v6560 = vpack.c.b16 %v6493, %v6492
    %v6561 = vpack.c.b16 %v6495, %v6494
    %v6562 = vpack.c.b16 %v6497, %v6496
    %v6563 = vpack.c.b16 %v6499, %v6498
    %6628 = vmatpush.bf16.msra.mxu0 %v6507
    %6629 = vmatpush.bf16.msra.mxu0 %v6506
    %6630 = vmatpush.bf16.msra.mxu0 %v6505
    %6631 = vmatpush.bf16.msra.mxu0 %v6504
    %6632 = vmatpush.bf16.msra.mxu0 %v6503
    %6633 = vmatpush.bf16.msra.mxu0 %v6502
    %6634 = vmatpush.bf16.msra.mxu0 %v6501
    %6635 = vmatpush.bf16.msra.mxu0 %v6500
    %6636 = vmatmul.bf16.gmra.mxu0 %v6233
    %v6637 = vpop.f32.mrf.mxu0
    %v6638 = vadd.f32 %v6242, %v6637
    %v6639 = vpop.f32.mrf.mxu0
    %6640 = vdwg.mxu0
    %6641 = vmatpush.bf16.msra.mxu0 %v6515
    %6642 = vmatpush.bf16.msra.mxu0 %v6514
    %6643 = vmatpush.bf16.msra.mxu0 %v6513
    %6644 = vmatpush.bf16.msra.mxu0 %v6512
    %6645 = vmatpush.bf16.msra.mxu0 %v6511
    %6646 = vmatpush.bf16.msra.mxu0 %v6510
    %6647 = vmatpush.bf16.msra.mxu0 %v6509
    %6648 = vmatpush.bf16.msra.mxu0 %v6508
    %6649 = vmatmul.bf16.gmra.mxu0 %v6234
    %v6650 = vpop.f32.mrf.mxu0
    %v6651 = vadd.f32 %v6638, %v6650
    %v6652 = vpop.f32.mrf.mxu0
    %6653 = vdwg.mxu0
    %6654 = vmatpush.bf16.msra.mxu0 %v6523
    %6655 = vmatpush.bf16.msra.mxu0 %v6522
    %6656 = vmatpush.bf16.msra.mxu0 %v6521
    %6657 = vmatpush.bf16.msra.mxu0 %v6520
    %6658 = vmatpush.bf16.msra.mxu0 %v6519
    %6659 = vmatpush.bf16.msra.mxu0 %v6518
    %6660 = vmatpush.bf16.msra.mxu0 %v6517
    %6661 = vmatpush.bf16.msra.mxu0 %v6516
    %6662 = vmatmul.bf16.gmra.mxu0 %v6235
    %v6663 = vpop.f32.mrf.mxu0
    %v6664 = vadd.f32 %v6651, %v6663
    %v6665 = vpop.f32.mrf.mxu0
    %6666 = vdwg.mxu0
    %6667 = vmatpush.bf16.msra.mxu0 %v6531
    %6668 = vmatpush.bf16.msra.mxu0 %v6530
    %6669 = vmatpush.bf16.msra.mxu0 %v6529
    %6670 = vmatpush.bf16.msra.mxu0 %v6528
    %6671 = vmatpush.bf16.msra.mxu0 %v6527
    %6672 = vmatpush.bf16.msra.mxu0 %v6526
    %6673 = vmatpush.bf16.msra.mxu0 %v6525
    %6674 = vmatpush.bf16.msra.mxu0 %v6524
    %6675 = vmatmul.bf16.gmra.mxu0 %v6236
    %v6676 = vpop.f32.mrf.mxu0
    %v6677 = vadd.f32 %v6664, %v6676
    %v6678 = vpop.f32.mrf.mxu0
    %6679 = vdwg.mxu0
    %6680 = vmatpush.bf16.msra.mxu0 %v6539
    %6681 = vmatpush.bf16.msra.mxu0 %v6538
    %6682 = vmatpush.bf16.msra.mxu0 %v6537
    %6683 = vmatpush.bf16.msra.mxu0 %v6536
    %6684 = vmatpush.bf16.msra.mxu0 %v6535
    %6685 = vmatpush.bf16.msra.mxu0 %v6534
    %6686 = vmatpush.bf16.msra.mxu0 %v6533
    %6687 = vmatpush.bf16.msra.mxu0 %v6532
    %6688 = vmatmul.bf16.gmra.mxu0 %v6237
    %v6689 = vpop.f32.mrf.mxu0
    %v6690 = vadd.f32 %v6677, %v6689
    %v6691 = vpop.f32.mrf.mxu0
    %6692 = vdwg.mxu0
    %6693 = vmatpush.bf16.msra.mxu0 %v6547
    %6694 = vmatpush.bf16.msra.mxu0 %v6546
    %6695 = vmatpush.bf16.msra.mxu0 %v6545
    %6696 = vmatpush.bf16.msra.mxu0 %v6544
    %6697 = vmatpush.bf16.msra.mxu0 %v6543
    %6698 = vmatpush.bf16.msra.mxu0 %v6542
    %6699 = vmatpush.bf16.msra.mxu0 %v6541
    %6700 = vmatpush.bf16.msra.mxu0 %v6540
    %6701 = vmatmul.bf16.gmra.mxu0 %v6238
    %v6702 = vpop.f32.mrf.mxu0
    %v6703 = vadd.f32 %v6690, %v6702
    %v6704 = vpop.f32.mrf.mxu0
    %6705 = vdwg.mxu0
    %6706 = vmatpush.bf16.msra.mxu0 %v6555
    %6707 = vmatpush.bf16.msra.mxu0 %v6554
    %6708 = vmatpush.bf16.msra.mxu0 %v6553
    %6709 = vmatpush.bf16.msra.mxu0 %v6552
    %6710 = vmatpush.bf16.msra.mxu0 %v6551
    %6711 = vmatpush.bf16.msra.mxu0 %v6550
    %6712 = vmatpush.bf16.msra.mxu0 %v6549
    %6713 = vmatpush.bf16.msra.mxu0 %v6548
    %6714 = vmatmul.bf16.gmra.mxu0 %v6239
    %v6715 = vpop.f32.mrf.mxu0
    %v6716 = vadd.f32 %v6703, %v6715
    %v6717 = vpop.f32.mrf.mxu0
    %6718 = vdwg.mxu0
    %6719 = vmatpush.bf16.msra.mxu0 %v6563
    %6720 = vmatpush.bf16.msra.mxu0 %v6562
    %6721 = vmatpush.bf16.msra.mxu0 %v6561
    %6722 = vmatpush.bf16.msra.mxu0 %v6560
    %6723 = vmatpush.bf16.msra.mxu0 %v6559
    %6724 = vmatpush.bf16.msra.mxu0 %v6558
    %6725 = vmatpush.bf16.msra.mxu0 %v6557
    %6726 = vmatpush.bf16.msra.mxu0 %v6556
    %6727 = vmatmul.bf16.gmra.mxu0 %v6240
    %v6728 = vpop.f32.mrf.mxu0
    %v6729 = vadd.f32 %v6716, %v6728
    %v6730 = vpop.f32.mrf.mxu0
    %6731 = vdwg.mxu0
    %6732 = vst [vmem:[#allocation49] sm:$0x3] %v6729
    %v6733 = vld [vmem:[#allocation40] sm:$0xff]
    %v6734 = vld [vmem:[#allocation40 + $0x8] sm:$0xff]
    %v6735 = vld [vmem:[#allocation40 + $0x10] sm:$0xff]
    %v6736 = vld [vmem:[#allocation40 + $0x18] sm:$0xff]
    %v6737 = vld [vmem:[#allocation40 + $0x20] sm:$0xff]
    %v6738 = vld [vmem:[#allocation40 + $0x28] sm:$0xff]
    %v6739 = vld [vmem:[#allocation40 + $0x30] sm:$0xff]
    %v6740 = vld [vmem:[#allocation40 + $0x38] sm:$0xff]
    %v6741 = vld [vmem:[#allocation40 + $0x40] sm:$0xff]
    %v6742 = vld [vmem:[#allocation40 + $0x48] sm:$0xff]
    %v6743 = vld [vmem:[#allocation40 + $0x50] sm:$0xff]
    %v6744 = vld [vmem:[#allocation40 + $0x58] sm:$0xff]
    %v6745 = vld [vmem:[#allocation40 + $0x60] sm:$0xff]
    %v6746 = vld [vmem:[#allocation40 + $0x68] sm:$0xff]
    %v6747 = vld [vmem:[#allocation40 + $0x70] sm:$0xff]
    %v6748 = vld [vmem:[#allocation40 + $0x78] sm:$0xff]
    %v6749 = vld [vmem:[#allocation40 + $0x80] sm:$0xff]
    %v6750 = vld [vmem:[#allocation40 + $0x88] sm:$0xff]
    %v6751 = vld [vmem:[#allocation40 + $0x90] sm:$0xff]
    %v6752 = vld [vmem:[#allocation40 + $0x98] sm:$0xff]
    %v6753 = vld [vmem:[#allocation40 + $0xa0] sm:$0xff]
    %v6754 = vld [vmem:[#allocation40 + $0xa8] sm:$0xff]
    %v6755 = vld [vmem:[#allocation40 + $0xb0] sm:$0xff]
    %v6756 = vld [vmem:[#allocation40 + $0xb8] sm:$0xff]
    %v6757 = vld [vmem:[#allocation40 + $0xc0] sm:$0xff]
    %v6758 = vld [vmem:[#allocation40 + $0xc8] sm:$0xff]
    %v6759 = vld [vmem:[#allocation40 + $0xd0] sm:$0xff]
    %v6760 = vld [vmem:[#allocation40 + $0xd8] sm:$0xff]
    %v6761 = vld [vmem:[#allocation40 + $0xe0] sm:$0xff]
    %v6762 = vld [vmem:[#allocation40 + $0xe8] sm:$0xff]
    %v6763 = vld [vmem:[#allocation40 + $0xf0] sm:$0xff]
    %v6764 = vld [vmem:[#allocation40 + $0xf8] sm:$0xff]
    %v6765 = vld [vmem:[#allocation40 + $0x100] sm:$0xff]
    %v6766 = vld [vmem:[#allocation40 + $0x108] sm:$0xff]
    %v6767 = vld [vmem:[#allocation40 + $0x110] sm:$0xff]
    %v6768 = vld [vmem:[#allocation40 + $0x118] sm:$0xff]
    %v6769 = vld [vmem:[#allocation40 + $0x120] sm:$0xff]
    %v6770 = vld [vmem:[#allocation40 + $0x128] sm:$0xff]
    %v6771 = vld [vmem:[#allocation40 + $0x130] sm:$0xff]
    %v6772 = vld [vmem:[#allocation40 + $0x138] sm:$0xff]
    %v6773 = vld [vmem:[#allocation40 + $0x140] sm:$0xff]
    %v6774 = vld [vmem:[#allocation40 + $0x148] sm:$0xff]
    %v6775 = vld [vmem:[#allocation40 + $0x150] sm:$0xff]
    %v6776 = vld [vmem:[#allocation40 + $0x158] sm:$0xff]
    %v6777 = vld [vmem:[#allocation40 + $0x160] sm:$0xff]
    %v6778 = vld [vmem:[#allocation40 + $0x168] sm:$0xff]
    %v6779 = vld [vmem:[#allocation40 + $0x170] sm:$0xff]
    %v6780 = vld [vmem:[#allocation40 + $0x178] sm:$0xff]
    %v6781 = vld [vmem:[#allocation40 + $0x180] sm:$0xff]
    %v6782 = vld [vmem:[#allocation40 + $0x188] sm:$0xff]
    %v6783 = vld [vmem:[#allocation40 + $0x190] sm:$0xff]
    %v6784 = vld [vmem:[#allocation40 + $0x198] sm:$0xff]
    %v6785 = vld [vmem:[#allocation40 + $0x1a0] sm:$0xff]
    %v6786 = vld [vmem:[#allocation40 + $0x1a8] sm:$0xff]
    %v6787 = vld [vmem:[#allocation40 + $0x1b0] sm:$0xff]
    %v6788 = vld [vmem:[#allocation40 + $0x1b8] sm:$0xff]
    %v6789 = vld [vmem:[#allocation40 + $0x1c0] sm:$0xff]
    %v6790 = vld [vmem:[#allocation40 + $0x1c8] sm:$0xff]
    %v6791 = vld [vmem:[#allocation40 + $0x1d0] sm:$0xff]
    %v6792 = vld [vmem:[#allocation40 + $0x1d8] sm:$0xff]
    %v6793 = vld [vmem:[#allocation40 + $0x1e0] sm:$0xff]
    %v6794 = vld [vmem:[#allocation40 + $0x1e8] sm:$0xff]
    %v6795 = vld [vmem:[#allocation40 + $0x1f0] sm:$0xff]
    %v6796 = vld [vmem:[#allocation40 + $0x1f8] sm:$0xff]
    %v6797 = vld [vmem:[#allocation41] sm:$0xff]
    %v6798 = vld [vmem:[#allocation43] sm:$0xff]
    %v6799 = vld [vmem:[#allocation43 + $0x8] sm:$0xff]
    %v6800 = vld [vmem:[#allocation43 + $0x10] sm:$0xff]
    %v6801 = vld [vmem:[#allocation43 + $0x18] sm:$0xff]
    %v6802 = vld [vmem:[#allocation43 + $0x20] sm:$0xff]
    %v6803 = vld [vmem:[#allocation43 + $0x28] sm:$0xff]
    %v6804 = vld [vmem:[#allocation43 + $0x30] sm:$0xff]
    %v6805 = vld [vmem:[#allocation43 + $0x38] sm:$0xff]
    %v6806 = vld [vmem:[#allocation43 + $0x40] sm:$0xff]
    %v6807 = vld [vmem:[#allocation43 + $0x48] sm:$0xff]
    %v6808 = vld [vmem:[#allocation43 + $0x50] sm:$0xff]
    %v6809 = vld [vmem:[#allocation43 + $0x58] sm:$0xff]
    %v6810 = vld [vmem:[#allocation43 + $0x60] sm:$0xff]
    %v6811 = vld [vmem:[#allocation43 + $0x68] sm:$0xff]
    %v6812 = vld [vmem:[#allocation43 + $0x70] sm:$0xff]
    %v6813 = vld [vmem:[#allocation43 + $0x78] sm:$0xff]
    %v6814 = vld [vmem:[#allocation43 + $0x80] sm:$0xff]
    %v6815 = vld [vmem:[#allocation43 + $0x88] sm:$0xff]
    %v6816 = vld [vmem:[#allocation43 + $0x90] sm:$0xff]
    %v6817 = vld [vmem:[#allocation43 + $0x98] sm:$0xff]
    %v6818 = vld [vmem:[#allocation43 + $0xa0] sm:$0xff]
    %v6819 = vld [vmem:[#allocation43 + $0xa8] sm:$0xff]
    %v6820 = vld [vmem:[#allocation43 + $0xb0] sm:$0xff]
    %v6821 = vld [vmem:[#allocation43 + $0xb8] sm:$0xff]
    %v6822 = vld [vmem:[#allocation43 + $0xc0] sm:$0xff]
    %v6823 = vld [vmem:[#allocation43 + $0xc8] sm:$0xff]
    %v6824 = vld [vmem:[#allocation43 + $0xd0] sm:$0xff]
    %v6825 = vld [vmem:[#allocation43 + $0xd8] sm:$0xff]
    %v6826 = vld [vmem:[#allocation43 + $0xe0] sm:$0xff]
    %v6827 = vld [vmem:[#allocation43 + $0xe8] sm:$0xff]
    %v6828 = vld [vmem:[#allocation43 + $0xf0] sm:$0xff]
    %v6829 = vld [vmem:[#allocation43 + $0xf8] sm:$0xff]
    %v6830 = vld [vmem:[#allocation43 + $0x100] sm:$0xff]
    %v6831 = vld [vmem:[#allocation43 + $0x108] sm:$0xff]
    %v6832 = vld [vmem:[#allocation43 + $0x110] sm:$0xff]
    %v6833 = vld [vmem:[#allocation43 + $0x118] sm:$0xff]
    %v6834 = vld [vmem:[#allocation43 + $0x120] sm:$0xff]
    %v6835 = vld [vmem:[#allocation43 + $0x128] sm:$0xff]
    %v6836 = vld [vmem:[#allocation43 + $0x130] sm:$0xff]
    %v6837 = vld [vmem:[#allocation43 + $0x138] sm:$0xff]
    %v6838 = vld [vmem:[#allocation43 + $0x140] sm:$0xff]
    %v6839 = vld [vmem:[#allocation43 + $0x148] sm:$0xff]
    %v6840 = vld [vmem:[#allocation43 + $0x150] sm:$0xff]
    %v6841 = vld [vmem:[#allocation43 + $0x158] sm:$0xff]
    %v6842 = vld [vmem:[#allocation43 + $0x160] sm:$0xff]
    %v6843 = vld [vmem:[#allocation43 + $0x168] sm:$0xff]
    %v6844 = vld [vmem:[#allocation43 + $0x170] sm:$0xff]
    %v6845 = vld [vmem:[#allocation43 + $0x178] sm:$0xff]
    %v6846 = vld [vmem:[#allocation43 + $0x180] sm:$0xff]
    %v6847 = vld [vmem:[#allocation43 + $0x188] sm:$0xff]
    %v6848 = vld [vmem:[#allocation43 + $0x190] sm:$0xff]
    %v6849 = vld [vmem:[#allocation43 + $0x198] sm:$0xff]
    %v6850 = vld [vmem:[#allocation43 + $0x1a0] sm:$0xff]
    %v6851 = vld [vmem:[#allocation43 + $0x1a8] sm:$0xff]
    %v6852 = vld [vmem:[#allocation43 + $0x1b0] sm:$0xff]
    %v6853 = vld [vmem:[#allocation43 + $0x1b8] sm:$0xff]
    %v6854 = vld [vmem:[#allocation43 + $0x1c0] sm:$0xff]
    %v6855 = vld [vmem:[#allocation43 + $0x1c8] sm:$0xff]
    %v6856 = vld [vmem:[#allocation43 + $0x1d0] sm:$0xff]
    %v6857 = vld [vmem:[#allocation43 + $0x1d8] sm:$0xff]
    %v6858 = vld [vmem:[#allocation43 + $0x1e0] sm:$0xff]
    %v6859 = vld [vmem:[#allocation43 + $0x1e8] sm:$0xff]
    %v6860 = vld [vmem:[#allocation43 + $0x1f0] sm:$0xff]
    %v6861 = vld [vmem:[#allocation43 + $0x1f8] sm:$0xff]
    %v6862 = vld [vmem:[#allocation43 + $0x200] sm:$0xff]
    %v6863 = vld [vmem:[#allocation43 + $0x208] sm:$0xff]
    %v6864 = vld [vmem:[#allocation43 + $0x210] sm:$0xff]
    %v6865 = vld [vmem:[#allocation43 + $0x218] sm:$0xff]
    %v6866 = vld [vmem:[#allocation43 + $0x220] sm:$0xff]
    %v6867 = vld [vmem:[#allocation43 + $0x228] sm:$0xff]
    %v6868 = vld [vmem:[#allocation43 + $0x230] sm:$0xff]
    %v6869 = vld [vmem:[#allocation43 + $0x238] sm:$0xff]
    %v6870 = vld [vmem:[#allocation43 + $0x240] sm:$0xff]
    %v6871 = vld [vmem:[#allocation43 + $0x248] sm:$0xff]
    %v6872 = vld [vmem:[#allocation43 + $0x250] sm:$0xff]
    %v6873 = vld [vmem:[#allocation43 + $0x258] sm:$0xff]
    %v6874 = vld [vmem:[#allocation43 + $0x260] sm:$0xff]
    %v6875 = vld [vmem:[#allocation43 + $0x268] sm:$0xff]
    %v6876 = vld [vmem:[#allocation43 + $0x270] sm:$0xff]
    %v6877 = vld [vmem:[#allocation43 + $0x278] sm:$0xff]
    %v6878 = vld [vmem:[#allocation43 + $0x280] sm:$0xff]
    %v6879 = vld [vmem:[#allocation43 + $0x288] sm:$0xff]
    %v6880 = vld [vmem:[#allocation43 + $0x290] sm:$0xff]
    %v6881 = vld [vmem:[#allocation43 + $0x298] sm:$0xff]
    %v6882 = vld [vmem:[#allocation43 + $0x2a0] sm:$0xff]
    %v6883 = vld [vmem:[#allocation43 + $0x2a8] sm:$0xff]
    %v6884 = vld [vmem:[#allocation43 + $0x2b0] sm:$0xff]
    %v6885 = vld [vmem:[#allocation43 + $0x2b8] sm:$0xff]
    %v6886 = vld [vmem:[#allocation43 + $0x2c0] sm:$0xff]
    %v6887 = vld [vmem:[#allocation43 + $0x2c8] sm:$0xff]
    %v6888 = vld [vmem:[#allocation43 + $0x2d0] sm:$0xff]
    %v6889 = vld [vmem:[#allocation43 + $0x2d8] sm:$0xff]
    %v6890 = vld [vmem:[#allocation43 + $0x2e0] sm:$0xff]
    %v6891 = vld [vmem:[#allocation43 + $0x2e8] sm:$0xff]
    %v6892 = vld [vmem:[#allocation43 + $0x2f0] sm:$0xff]
    %v6893 = vld [vmem:[#allocation43 + $0x2f8] sm:$0xff]
    %v6894 = vld [vmem:[#allocation43 + $0x300] sm:$0xff]
    %v6895 = vld [vmem:[#allocation43 + $0x308] sm:$0xff]
    %v6896 = vld [vmem:[#allocation43 + $0x310] sm:$0xff]
    %v6897 = vld [vmem:[#allocation43 + $0x318] sm:$0xff]
    %v6898 = vld [vmem:[#allocation43 + $0x320] sm:$0xff]
    %v6899 = vld [vmem:[#allocation43 + $0x328] sm:$0xff]
    %v6900 = vld [vmem:[#allocation43 + $0x330] sm:$0xff]
    %v6901 = vld [vmem:[#allocation43 + $0x338] sm:$0xff]
    %v6902 = vld [vmem:[#allocation43 + $0x340] sm:$0xff]
    %v6903 = vld [vmem:[#allocation43 + $0x348] sm:$0xff]
    %v6904 = vld [vmem:[#allocation43 + $0x350] sm:$0xff]
    %v6905 = vld [vmem:[#allocation43 + $0x358] sm:$0xff]
    %v6906 = vld [vmem:[#allocation43 + $0x360] sm:$0xff]
    %v6907 = vld [vmem:[#allocation43 + $0x368] sm:$0xff]
    %v6908 = vld [vmem:[#allocation43 + $0x370] sm:$0xff]
    %v6909 = vld [vmem:[#allocation43 + $0x378] sm:$0xff]
    %v6910 = vld [vmem:[#allocation43 + $0x380] sm:$0xff]
    %v6911 = vld [vmem:[#allocation43 + $0x388] sm:$0xff]
    %v6912 = vld [vmem:[#allocation43 + $0x390] sm:$0xff]
    %v6913 = vld [vmem:[#allocation43 + $0x398] sm:$0xff]
    %v6914 = vld [vmem:[#allocation43 + $0x3a0] sm:$0xff]
    %v6915 = vld [vmem:[#allocation43 + $0x3a8] sm:$0xff]
    %v6916 = vld [vmem:[#allocation43 + $0x3b0] sm:$0xff]
    %v6917 = vld [vmem:[#allocation43 + $0x3b8] sm:$0xff]
    %v6918 = vld [vmem:[#allocation43 + $0x3c0] sm:$0xff]
    %v6919 = vld [vmem:[#allocation43 + $0x3c8] sm:$0xff]
    %v6920 = vld [vmem:[#allocation43 + $0x3d0] sm:$0xff]
    %v6921 = vld [vmem:[#allocation43 + $0x3d8] sm:$0xff]
    %v6922 = vld [vmem:[#allocation43 + $0x3e0] sm:$0xff]
    %v6923 = vld [vmem:[#allocation43 + $0x3e8] sm:$0xff]
    %v6924 = vld [vmem:[#allocation43 + $0x3f0] sm:$0xff]
    %v6925 = vld [vmem:[#allocation43 + $0x3f8] sm:$0xff]
    %v6926 = vld [vmem:[#allocation43 + $0x400] sm:$0xff]
    %v6927 = vld [vmem:[#allocation43 + $0x408] sm:$0xff]
    %v6928 = vld [vmem:[#allocation43 + $0x410] sm:$0xff]
    %v6929 = vld [vmem:[#allocation43 + $0x418] sm:$0xff]
    %v6930 = vld [vmem:[#allocation43 + $0x420] sm:$0xff]
    %v6931 = vld [vmem:[#allocation43 + $0x428] sm:$0xff]
    %v6932 = vld [vmem:[#allocation43 + $0x430] sm:$0xff]
    %v6933 = vld [vmem:[#allocation43 + $0x438] sm:$0xff]
    %v6934 = vld [vmem:[#allocation43 + $0x440] sm:$0xff]
    %v6935 = vld [vmem:[#allocation43 + $0x448] sm:$0xff]
    %v6936 = vld [vmem:[#allocation43 + $0x450] sm:$0xff]
    %v6937 = vld [vmem:[#allocation43 + $0x458] sm:$0xff]
    %v6938 = vld [vmem:[#allocation43 + $0x460] sm:$0xff]
    %v6939 = vld [vmem:[#allocation43 + $0x468] sm:$0xff]
    %v6940 = vld [vmem:[#allocation43 + $0x470] sm:$0xff]
    %v6941 = vld [vmem:[#allocation43 + $0x478] sm:$0xff]
    %v6942 = vld [vmem:[#allocation43 + $0x480] sm:$0xff]
    %v6943 = vld [vmem:[#allocation43 + $0x488] sm:$0xff]
    %v6944 = vld [vmem:[#allocation43 + $0x490] sm:$0xff]
    %v6945 = vld [vmem:[#allocation43 + $0x498] sm:$0xff]
    %v6946 = vld [vmem:[#allocation43 + $0x4a0] sm:$0xff]
    %v6947 = vld [vmem:[#allocation43 + $0x4a8] sm:$0xff]
    %v6948 = vld [vmem:[#allocation43 + $0x4b0] sm:$0xff]
    %v6949 = vld [vmem:[#allocation43 + $0x4b8] sm:$0xff]
    %v6950 = vld [vmem:[#allocation43 + $0x4c0] sm:$0xff]
    %v6951 = vld [vmem:[#allocation43 + $0x4c8] sm:$0xff]
    %v6952 = vld [vmem:[#allocation43 + $0x4d0] sm:$0xff]
    %v6953 = vld [vmem:[#allocation43 + $0x4d8] sm:$0xff]
    %v6954 = vld [vmem:[#allocation43 + $0x4e0] sm:$0xff]
    %v6955 = vld [vmem:[#allocation43 + $0x4e8] sm:$0xff]
    %v6956 = vld [vmem:[#allocation43 + $0x4f0] sm:$0xff]
    %v6957 = vld [vmem:[#allocation43 + $0x4f8] sm:$0xff]
    %v6958 = vld [vmem:[#allocation43 + $0x500] sm:$0xff]
    %v6959 = vld [vmem:[#allocation43 + $0x508] sm:$0xff]
    %v6960 = vld [vmem:[#allocation43 + $0x510] sm:$0xff]
    %v6961 = vld [vmem:[#allocation43 + $0x518] sm:$0xff]
    %v6962 = vld [vmem:[#allocation43 + $0x520] sm:$0xff]
    %v6963 = vld [vmem:[#allocation43 + $0x528] sm:$0xff]
    %v6964 = vld [vmem:[#allocation43 + $0x530] sm:$0xff]
    %v6965 = vld [vmem:[#allocation43 + $0x538] sm:$0xff]
    %v6966 = vld [vmem:[#allocation43 + $0x540] sm:$0xff]
    %v6967 = vld [vmem:[#allocation43 + $0x548] sm:$0xff]
    %v6968 = vld [vmem:[#allocation43 + $0x550] sm:$0xff]
    %v6969 = vld [vmem:[#allocation43 + $0x558] sm:$0xff]
    %v6970 = vld [vmem:[#allocation43 + $0x560] sm:$0xff]
    %v6971 = vld [vmem:[#allocation43 + $0x568] sm:$0xff]
    %v6972 = vld [vmem:[#allocation43 + $0x570] sm:$0xff]
    %v6973 = vld [vmem:[#allocation43 + $0x578] sm:$0xff]
    %v6974 = vld [vmem:[#allocation43 + $0x580] sm:$0xff]
    %v6975 = vld [vmem:[#allocation43 + $0x588] sm:$0xff]
    %v6976 = vld [vmem:[#allocation43 + $0x590] sm:$0xff]
    %v6977 = vld [vmem:[#allocation43 + $0x598] sm:$0xff]
    %v6978 = vld [vmem:[#allocation43 + $0x5a0] sm:$0xff]
    %v6979 = vld [vmem:[#allocation43 + $0x5a8] sm:$0xff]
    %v6980 = vld [vmem:[#allocation43 + $0x5b0] sm:$0xff]
    %v6981 = vld [vmem:[#allocation43 + $0x5b8] sm:$0xff]
    %v6982 = vld [vmem:[#allocation43 + $0x5c0] sm:$0xff]
    %v6983 = vld [vmem:[#allocation43 + $0x5c8] sm:$0xff]
    %v6984 = vld [vmem:[#allocation43 + $0x5d0] sm:$0xff]
    %v6985 = vld [vmem:[#allocation43 + $0x5d8] sm:$0xff]
    %v6986 = vld [vmem:[#allocation43 + $0x5e0] sm:$0xff]
    %v6987 = vld [vmem:[#allocation43 + $0x5e8] sm:$0xff]
    %v6988 = vld [vmem:[#allocation43 + $0x5f0] sm:$0xff]
    %v6989 = vld [vmem:[#allocation43 + $0x5f8] sm:$0xff]
    %v6990 = vld [vmem:[#allocation43 + $0x600] sm:$0xff]
    %v6991 = vld [vmem:[#allocation43 + $0x608] sm:$0xff]
    %v6992 = vld [vmem:[#allocation43 + $0x610] sm:$0xff]
    %v6993 = vld [vmem:[#allocation43 + $0x618] sm:$0xff]
    %v6994 = vld [vmem:[#allocation43 + $0x620] sm:$0xff]
    %v6995 = vld [vmem:[#allocation43 + $0x628] sm:$0xff]
    %v6996 = vld [vmem:[#allocation43 + $0x630] sm:$0xff]
    %v6997 = vld [vmem:[#allocation43 + $0x638] sm:$0xff]
    %v6998 = vld [vmem:[#allocation43 + $0x640] sm:$0xff]
    %v6999 = vld [vmem:[#allocation43 + $0x648] sm:$0xff]
    %v7000 = vld [vmem:[#allocation43 + $0x650] sm:$0xff]
    %v7001 = vld [vmem:[#allocation43 + $0x658] sm:$0xff]
    %v7002 = vld [vmem:[#allocation43 + $0x660] sm:$0xff]
    %v7003 = vld [vmem:[#allocation43 + $0x668] sm:$0xff]
    %v7004 = vld [vmem:[#allocation43 + $0x670] sm:$0xff]
    %v7005 = vld [vmem:[#allocation43 + $0x678] sm:$0xff]
    %v7006 = vld [vmem:[#allocation43 + $0x680] sm:$0xff]
    %v7007 = vld [vmem:[#allocation43 + $0x688] sm:$0xff]
    %v7008 = vld [vmem:[#allocation43 + $0x690] sm:$0xff]
    %v7009 = vld [vmem:[#allocation43 + $0x698] sm:$0xff]
    %v7010 = vld [vmem:[#allocation43 + $0x6a0] sm:$0xff]
    %v7011 = vld [vmem:[#allocation43 + $0x6a8] sm:$0xff]
    %v7012 = vld [vmem:[#allocation43 + $0x6b0] sm:$0xff]
    %v7013 = vld [vmem:[#allocation43 + $0x6b8] sm:$0xff]
    %v7014 = vld [vmem:[#allocation43 + $0x6c0] sm:$0xff]
    %v7015 = vld [vmem:[#allocation43 + $0x6c8] sm:$0xff]
    %v7016 = vld [vmem:[#allocation43 + $0x6d0] sm:$0xff]
    %v7017 = vld [vmem:[#allocation43 + $0x6d8] sm:$0xff]
    %v7018 = vld [vmem:[#allocation43 + $0x6e0] sm:$0xff]
    %v7019 = vld [vmem:[#allocation43 + $0x6e8] sm:$0xff]
    %v7020 = vld [vmem:[#allocation43 + $0x6f0] sm:$0xff]
    %v7021 = vld [vmem:[#allocation43 + $0x6f8] sm:$0xff]
    %v7022 = vld [vmem:[#allocation43 + $0x700] sm:$0xff]
    %v7023 = vld [vmem:[#allocation43 + $0x708] sm:$0xff]
    %v7024 = vld [vmem:[#allocation43 + $0x710] sm:$0xff]
    %v7025 = vld [vmem:[#allocation43 + $0x718] sm:$0xff]
    %v7026 = vld [vmem:[#allocation43 + $0x720] sm:$0xff]
    %v7027 = vld [vmem:[#allocation43 + $0x728] sm:$0xff]
    %v7028 = vld [vmem:[#allocation43 + $0x730] sm:$0xff]
    %v7029 = vld [vmem:[#allocation43 + $0x738] sm:$0xff]
    %v7030 = vld [vmem:[#allocation43 + $0x740] sm:$0xff]
    %v7031 = vld [vmem:[#allocation43 + $0x748] sm:$0xff]
    %v7032 = vld [vmem:[#allocation43 + $0x750] sm:$0xff]
    %v7033 = vld [vmem:[#allocation43 + $0x758] sm:$0xff]
    %v7034 = vld [vmem:[#allocation43 + $0x760] sm:$0xff]
    %v7035 = vld [vmem:[#allocation43 + $0x768] sm:$0xff]
    %v7036 = vld [vmem:[#allocation43 + $0x770] sm:$0xff]
    %v7037 = vld [vmem:[#allocation43 + $0x778] sm:$0xff]
    %v7038 = vld [vmem:[#allocation43 + $0x780] sm:$0xff]
    %v7039 = vld [vmem:[#allocation43 + $0x788] sm:$0xff]
    %v7040 = vld [vmem:[#allocation43 + $0x790] sm:$0xff]
    %v7041 = vld [vmem:[#allocation43 + $0x798] sm:$0xff]
    %v7042 = vld [vmem:[#allocation43 + $0x7a0] sm:$0xff]
    %v7043 = vld [vmem:[#allocation43 + $0x7a8] sm:$0xff]
    %v7044 = vld [vmem:[#allocation43 + $0x7b0] sm:$0xff]
    %v7045 = vld [vmem:[#allocation43 + $0x7b8] sm:$0xff]
    %v7046 = vld [vmem:[#allocation43 + $0x7c0] sm:$0xff]
    %v7047 = vld [vmem:[#allocation43 + $0x7c8] sm:$0xff]
    %v7048 = vld [vmem:[#allocation43 + $0x7d0] sm:$0xff]
    %v7049 = vld [vmem:[#allocation43 + $0x7d8] sm:$0xff]
    %v7050 = vld [vmem:[#allocation43 + $0x7e0] sm:$0xff]
    %v7051 = vld [vmem:[#allocation43 + $0x7e8] sm:$0xff]
    %v7052 = vld [vmem:[#allocation43 + $0x7f0] sm:$0xff]
    %v7053 = vld [vmem:[#allocation43 + $0x7f8] sm:$0xff]
    %v7054 = vld [vmem:[#allocation43 + $0x800] sm:$0xff]
    %v7055 = vld [vmem:[#allocation43 + $0x808] sm:$0xff]
    %v7056 = vld [vmem:[#allocation43 + $0x810] sm:$0xff]
    %v7057 = vld [vmem:[#allocation43 + $0x818] sm:$0xff]
    %v7058 = vld [vmem:[#allocation43 + $0x820] sm:$0xff]
    %v7059 = vld [vmem:[#allocation43 + $0x828] sm:$0xff]
    %v7060 = vld [vmem:[#allocation43 + $0x830] sm:$0xff]
    %v7061 = vld [vmem:[#allocation43 + $0x838] sm:$0xff]
    %v7062 = vld [vmem:[#allocation43 + $0x840] sm:$0xff]
    %v7063 = vld [vmem:[#allocation43 + $0x848] sm:$0xff]
    %v7064 = vld [vmem:[#allocation43 + $0x850] sm:$0xff]
    %v7065 = vld [vmem:[#allocation43 + $0x858] sm:$0xff]
    %v7066 = vld [vmem:[#allocation43 + $0x860] sm:$0xff]
    %v7067 = vld [vmem:[#allocation43 + $0x868] sm:$0xff]
    %v7068 = vld [vmem:[#allocation43 + $0x870] sm:$0xff]
    %v7069 = vld [vmem:[#allocation43 + $0x878] sm:$0xff]
    %v7070 = vld [vmem:[#allocation43 + $0x880] sm:$0xff]
    %v7071 = vld [vmem:[#allocation43 + $0x888] sm:$0xff]
    %v7072 = vld [vmem:[#allocation43 + $0x890] sm:$0xff]
    %v7073 = vld [vmem:[#allocation43 + $0x898] sm:$0xff]
    %v7074 = vld [vmem:[#allocation43 + $0x8a0] sm:$0xff]
    %v7075 = vld [vmem:[#allocation43 + $0x8a8] sm:$0xff]
    %v7076 = vld [vmem:[#allocation43 + $0x8b0] sm:$0xff]
    %v7077 = vld [vmem:[#allocation43 + $0x8b8] sm:$0xff]
    %v7078 = vld [vmem:[#allocation43 + $0x8c0] sm:$0xff]
    %v7079 = vld [vmem:[#allocation43 + $0x8c8] sm:$0xff]
    %v7080 = vld [vmem:[#allocation43 + $0x8d0] sm:$0xff]
    %v7081 = vld [vmem:[#allocation43 + $0x8d8] sm:$0xff]
    %v7082 = vld [vmem:[#allocation43 + $0x8e0] sm:$0xff]
    %v7083 = vld [vmem:[#allocation43 + $0x8e8] sm:$0xff]
    %v7084 = vld [vmem:[#allocation43 + $0x8f0] sm:$0xff]
    %v7085 = vld [vmem:[#allocation43 + $0x8f8] sm:$0xff]
    %v7086 = vld [vmem:[#allocation43 + $0x900] sm:$0xff]
    %v7087 = vld [vmem:[#allocation43 + $0x908] sm:$0xff]
    %v7088 = vld [vmem:[#allocation43 + $0x910] sm:$0xff]
    %v7089 = vld [vmem:[#allocation43 + $0x918] sm:$0xff]
    %v7090 = vld [vmem:[#allocation43 + $0x920] sm:$0xff]
    %v7091 = vld [vmem:[#allocation43 + $0x928] sm:$0xff]
    %v7092 = vld [vmem:[#allocation43 + $0x930] sm:$0xff]
    %v7093 = vld [vmem:[#allocation43 + $0x938] sm:$0xff]
    %v7094 = vld [vmem:[#allocation43 + $0x940] sm:$0xff]
    %v7095 = vld [vmem:[#allocation43 + $0x948] sm:$0xff]
    %v7096 = vld [vmem:[#allocation43 + $0x950] sm:$0xff]
    %v7097 = vld [vmem:[#allocation43 + $0x958] sm:$0xff]
    %v7098 = vld [vmem:[#allocation43 + $0x960] sm:$0xff]
    %v7099 = vld [vmem:[#allocation43 + $0x968] sm:$0xff]
    %v7100 = vld [vmem:[#allocation43 + $0x970] sm:$0xff]
    %v7101 = vld [vmem:[#allocation43 + $0x978] sm:$0xff]
    %v7102 = vld [vmem:[#allocation43 + $0x980] sm:$0xff]
    %v7103 = vld [vmem:[#allocation43 + $0x988] sm:$0xff]
    %v7104 = vld [vmem:[#allocation43 + $0x990] sm:$0xff]
    %v7105 = vld [vmem:[#allocation43 + $0x998] sm:$0xff]
    %v7106 = vld [vmem:[#allocation43 + $0x9a0] sm:$0xff]
    %v7107 = vld [vmem:[#allocation43 + $0x9a8] sm:$0xff]
    %v7108 = vld [vmem:[#allocation43 + $0x9b0] sm:$0xff]
    %v7109 = vld [vmem:[#allocation43 + $0x9b8] sm:$0xff]
    %v7110 = vld [vmem:[#allocation43 + $0x9c0] sm:$0xff]
    %v7111 = vld [vmem:[#allocation43 + $0x9c8] sm:$0xff]
    %v7112 = vld [vmem:[#allocation43 + $0x9d0] sm:$0xff]
    %v7113 = vld [vmem:[#allocation43 + $0x9d8] sm:$0xff]
    %v7114 = vld [vmem:[#allocation43 + $0x9e0] sm:$0xff]
    %v7115 = vld [vmem:[#allocation43 + $0x9e8] sm:$0xff]
    %v7116 = vld [vmem:[#allocation43 + $0x9f0] sm:$0xff]
    %v7117 = vld [vmem:[#allocation43 + $0x9f8] sm:$0xff]
    %v7118 = vld [vmem:[#allocation43 + $0xa00] sm:$0xff]
    %v7119 = vld [vmem:[#allocation43 + $0xa08] sm:$0xff]
    %v7120 = vld [vmem:[#allocation43 + $0xa10] sm:$0xff]
    %v7121 = vld [vmem:[#allocation43 + $0xa18] sm:$0xff]
    %v7122 = vld [vmem:[#allocation43 + $0xa20] sm:$0xff]
    %v7123 = vld [vmem:[#allocation43 + $0xa28] sm:$0xff]
    %v7124 = vld [vmem:[#allocation43 + $0xa30] sm:$0xff]
    %v7125 = vld [vmem:[#allocation43 + $0xa38] sm:$0xff]
    %v7126 = vld [vmem:[#allocation43 + $0xa40] sm:$0xff]
    %v7127 = vld [vmem:[#allocation43 + $0xa48] sm:$0xff]
    %v7128 = vld [vmem:[#allocation43 + $0xa50] sm:$0xff]
    %v7129 = vld [vmem:[#allocation43 + $0xa58] sm:$0xff]
    %v7130 = vld [vmem:[#allocation43 + $0xa60] sm:$0xff]
    %v7131 = vld [vmem:[#allocation43 + $0xa68] sm:$0xff]
    %v7132 = vld [vmem:[#allocation43 + $0xa70] sm:$0xff]
    %v7133 = vld [vmem:[#allocation43 + $0xa78] sm:$0xff]
    %v7134 = vld [vmem:[#allocation43 + $0xa80] sm:$0xff]
    %v7135 = vld [vmem:[#allocation43 + $0xa88] sm:$0xff]
    %v7136 = vld [vmem:[#allocation43 + $0xa90] sm:$0xff]
    %v7137 = vld [vmem:[#allocation43 + $0xa98] sm:$0xff]
    %v7138 = vld [vmem:[#allocation43 + $0xaa0] sm:$0xff]
    %v7139 = vld [vmem:[#allocation43 + $0xaa8] sm:$0xff]
    %v7140 = vld [vmem:[#allocation43 + $0xab0] sm:$0xff]
    %v7141 = vld [vmem:[#allocation43 + $0xab8] sm:$0xff]
    %v7142 = vld [vmem:[#allocation43 + $0xac0] sm:$0xff]
    %v7143 = vld [vmem:[#allocation43 + $0xac8] sm:$0xff]
    %v7144 = vld [vmem:[#allocation43 + $0xad0] sm:$0xff]
    %v7145 = vld [vmem:[#allocation43 + $0xad8] sm:$0xff]
    %v7146 = vld [vmem:[#allocation43 + $0xae0] sm:$0xff]
    %v7147 = vld [vmem:[#allocation43 + $0xae8] sm:$0xff]
    %v7148 = vld [vmem:[#allocation43 + $0xaf0] sm:$0xff]
    %v7149 = vld [vmem:[#allocation43 + $0xaf8] sm:$0xff]
    %v7150 = vld [vmem:[#allocation43 + $0xb00] sm:$0xff]
    %v7151 = vld [vmem:[#allocation43 + $0xb08] sm:$0xff]
    %v7152 = vld [vmem:[#allocation43 + $0xb10] sm:$0xff]
    %v7153 = vld [vmem:[#allocation43 + $0xb18] sm:$0xff]
    %v7154 = vld [vmem:[#allocation43 + $0xb20] sm:$0xff]
    %v7155 = vld [vmem:[#allocation43 + $0xb28] sm:$0xff]
    %v7156 = vld [vmem:[#allocation43 + $0xb30] sm:$0xff]
    %v7157 = vld [vmem:[#allocation43 + $0xb38] sm:$0xff]
    %v7158 = vld [vmem:[#allocation43 + $0xb40] sm:$0xff]
    %v7159 = vld [vmem:[#allocation43 + $0xb48] sm:$0xff]
    %v7160 = vld [vmem:[#allocation43 + $0xb50] sm:$0xff]
    %v7161 = vld [vmem:[#allocation43 + $0xb58] sm:$0xff]
    %v7162 = vld [vmem:[#allocation43 + $0xb60] sm:$0xff]
    %v7163 = vld [vmem:[#allocation43 + $0xb68] sm:$0xff]
    %v7164 = vld [vmem:[#allocation43 + $0xb70] sm:$0xff]
    %v7165 = vld [vmem:[#allocation43 + $0xb78] sm:$0xff]
    %v7166 = vld [vmem:[#allocation43 + $0xb80] sm:$0xff]
    %v7167 = vld [vmem:[#allocation43 + $0xb88] sm:$0xff]
    %v7168 = vld [vmem:[#allocation43 + $0xb90] sm:$0xff]
    %v7169 = vld [vmem:[#allocation43 + $0xb98] sm:$0xff]
    %v7170 = vld [vmem:[#allocation43 + $0xba0] sm:$0xff]
    %v7171 = vld [vmem:[#allocation43 + $0xba8] sm:$0xff]
    %v7172 = vld [vmem:[#allocation43 + $0xbb0] sm:$0xff]
    %v7173 = vld [vmem:[#allocation43 + $0xbb8] sm:$0xff]
    %v7174 = vld [vmem:[#allocation43 + $0xbc0] sm:$0xff]
    %v7175 = vld [vmem:[#allocation43 + $0xbc8] sm:$0xff]
    %v7176 = vld [vmem:[#allocation43 + $0xbd0] sm:$0xff]
    %v7177 = vld [vmem:[#allocation43 + $0xbd8] sm:$0xff]
    %v7178 = vld [vmem:[#allocation43 + $0xbe0] sm:$0xff]
    %v7179 = vld [vmem:[#allocation43 + $0xbe8] sm:$0xff]
    %v7180 = vld [vmem:[#allocation43 + $0xbf0] sm:$0xff]
    %v7181 = vld [vmem:[#allocation43 + $0xbf8] sm:$0xff]
    %v7182 = vld [vmem:[#allocation43 + $0xc00] sm:$0xff]
    %v7183 = vld [vmem:[#allocation43 + $0xc08] sm:$0xff]
    %v7184 = vld [vmem:[#allocation43 + $0xc10] sm:$0xff]
    %v7185 = vld [vmem:[#allocation43 + $0xc18] sm:$0xff]
    %v7186 = vld [vmem:[#allocation43 + $0xc20] sm:$0xff]
    %v7187 = vld [vmem:[#allocation43 + $0xc28] sm:$0xff]
    %v7188 = vld [vmem:[#allocation43 + $0xc30] sm:$0xff]
    %v7189 = vld [vmem:[#allocation43 + $0xc38] sm:$0xff]
    %v7190 = vld [vmem:[#allocation43 + $0xc40] sm:$0xff]
    %v7191 = vld [vmem:[#allocation43 + $0xc48] sm:$0xff]
    %v7192 = vld [vmem:[#allocation43 + $0xc50] sm:$0xff]
    %v7193 = vld [vmem:[#allocation43 + $0xc58] sm:$0xff]
    %v7194 = vld [vmem:[#allocation43 + $0xc60] sm:$0xff]
    %v7195 = vld [vmem:[#allocation43 + $0xc68] sm:$0xff]
    %v7196 = vld [vmem:[#allocation43 + $0xc70] sm:$0xff]
    %v7197 = vld [vmem:[#allocation43 + $0xc78] sm:$0xff]
    %v7198 = vld [vmem:[#allocation43 + $0xc80] sm:$0xff]
    %v7199 = vld [vmem:[#allocation43 + $0xc88] sm:$0xff]
    %v7200 = vld [vmem:[#allocation43 + $0xc90] sm:$0xff]
    %v7201 = vld [vmem:[#allocation43 + $0xc98] sm:$0xff]
    %v7202 = vld [vmem:[#allocation43 + $0xca0] sm:$0xff]
    %v7203 = vld [vmem:[#allocation43 + $0xca8] sm:$0xff]
    %v7204 = vld [vmem:[#allocation43 + $0xcb0] sm:$0xff]
    %v7205 = vld [vmem:[#allocation43 + $0xcb8] sm:$0xff]
    %v7206 = vld [vmem:[#allocation43 + $0xcc0] sm:$0xff]
    %v7207 = vld [vmem:[#allocation43 + $0xcc8] sm:$0xff]
    %v7208 = vld [vmem:[#allocation43 + $0xcd0] sm:$0xff]
    %v7209 = vld [vmem:[#allocation43 + $0xcd8] sm:$0xff]
    %v7210 = vld [vmem:[#allocation43 + $0xce0] sm:$0xff]
    %v7211 = vld [vmem:[#allocation43 + $0xce8] sm:$0xff]
    %v7212 = vld [vmem:[#allocation43 + $0xcf0] sm:$0xff]
    %v7213 = vld [vmem:[#allocation43 + $0xcf8] sm:$0xff]
    %v7214 = vld [vmem:[#allocation43 + $0xd00] sm:$0xff]
    %v7215 = vld [vmem:[#allocation43 + $0xd08] sm:$0xff]
    %v7216 = vld [vmem:[#allocation43 + $0xd10] sm:$0xff]
    %v7217 = vld [vmem:[#allocation43 + $0xd18] sm:$0xff]
    %v7218 = vld [vmem:[#allocation43 + $0xd20] sm:$0xff]
    %v7219 = vld [vmem:[#allocation43 + $0xd28] sm:$0xff]
    %v7220 = vld [vmem:[#allocation43 + $0xd30] sm:$0xff]
    %v7221 = vld [vmem:[#allocation43 + $0xd38] sm:$0xff]
    %v7222 = vld [vmem:[#allocation43 + $0xd40] sm:$0xff]
    %v7223 = vld [vmem:[#allocation43 + $0xd48] sm:$0xff]
    %v7224 = vld [vmem:[#allocation43 + $0xd50] sm:$0xff]
    %v7225 = vld [vmem:[#allocation43 + $0xd58] sm:$0xff]
    %v7226 = vld [vmem:[#allocation43 + $0xd60] sm:$0xff]
    %v7227 = vld [vmem:[#allocation43 + $0xd68] sm:$0xff]
    %v7228 = vld [vmem:[#allocation43 + $0xd70] sm:$0xff]
    %v7229 = vld [vmem:[#allocation43 + $0xd78] sm:$0xff]
    %v7230 = vld [vmem:[#allocation43 + $0xd80] sm:$0xff]
    %v7231 = vld [vmem:[#allocation43 + $0xd88] sm:$0xff]
    %v7232 = vld [vmem:[#allocation43 + $0xd90] sm:$0xff]
    %v7233 = vld [vmem:[#allocation43 + $0xd98] sm:$0xff]
    %v7234 = vld [vmem:[#allocation43 + $0xda0] sm:$0xff]
    %v7235 = vld [vmem:[#allocation43 + $0xda8] sm:$0xff]
    %v7236 = vld [vmem:[#allocation43 + $0xdb0] sm:$0xff]
    %v7237 = vld [vmem:[#allocation43 + $0xdb8] sm:$0xff]
    %v7238 = vld [vmem:[#allocation43 + $0xdc0] sm:$0xff]
    %v7239 = vld [vmem:[#allocation43 + $0xdc8] sm:$0xff]
    %v7240 = vld [vmem:[#allocation43 + $0xdd0] sm:$0xff]
    %v7241 = vld [vmem:[#allocation43 + $0xdd8] sm:$0xff]
    %v7242 = vld [vmem:[#allocation43 + $0xde0] sm:$0xff]
    %v7243 = vld [vmem:[#allocation43 + $0xde8] sm:$0xff]
    %v7244 = vld [vmem:[#allocation43 + $0xdf0] sm:$0xff]
    %v7245 = vld [vmem:[#allocation43 + $0xdf8] sm:$0xff]
    %v7246 = vld [vmem:[#allocation43 + $0xe00] sm:$0xff]
    %v7247 = vld [vmem:[#allocation43 + $0xe08] sm:$0xff]
    %v7248 = vld [vmem:[#allocation43 + $0xe10] sm:$0xff]
    %v7249 = vld [vmem:[#allocation43 + $0xe18] sm:$0xff]
    %v7250 = vld [vmem:[#allocation43 + $0xe20] sm:$0xff]
    %v7251 = vld [vmem:[#allocation43 + $0xe28] sm:$0xff]
    %v7252 = vld [vmem:[#allocation43 + $0xe30] sm:$0xff]
    %v7253 = vld [vmem:[#allocation43 + $0xe38] sm:$0xff]
    %v7254 = vld [vmem:[#allocation43 + $0xe40] sm:$0xff]
    %v7255 = vld [vmem:[#allocation43 + $0xe48] sm:$0xff]
    %v7256 = vld [vmem:[#allocation43 + $0xe50] sm:$0xff]
    %v7257 = vld [vmem:[#allocation43 + $0xe58] sm:$0xff]
    %v7258 = vld [vmem:[#allocation43 + $0xe60] sm:$0xff]
    %v7259 = vld [vmem:[#allocation43 + $0xe68] sm:$0xff]
    %v7260 = vld [vmem:[#allocation43 + $0xe70] sm:$0xff]
    %v7261 = vld [vmem:[#allocation43 + $0xe78] sm:$0xff]
    %v7262 = vld [vmem:[#allocation43 + $0xe80] sm:$0xff]
    %v7263 = vld [vmem:[#allocation43 + $0xe88] sm:$0xff]
    %v7264 = vld [vmem:[#allocation43 + $0xe90] sm:$0xff]
    %v7265 = vld [vmem:[#allocation43 + $0xe98] sm:$0xff]
    %v7266 = vld [vmem:[#allocation43 + $0xea0] sm:$0xff]
    %v7267 = vld [vmem:[#allocation43 + $0xea8] sm:$0xff]
    %v7268 = vld [vmem:[#allocation43 + $0xeb0] sm:$0xff]
    %v7269 = vld [vmem:[#allocation43 + $0xeb8] sm:$0xff]
    %v7270 = vld [vmem:[#allocation43 + $0xec0] sm:$0xff]
    %v7271 = vld [vmem:[#allocation43 + $0xec8] sm:$0xff]
    %v7272 = vld [vmem:[#allocation43 + $0xed0] sm:$0xff]
    %v7273 = vld [vmem:[#allocation43 + $0xed8] sm:$0xff]
    %v7274 = vld [vmem:[#allocation43 + $0xee0] sm:$0xff]
    %v7275 = vld [vmem:[#allocation43 + $0xee8] sm:$0xff]
    %v7276 = vld [vmem:[#allocation43 + $0xef0] sm:$0xff]
    %v7277 = vld [vmem:[#allocation43 + $0xef8] sm:$0xff]
    %v7278 = vld [vmem:[#allocation43 + $0xf00] sm:$0xff]
    %v7279 = vld [vmem:[#allocation43 + $0xf08] sm:$0xff]
    %v7280 = vld [vmem:[#allocation43 + $0xf10] sm:$0xff]
    %v7281 = vld [vmem:[#allocation43 + $0xf18] sm:$0xff]
    %v7282 = vld [vmem:[#allocation43 + $0xf20] sm:$0xff]
    %v7283 = vld [vmem:[#allocation43 + $0xf28] sm:$0xff]
    %v7284 = vld [vmem:[#allocation43 + $0xf30] sm:$0xff]
    %v7285 = vld [vmem:[#allocation43 + $0xf38] sm:$0xff]
    %v7286 = vld [vmem:[#allocation43 + $0xf40] sm:$0xff]
    %v7287 = vld [vmem:[#allocation43 + $0xf48] sm:$0xff]
    %v7288 = vld [vmem:[#allocation43 + $0xf50] sm:$0xff]
    %v7289 = vld [vmem:[#allocation43 + $0xf58] sm:$0xff]
    %v7290 = vld [vmem:[#allocation43 + $0xf60] sm:$0xff]
    %v7291 = vld [vmem:[#allocation43 + $0xf68] sm:$0xff]
    %v7292 = vld [vmem:[#allocation43 + $0xf70] sm:$0xff]
    %v7293 = vld [vmem:[#allocation43 + $0xf78] sm:$0xff]
    %v7294 = vld [vmem:[#allocation43 + $0xf80] sm:$0xff]
    %v7295 = vld [vmem:[#allocation43 + $0xf88] sm:$0xff]
    %v7296 = vld [vmem:[#allocation43 + $0xf90] sm:$0xff]
    %v7297 = vld [vmem:[#allocation43 + $0xf98] sm:$0xff]
    %v7298 = vld [vmem:[#allocation43 + $0xfa0] sm:$0xff]
    %v7299 = vld [vmem:[#allocation43 + $0xfa8] sm:$0xff]
    %v7300 = vld [vmem:[#allocation43 + $0xfb0] sm:$0xff]
    %v7301 = vld [vmem:[#allocation43 + $0xfb8] sm:$0xff]
    %v7302 = vld [vmem:[#allocation43 + $0xfc0] sm:$0xff]
    %v7303 = vld [vmem:[#allocation43 + $0xfc8] sm:$0xff]
    %v7304 = vld [vmem:[#allocation43 + $0xfd0] sm:$0xff]
    %v7305 = vld [vmem:[#allocation43 + $0xfd8] sm:$0xff]
    %v7306 = vld [vmem:[#allocation43 + $0xfe0] sm:$0xff]
    %v7307 = vld [vmem:[#allocation43 + $0xfe8] sm:$0xff]
    %v7308 = vld [vmem:[#allocation43 + $0xff0] sm:$0xff]
    %v7309 = vld [vmem:[#allocation43 + $0xff8] sm:$0xff]
    %v7310 = vld [vmem:[#allocation44] sm:$0xff]
    %v7311 = vld [vmem:[#allocation46] sm:$0xf]
    %v7312 = vld [vmem:[#allocation46 + $0x4] sm:$0xf]
    %v7313 = vld [vmem:[#allocation46 + $0x8] sm:$0xf]
    %v7314 = vld [vmem:[#allocation46 + $0xc] sm:$0xf]
    %v7315 = vld [vmem:[#allocation46 + $0x10] sm:$0xf]
    %v7316 = vld [vmem:[#allocation46 + $0x14] sm:$0xf]
    %v7317 = vld [vmem:[#allocation46 + $0x18] sm:$0xf]
    %v7318 = vld [vmem:[#allocation46 + $0x1c] sm:$0xf]
    %v7319 = vld [vmem:[#allocation46 + $0x20] sm:$0xf]
    %v7320 = vld [vmem:[#allocation46 + $0x24] sm:$0xf]
    %v7321 = vld [vmem:[#allocation46 + $0x28] sm:$0xf]
    %v7322 = vld [vmem:[#allocation46 + $0x2c] sm:$0xf]
    %v7323 = vld [vmem:[#allocation46 + $0x30] sm:$0xf]
    %v7324 = vld [vmem:[#allocation46 + $0x34] sm:$0xf]
    %v7325 = vld [vmem:[#allocation46 + $0x38] sm:$0xf]
    %v7326 = vld [vmem:[#allocation46 + $0x3c] sm:$0xf]
    %v7327 = vld [vmem:[#allocation46 + $0x40] sm:$0xf]
    %v7328 = vld [vmem:[#allocation46 + $0x44] sm:$0xf]
    %v7329 = vld [vmem:[#allocation46 + $0x48] sm:$0xf]
    %v7330 = vld [vmem:[#allocation46 + $0x4c] sm:$0xf]
    %v7331 = vld [vmem:[#allocation46 + $0x50] sm:$0xf]
    %v7332 = vld [vmem:[#allocation46 + $0x54] sm:$0xf]
    %v7333 = vld [vmem:[#allocation46 + $0x58] sm:$0xf]
    %v7334 = vld [vmem:[#allocation46 + $0x5c] sm:$0xf]
    %v7335 = vld [vmem:[#allocation46 + $0x60] sm:$0xf]
    %v7336 = vld [vmem:[#allocation46 + $0x64] sm:$0xf]
    %v7337 = vld [vmem:[#allocation46 + $0x68] sm:$0xf]
    %v7338 = vld [vmem:[#allocation46 + $0x6c] sm:$0xf]
    %v7339 = vld [vmem:[#allocation46 + $0x70] sm:$0xf]
    %v7340 = vld [vmem:[#allocation46 + $0x74] sm:$0xf]
    %v7341 = vld [vmem:[#allocation46 + $0x78] sm:$0xf]
    %v7342 = vld [vmem:[#allocation46 + $0x7c] sm:$0xf]
    %v7343 = vld [vmem:[#allocation46 + $0x80] sm:$0xf]
    %v7344 = vld [vmem:[#allocation46 + $0x84] sm:$0xf]
    %v7345 = vld [vmem:[#allocation46 + $0x88] sm:$0xf]
    %v7346 = vld [vmem:[#allocation46 + $0x8c] sm:$0xf]
    %v7347 = vld [vmem:[#allocation46 + $0x90] sm:$0xf]
    %v7348 = vld [vmem:[#allocation46 + $0x94] sm:$0xf]
    %v7349 = vld [vmem:[#allocation46 + $0x98] sm:$0xf]
    %v7350 = vld [vmem:[#allocation46 + $0x9c] sm:$0xf]
    %v7351 = vld [vmem:[#allocation46 + $0xa0] sm:$0xf]
    %v7352 = vld [vmem:[#allocation46 + $0xa4] sm:$0xf]
    %v7353 = vld [vmem:[#allocation46 + $0xa8] sm:$0xf]
    %v7354 = vld [vmem:[#allocation46 + $0xac] sm:$0xf]
    %v7355 = vld [vmem:[#allocation46 + $0xb0] sm:$0xf]
    %v7356 = vld [vmem:[#allocation46 + $0xb4] sm:$0xf]
    %v7357 = vld [vmem:[#allocation46 + $0xb8] sm:$0xf]
    %v7358 = vld [vmem:[#allocation46 + $0xbc] sm:$0xf]
    %v7359 = vld [vmem:[#allocation46 + $0xc0] sm:$0xf]
    %v7360 = vld [vmem:[#allocation46 + $0xc4] sm:$0xf]
    %v7361 = vld [vmem:[#allocation46 + $0xc8] sm:$0xf]
    %v7362 = vld [vmem:[#allocation46 + $0xcc] sm:$0xf]
    %v7363 = vld [vmem:[#allocation46 + $0xd0] sm:$0xf]
    %v7364 = vld [vmem:[#allocation46 + $0xd4] sm:$0xf]
    %v7365 = vld [vmem:[#allocation46 + $0xd8] sm:$0xf]
    %v7366 = vld [vmem:[#allocation46 + $0xdc] sm:$0xf]
    %v7367 = vld [vmem:[#allocation46 + $0xe0] sm:$0xf]
    %v7368 = vld [vmem:[#allocation46 + $0xe4] sm:$0xf]
    %v7369 = vld [vmem:[#allocation46 + $0xe8] sm:$0xf]
    %v7370 = vld [vmem:[#allocation46 + $0xec] sm:$0xf]
    %v7371 = vld [vmem:[#allocation46 + $0xf0] sm:$0xf]
    %v7372 = vld [vmem:[#allocation46 + $0xf4] sm:$0xf]
    %v7373 = vld [vmem:[#allocation46 + $0xf8] sm:$0xf]
    %v7374 = vld [vmem:[#allocation46 + $0xfc] sm:$0xf]
    %v7375 = vld [vmem:[#allocation46 + $0x100] sm:$0xf]
    %v7376 = vld [vmem:[#allocation46 + $0x104] sm:$0xf]
    %v7377 = vld [vmem:[#allocation46 + $0x108] sm:$0xf]
    %v7378 = vld [vmem:[#allocation46 + $0x10c] sm:$0xf]
    %v7379 = vld [vmem:[#allocation46 + $0x110] sm:$0xf]
    %v7380 = vld [vmem:[#allocation46 + $0x114] sm:$0xf]
    %v7381 = vld [vmem:[#allocation46 + $0x118] sm:$0xf]
    %v7382 = vld [vmem:[#allocation46 + $0x11c] sm:$0xf]
    %v7383 = vld [vmem:[#allocation46 + $0x120] sm:$0xf]
    %v7384 = vld [vmem:[#allocation46 + $0x124] sm:$0xf]
    %v7385 = vld [vmem:[#allocation46 + $0x128] sm:$0xf]
    %v7386 = vld [vmem:[#allocation46 + $0x12c] sm:$0xf]
    %v7387 = vld [vmem:[#allocation46 + $0x130] sm:$0xf]
    %v7388 = vld [vmem:[#allocation46 + $0x134] sm:$0xf]
    %v7389 = vld [vmem:[#allocation46 + $0x138] sm:$0xf]
    %v7390 = vld [vmem:[#allocation46 + $0x13c] sm:$0xf]
    %v7391 = vld [vmem:[#allocation46 + $0x140] sm:$0xf]
    %v7392 = vld [vmem:[#allocation46 + $0x144] sm:$0xf]
    %v7393 = vld [vmem:[#allocation46 + $0x148] sm:$0xf]
    %v7394 = vld [vmem:[#allocation46 + $0x14c] sm:$0xf]
    %v7395 = vld [vmem:[#allocation46 + $0x150] sm:$0xf]
    %v7396 = vld [vmem:[#allocation46 + $0x154] sm:$0xf]
    %v7397 = vld [vmem:[#allocation46 + $0x158] sm:$0xf]
    %v7398 = vld [vmem:[#allocation46 + $0x15c] sm:$0xf]
    %v7399 = vld [vmem:[#allocation46 + $0x160] sm:$0xf]
    %v7400 = vld [vmem:[#allocation46 + $0x164] sm:$0xf]
    %v7401 = vld [vmem:[#allocation46 + $0x168] sm:$0xf]
    %v7402 = vld [vmem:[#allocation46 + $0x16c] sm:$0xf]
    %v7403 = vld [vmem:[#allocation46 + $0x170] sm:$0xf]
    %v7404 = vld [vmem:[#allocation46 + $0x174] sm:$0xf]
    %v7405 = vld [vmem:[#allocation46 + $0x178] sm:$0xf]
    %v7406 = vld [vmem:[#allocation46 + $0x17c] sm:$0xf]
    %v7407 = vld [vmem:[#allocation46 + $0x180] sm:$0xf]
    %v7408 = vld [vmem:[#allocation46 + $0x184] sm:$0xf]
    %v7409 = vld [vmem:[#allocation46 + $0x188] sm:$0xf]
    %v7410 = vld [vmem:[#allocation46 + $0x18c] sm:$0xf]
    %v7411 = vld [vmem:[#allocation46 + $0x190] sm:$0xf]
    %v7412 = vld [vmem:[#allocation46 + $0x194] sm:$0xf]
    %v7413 = vld [vmem:[#allocation46 + $0x198] sm:$0xf]
    %v7414 = vld [vmem:[#allocation46 + $0x19c] sm:$0xf]
    %v7415 = vld [vmem:[#allocation46 + $0x1a0] sm:$0xf]
    %v7416 = vld [vmem:[#allocation46 + $0x1a4] sm:$0xf]
    %v7417 = vld [vmem:[#allocation46 + $0x1a8] sm:$0xf]
    %v7418 = vld [vmem:[#allocation46 + $0x1ac] sm:$0xf]
    %v7419 = vld [vmem:[#allocation46 + $0x1b0] sm:$0xf]
    %v7420 = vld [vmem:[#allocation46 + $0x1b4] sm:$0xf]
    %v7421 = vld [vmem:[#allocation46 + $0x1b8] sm:$0xf]
    %v7422 = vld [vmem:[#allocation46 + $0x1bc] sm:$0xf]
    %v7423 = vld [vmem:[#allocation46 + $0x1c0] sm:$0xf]
    %v7424 = vld [vmem:[#allocation46 + $0x1c4] sm:$0xf]
    %v7425 = vld [vmem:[#allocation46 + $0x1c8] sm:$0xf]
    %v7426 = vld [vmem:[#allocation46 + $0x1cc] sm:$0xf]
    %v7427 = vld [vmem:[#allocation46 + $0x1d0] sm:$0xf]
    %v7428 = vld [vmem:[#allocation46 + $0x1d4] sm:$0xf]
    %v7429 = vld [vmem:[#allocation46 + $0x1d8] sm:$0xf]
    %v7430 = vld [vmem:[#allocation46 + $0x1dc] sm:$0xf]
    %v7431 = vld [vmem:[#allocation46 + $0x1e0] sm:$0xf]
    %v7432 = vld [vmem:[#allocation46 + $0x1e4] sm:$0xf]
    %v7433 = vld [vmem:[#allocation46 + $0x1e8] sm:$0xf]
    %v7434 = vld [vmem:[#allocation46 + $0x1ec] sm:$0xf]
    %v7435 = vld [vmem:[#allocation46 + $0x1f0] sm:$0xf]
    %v7436 = vld [vmem:[#allocation46 + $0x1f4] sm:$0xf]
    %v7437 = vld [vmem:[#allocation46 + $0x1f8] sm:$0xf]
    %v7438 = vld [vmem:[#allocation46 + $0x1fc] sm:$0xf]
    %v7439 = vld [vmem:[#allocation47] sm:$0x1]
    %v7441 = vperm.slane %v6797, 0
    %v7442 = vperm.slane %v6797, 1
    %v7443 = vperm.slane %v6797, 2
    %v7444 = vperm.slane %v6797, 3
    %v7445 = vperm.slane %v6797, 4
    %v7446 = vperm.slane %v6797, 5
    %v7447 = vperm.slane %v6797, 6
    %v7448 = vperm.slane %v6797, 7
    %v7521 = vunpack.c.l.b16 %v6733
    %v7522 = vunpack.c.h.b16 %v6733
    %v7523 = vunpack.c.l.b16 %v6734
    %v7524 = vunpack.c.h.b16 %v6734
    %v7525 = vunpack.c.l.b16 %v6735
    %v7526 = vunpack.c.h.b16 %v6735
    %v7527 = vunpack.c.l.b16 %v6736
    %v7528 = vunpack.c.h.b16 %v6736
    %v7529 = vunpack.c.l.b16 %v6737
    %v7530 = vunpack.c.h.b16 %v6737
    %v7531 = vunpack.c.l.b16 %v6738
    %v7532 = vunpack.c.h.b16 %v6738
    %v7533 = vunpack.c.l.b16 %v6739
    %v7534 = vunpack.c.h.b16 %v6739
    %v7535 = vunpack.c.l.b16 %v6740
    %v7536 = vunpack.c.h.b16 %v6740
    %v7537 = vunpack.c.l.b16 %v6741
    %v7538 = vunpack.c.h.b16 %v6741
    %v7539 = vunpack.c.l.b16 %v6742
    %v7540 = vunpack.c.h.b16 %v6742
    %v7541 = vunpack.c.l.b16 %v6743
    %v7542 = vunpack.c.h.b16 %v6743
    %v7543 = vunpack.c.l.b16 %v6744
    %v7544 = vunpack.c.h.b16 %v6744
    %v7545 = vunpack.c.l.b16 %v6745
    %v7546 = vunpack.c.h.b16 %v6745
    %v7547 = vunpack.c.l.b16 %v6746
    %v7548 = vunpack.c.h.b16 %v6746
    %v7549 = vunpack.c.l.b16 %v6747
    %v7550 = vunpack.c.h.b16 %v6747
    %v7551 = vunpack.c.l.b16 %v6748
    %v7552 = vunpack.c.h.b16 %v6748
    %v7553 = vunpack.c.l.b16 %v6749
    %v7554 = vunpack.c.h.b16 %v6749
    %v7555 = vunpack.c.l.b16 %v6750
    %v7556 = vunpack.c.h.b16 %v6750
    %v7557 = vunpack.c.l.b16 %v6751
    %v7558 = vunpack.c.h.b16 %v6751
    %v7559 = vunpack.c.l.b16 %v6752
    %v7560 = vunpack.c.h.b16 %v6752
    %v7561 = vunpack.c.l.b16 %v6753
    %v7562 = vunpack.c.h.b16 %v6753
    %v7563 = vunpack.c.l.b16 %v6754
    %v7564 = vunpack.c.h.b16 %v6754
    %v7565 = vunpack.c.l.b16 %v6755
    %v7566 = vunpack.c.h.b16 %v6755
    %v7567 = vunpack.c.l.b16 %v6756
    %v7568 = vunpack.c.h.b16 %v6756
    %v7569 = vunpack.c.l.b16 %v6757
    %v7570 = vunpack.c.h.b16 %v6757
    %v7571 = vunpack.c.l.b16 %v6758
    %v7572 = vunpack.c.h.b16 %v6758
    %v7573 = vunpack.c.l.b16 %v6759
    %v7574 = vunpack.c.h.b16 %v6759
    %v7575 = vunpack.c.l.b16 %v6760
    %v7576 = vunpack.c.h.b16 %v6760
    %v7577 = vunpack.c.l.b16 %v6761
    %v7578 = vunpack.c.h.b16 %v6761
    %v7579 = vunpack.c.l.b16 %v6762
    %v7580 = vunpack.c.h.b16 %v6762
    %v7581 = vunpack.c.l.b16 %v6763
    %v7582 = vunpack.c.h.b16 %v6763
    %v7583 = vunpack.c.l.b16 %v6764
    %v7584 = vunpack.c.h.b16 %v6764
    %v7585 = vunpack.c.l.b16 %v6765
    %v7586 = vunpack.c.h.b16 %v6765
    %v7587 = vunpack.c.l.b16 %v6766
    %v7588 = vunpack.c.h.b16 %v6766
    %v7589 = vunpack.c.l.b16 %v6767
    %v7590 = vunpack.c.h.b16 %v6767
    %v7591 = vunpack.c.l.b16 %v6768
    %v7592 = vunpack.c.h.b16 %v6768
    %v7593 = vunpack.c.l.b16 %v6769
    %v7594 = vunpack.c.h.b16 %v6769
    %v7595 = vunpack.c.l.b16 %v6770
    %v7596 = vunpack.c.h.b16 %v6770
    %v7597 = vunpack.c.l.b16 %v6771
    %v7598 = vunpack.c.h.b16 %v6771
    %v7599 = vunpack.c.l.b16 %v6772
    %v7600 = vunpack.c.h.b16 %v6772
    %v7601 = vunpack.c.l.b16 %v6773
    %v7602 = vunpack.c.h.b16 %v6773
    %v7603 = vunpack.c.l.b16 %v6774
    %v7604 = vunpack.c.h.b16 %v6774
    %v7605 = vunpack.c.l.b16 %v6775
    %v7606 = vunpack.c.h.b16 %v6775
    %v7607 = vunpack.c.l.b16 %v6776
    %v7608 = vunpack.c.h.b16 %v6776
    %v7609 = vunpack.c.l.b16 %v6777
    %v7610 = vunpack.c.h.b16 %v6777
    %v7611 = vunpack.c.l.b16 %v6778
    %v7612 = vunpack.c.h.b16 %v6778
    %v7613 = vunpack.c.l.b16 %v6779
    %v7614 = vunpack.c.h.b16 %v6779
    %v7615 = vunpack.c.l.b16 %v6780
    %v7616 = vunpack.c.h.b16 %v6780
    %v7617 = vunpack.c.l.b16 %v6781
    %v7618 = vunpack.c.h.b16 %v6781
    %v7619 = vunpack.c.l.b16 %v6782
    %v7620 = vunpack.c.h.b16 %v6782
    %v7621 = vunpack.c.l.b16 %v6783
    %v7622 = vunpack.c.h.b16 %v6783
    %v7623 = vunpack.c.l.b16 %v6784
    %v7624 = vunpack.c.h.b16 %v6784
    %v7625 = vunpack.c.l.b16 %v6785
    %v7626 = vunpack.c.h.b16 %v6785
    %v7627 = vunpack.c.l.b16 %v6786
    %v7628 = vunpack.c.h.b16 %v6786
    %v7629 = vunpack.c.l.b16 %v6787
    %v7630 = vunpack.c.h.b16 %v6787
    %v7631 = vunpack.c.l.b16 %v6788
    %v7632 = vunpack.c.h.b16 %v6788
    %v7633 = vunpack.c.l.b16 %v6789
    %v7634 = vunpack.c.h.b16 %v6789
    %v7635 = vunpack.c.l.b16 %v6790
    %v7636 = vunpack.c.h.b16 %v6790
    %v7637 = vunpack.c.l.b16 %v6791
    %v7638 = vunpack.c.h.b16 %v6791
    %v7639 = vunpack.c.l.b16 %v6792
    %v7640 = vunpack.c.h.b16 %v6792
    %v7641 = vunpack.c.l.b16 %v6793
    %v7642 = vunpack.c.h.b16 %v6793
    %v7643 = vunpack.c.l.b16 %v6794
    %v7644 = vunpack.c.h.b16 %v6794
    %v7645 = vunpack.c.l.b16 %v6795
    %v7646 = vunpack.c.h.b16 %v6795
    %v7647 = vunpack.c.l.b16 %v6796
    %v7648 = vunpack.c.h.b16 %v6796
    %v7649 = vpack.c.b16 %v7529, %v7521
    %v7650 = vpack.c.b16 %v7530, %v7522
    %v7651 = vpack.c.b16 %v7531, %v7523
    %v7652 = vpack.c.b16 %v7532, %v7524
    %v7653 = vpack.c.b16 %v7533, %v7525
    %v7654 = vpack.c.b16 %v7534, %v7526
    %v7655 = vpack.c.b16 %v7535, %v7527
    %v7656 = vpack.c.b16 %v7536, %v7528
    %v7657 = vpack.c.b16 %v7545, %v7537
    %v7658 = vpack.c.b16 %v7546, %v7538
    %v7659 = vpack.c.b16 %v7547, %v7539
    %v7660 = vpack.c.b16 %v7548, %v7540
    %v7661 = vpack.c.b16 %v7549, %v7541
    %v7662 = vpack.c.b16 %v7550, %v7542
    %v7663 = vpack.c.b16 %v7551, %v7543
    %v7664 = vpack.c.b16 %v7552, %v7544
    %v7665 = vpack.c.b16 %v7561, %v7553
    %v7666 = vpack.c.b16 %v7562, %v7554
    %v7667 = vpack.c.b16 %v7563, %v7555
    %v7668 = vpack.c.b16 %v7564, %v7556
    %v7669 = vpack.c.b16 %v7565, %v7557
    %v7670 = vpack.c.b16 %v7566, %v7558
    %v7671 = vpack.c.b16 %v7567, %v7559
    %v7672 = vpack.c.b16 %v7568, %v7560
    %v7673 = vpack.c.b16 %v7577, %v7569
    %v7674 = vpack.c.b16 %v7578, %v7570
    %v7675 = vpack.c.b16 %v7579, %v7571
    %v7676 = vpack.c.b16 %v7580, %v7572
    %v7677 = vpack.c.b16 %v7581, %v7573
    %v7678 = vpack.c.b16 %v7582, %v7574
    %v7679 = vpack.c.b16 %v7583, %v7575
    %v7680 = vpack.c.b16 %v7584, %v7576
    %v7681 = vpack.c.b16 %v7593, %v7585
    %v7682 = vpack.c.b16 %v7594, %v7586
    %v7683 = vpack.c.b16 %v7595, %v7587
    %v7684 = vpack.c.b16 %v7596, %v7588
    %v7685 = vpack.c.b16 %v7597, %v7589
    %v7686 = vpack.c.b16 %v7598, %v7590
    %v7687 = vpack.c.b16 %v7599, %v7591
    %v7688 = vpack.c.b16 %v7600, %v7592
    %v7689 = vpack.c.b16 %v7609, %v7601
    %v7690 = vpack.c.b16 %v7610, %v7602
    %v7691 = vpack.c.b16 %v7611, %v7603
    %v7692 = vpack.c.b16 %v7612, %v7604
    %v7693 = vpack.c.b16 %v7613, %v7605
    %v7694 = vpack.c.b16 %v7614, %v7606
    %v7695 = vpack.c.b16 %v7615, %v7607
    %v7696 = vpack.c.b16 %v7616, %v7608
    %v7697 = vpack.c.b16 %v7625, %v7617
    %v7698 = vpack.c.b16 %v7626, %v7618
    %v7699 = vpack.c.b16 %v7627, %v7619
    %v7700 = vpack.c.b16 %v7628, %v7620
    %v7701 = vpack.c.b16 %v7629, %v7621
    %v7702 = vpack.c.b16 %v7630, %v7622
    %v7703 = vpack.c.b16 %v7631, %v7623
    %v7704 = vpack.c.b16 %v7632, %v7624
    %v7705 = vpack.c.b16 %v7641, %v7633
    %v7706 = vpack.c.b16 %v7642, %v7634
    %v7707 = vpack.c.b16 %v7643, %v7635
    %v7708 = vpack.c.b16 %v7644, %v7636
    %v7709 = vpack.c.b16 %v7645, %v7637
    %v7710 = vpack.c.b16 %v7646, %v7638
    %v7711 = vpack.c.b16 %v7647, %v7639
    %v7712 = vpack.c.b16 %v7648, %v7640
    %7777 = vmatpush.bf16.msra.mxu0 %v7705
    %7778 = vmatpush.bf16.msra.mxu0 %v7697
    %7779 = vmatpush.bf16.msra.mxu0 %v7689
    %7780 = vmatpush.bf16.msra.mxu0 %v7681
    %7781 = vmatpush.bf16.msra.mxu0 %v7673
    %7782 = vmatpush.bf16.msra.mxu0 %v7665
    %7783 = vmatpush.bf16.msra.mxu0 %v7657
    %7784 = vmatpush.bf16.msra.mxu0 %v7649
    %7785 = vmatmul.bf16.gmra.mxu0 %v2358
    %v7786 = vpop.f32.mrf.mxu0
    %v7787 = vadd.f32 %v7441, %v7786
    %v7788 = vpop.f32.mrf.mxu0
    %7789 = vdwg.mxu0
    %7790 = vmatpush.bf16.msra.mxu0 %v7706
    %7791 = vmatpush.bf16.msra.mxu0 %v7698
    %7792 = vmatpush.bf16.msra.mxu0 %v7690
    %7793 = vmatpush.bf16.msra.mxu0 %v7682
    %7794 = vmatpush.bf16.msra.mxu0 %v7674
    %7795 = vmatpush.bf16.msra.mxu0 %v7666
    %7796 = vmatpush.bf16.msra.mxu0 %v7658
    %7797 = vmatpush.bf16.msra.mxu0 %v7650
    %7798 = vmatmul.bf16.gmra.mxu0 %v2358
    %v7799 = vpop.f32.mrf.mxu0
    %v7800 = vadd.f32 %v7442, %v7799
    %v7801 = vpop.f32.mrf.mxu0
    %7802 = vdwg.mxu0
    %7803 = vmatpush.bf16.msra.mxu0 %v7707
    %7804 = vmatpush.bf16.msra.mxu0 %v7699
    %7805 = vmatpush.bf16.msra.mxu0 %v7691
    %7806 = vmatpush.bf16.msra.mxu0 %v7683
    %7807 = vmatpush.bf16.msra.mxu0 %v7675
    %7808 = vmatpush.bf16.msra.mxu0 %v7667
    %7809 = vmatpush.bf16.msra.mxu0 %v7659
    %7810 = vmatpush.bf16.msra.mxu0 %v7651
    %7811 = vmatmul.bf16.gmra.mxu0 %v2358
    %v7812 = vpop.f32.mrf.mxu0
    %v7813 = vadd.f32 %v7443, %v7812
    %v7814 = vpop.f32.mrf.mxu0
    %7815 = vdwg.mxu0
    %7816 = vmatpush.bf16.msra.mxu0 %v7708
    %7817 = vmatpush.bf16.msra.mxu0 %v7700
    %7818 = vmatpush.bf16.msra.mxu0 %v7692
    %7819 = vmatpush.bf16.msra.mxu0 %v7684
    %7820 = vmatpush.bf16.msra.mxu0 %v7676
    %7821 = vmatpush.bf16.msra.mxu0 %v7668
    %7822 = vmatpush.bf16.msra.mxu0 %v7660
    %7823 = vmatpush.bf16.msra.mxu0 %v7652
    %7824 = vmatmul.bf16.gmra.mxu0 %v2358
    %v7825 = vpop.f32.mrf.mxu0
    %v7826 = vadd.f32 %v7444, %v7825
    %v7827 = vpop.f32.mrf.mxu0
    %7828 = vdwg.mxu0
    %7829 = vmatpush.bf16.msra.mxu0 %v7709
    %7830 = vmatpush.bf16.msra.mxu0 %v7701
    %7831 = vmatpush.bf16.msra.mxu0 %v7693
    %7832 = vmatpush.bf16.msra.mxu0 %v7685
    %7833 = vmatpush.bf16.msra.mxu0 %v7677
    %7834 = vmatpush.bf16.msra.mxu0 %v7669
    %7835 = vmatpush.bf16.msra.mxu0 %v7661
    %7836 = vmatpush.bf16.msra.mxu0 %v7653
    %7837 = vmatmul.bf16.gmra.mxu0 %v2358
    %v7838 = vpop.f32.mrf.mxu0
    %v7839 = vadd.f32 %v7445, %v7838
    %v7840 = vpop.f32.mrf.mxu0
    %7841 = vdwg.mxu0
    %7842 = vmatpush.bf16.msra.mxu0 %v7710
    %7843 = vmatpush.bf16.msra.mxu0 %v7702
    %7844 = vmatpush.bf16.msra.mxu0 %v7694
    %7845 = vmatpush.bf16.msra.mxu0 %v7686
    %7846 = vmatpush.bf16.msra.mxu0 %v7678
    %7847 = vmatpush.bf16.msra.mxu0 %v7670
    %7848 = vmatpush.bf16.msra.mxu0 %v7662
    %7849 = vmatpush.bf16.msra.mxu0 %v7654
    %7850 = vmatmul.bf16.gmra.mxu0 %v2358
    %v7851 = vpop.f32.mrf.mxu0
    %v7852 = vadd.f32 %v7446, %v7851
    %v7853 = vpop.f32.mrf.mxu0
    %7854 = vdwg.mxu0
    %7855 = vmatpush.bf16.msra.mxu0 %v7711
    %7856 = vmatpush.bf16.msra.mxu0 %v7703
    %7857 = vmatpush.bf16.msra.mxu0 %v7695
    %7858 = vmatpush.bf16.msra.mxu0 %v7687
    %7859 = vmatpush.bf16.msra.mxu0 %v7679
    %7860 = vmatpush.bf16.msra.mxu0 %v7671
    %7861 = vmatpush.bf16.msra.mxu0 %v7663
    %7862 = vmatpush.bf16.msra.mxu0 %v7655
    %7863 = vmatmul.bf16.gmra.mxu0 %v2358
    %v7864 = vpop.f32.mrf.mxu0
    %v7865 = vadd.f32 %v7447, %v7864
    %v7866 = vpop.f32.mrf.mxu0
    %7867 = vdwg.mxu0
    %7868 = vmatpush.bf16.msra.mxu0 %v7712
    %7869 = vmatpush.bf16.msra.mxu0 %v7704
    %7870 = vmatpush.bf16.msra.mxu0 %v7696
    %7871 = vmatpush.bf16.msra.mxu0 %v7688
    %7872 = vmatpush.bf16.msra.mxu0 %v7680
    %7873 = vmatpush.bf16.msra.mxu0 %v7672
    %7874 = vmatpush.bf16.msra.mxu0 %v7664
    %7875 = vmatpush.bf16.msra.mxu0 %v7656
    %7876 = vmatmul.bf16.gmra.mxu0 %v2358
    %v7877 = vpop.f32.mrf.mxu0
    %v7878 = vadd.f32 %v7448, %v7877
    %v7879 = vpop.f32.mrf.mxu0
    %7880 = vdwg.mxu0
    %v7881 = vmax.f32 %v7787, 0.0
    %v7882 = vmax.f32 %v7800, 0.0
    %v7883 = vmax.f32 %v7813, 0.0
    %v7884 = vmax.f32 %v7826, 0.0
    %v7885 = vmax.f32 %v7839, 0.0
    %v7886 = vmax.f32 %v7852, 0.0
    %v7887 = vmax.f32 %v7865, 0.0
    %v7888 = vmax.f32 %v7878, 0.0
    %v7889 = vpack.c.bf16 %v7881, %v7881
    %v7890 = vpack.c.bf16 %v7882, %v7882
    %v7891 = vpack.c.bf16 %v7883, %v7883
    %v7892 = vpack.c.bf16 %v7884, %v7884
    %v7893 = vpack.c.bf16 %v7885, %v7885
    %v7894 = vpack.c.bf16 %v7886, %v7886
    %v7895 = vpack.c.bf16 %v7887, %v7887
    %v7896 = vpack.c.bf16 %v7888, %v7888
    %v7898 = vperm.slane %v7310, 0
    %v7899 = vperm.slane %v7310, 1
    %v7900 = vperm.slane %v7310, 2
    %v7901 = vperm.slane %v7310, 3
    %v7902 = vperm.slane %v7310, 4
    %v7903 = vperm.slane %v7310, 5
    %v7904 = vperm.slane %v7310, 6
    %v7905 = vperm.slane %v7310, 7
    %v8426 = vunpack.c.l.b16 %v6798
    %v8427 = vunpack.c.h.b16 %v6798
    %v8428 = vunpack.c.l.b16 %v6799
    %v8429 = vunpack.c.h.b16 %v6799
    %v8430 = vunpack.c.l.b16 %v6800
    %v8431 = vunpack.c.h.b16 %v6800
    %v8432 = vunpack.c.l.b16 %v6801
    %v8433 = vunpack.c.h.b16 %v6801
    %v8434 = vunpack.c.l.b16 %v6802
    %v8435 = vunpack.c.h.b16 %v6802
    %v8436 = vunpack.c.l.b16 %v6803
    %v8437 = vunpack.c.h.b16 %v6803
    %v8438 = vunpack.c.l.b16 %v6804
    %v8439 = vunpack.c.h.b16 %v6804
    %v8440 = vunpack.c.l.b16 %v6805
    %v8441 = vunpack.c.h.b16 %v6805
    %v8442 = vunpack.c.l.b16 %v6806
    %v8443 = vunpack.c.h.b16 %v6806
    %v8444 = vunpack.c.l.b16 %v6807
    %v8445 = vunpack.c.h.b16 %v6807
    %v8446 = vunpack.c.l.b16 %v6808
    %v8447 = vunpack.c.h.b16 %v6808
    %v8448 = vunpack.c.l.b16 %v6809
    %v8449 = vunpack.c.h.b16 %v6809
    %v8450 = vunpack.c.l.b16 %v6810
    %v8451 = vunpack.c.h.b16 %v6810
    %v8452 = vunpack.c.l.b16 %v6811
    %v8453 = vunpack.c.h.b16 %v6811
    %v8454 = vunpack.c.l.b16 %v6812
    %v8455 = vunpack.c.h.b16 %v6812
    %v8456 = vunpack.c.l.b16 %v6813
    %v8457 = vunpack.c.h.b16 %v6813
    %v8458 = vunpack.c.l.b16 %v6814
    %v8459 = vunpack.c.h.b16 %v6814
    %v8460 = vunpack.c.l.b16 %v6815
    %v8461 = vunpack.c.h.b16 %v6815
    %v8462 = vunpack.c.l.b16 %v6816
    %v8463 = vunpack.c.h.b16 %v6816
    %v8464 = vunpack.c.l.b16 %v6817
    %v8465 = vunpack.c.h.b16 %v6817
    %v8466 = vunpack.c.l.b16 %v6818
    %v8467 = vunpack.c.h.b16 %v6818
    %v8468 = vunpack.c.l.b16 %v6819
    %v8469 = vunpack.c.h.b16 %v6819
    %v8470 = vunpack.c.l.b16 %v6820
    %v8471 = vunpack.c.h.b16 %v6820
    %v8472 = vunpack.c.l.b16 %v6821
    %v8473 = vunpack.c.h.b16 %v6821
    %v8474 = vunpack.c.l.b16 %v6822
    %v8475 = vunpack.c.h.b16 %v6822
    %v8476 = vunpack.c.l.b16 %v6823
    %v8477 = vunpack.c.h.b16 %v6823
    %v8478 = vunpack.c.l.b16 %v6824
    %v8479 = vunpack.c.h.b16 %v6824
    %v8480 = vunpack.c.l.b16 %v6825
    %v8481 = vunpack.c.h.b16 %v6825
    %v8482 = vunpack.c.l.b16 %v6826
    %v8483 = vunpack.c.h.b16 %v6826
    %v8484 = vunpack.c.l.b16 %v6827
    %v8485 = vunpack.c.h.b16 %v6827
    %v8486 = vunpack.c.l.b16 %v6828
    %v8487 = vunpack.c.h.b16 %v6828
    %v8488 = vunpack.c.l.b16 %v6829
    %v8489 = vunpack.c.h.b16 %v6829
    %v8490 = vunpack.c.l.b16 %v6830
    %v8491 = vunpack.c.h.b16 %v6830
    %v8492 = vunpack.c.l.b16 %v6831
    %v8493 = vunpack.c.h.b16 %v6831
    %v8494 = vunpack.c.l.b16 %v6832
    %v8495 = vunpack.c.h.b16 %v6832
    %v8496 = vunpack.c.l.b16 %v6833
    %v8497 = vunpack.c.h.b16 %v6833
    %v8498 = vunpack.c.l.b16 %v6834
    %v8499 = vunpack.c.h.b16 %v6834
    %v8500 = vunpack.c.l.b16 %v6835
    %v8501 = vunpack.c.h.b16 %v6835
    %v8502 = vunpack.c.l.b16 %v6836
    %v8503 = vunpack.c.h.b16 %v6836
    %v8504 = vunpack.c.l.b16 %v6837
    %v8505 = vunpack.c.h.b16 %v6837
    %v8506 = vunpack.c.l.b16 %v6838
    %v8507 = vunpack.c.h.b16 %v6838
    %v8508 = vunpack.c.l.b16 %v6839
    %v8509 = vunpack.c.h.b16 %v6839
    %v8510 = vunpack.c.l.b16 %v6840
    %v8511 = vunpack.c.h.b16 %v6840
    %v8512 = vunpack.c.l.b16 %v6841
    %v8513 = vunpack.c.h.b16 %v6841
    %v8514 = vunpack.c.l.b16 %v6842
    %v8515 = vunpack.c.h.b16 %v6842
    %v8516 = vunpack.c.l.b16 %v6843
    %v8517 = vunpack.c.h.b16 %v6843
    %v8518 = vunpack.c.l.b16 %v6844
    %v8519 = vunpack.c.h.b16 %v6844
    %v8520 = vunpack.c.l.b16 %v6845
    %v8521 = vunpack.c.h.b16 %v6845
    %v8522 = vunpack.c.l.b16 %v6846
    %v8523 = vunpack.c.h.b16 %v6846
    %v8524 = vunpack.c.l.b16 %v6847
    %v8525 = vunpack.c.h.b16 %v6847
    %v8526 = vunpack.c.l.b16 %v6848
    %v8527 = vunpack.c.h.b16 %v6848
    %v8528 = vunpack.c.l.b16 %v6849
    %v8529 = vunpack.c.h.b16 %v6849
    %v8530 = vunpack.c.l.b16 %v6850
    %v8531 = vunpack.c.h.b16 %v6850
    %v8532 = vunpack.c.l.b16 %v6851
    %v8533 = vunpack.c.h.b16 %v6851
    %v8534 = vunpack.c.l.b16 %v6852
    %v8535 = vunpack.c.h.b16 %v6852
    %v8536 = vunpack.c.l.b16 %v6853
    %v8537 = vunpack.c.h.b16 %v6853
    %v8538 = vunpack.c.l.b16 %v6854
    %v8539 = vunpack.c.h.b16 %v6854
    %v8540 = vunpack.c.l.b16 %v6855
    %v8541 = vunpack.c.h.b16 %v6855
    %v8542 = vunpack.c.l.b16 %v6856
    %v8543 = vunpack.c.h.b16 %v6856
    %v8544 = vunpack.c.l.b16 %v6857
    %v8545 = vunpack.c.h.b16 %v6857
    %v8546 = vunpack.c.l.b16 %v6858
    %v8547 = vunpack.c.h.b16 %v6858
    %v8548 = vunpack.c.l.b16 %v6859
    %v8549 = vunpack.c.h.b16 %v6859
    %v8550 = vunpack.c.l.b16 %v6860
    %v8551 = vunpack.c.h.b16 %v6860
    %v8552 = vunpack.c.l.b16 %v6861
    %v8553 = vunpack.c.h.b16 %v6861
    %v8554 = vunpack.c.l.b16 %v6862
    %v8555 = vunpack.c.h.b16 %v6862
    %v8556 = vunpack.c.l.b16 %v6863
    %v8557 = vunpack.c.h.b16 %v6863
    %v8558 = vunpack.c.l.b16 %v6864
    %v8559 = vunpack.c.h.b16 %v6864
    %v8560 = vunpack.c.l.b16 %v6865
    %v8561 = vunpack.c.h.b16 %v6865
    %v8562 = vunpack.c.l.b16 %v6866
    %v8563 = vunpack.c.h.b16 %v6866
    %v8564 = vunpack.c.l.b16 %v6867
    %v8565 = vunpack.c.h.b16 %v6867
    %v8566 = vunpack.c.l.b16 %v6868
    %v8567 = vunpack.c.h.b16 %v6868
    %v8568 = vunpack.c.l.b16 %v6869
    %v8569 = vunpack.c.h.b16 %v6869
    %v8570 = vunpack.c.l.b16 %v6870
    %v8571 = vunpack.c.h.b16 %v6870
    %v8572 = vunpack.c.l.b16 %v6871
    %v8573 = vunpack.c.h.b16 %v6871
    %v8574 = vunpack.c.l.b16 %v6872
    %v8575 = vunpack.c.h.b16 %v6872
    %v8576 = vunpack.c.l.b16 %v6873
    %v8577 = vunpack.c.h.b16 %v6873
    %v8578 = vunpack.c.l.b16 %v6874
    %v8579 = vunpack.c.h.b16 %v6874
    %v8580 = vunpack.c.l.b16 %v6875
    %v8581 = vunpack.c.h.b16 %v6875
    %v8582 = vunpack.c.l.b16 %v6876
    %v8583 = vunpack.c.h.b16 %v6876
    %v8584 = vunpack.c.l.b16 %v6877
    %v8585 = vunpack.c.h.b16 %v6877
    %v8586 = vunpack.c.l.b16 %v6878
    %v8587 = vunpack.c.h.b16 %v6878
    %v8588 = vunpack.c.l.b16 %v6879
    %v8589 = vunpack.c.h.b16 %v6879
    %v8590 = vunpack.c.l.b16 %v6880
    %v8591 = vunpack.c.h.b16 %v6880
    %v8592 = vunpack.c.l.b16 %v6881
    %v8593 = vunpack.c.h.b16 %v6881
    %v8594 = vunpack.c.l.b16 %v6882
    %v8595 = vunpack.c.h.b16 %v6882
    %v8596 = vunpack.c.l.b16 %v6883
    %v8597 = vunpack.c.h.b16 %v6883
    %v8598 = vunpack.c.l.b16 %v6884
    %v8599 = vunpack.c.h.b16 %v6884
    %v8600 = vunpack.c.l.b16 %v6885
    %v8601 = vunpack.c.h.b16 %v6885
    %v8602 = vunpack.c.l.b16 %v6886
    %v8603 = vunpack.c.h.b16 %v6886
    %v8604 = vunpack.c.l.b16 %v6887
    %v8605 = vunpack.c.h.b16 %v6887
    %v8606 = vunpack.c.l.b16 %v6888
    %v8607 = vunpack.c.h.b16 %v6888
    %v8608 = vunpack.c.l.b16 %v6889
    %v8609 = vunpack.c.h.b16 %v6889
    %v8610 = vunpack.c.l.b16 %v6890
    %v8611 = vunpack.c.h.b16 %v6890
    %v8612 = vunpack.c.l.b16 %v6891
    %v8613 = vunpack.c.h.b16 %v6891
    %v8614 = vunpack.c.l.b16 %v6892
    %v8615 = vunpack.c.h.b16 %v6892
    %v8616 = vunpack.c.l.b16 %v6893
    %v8617 = vunpack.c.h.b16 %v6893
    %v8618 = vunpack.c.l.b16 %v6894
    %v8619 = vunpack.c.h.b16 %v6894
    %v8620 = vunpack.c.l.b16 %v6895
    %v8621 = vunpack.c.h.b16 %v6895
    %v8622 = vunpack.c.l.b16 %v6896
    %v8623 = vunpack.c.h.b16 %v6896
    %v8624 = vunpack.c.l.b16 %v6897
    %v8625 = vunpack.c.h.b16 %v6897
    %v8626 = vunpack.c.l.b16 %v6898
    %v8627 = vunpack.c.h.b16 %v6898
    %v8628 = vunpack.c.l.b16 %v6899
    %v8629 = vunpack.c.h.b16 %v6899
    %v8630 = vunpack.c.l.b16 %v6900
    %v8631 = vunpack.c.h.b16 %v6900
    %v8632 = vunpack.c.l.b16 %v6901
    %v8633 = vunpack.c.h.b16 %v6901
    %v8634 = vunpack.c.l.b16 %v6902
    %v8635 = vunpack.c.h.b16 %v6902
    %v8636 = vunpack.c.l.b16 %v6903
    %v8637 = vunpack.c.h.b16 %v6903
    %v8638 = vunpack.c.l.b16 %v6904
    %v8639 = vunpack.c.h.b16 %v6904
    %v8640 = vunpack.c.l.b16 %v6905
    %v8641 = vunpack.c.h.b16 %v6905
    %v8642 = vunpack.c.l.b16 %v6906
    %v8643 = vunpack.c.h.b16 %v6906
    %v8644 = vunpack.c.l.b16 %v6907
    %v8645 = vunpack.c.h.b16 %v6907
    %v8646 = vunpack.c.l.b16 %v6908
    %v8647 = vunpack.c.h.b16 %v6908
    %v8648 = vunpack.c.l.b16 %v6909
    %v8649 = vunpack.c.h.b16 %v6909
    %v8650 = vunpack.c.l.b16 %v6910
    %v8651 = vunpack.c.h.b16 %v6910
    %v8652 = vunpack.c.l.b16 %v6911
    %v8653 = vunpack.c.h.b16 %v6911
    %v8654 = vunpack.c.l.b16 %v6912
    %v8655 = vunpack.c.h.b16 %v6912
    %v8656 = vunpack.c.l.b16 %v6913
    %v8657 = vunpack.c.h.b16 %v6913
    %v8658 = vunpack.c.l.b16 %v6914
    %v8659 = vunpack.c.h.b16 %v6914
    %v8660 = vunpack.c.l.b16 %v6915
    %v8661 = vunpack.c.h.b16 %v6915
    %v8662 = vunpack.c.l.b16 %v6916
    %v8663 = vunpack.c.h.b16 %v6916
    %v8664 = vunpack.c.l.b16 %v6917
    %v8665 = vunpack.c.h.b16 %v6917
    %v8666 = vunpack.c.l.b16 %v6918
    %v8667 = vunpack.c.h.b16 %v6918
    %v8668 = vunpack.c.l.b16 %v6919
    %v8669 = vunpack.c.h.b16 %v6919
    %v8670 = vunpack.c.l.b16 %v6920
    %v8671 = vunpack.c.h.b16 %v6920
    %v8672 = vunpack.c.l.b16 %v6921
    %v8673 = vunpack.c.h.b16 %v6921
    %v8674 = vunpack.c.l.b16 %v6922
    %v8675 = vunpack.c.h.b16 %v6922
    %v8676 = vunpack.c.l.b16 %v6923
    %v8677 = vunpack.c.h.b16 %v6923
    %v8678 = vunpack.c.l.b16 %v6924
    %v8679 = vunpack.c.h.b16 %v6924
    %v8680 = vunpack.c.l.b16 %v6925
    %v8681 = vunpack.c.h.b16 %v6925
    %v8682 = vunpack.c.l.b16 %v6926
    %v8683 = vunpack.c.h.b16 %v6926
    %v8684 = vunpack.c.l.b16 %v6927
    %v8685 = vunpack.c.h.b16 %v6927
    %v8686 = vunpack.c.l.b16 %v6928
    %v8687 = vunpack.c.h.b16 %v6928
    %v8688 = vunpack.c.l.b16 %v6929
    %v8689 = vunpack.c.h.b16 %v6929
    %v8690 = vunpack.c.l.b16 %v6930
    %v8691 = vunpack.c.h.b16 %v6930
    %v8692 = vunpack.c.l.b16 %v6931
    %v8693 = vunpack.c.h.b16 %v6931
    %v8694 = vunpack.c.l.b16 %v6932
    %v8695 = vunpack.c.h.b16 %v6932
    %v8696 = vunpack.c.l.b16 %v6933
    %v8697 = vunpack.c.h.b16 %v6933
    %v8698 = vunpack.c.l.b16 %v6934
    %v8699 = vunpack.c.h.b16 %v6934
    %v8700 = vunpack.c.l.b16 %v6935
    %v8701 = vunpack.c.h.b16 %v6935
    %v8702 = vunpack.c.l.b16 %v6936
    %v8703 = vunpack.c.h.b16 %v6936
    %v8704 = vunpack.c.l.b16 %v6937
    %v8705 = vunpack.c.h.b16 %v6937
    %v8706 = vunpack.c.l.b16 %v6938
    %v8707 = vunpack.c.h.b16 %v6938
    %v8708 = vunpack.c.l.b16 %v6939
    %v8709 = vunpack.c.h.b16 %v6939
    %v8710 = vunpack.c.l.b16 %v6940
    %v8711 = vunpack.c.h.b16 %v6940
    %v8712 = vunpack.c.l.b16 %v6941
    %v8713 = vunpack.c.h.b16 %v6941
    %v8714 = vunpack.c.l.b16 %v6942
    %v8715 = vunpack.c.h.b16 %v6942
    %v8716 = vunpack.c.l.b16 %v6943
    %v8717 = vunpack.c.h.b16 %v6943
    %v8718 = vunpack.c.l.b16 %v6944
    %v8719 = vunpack.c.h.b16 %v6944
    %v8720 = vunpack.c.l.b16 %v6945
    %v8721 = vunpack.c.h.b16 %v6945
    %v8722 = vunpack.c.l.b16 %v6946
    %v8723 = vunpack.c.h.b16 %v6946
    %v8724 = vunpack.c.l.b16 %v6947
    %v8725 = vunpack.c.h.b16 %v6947
    %v8726 = vunpack.c.l.b16 %v6948
    %v8727 = vunpack.c.h.b16 %v6948
    %v8728 = vunpack.c.l.b16 %v6949
    %v8729 = vunpack.c.h.b16 %v6949
    %v8730 = vunpack.c.l.b16 %v6950
    %v8731 = vunpack.c.h.b16 %v6950
    %v8732 = vunpack.c.l.b16 %v6951
    %v8733 = vunpack.c.h.b16 %v6951
    %v8734 = vunpack.c.l.b16 %v6952
    %v8735 = vunpack.c.h.b16 %v6952
    %v8736 = vunpack.c.l.b16 %v6953
    %v8737 = vunpack.c.h.b16 %v6953
    %v8738 = vunpack.c.l.b16 %v6954
    %v8739 = vunpack.c.h.b16 %v6954
    %v8740 = vunpack.c.l.b16 %v6955
    %v8741 = vunpack.c.h.b16 %v6955
    %v8742 = vunpack.c.l.b16 %v6956
    %v8743 = vunpack.c.h.b16 %v6956
    %v8744 = vunpack.c.l.b16 %v6957
    %v8745 = vunpack.c.h.b16 %v6957
    %v8746 = vunpack.c.l.b16 %v6958
    %v8747 = vunpack.c.h.b16 %v6958
    %v8748 = vunpack.c.l.b16 %v6959
    %v8749 = vunpack.c.h.b16 %v6959
    %v8750 = vunpack.c.l.b16 %v6960
    %v8751 = vunpack.c.h.b16 %v6960
    %v8752 = vunpack.c.l.b16 %v6961
    %v8753 = vunpack.c.h.b16 %v6961
    %v8754 = vunpack.c.l.b16 %v6962
    %v8755 = vunpack.c.h.b16 %v6962
    %v8756 = vunpack.c.l.b16 %v6963
    %v8757 = vunpack.c.h.b16 %v6963
    %v8758 = vunpack.c.l.b16 %v6964
    %v8759 = vunpack.c.h.b16 %v6964
    %v8760 = vunpack.c.l.b16 %v6965
    %v8761 = vunpack.c.h.b16 %v6965
    %v8762 = vunpack.c.l.b16 %v6966
    %v8763 = vunpack.c.h.b16 %v6966
    %v8764 = vunpack.c.l.b16 %v6967
    %v8765 = vunpack.c.h.b16 %v6967
    %v8766 = vunpack.c.l.b16 %v6968
    %v8767 = vunpack.c.h.b16 %v6968
    %v8768 = vunpack.c.l.b16 %v6969
    %v8769 = vunpack.c.h.b16 %v6969
    %v8770 = vunpack.c.l.b16 %v6970
    %v8771 = vunpack.c.h.b16 %v6970
    %v8772 = vunpack.c.l.b16 %v6971
    %v8773 = vunpack.c.h.b16 %v6971
    %v8774 = vunpack.c.l.b16 %v6972
    %v8775 = vunpack.c.h.b16 %v6972
    %v8776 = vunpack.c.l.b16 %v6973
    %v8777 = vunpack.c.h.b16 %v6973
    %v8778 = vunpack.c.l.b16 %v6974
    %v8779 = vunpack.c.h.b16 %v6974
    %v8780 = vunpack.c.l.b16 %v6975
    %v8781 = vunpack.c.h.b16 %v6975
    %v8782 = vunpack.c.l.b16 %v6976
    %v8783 = vunpack.c.h.b16 %v6976
    %v8784 = vunpack.c.l.b16 %v6977
    %v8785 = vunpack.c.h.b16 %v6977
    %v8786 = vunpack.c.l.b16 %v6978
    %v8787 = vunpack.c.h.b16 %v6978
    %v8788 = vunpack.c.l.b16 %v6979
    %v8789 = vunpack.c.h.b16 %v6979
    %v8790 = vunpack.c.l.b16 %v6980
    %v8791 = vunpack.c.h.b16 %v6980
    %v8792 = vunpack.c.l.b16 %v6981
    %v8793 = vunpack.c.h.b16 %v6981
    %v8794 = vunpack.c.l.b16 %v6982
    %v8795 = vunpack.c.h.b16 %v6982
    %v8796 = vunpack.c.l.b16 %v6983
    %v8797 = vunpack.c.h.b16 %v6983
    %v8798 = vunpack.c.l.b16 %v6984
    %v8799 = vunpack.c.h.b16 %v6984
    %v8800 = vunpack.c.l.b16 %v6985
    %v8801 = vunpack.c.h.b16 %v6985
    %v8802 = vunpack.c.l.b16 %v6986
    %v8803 = vunpack.c.h.b16 %v6986
    %v8804 = vunpack.c.l.b16 %v6987
    %v8805 = vunpack.c.h.b16 %v6987
    %v8806 = vunpack.c.l.b16 %v6988
    %v8807 = vunpack.c.h.b16 %v6988
    %v8808 = vunpack.c.l.b16 %v6989
    %v8809 = vunpack.c.h.b16 %v6989
    %v8810 = vunpack.c.l.b16 %v6990
    %v8811 = vunpack.c.h.b16 %v6990
    %v8812 = vunpack.c.l.b16 %v6991
    %v8813 = vunpack.c.h.b16 %v6991
    %v8814 = vunpack.c.l.b16 %v6992
    %v8815 = vunpack.c.h.b16 %v6992
    %v8816 = vunpack.c.l.b16 %v6993
    %v8817 = vunpack.c.h.b16 %v6993
    %v8818 = vunpack.c.l.b16 %v6994
    %v8819 = vunpack.c.h.b16 %v6994
    %v8820 = vunpack.c.l.b16 %v6995
    %v8821 = vunpack.c.h.b16 %v6995
    %v8822 = vunpack.c.l.b16 %v6996
    %v8823 = vunpack.c.h.b16 %v6996
    %v8824 = vunpack.c.l.b16 %v6997
    %v8825 = vunpack.c.h.b16 %v6997
    %v8826 = vunpack.c.l.b16 %v6998
    %v8827 = vunpack.c.h.b16 %v6998
    %v8828 = vunpack.c.l.b16 %v6999
    %v8829 = vunpack.c.h.b16 %v6999
    %v8830 = vunpack.c.l.b16 %v7000
    %v8831 = vunpack.c.h.b16 %v7000
    %v8832 = vunpack.c.l.b16 %v7001
    %v8833 = vunpack.c.h.b16 %v7001
    %v8834 = vunpack.c.l.b16 %v7002
    %v8835 = vunpack.c.h.b16 %v7002
    %v8836 = vunpack.c.l.b16 %v7003
    %v8837 = vunpack.c.h.b16 %v7003
    %v8838 = vunpack.c.l.b16 %v7004
    %v8839 = vunpack.c.h.b16 %v7004
    %v8840 = vunpack.c.l.b16 %v7005
    %v8841 = vunpack.c.h.b16 %v7005
    %v8842 = vunpack.c.l.b16 %v7006
    %v8843 = vunpack.c.h.b16 %v7006
    %v8844 = vunpack.c.l.b16 %v7007
    %v8845 = vunpack.c.h.b16 %v7007
    %v8846 = vunpack.c.l.b16 %v7008
    %v8847 = vunpack.c.h.b16 %v7008
    %v8848 = vunpack.c.l.b16 %v7009
    %v8849 = vunpack.c.h.b16 %v7009
    %v8850 = vunpack.c.l.b16 %v7010
    %v8851 = vunpack.c.h.b16 %v7010
    %v8852 = vunpack.c.l.b16 %v7011
    %v8853 = vunpack.c.h.b16 %v7011
    %v8854 = vunpack.c.l.b16 %v7012
    %v8855 = vunpack.c.h.b16 %v7012
    %v8856 = vunpack.c.l.b16 %v7013
    %v8857 = vunpack.c.h.b16 %v7013
    %v8858 = vunpack.c.l.b16 %v7014
    %v8859 = vunpack.c.h.b16 %v7014
    %v8860 = vunpack.c.l.b16 %v7015
    %v8861 = vunpack.c.h.b16 %v7015
    %v8862 = vunpack.c.l.b16 %v7016
    %v8863 = vunpack.c.h.b16 %v7016
    %v8864 = vunpack.c.l.b16 %v7017
    %v8865 = vunpack.c.h.b16 %v7017
    %v8866 = vunpack.c.l.b16 %v7018
    %v8867 = vunpack.c.h.b16 %v7018
    %v8868 = vunpack.c.l.b16 %v7019
    %v8869 = vunpack.c.h.b16 %v7019
    %v8870 = vunpack.c.l.b16 %v7020
    %v8871 = vunpack.c.h.b16 %v7020
    %v8872 = vunpack.c.l.b16 %v7021
    %v8873 = vunpack.c.h.b16 %v7021
    %v8874 = vunpack.c.l.b16 %v7022
    %v8875 = vunpack.c.h.b16 %v7022
    %v8876 = vunpack.c.l.b16 %v7023
    %v8877 = vunpack.c.h.b16 %v7023
    %v8878 = vunpack.c.l.b16 %v7024
    %v8879 = vunpack.c.h.b16 %v7024
    %v8880 = vunpack.c.l.b16 %v7025
    %v8881 = vunpack.c.h.b16 %v7025
    %v8882 = vunpack.c.l.b16 %v7026
    %v8883 = vunpack.c.h.b16 %v7026
    %v8884 = vunpack.c.l.b16 %v7027
    %v8885 = vunpack.c.h.b16 %v7027
    %v8886 = vunpack.c.l.b16 %v7028
    %v8887 = vunpack.c.h.b16 %v7028
    %v8888 = vunpack.c.l.b16 %v7029
    %v8889 = vunpack.c.h.b16 %v7029
    %v8890 = vunpack.c.l.b16 %v7030
    %v8891 = vunpack.c.h.b16 %v7030
    %v8892 = vunpack.c.l.b16 %v7031
    %v8893 = vunpack.c.h.b16 %v7031
    %v8894 = vunpack.c.l.b16 %v7032
    %v8895 = vunpack.c.h.b16 %v7032
    %v8896 = vunpack.c.l.b16 %v7033
    %v8897 = vunpack.c.h.b16 %v7033
    %v8898 = vunpack.c.l.b16 %v7034
    %v8899 = vunpack.c.h.b16 %v7034
    %v8900 = vunpack.c.l.b16 %v7035
    %v8901 = vunpack.c.h.b16 %v7035
    %v8902 = vunpack.c.l.b16 %v7036
    %v8903 = vunpack.c.h.b16 %v7036
    %v8904 = vunpack.c.l.b16 %v7037
    %v8905 = vunpack.c.h.b16 %v7037
    %v8906 = vunpack.c.l.b16 %v7038
    %v8907 = vunpack.c.h.b16 %v7038
    %v8908 = vunpack.c.l.b16 %v7039
    %v8909 = vunpack.c.h.b16 %v7039
    %v8910 = vunpack.c.l.b16 %v7040
    %v8911 = vunpack.c.h.b16 %v7040
    %v8912 = vunpack.c.l.b16 %v7041
    %v8913 = vunpack.c.h.b16 %v7041
    %v8914 = vunpack.c.l.b16 %v7042
    %v8915 = vunpack.c.h.b16 %v7042
    %v8916 = vunpack.c.l.b16 %v7043
    %v8917 = vunpack.c.h.b16 %v7043
    %v8918 = vunpack.c.l.b16 %v7044
    %v8919 = vunpack.c.h.b16 %v7044
    %v8920 = vunpack.c.l.b16 %v7045
    %v8921 = vunpack.c.h.b16 %v7045
    %v8922 = vunpack.c.l.b16 %v7046
    %v8923 = vunpack.c.h.b16 %v7046
    %v8924 = vunpack.c.l.b16 %v7047
    %v8925 = vunpack.c.h.b16 %v7047
    %v8926 = vunpack.c.l.b16 %v7048
    %v8927 = vunpack.c.h.b16 %v7048
    %v8928 = vunpack.c.l.b16 %v7049
    %v8929 = vunpack.c.h.b16 %v7049
    %v8930 = vunpack.c.l.b16 %v7050
    %v8931 = vunpack.c.h.b16 %v7050
    %v8932 = vunpack.c.l.b16 %v7051
    %v8933 = vunpack.c.h.b16 %v7051
    %v8934 = vunpack.c.l.b16 %v7052
    %v8935 = vunpack.c.h.b16 %v7052
    %v8936 = vunpack.c.l.b16 %v7053
    %v8937 = vunpack.c.h.b16 %v7053
    %v8938 = vunpack.c.l.b16 %v7054
    %v8939 = vunpack.c.h.b16 %v7054
    %v8940 = vunpack.c.l.b16 %v7055
    %v8941 = vunpack.c.h.b16 %v7055
    %v8942 = vunpack.c.l.b16 %v7056
    %v8943 = vunpack.c.h.b16 %v7056
    %v8944 = vunpack.c.l.b16 %v7057
    %v8945 = vunpack.c.h.b16 %v7057
    %v8946 = vunpack.c.l.b16 %v7058
    %v8947 = vunpack.c.h.b16 %v7058
    %v8948 = vunpack.c.l.b16 %v7059
    %v8949 = vunpack.c.h.b16 %v7059
    %v8950 = vunpack.c.l.b16 %v7060
    %v8951 = vunpack.c.h.b16 %v7060
    %v8952 = vunpack.c.l.b16 %v7061
    %v8953 = vunpack.c.h.b16 %v7061
    %v8954 = vunpack.c.l.b16 %v7062
    %v8955 = vunpack.c.h.b16 %v7062
    %v8956 = vunpack.c.l.b16 %v7063
    %v8957 = vunpack.c.h.b16 %v7063
    %v8958 = vunpack.c.l.b16 %v7064
    %v8959 = vunpack.c.h.b16 %v7064
    %v8960 = vunpack.c.l.b16 %v7065
    %v8961 = vunpack.c.h.b16 %v7065
    %v8962 = vunpack.c.l.b16 %v7066
    %v8963 = vunpack.c.h.b16 %v7066
    %v8964 = vunpack.c.l.b16 %v7067
    %v8965 = vunpack.c.h.b16 %v7067
    %v8966 = vunpack.c.l.b16 %v7068
    %v8967 = vunpack.c.h.b16 %v7068
    %v8968 = vunpack.c.l.b16 %v7069
    %v8969 = vunpack.c.h.b16 %v7069
    %v8970 = vunpack.c.l.b16 %v7070
    %v8971 = vunpack.c.h.b16 %v7070
    %v8972 = vunpack.c.l.b16 %v7071
    %v8973 = vunpack.c.h.b16 %v7071
    %v8974 = vunpack.c.l.b16 %v7072
    %v8975 = vunpack.c.h.b16 %v7072
    %v8976 = vunpack.c.l.b16 %v7073
    %v8977 = vunpack.c.h.b16 %v7073
    %v8978 = vunpack.c.l.b16 %v7074
    %v8979 = vunpack.c.h.b16 %v7074
    %v8980 = vunpack.c.l.b16 %v7075
    %v8981 = vunpack.c.h.b16 %v7075
    %v8982 = vunpack.c.l.b16 %v7076
    %v8983 = vunpack.c.h.b16 %v7076
    %v8984 = vunpack.c.l.b16 %v7077
    %v8985 = vunpack.c.h.b16 %v7077
    %v8986 = vunpack.c.l.b16 %v7078
    %v8987 = vunpack.c.h.b16 %v7078
    %v8988 = vunpack.c.l.b16 %v7079
    %v8989 = vunpack.c.h.b16 %v7079
    %v8990 = vunpack.c.l.b16 %v7080
    %v8991 = vunpack.c.h.b16 %v7080
    %v8992 = vunpack.c.l.b16 %v7081
    %v8993 = vunpack.c.h.b16 %v7081
    %v8994 = vunpack.c.l.b16 %v7082
    %v8995 = vunpack.c.h.b16 %v7082
    %v8996 = vunpack.c.l.b16 %v7083
    %v8997 = vunpack.c.h.b16 %v7083
    %v8998 = vunpack.c.l.b16 %v7084
    %v8999 = vunpack.c.h.b16 %v7084
    %v9000 = vunpack.c.l.b16 %v7085
    %v9001 = vunpack.c.h.b16 %v7085
    %v9002 = vunpack.c.l.b16 %v7086
    %v9003 = vunpack.c.h.b16 %v7086
    %v9004 = vunpack.c.l.b16 %v7087
    %v9005 = vunpack.c.h.b16 %v7087
    %v9006 = vunpack.c.l.b16 %v7088
    %v9007 = vunpack.c.h.b16 %v7088
    %v9008 = vunpack.c.l.b16 %v7089
    %v9009 = vunpack.c.h.b16 %v7089
    %v9010 = vunpack.c.l.b16 %v7090
    %v9011 = vunpack.c.h.b16 %v7090
    %v9012 = vunpack.c.l.b16 %v7091
    %v9013 = vunpack.c.h.b16 %v7091
    %v9014 = vunpack.c.l.b16 %v7092
    %v9015 = vunpack.c.h.b16 %v7092
    %v9016 = vunpack.c.l.b16 %v7093
    %v9017 = vunpack.c.h.b16 %v7093
    %v9018 = vunpack.c.l.b16 %v7094
    %v9019 = vunpack.c.h.b16 %v7094
    %v9020 = vunpack.c.l.b16 %v7095
    %v9021 = vunpack.c.h.b16 %v7095
    %v9022 = vunpack.c.l.b16 %v7096
    %v9023 = vunpack.c.h.b16 %v7096
    %v9024 = vunpack.c.l.b16 %v7097
    %v9025 = vunpack.c.h.b16 %v7097
    %v9026 = vunpack.c.l.b16 %v7098
    %v9027 = vunpack.c.h.b16 %v7098
    %v9028 = vunpack.c.l.b16 %v7099
    %v9029 = vunpack.c.h.b16 %v7099
    %v9030 = vunpack.c.l.b16 %v7100
    %v9031 = vunpack.c.h.b16 %v7100
    %v9032 = vunpack.c.l.b16 %v7101
    %v9033 = vunpack.c.h.b16 %v7101
    %v9034 = vunpack.c.l.b16 %v7102
    %v9035 = vunpack.c.h.b16 %v7102
    %v9036 = vunpack.c.l.b16 %v7103
    %v9037 = vunpack.c.h.b16 %v7103
    %v9038 = vunpack.c.l.b16 %v7104
    %v9039 = vunpack.c.h.b16 %v7104
    %v9040 = vunpack.c.l.b16 %v7105
    %v9041 = vunpack.c.h.b16 %v7105
    %v9042 = vunpack.c.l.b16 %v7106
    %v9043 = vunpack.c.h.b16 %v7106
    %v9044 = vunpack.c.l.b16 %v7107
    %v9045 = vunpack.c.h.b16 %v7107
    %v9046 = vunpack.c.l.b16 %v7108
    %v9047 = vunpack.c.h.b16 %v7108
    %v9048 = vunpack.c.l.b16 %v7109
    %v9049 = vunpack.c.h.b16 %v7109
    %v9050 = vunpack.c.l.b16 %v7110
    %v9051 = vunpack.c.h.b16 %v7110
    %v9052 = vunpack.c.l.b16 %v7111
    %v9053 = vunpack.c.h.b16 %v7111
    %v9054 = vunpack.c.l.b16 %v7112
    %v9055 = vunpack.c.h.b16 %v7112
    %v9056 = vunpack.c.l.b16 %v7113
    %v9057 = vunpack.c.h.b16 %v7113
    %v9058 = vunpack.c.l.b16 %v7114
    %v9059 = vunpack.c.h.b16 %v7114
    %v9060 = vunpack.c.l.b16 %v7115
    %v9061 = vunpack.c.h.b16 %v7115
    %v9062 = vunpack.c.l.b16 %v7116
    %v9063 = vunpack.c.h.b16 %v7116
    %v9064 = vunpack.c.l.b16 %v7117
    %v9065 = vunpack.c.h.b16 %v7117
    %v9066 = vunpack.c.l.b16 %v7118
    %v9067 = vunpack.c.h.b16 %v7118
    %v9068 = vunpack.c.l.b16 %v7119
    %v9069 = vunpack.c.h.b16 %v7119
    %v9070 = vunpack.c.l.b16 %v7120
    %v9071 = vunpack.c.h.b16 %v7120
    %v9072 = vunpack.c.l.b16 %v7121
    %v9073 = vunpack.c.h.b16 %v7121
    %v9074 = vunpack.c.l.b16 %v7122
    %v9075 = vunpack.c.h.b16 %v7122
    %v9076 = vunpack.c.l.b16 %v7123
    %v9077 = vunpack.c.h.b16 %v7123
    %v9078 = vunpack.c.l.b16 %v7124
    %v9079 = vunpack.c.h.b16 %v7124
    %v9080 = vunpack.c.l.b16 %v7125
    %v9081 = vunpack.c.h.b16 %v7125
    %v9082 = vunpack.c.l.b16 %v7126
    %v9083 = vunpack.c.h.b16 %v7126
    %v9084 = vunpack.c.l.b16 %v7127
    %v9085 = vunpack.c.h.b16 %v7127
    %v9086 = vunpack.c.l.b16 %v7128
    %v9087 = vunpack.c.h.b16 %v7128
    %v9088 = vunpack.c.l.b16 %v7129
    %v9089 = vunpack.c.h.b16 %v7129
    %v9090 = vunpack.c.l.b16 %v7130
    %v9091 = vunpack.c.h.b16 %v7130
    %v9092 = vunpack.c.l.b16 %v7131
    %v9093 = vunpack.c.h.b16 %v7131
    %v9094 = vunpack.c.l.b16 %v7132
    %v9095 = vunpack.c.h.b16 %v7132
    %v9096 = vunpack.c.l.b16 %v7133
    %v9097 = vunpack.c.h.b16 %v7133
    %v9098 = vunpack.c.l.b16 %v7134
    %v9099 = vunpack.c.h.b16 %v7134
    %v9100 = vunpack.c.l.b16 %v7135
    %v9101 = vunpack.c.h.b16 %v7135
    %v9102 = vunpack.c.l.b16 %v7136
    %v9103 = vunpack.c.h.b16 %v7136
    %v9104 = vunpack.c.l.b16 %v7137
    %v9105 = vunpack.c.h.b16 %v7137
    %v9106 = vunpack.c.l.b16 %v7138
    %v9107 = vunpack.c.h.b16 %v7138
    %v9108 = vunpack.c.l.b16 %v7139
    %v9109 = vunpack.c.h.b16 %v7139
    %v9110 = vunpack.c.l.b16 %v7140
    %v9111 = vunpack.c.h.b16 %v7140
    %v9112 = vunpack.c.l.b16 %v7141
    %v9113 = vunpack.c.h.b16 %v7141
    %v9114 = vunpack.c.l.b16 %v7142
    %v9115 = vunpack.c.h.b16 %v7142
    %v9116 = vunpack.c.l.b16 %v7143
    %v9117 = vunpack.c.h.b16 %v7143
    %v9118 = vunpack.c.l.b16 %v7144
    %v9119 = vunpack.c.h.b16 %v7144
    %v9120 = vunpack.c.l.b16 %v7145
    %v9121 = vunpack.c.h.b16 %v7145
    %v9122 = vunpack.c.l.b16 %v7146
    %v9123 = vunpack.c.h.b16 %v7146
    %v9124 = vunpack.c.l.b16 %v7147
    %v9125 = vunpack.c.h.b16 %v7147
    %v9126 = vunpack.c.l.b16 %v7148
    %v9127 = vunpack.c.h.b16 %v7148
    %v9128 = vunpack.c.l.b16 %v7149
    %v9129 = vunpack.c.h.b16 %v7149
    %v9130 = vunpack.c.l.b16 %v7150
    %v9131 = vunpack.c.h.b16 %v7150
    %v9132 = vunpack.c.l.b16 %v7151
    %v9133 = vunpack.c.h.b16 %v7151
    %v9134 = vunpack.c.l.b16 %v7152
    %v9135 = vunpack.c.h.b16 %v7152
    %v9136 = vunpack.c.l.b16 %v7153
    %v9137 = vunpack.c.h.b16 %v7153
    %v9138 = vunpack.c.l.b16 %v7154
    %v9139 = vunpack.c.h.b16 %v7154
    %v9140 = vunpack.c.l.b16 %v7155
    %v9141 = vunpack.c.h.b16 %v7155
    %v9142 = vunpack.c.l.b16 %v7156
    %v9143 = vunpack.c.h.b16 %v7156
    %v9144 = vunpack.c.l.b16 %v7157
    %v9145 = vunpack.c.h.b16 %v7157
    %v9146 = vunpack.c.l.b16 %v7158
    %v9147 = vunpack.c.h.b16 %v7158
    %v9148 = vunpack.c.l.b16 %v7159
    %v9149 = vunpack.c.h.b16 %v7159
    %v9150 = vunpack.c.l.b16 %v7160
    %v9151 = vunpack.c.h.b16 %v7160
    %v9152 = vunpack.c.l.b16 %v7161
    %v9153 = vunpack.c.h.b16 %v7161
    %v9154 = vunpack.c.l.b16 %v7162
    %v9155 = vunpack.c.h.b16 %v7162
    %v9156 = vunpack.c.l.b16 %v7163
    %v9157 = vunpack.c.h.b16 %v7163
    %v9158 = vunpack.c.l.b16 %v7164
    %v9159 = vunpack.c.h.b16 %v7164
    %v9160 = vunpack.c.l.b16 %v7165
    %v9161 = vunpack.c.h.b16 %v7165
    %v9162 = vunpack.c.l.b16 %v7166
    %v9163 = vunpack.c.h.b16 %v7166
    %v9164 = vunpack.c.l.b16 %v7167
    %v9165 = vunpack.c.h.b16 %v7167
    %v9166 = vunpack.c.l.b16 %v7168
    %v9167 = vunpack.c.h.b16 %v7168
    %v9168 = vunpack.c.l.b16 %v7169
    %v9169 = vunpack.c.h.b16 %v7169
    %v9170 = vunpack.c.l.b16 %v7170
    %v9171 = vunpack.c.h.b16 %v7170
    %v9172 = vunpack.c.l.b16 %v7171
    %v9173 = vunpack.c.h.b16 %v7171
    %v9174 = vunpack.c.l.b16 %v7172
    %v9175 = vunpack.c.h.b16 %v7172
    %v9176 = vunpack.c.l.b16 %v7173
    %v9177 = vunpack.c.h.b16 %v7173
    %v9178 = vunpack.c.l.b16 %v7174
    %v9179 = vunpack.c.h.b16 %v7174
    %v9180 = vunpack.c.l.b16 %v7175
    %v9181 = vunpack.c.h.b16 %v7175
    %v9182 = vunpack.c.l.b16 %v7176
    %v9183 = vunpack.c.h.b16 %v7176
    %v9184 = vunpack.c.l.b16 %v7177
    %v9185 = vunpack.c.h.b16 %v7177
    %v9186 = vunpack.c.l.b16 %v7178
    %v9187 = vunpack.c.h.b16 %v7178
    %v9188 = vunpack.c.l.b16 %v7179
    %v9189 = vunpack.c.h.b16 %v7179
    %v9190 = vunpack.c.l.b16 %v7180
    %v9191 = vunpack.c.h.b16 %v7180
    %v9192 = vunpack.c.l.b16 %v7181
    %v9193 = vunpack.c.h.b16 %v7181
    %v9194 = vunpack.c.l.b16 %v7182
    %v9195 = vunpack.c.h.b16 %v7182
    %v9196 = vunpack.c.l.b16 %v7183
    %v9197 = vunpack.c.h.b16 %v7183
    %v9198 = vunpack.c.l.b16 %v7184
    %v9199 = vunpack.c.h.b16 %v7184
    %v9200 = vunpack.c.l.b16 %v7185
    %v9201 = vunpack.c.h.b16 %v7185
    %v9202 = vunpack.c.l.b16 %v7186
    %v9203 = vunpack.c.h.b16 %v7186
    %v9204 = vunpack.c.l.b16 %v7187
    %v9205 = vunpack.c.h.b16 %v7187
    %v9206 = vunpack.c.l.b16 %v7188
    %v9207 = vunpack.c.h.b16 %v7188
    %v9208 = vunpack.c.l.b16 %v7189
    %v9209 = vunpack.c.h.b16 %v7189
    %v9210 = vunpack.c.l.b16 %v7190
    %v9211 = vunpack.c.h.b16 %v7190
    %v9212 = vunpack.c.l.b16 %v7191
    %v9213 = vunpack.c.h.b16 %v7191
    %v9214 = vunpack.c.l.b16 %v7192
    %v9215 = vunpack.c.h.b16 %v7192
    %v9216 = vunpack.c.l.b16 %v7193
    %v9217 = vunpack.c.h.b16 %v7193
    %v9218 = vunpack.c.l.b16 %v7194
    %v9219 = vunpack.c.h.b16 %v7194
    %v9220 = vunpack.c.l.b16 %v7195
    %v9221 = vunpack.c.h.b16 %v7195
    %v9222 = vunpack.c.l.b16 %v7196
    %v9223 = vunpack.c.h.b16 %v7196
    %v9224 = vunpack.c.l.b16 %v7197
    %v9225 = vunpack.c.h.b16 %v7197
    %v9226 = vunpack.c.l.b16 %v7198
    %v9227 = vunpack.c.h.b16 %v7198
    %v9228 = vunpack.c.l.b16 %v7199
    %v9229 = vunpack.c.h.b16 %v7199
    %v9230 = vunpack.c.l.b16 %v7200
    %v9231 = vunpack.c.h.b16 %v7200
    %v9232 = vunpack.c.l.b16 %v7201
    %v9233 = vunpack.c.h.b16 %v7201
    %v9234 = vunpack.c.l.b16 %v7202
    %v9235 = vunpack.c.h.b16 %v7202
    %v9236 = vunpack.c.l.b16 %v7203
    %v9237 = vunpack.c.h.b16 %v7203
    %v9238 = vunpack.c.l.b16 %v7204
    %v9239 = vunpack.c.h.b16 %v7204
    %v9240 = vunpack.c.l.b16 %v7205
    %v9241 = vunpack.c.h.b16 %v7205
    %v9242 = vunpack.c.l.b16 %v7206
    %v9243 = vunpack.c.h.b16 %v7206
    %v9244 = vunpack.c.l.b16 %v7207
    %v9245 = vunpack.c.h.b16 %v7207
    %v9246 = vunpack.c.l.b16 %v7208
    %v9247 = vunpack.c.h.b16 %v7208
    %v9248 = vunpack.c.l.b16 %v7209
    %v9249 = vunpack.c.h.b16 %v7209
    %v9250 = vunpack.c.l.b16 %v7210
    %v9251 = vunpack.c.h.b16 %v7210
    %v9252 = vunpack.c.l.b16 %v7211
    %v9253 = vunpack.c.h.b16 %v7211
    %v9254 = vunpack.c.l.b16 %v7212
    %v9255 = vunpack.c.h.b16 %v7212
    %v9256 = vunpack.c.l.b16 %v7213
    %v9257 = vunpack.c.h.b16 %v7213
    %v9258 = vunpack.c.l.b16 %v7214
    %v9259 = vunpack.c.h.b16 %v7214
    %v9260 = vunpack.c.l.b16 %v7215
    %v9261 = vunpack.c.h.b16 %v7215
    %v9262 = vunpack.c.l.b16 %v7216
    %v9263 = vunpack.c.h.b16 %v7216
    %v9264 = vunpack.c.l.b16 %v7217
    %v9265 = vunpack.c.h.b16 %v7217
    %v9266 = vunpack.c.l.b16 %v7218
    %v9267 = vunpack.c.h.b16 %v7218
    %v9268 = vunpack.c.l.b16 %v7219
    %v9269 = vunpack.c.h.b16 %v7219
    %v9270 = vunpack.c.l.b16 %v7220
    %v9271 = vunpack.c.h.b16 %v7220
    %v9272 = vunpack.c.l.b16 %v7221
    %v9273 = vunpack.c.h.b16 %v7221
    %v9274 = vunpack.c.l.b16 %v7222
    %v9275 = vunpack.c.h.b16 %v7222
    %v9276 = vunpack.c.l.b16 %v7223
    %v9277 = vunpack.c.h.b16 %v7223
    %v9278 = vunpack.c.l.b16 %v7224
    %v9279 = vunpack.c.h.b16 %v7224
    %v9280 = vunpack.c.l.b16 %v7225
    %v9281 = vunpack.c.h.b16 %v7225
    %v9282 = vunpack.c.l.b16 %v7226
    %v9283 = vunpack.c.h.b16 %v7226
    %v9284 = vunpack.c.l.b16 %v7227
    %v9285 = vunpack.c.h.b16 %v7227
    %v9286 = vunpack.c.l.b16 %v7228
    %v9287 = vunpack.c.h.b16 %v7228
    %v9288 = vunpack.c.l.b16 %v7229
    %v9289 = vunpack.c.h.b16 %v7229
    %v9290 = vunpack.c.l.b16 %v7230
    %v9291 = vunpack.c.h.b16 %v7230
    %v9292 = vunpack.c.l.b16 %v7231
    %v9293 = vunpack.c.h.b16 %v7231
    %v9294 = vunpack.c.l.b16 %v7232
    %v9295 = vunpack.c.h.b16 %v7232
    %v9296 = vunpack.c.l.b16 %v7233
    %v9297 = vunpack.c.h.b16 %v7233
    %v9298 = vunpack.c.l.b16 %v7234
    %v9299 = vunpack.c.h.b16 %v7234
    %v9300 = vunpack.c.l.b16 %v7235
    %v9301 = vunpack.c.h.b16 %v7235
    %v9302 = vunpack.c.l.b16 %v7236
    %v9303 = vunpack.c.h.b16 %v7236
    %v9304 = vunpack.c.l.b16 %v7237
    %v9305 = vunpack.c.h.b16 %v7237
    %v9306 = vunpack.c.l.b16 %v7238
    %v9307 = vunpack.c.h.b16 %v7238
    %v9308 = vunpack.c.l.b16 %v7239
    %v9309 = vunpack.c.h.b16 %v7239
    %v9310 = vunpack.c.l.b16 %v7240
    %v9311 = vunpack.c.h.b16 %v7240
    %v9312 = vunpack.c.l.b16 %v7241
    %v9313 = vunpack.c.h.b16 %v7241
    %v9314 = vunpack.c.l.b16 %v7242
    %v9315 = vunpack.c.h.b16 %v7242
    %v9316 = vunpack.c.l.b16 %v7243
    %v9317 = vunpack.c.h.b16 %v7243
    %v9318 = vunpack.c.l.b16 %v7244
    %v9319 = vunpack.c.h.b16 %v7244
    %v9320 = vunpack.c.l.b16 %v7245
    %v9321 = vunpack.c.h.b16 %v7245
    %v9322 = vunpack.c.l.b16 %v7246
    %v9323 = vunpack.c.h.b16 %v7246
    %v9324 = vunpack.c.l.b16 %v7247
    %v9325 = vunpack.c.h.b16 %v7247
    %v9326 = vunpack.c.l.b16 %v7248
    %v9327 = vunpack.c.h.b16 %v7248
    %v9328 = vunpack.c.l.b16 %v7249
    %v9329 = vunpack.c.h.b16 %v7249
    %v9330 = vunpack.c.l.b16 %v7250
    %v9331 = vunpack.c.h.b16 %v7250
    %v9332 = vunpack.c.l.b16 %v7251
    %v9333 = vunpack.c.h.b16 %v7251
    %v9334 = vunpack.c.l.b16 %v7252
    %v9335 = vunpack.c.h.b16 %v7252
    %v9336 = vunpack.c.l.b16 %v7253
    %v9337 = vunpack.c.h.b16 %v7253
    %v9338 = vunpack.c.l.b16 %v7254
    %v9339 = vunpack.c.h.b16 %v7254
    %v9340 = vunpack.c.l.b16 %v7255
    %v9341 = vunpack.c.h.b16 %v7255
    %v9342 = vunpack.c.l.b16 %v7256
    %v9343 = vunpack.c.h.b16 %v7256
    %v9344 = vunpack.c.l.b16 %v7257
    %v9345 = vunpack.c.h.b16 %v7257
    %v9346 = vunpack.c.l.b16 %v7258
    %v9347 = vunpack.c.h.b16 %v7258
    %v9348 = vunpack.c.l.b16 %v7259
    %v9349 = vunpack.c.h.b16 %v7259
    %v9350 = vunpack.c.l.b16 %v7260
    %v9351 = vunpack.c.h.b16 %v7260
    %v9352 = vunpack.c.l.b16 %v7261
    %v9353 = vunpack.c.h.b16 %v7261
    %v9354 = vunpack.c.l.b16 %v7262
    %v9355 = vunpack.c.h.b16 %v7262
    %v9356 = vunpack.c.l.b16 %v7263
    %v9357 = vunpack.c.h.b16 %v7263
    %v9358 = vunpack.c.l.b16 %v7264
    %v9359 = vunpack.c.h.b16 %v7264
    %v9360 = vunpack.c.l.b16 %v7265
    %v9361 = vunpack.c.h.b16 %v7265
    %v9362 = vunpack.c.l.b16 %v7266
    %v9363 = vunpack.c.h.b16 %v7266
    %v9364 = vunpack.c.l.b16 %v7267
    %v9365 = vunpack.c.h.b16 %v7267
    %v9366 = vunpack.c.l.b16 %v7268
    %v9367 = vunpack.c.h.b16 %v7268
    %v9368 = vunpack.c.l.b16 %v7269
    %v9369 = vunpack.c.h.b16 %v7269
    %v9370 = vunpack.c.l.b16 %v7270
    %v9371 = vunpack.c.h.b16 %v7270
    %v9372 = vunpack.c.l.b16 %v7271
    %v9373 = vunpack.c.h.b16 %v7271
    %v9374 = vunpack.c.l.b16 %v7272
    %v9375 = vunpack.c.h.b16 %v7272
    %v9376 = vunpack.c.l.b16 %v7273
    %v9377 = vunpack.c.h.b16 %v7273
    %v9378 = vunpack.c.l.b16 %v7274
    %v9379 = vunpack.c.h.b16 %v7274
    %v9380 = vunpack.c.l.b16 %v7275
    %v9381 = vunpack.c.h.b16 %v7275
    %v9382 = vunpack.c.l.b16 %v7276
    %v9383 = vunpack.c.h.b16 %v7276
    %v9384 = vunpack.c.l.b16 %v7277
    %v9385 = vunpack.c.h.b16 %v7277
    %v9386 = vunpack.c.l.b16 %v7278
    %v9387 = vunpack.c.h.b16 %v7278
    %v9388 = vunpack.c.l.b16 %v7279
    %v9389 = vunpack.c.h.b16 %v7279
    %v9390 = vunpack.c.l.b16 %v7280
    %v9391 = vunpack.c.h.b16 %v7280
    %v9392 = vunpack.c.l.b16 %v7281
    %v9393 = vunpack.c.h.b16 %v7281
    %v9394 = vunpack.c.l.b16 %v7282
    %v9395 = vunpack.c.h.b16 %v7282
    %v9396 = vunpack.c.l.b16 %v7283
    %v9397 = vunpack.c.h.b16 %v7283
    %v9398 = vunpack.c.l.b16 %v7284
    %v9399 = vunpack.c.h.b16 %v7284
    %v9400 = vunpack.c.l.b16 %v7285
    %v9401 = vunpack.c.h.b16 %v7285
    %v9402 = vunpack.c.l.b16 %v7286
    %v9403 = vunpack.c.h.b16 %v7286
    %v9404 = vunpack.c.l.b16 %v7287
    %v9405 = vunpack.c.h.b16 %v7287
    %v9406 = vunpack.c.l.b16 %v7288
    %v9407 = vunpack.c.h.b16 %v7288
    %v9408 = vunpack.c.l.b16 %v7289
    %v9409 = vunpack.c.h.b16 %v7289
    %v9410 = vunpack.c.l.b16 %v7290
    %v9411 = vunpack.c.h.b16 %v7290
    %v9412 = vunpack.c.l.b16 %v7291
    %v9413 = vunpack.c.h.b16 %v7291
    %v9414 = vunpack.c.l.b16 %v7292
    %v9415 = vunpack.c.h.b16 %v7292
    %v9416 = vunpack.c.l.b16 %v7293
    %v9417 = vunpack.c.h.b16 %v7293
    %v9418 = vunpack.c.l.b16 %v7294
    %v9419 = vunpack.c.h.b16 %v7294
    %v9420 = vunpack.c.l.b16 %v7295
    %v9421 = vunpack.c.h.b16 %v7295
    %v9422 = vunpack.c.l.b16 %v7296
    %v9423 = vunpack.c.h.b16 %v7296
    %v9424 = vunpack.c.l.b16 %v7297
    %v9425 = vunpack.c.h.b16 %v7297
    %v9426 = vunpack.c.l.b16 %v7298
    %v9427 = vunpack.c.h.b16 %v7298
    %v9428 = vunpack.c.l.b16 %v7299
    %v9429 = vunpack.c.h.b16 %v7299
    %v9430 = vunpack.c.l.b16 %v7300
    %v9431 = vunpack.c.h.b16 %v7300
    %v9432 = vunpack.c.l.b16 %v7301
    %v9433 = vunpack.c.h.b16 %v7301
    %v9434 = vunpack.c.l.b16 %v7302
    %v9435 = vunpack.c.h.b16 %v7302
    %v9436 = vunpack.c.l.b16 %v7303
    %v9437 = vunpack.c.h.b16 %v7303
    %v9438 = vunpack.c.l.b16 %v7304
    %v9439 = vunpack.c.h.b16 %v7304
    %v9440 = vunpack.c.l.b16 %v7305
    %v9441 = vunpack.c.h.b16 %v7305
    %v9442 = vunpack.c.l.b16 %v7306
    %v9443 = vunpack.c.h.b16 %v7306
    %v9444 = vunpack.c.l.b16 %v7307
    %v9445 = vunpack.c.h.b16 %v7307
    %v9446 = vunpack.c.l.b16 %v7308
    %v9447 = vunpack.c.h.b16 %v7308
    %v9448 = vunpack.c.l.b16 %v7309
    %v9449 = vunpack.c.h.b16 %v7309
    %v9450 = vpack.c.b16 %v8434, %v8426
    %v9451 = vpack.c.b16 %v8435, %v8427
    %v9452 = vpack.c.b16 %v8436, %v8428
    %v9453 = vpack.c.b16 %v8437, %v8429
    %v9454 = vpack.c.b16 %v8438, %v8430
    %v9455 = vpack.c.b16 %v8439, %v8431
    %v9456 = vpack.c.b16 %v8440, %v8432
    %v9457 = vpack.c.b16 %v8441, %v8433
    %v9458 = vpack.c.b16 %v8450, %v8442
    %v9459 = vpack.c.b16 %v8451, %v8443
    %v9460 = vpack.c.b16 %v8452, %v8444
    %v9461 = vpack.c.b16 %v8453, %v8445
    %v9462 = vpack.c.b16 %v8454, %v8446
    %v9463 = vpack.c.b16 %v8455, %v8447
    %v9464 = vpack.c.b16 %v8456, %v8448
    %v9465 = vpack.c.b16 %v8457, %v8449
    %v9466 = vpack.c.b16 %v8466, %v8458
    %v9467 = vpack.c.b16 %v8467, %v8459
    %v9468 = vpack.c.b16 %v8468, %v8460
    %v9469 = vpack.c.b16 %v8469, %v8461
    %v9470 = vpack.c.b16 %v8470, %v8462
    %v9471 = vpack.c.b16 %v8471, %v8463
    %v9472 = vpack.c.b16 %v8472, %v8464
    %v9473 = vpack.c.b16 %v8473, %v8465
    %v9474 = vpack.c.b16 %v8482, %v8474
    %v9475 = vpack.c.b16 %v8483, %v8475
    %v9476 = vpack.c.b16 %v8484, %v8476
    %v9477 = vpack.c.b16 %v8485, %v8477
    %v9478 = vpack.c.b16 %v8486, %v8478
    %v9479 = vpack.c.b16 %v8487, %v8479
    %v9480 = vpack.c.b16 %v8488, %v8480
    %v9481 = vpack.c.b16 %v8489, %v8481
    %v9482 = vpack.c.b16 %v8498, %v8490
    %v9483 = vpack.c.b16 %v8499, %v8491
    %v9484 = vpack.c.b16 %v8500, %v8492
    %v9485 = vpack.c.b16 %v8501, %v8493
    %v9486 = vpack.c.b16 %v8502, %v8494
    %v9487 = vpack.c.b16 %v8503, %v8495
    %v9488 = vpack.c.b16 %v8504, %v8496
    %v9489 = vpack.c.b16 %v8505, %v8497
    %v9490 = vpack.c.b16 %v8514, %v8506
    %v9491 = vpack.c.b16 %v8515, %v8507
    %v9492 = vpack.c.b16 %v8516, %v8508
    %v9493 = vpack.c.b16 %v8517, %v8509
    %v9494 = vpack.c.b16 %v8518, %v8510
    %v9495 = vpack.c.b16 %v8519, %v8511
    %v9496 = vpack.c.b16 %v8520, %v8512
    %v9497 = vpack.c.b16 %v8521, %v8513
    %v9498 = vpack.c.b16 %v8530, %v8522
    %v9499 = vpack.c.b16 %v8531, %v8523
    %v9500 = vpack.c.b16 %v8532, %v8524
    %v9501 = vpack.c.b16 %v8533, %v8525
    %v9502 = vpack.c.b16 %v8534, %v8526
    %v9503 = vpack.c.b16 %v8535, %v8527
    %v9504 = vpack.c.b16 %v8536, %v8528
    %v9505 = vpack.c.b16 %v8537, %v8529
    %v9506 = vpack.c.b16 %v8546, %v8538
    %v9507 = vpack.c.b16 %v8547, %v8539
    %v9508 = vpack.c.b16 %v8548, %v8540
    %v9509 = vpack.c.b16 %v8549, %v8541
    %v9510 = vpack.c.b16 %v8550, %v8542
    %v9511 = vpack.c.b16 %v8551, %v8543
    %v9512 = vpack.c.b16 %v8552, %v8544
    %v9513 = vpack.c.b16 %v8553, %v8545
    %v9514 = vpack.c.b16 %v8562, %v8554
    %v9515 = vpack.c.b16 %v8563, %v8555
    %v9516 = vpack.c.b16 %v8564, %v8556
    %v9517 = vpack.c.b16 %v8565, %v8557
    %v9518 = vpack.c.b16 %v8566, %v8558
    %v9519 = vpack.c.b16 %v8567, %v8559
    %v9520 = vpack.c.b16 %v8568, %v8560
    %v9521 = vpack.c.b16 %v8569, %v8561
    %v9522 = vpack.c.b16 %v8578, %v8570
    %v9523 = vpack.c.b16 %v8579, %v8571
    %v9524 = vpack.c.b16 %v8580, %v8572
    %v9525 = vpack.c.b16 %v8581, %v8573
    %v9526 = vpack.c.b16 %v8582, %v8574
    %v9527 = vpack.c.b16 %v8583, %v8575
    %v9528 = vpack.c.b16 %v8584, %v8576
    %v9529 = vpack.c.b16 %v8585, %v8577
    %v9530 = vpack.c.b16 %v8594, %v8586
    %v9531 = vpack.c.b16 %v8595, %v8587
    %v9532 = vpack.c.b16 %v8596, %v8588
    %v9533 = vpack.c.b16 %v8597, %v8589
    %v9534 = vpack.c.b16 %v8598, %v8590
    %v9535 = vpack.c.b16 %v8599, %v8591
    %v9536 = vpack.c.b16 %v8600, %v8592
    %v9537 = vpack.c.b16 %v8601, %v8593
    %v9538 = vpack.c.b16 %v8610, %v8602
    %v9539 = vpack.c.b16 %v8611, %v8603
    %v9540 = vpack.c.b16 %v8612, %v8604
    %v9541 = vpack.c.b16 %v8613, %v8605
    %v9542 = vpack.c.b16 %v8614, %v8606
    %v9543 = vpack.c.b16 %v8615, %v8607
    %v9544 = vpack.c.b16 %v8616, %v8608
    %v9545 = vpack.c.b16 %v8617, %v8609
    %v9546 = vpack.c.b16 %v8626, %v8618
    %v9547 = vpack.c.b16 %v8627, %v8619
    %v9548 = vpack.c.b16 %v8628, %v8620
    %v9549 = vpack.c.b16 %v8629, %v8621
    %v9550 = vpack.c.b16 %v8630, %v8622
    %v9551 = vpack.c.b16 %v8631, %v8623
    %v9552 = vpack.c.b16 %v8632, %v8624
    %v9553 = vpack.c.b16 %v8633, %v8625
    %v9554 = vpack.c.b16 %v8642, %v8634
    %v9555 = vpack.c.b16 %v8643, %v8635
    %v9556 = vpack.c.b16 %v8644, %v8636
    %v9557 = vpack.c.b16 %v8645, %v8637
    %v9558 = vpack.c.b16 %v8646, %v8638
    %v9559 = vpack.c.b16 %v8647, %v8639
    %v9560 = vpack.c.b16 %v8648, %v8640
    %v9561 = vpack.c.b16 %v8649, %v8641
    %v9562 = vpack.c.b16 %v8658, %v8650
    %v9563 = vpack.c.b16 %v8659, %v8651
    %v9564 = vpack.c.b16 %v8660, %v8652
    %v9565 = vpack.c.b16 %v8661, %v8653
    %v9566 = vpack.c.b16 %v8662, %v8654
    %v9567 = vpack.c.b16 %v8663, %v8655
    %v9568 = vpack.c.b16 %v8664, %v8656
    %v9569 = vpack.c.b16 %v8665, %v8657
    %v9570 = vpack.c.b16 %v8674, %v8666
    %v9571 = vpack.c.b16 %v8675, %v8667
    %v9572 = vpack.c.b16 %v8676, %v8668
    %v9573 = vpack.c.b16 %v8677, %v8669
    %v9574 = vpack.c.b16 %v8678, %v8670
    %v9575 = vpack.c.b16 %v8679, %v8671
    %v9576 = vpack.c.b16 %v8680, %v8672
    %v9577 = vpack.c.b16 %v8681, %v8673
    %v9578 = vpack.c.b16 %v8690, %v8682
    %v9579 = vpack.c.b16 %v8691, %v8683
    %v9580 = vpack.c.b16 %v8692, %v8684
    %v9581 = vpack.c.b16 %v8693, %v8685
    %v9582 = vpack.c.b16 %v8694, %v8686
    %v9583 = vpack.c.b16 %v8695, %v8687
    %v9584 = vpack.c.b16 %v8696, %v8688
    %v9585 = vpack.c.b16 %v8697, %v8689
    %v9586 = vpack.c.b16 %v8706, %v8698
    %v9587 = vpack.c.b16 %v8707, %v8699
    %v9588 = vpack.c.b16 %v8708, %v8700
    %v9589 = vpack.c.b16 %v8709, %v8701
    %v9590 = vpack.c.b16 %v8710, %v8702
    %v9591 = vpack.c.b16 %v8711, %v8703
    %v9592 = vpack.c.b16 %v8712, %v8704
    %v9593 = vpack.c.b16 %v8713, %v8705
    %v9594 = vpack.c.b16 %v8722, %v8714
    %v9595 = vpack.c.b16 %v8723, %v8715
    %v9596 = vpack.c.b16 %v8724, %v8716
    %v9597 = vpack.c.b16 %v8725, %v8717
    %v9598 = vpack.c.b16 %v8726, %v8718
    %v9599 = vpack.c.b16 %v8727, %v8719
    %v9600 = vpack.c.b16 %v8728, %v8720
    %v9601 = vpack.c.b16 %v8729, %v8721
    %v9602 = vpack.c.b16 %v8738, %v8730
    %v9603 = vpack.c.b16 %v8739, %v8731
    %v9604 = vpack.c.b16 %v8740, %v8732
    %v9605 = vpack.c.b16 %v8741, %v8733
    %v9606 = vpack.c.b16 %v8742, %v8734
    %v9607 = vpack.c.b16 %v8743, %v8735
    %v9608 = vpack.c.b16 %v8744, %v8736
    %v9609 = vpack.c.b16 %v8745, %v8737
    %v9610 = vpack.c.b16 %v8754, %v8746
    %v9611 = vpack.c.b16 %v8755, %v8747
    %v9612 = vpack.c.b16 %v8756, %v8748
    %v9613 = vpack.c.b16 %v8757, %v8749
    %v9614 = vpack.c.b16 %v8758, %v8750
    %v9615 = vpack.c.b16 %v8759, %v8751
    %v9616 = vpack.c.b16 %v8760, %v8752
    %v9617 = vpack.c.b16 %v8761, %v8753
    %v9618 = vpack.c.b16 %v8770, %v8762
    %v9619 = vpack.c.b16 %v8771, %v8763
    %v9620 = vpack.c.b16 %v8772, %v8764
    %v9621 = vpack.c.b16 %v8773, %v8765
    %v9622 = vpack.c.b16 %v8774, %v8766
    %v9623 = vpack.c.b16 %v8775, %v8767
    %v9624 = vpack.c.b16 %v8776, %v8768
    %v9625 = vpack.c.b16 %v8777, %v8769
    %v9626 = vpack.c.b16 %v8786, %v8778
    %v9627 = vpack.c.b16 %v8787, %v8779
    %v9628 = vpack.c.b16 %v8788, %v8780
    %v9629 = vpack.c.b16 %v8789, %v8781
    %v9630 = vpack.c.b16 %v8790, %v8782
    %v9631 = vpack.c.b16 %v8791, %v8783
    %v9632 = vpack.c.b16 %v8792, %v8784
    %v9633 = vpack.c.b16 %v8793, %v8785
    %v9634 = vpack.c.b16 %v8802, %v8794
    %v9635 = vpack.c.b16 %v8803, %v8795
    %v9636 = vpack.c.b16 %v8804, %v8796
    %v9637 = vpack.c.b16 %v8805, %v8797
    %v9638 = vpack.c.b16 %v8806, %v8798
    %v9639 = vpack.c.b16 %v8807, %v8799
    %v9640 = vpack.c.b16 %v8808, %v8800
    %v9641 = vpack.c.b16 %v8809, %v8801
    %v9642 = vpack.c.b16 %v8818, %v8810
    %v9643 = vpack.c.b16 %v8819, %v8811
    %v9644 = vpack.c.b16 %v8820, %v8812
    %v9645 = vpack.c.b16 %v8821, %v8813
    %v9646 = vpack.c.b16 %v8822, %v8814
    %v9647 = vpack.c.b16 %v8823, %v8815
    %v9648 = vpack.c.b16 %v8824, %v8816
    %v9649 = vpack.c.b16 %v8825, %v8817
    %v9650 = vpack.c.b16 %v8834, %v8826
    %v9651 = vpack.c.b16 %v8835, %v8827
    %v9652 = vpack.c.b16 %v8836, %v8828
    %v9653 = vpack.c.b16 %v8837, %v8829
    %v9654 = vpack.c.b16 %v8838, %v8830
    %v9655 = vpack.c.b16 %v8839, %v8831
    %v9656 = vpack.c.b16 %v8840, %v8832
    %v9657 = vpack.c.b16 %v8841, %v8833
    %v9658 = vpack.c.b16 %v8850, %v8842
    %v9659 = vpack.c.b16 %v8851, %v8843
    %v9660 = vpack.c.b16 %v8852, %v8844
    %v9661 = vpack.c.b16 %v8853, %v8845
    %v9662 = vpack.c.b16 %v8854, %v8846
    %v9663 = vpack.c.b16 %v8855, %v8847
    %v9664 = vpack.c.b16 %v8856, %v8848
    %v9665 = vpack.c.b16 %v8857, %v8849
    %v9666 = vpack.c.b16 %v8866, %v8858
    %v9667 = vpack.c.b16 %v8867, %v8859
    %v9668 = vpack.c.b16 %v8868, %v8860
    %v9669 = vpack.c.b16 %v8869, %v8861
    %v9670 = vpack.c.b16 %v8870, %v8862
    %v9671 = vpack.c.b16 %v8871, %v8863
    %v9672 = vpack.c.b16 %v8872, %v8864
    %v9673 = vpack.c.b16 %v8873, %v8865
    %v9674 = vpack.c.b16 %v8882, %v8874
    %v9675 = vpack.c.b16 %v8883, %v8875
    %v9676 = vpack.c.b16 %v8884, %v8876
    %v9677 = vpack.c.b16 %v8885, %v8877
    %v9678 = vpack.c.b16 %v8886, %v8878
    %v9679 = vpack.c.b16 %v8887, %v8879
    %v9680 = vpack.c.b16 %v8888, %v8880
    %v9681 = vpack.c.b16 %v8889, %v8881
    %v9682 = vpack.c.b16 %v8898, %v8890
    %v9683 = vpack.c.b16 %v8899, %v8891
    %v9684 = vpack.c.b16 %v8900, %v8892
    %v9685 = vpack.c.b16 %v8901, %v8893
    %v9686 = vpack.c.b16 %v8902, %v8894
    %v9687 = vpack.c.b16 %v8903, %v8895
    %v9688 = vpack.c.b16 %v8904, %v8896
    %v9689 = vpack.c.b16 %v8905, %v8897
    %v9690 = vpack.c.b16 %v8914, %v8906
    %v9691 = vpack.c.b16 %v8915, %v8907
    %v9692 = vpack.c.b16 %v8916, %v8908
    %v9693 = vpack.c.b16 %v8917, %v8909
    %v9694 = vpack.c.b16 %v8918, %v8910
    %v9695 = vpack.c.b16 %v8919, %v8911
    %v9696 = vpack.c.b16 %v8920, %v8912
    %v9697 = vpack.c.b16 %v8921, %v8913
    %v9698 = vpack.c.b16 %v8930, %v8922
    %v9699 = vpack.c.b16 %v8931, %v8923
    %v9700 = vpack.c.b16 %v8932, %v8924
    %v9701 = vpack.c.b16 %v8933, %v8925
    %v9702 = vpack.c.b16 %v8934, %v8926
    %v9703 = vpack.c.b16 %v8935, %v8927
    %v9704 = vpack.c.b16 %v8936, %v8928
    %v9705 = vpack.c.b16 %v8937, %v8929
    %v9706 = vpack.c.b16 %v8946, %v8938
    %v9707 = vpack.c.b16 %v8947, %v8939
    %v9708 = vpack.c.b16 %v8948, %v8940
    %v9709 = vpack.c.b16 %v8949, %v8941
    %v9710 = vpack.c.b16 %v8950, %v8942
    %v9711 = vpack.c.b16 %v8951, %v8943
    %v9712 = vpack.c.b16 %v8952, %v8944
    %v9713 = vpack.c.b16 %v8953, %v8945
    %v9714 = vpack.c.b16 %v8962, %v8954
    %v9715 = vpack.c.b16 %v8963, %v8955
    %v9716 = vpack.c.b16 %v8964, %v8956
    %v9717 = vpack.c.b16 %v8965, %v8957
    %v9718 = vpack.c.b16 %v8966, %v8958
    %v9719 = vpack.c.b16 %v8967, %v8959
    %v9720 = vpack.c.b16 %v8968, %v8960
    %v9721 = vpack.c.b16 %v8969, %v8961
    %v9722 = vpack.c.b16 %v8978, %v8970
    %v9723 = vpack.c.b16 %v8979, %v8971
    %v9724 = vpack.c.b16 %v8980, %v8972
    %v9725 = vpack.c.b16 %v8981, %v8973
    %v9726 = vpack.c.b16 %v8982, %v8974
    %v9727 = vpack.c.b16 %v8983, %v8975
    %v9728 = vpack.c.b16 %v8984, %v8976
    %v9729 = vpack.c.b16 %v8985, %v8977
    %v9730 = vpack.c.b16 %v8994, %v8986
    %v9731 = vpack.c.b16 %v8995, %v8987
    %v9732 = vpack.c.b16 %v8996, %v8988
    %v9733 = vpack.c.b16 %v8997, %v8989
    %v9734 = vpack.c.b16 %v8998, %v8990
    %v9735 = vpack.c.b16 %v8999, %v8991
    %v9736 = vpack.c.b16 %v9000, %v8992
    %v9737 = vpack.c.b16 %v9001, %v8993
    %v9738 = vpack.c.b16 %v9010, %v9002
    %v9739 = vpack.c.b16 %v9011, %v9003
    %v9740 = vpack.c.b16 %v9012, %v9004
    %v9741 = vpack.c.b16 %v9013, %v9005
    %v9742 = vpack.c.b16 %v9014, %v9006
    %v9743 = vpack.c.b16 %v9015, %v9007
    %v9744 = vpack.c.b16 %v9016, %v9008
    %v9745 = vpack.c.b16 %v9017, %v9009
    %v9746 = vpack.c.b16 %v9026, %v9018
    %v9747 = vpack.c.b16 %v9027, %v9019
    %v9748 = vpack.c.b16 %v9028, %v9020
    %v9749 = vpack.c.b16 %v9029, %v9021
    %v9750 = vpack.c.b16 %v9030, %v9022
    %v9751 = vpack.c.b16 %v9031, %v9023
    %v9752 = vpack.c.b16 %v9032, %v9024
    %v9753 = vpack.c.b16 %v9033, %v9025
    %v9754 = vpack.c.b16 %v9042, %v9034
    %v9755 = vpack.c.b16 %v9043, %v9035
    %v9756 = vpack.c.b16 %v9044, %v9036
    %v9757 = vpack.c.b16 %v9045, %v9037
    %v9758 = vpack.c.b16 %v9046, %v9038
    %v9759 = vpack.c.b16 %v9047, %v9039
    %v9760 = vpack.c.b16 %v9048, %v9040
    %v9761 = vpack.c.b16 %v9049, %v9041
    %v9762 = vpack.c.b16 %v9058, %v9050
    %v9763 = vpack.c.b16 %v9059, %v9051
    %v9764 = vpack.c.b16 %v9060, %v9052
    %v9765 = vpack.c.b16 %v9061, %v9053
    %v9766 = vpack.c.b16 %v9062, %v9054
    %v9767 = vpack.c.b16 %v9063, %v9055
    %v9768 = vpack.c.b16 %v9064, %v9056
    %v9769 = vpack.c.b16 %v9065, %v9057
    %v9770 = vpack.c.b16 %v9074, %v9066
    %v9771 = vpack.c.b16 %v9075, %v9067
    %v9772 = vpack.c.b16 %v9076, %v9068
    %v9773 = vpack.c.b16 %v9077, %v9069
    %v9774 = vpack.c.b16 %v9078, %v9070
    %v9775 = vpack.c.b16 %v9079, %v9071
    %v9776 = vpack.c.b16 %v9080, %v9072
    %v9777 = vpack.c.b16 %v9081, %v9073
    %v9778 = vpack.c.b16 %v9090, %v9082
    %v9779 = vpack.c.b16 %v9091, %v9083
    %v9780 = vpack.c.b16 %v9092, %v9084
    %v9781 = vpack.c.b16 %v9093, %v9085
    %v9782 = vpack.c.b16 %v9094, %v9086
    %v9783 = vpack.c.b16 %v9095, %v9087
    %v9784 = vpack.c.b16 %v9096, %v9088
    %v9785 = vpack.c.b16 %v9097, %v9089
    %v9786 = vpack.c.b16 %v9106, %v9098
    %v9787 = vpack.c.b16 %v9107, %v9099
    %v9788 = vpack.c.b16 %v9108, %v9100
    %v9789 = vpack.c.b16 %v9109, %v9101
    %v9790 = vpack.c.b16 %v9110, %v9102
    %v9791 = vpack.c.b16 %v9111, %v9103
    %v9792 = vpack.c.b16 %v9112, %v9104
    %v9793 = vpack.c.b16 %v9113, %v9105
    %v9794 = vpack.c.b16 %v9122, %v9114
    %v9795 = vpack.c.b16 %v9123, %v9115
    %v9796 = vpack.c.b16 %v9124, %v9116
    %v9797 = vpack.c.b16 %v9125, %v9117
    %v9798 = vpack.c.b16 %v9126, %v9118
    %v9799 = vpack.c.b16 %v9127, %v9119
    %v9800 = vpack.c.b16 %v9128, %v9120
    %v9801 = vpack.c.b16 %v9129, %v9121
    %v9802 = vpack.c.b16 %v9138, %v9130
    %v9803 = vpack.c.b16 %v9139, %v9131
    %v9804 = vpack.c.b16 %v9140, %v9132
    %v9805 = vpack.c.b16 %v9141, %v9133
    %v9806 = vpack.c.b16 %v9142, %v9134
    %v9807 = vpack.c.b16 %v9143, %v9135
    %v9808 = vpack.c.b16 %v9144, %v9136
    %v9809 = vpack.c.b16 %v9145, %v9137
    %v9810 = vpack.c.b16 %v9154, %v9146
    %v9811 = vpack.c.b16 %v9155, %v9147
    %v9812 = vpack.c.b16 %v9156, %v9148
    %v9813 = vpack.c.b16 %v9157, %v9149
    %v9814 = vpack.c.b16 %v9158, %v9150
    %v9815 = vpack.c.b16 %v9159, %v9151
    %v9816 = vpack.c.b16 %v9160, %v9152
    %v9817 = vpack.c.b16 %v9161, %v9153
    %v9818 = vpack.c.b16 %v9170, %v9162
    %v9819 = vpack.c.b16 %v9171, %v9163
    %v9820 = vpack.c.b16 %v9172, %v9164
    %v9821 = vpack.c.b16 %v9173, %v9165
    %v9822 = vpack.c.b16 %v9174, %v9166
    %v9823 = vpack.c.b16 %v9175, %v9167
    %v9824 = vpack.c.b16 %v9176, %v9168
    %v9825 = vpack.c.b16 %v9177, %v9169
    %v9826 = vpack.c.b16 %v9186, %v9178
    %v9827 = vpack.c.b16 %v9187, %v9179
    %v9828 = vpack.c.b16 %v9188, %v9180
    %v9829 = vpack.c.b16 %v9189, %v9181
    %v9830 = vpack.c.b16 %v9190, %v9182
    %v9831 = vpack.c.b16 %v9191, %v9183
    %v9832 = vpack.c.b16 %v9192, %v9184
    %v9833 = vpack.c.b16 %v9193, %v9185
    %v9834 = vpack.c.b16 %v9202, %v9194
    %v9835 = vpack.c.b16 %v9203, %v9195
    %v9836 = vpack.c.b16 %v9204, %v9196
    %v9837 = vpack.c.b16 %v9205, %v9197
    %v9838 = vpack.c.b16 %v9206, %v9198
    %v9839 = vpack.c.b16 %v9207, %v9199
    %v9840 = vpack.c.b16 %v9208, %v9200
    %v9841 = vpack.c.b16 %v9209, %v9201
    %v9842 = vpack.c.b16 %v9218, %v9210
    %v9843 = vpack.c.b16 %v9219, %v9211
    %v9844 = vpack.c.b16 %v9220, %v9212
    %v9845 = vpack.c.b16 %v9221, %v9213
    %v9846 = vpack.c.b16 %v9222, %v9214
    %v9847 = vpack.c.b16 %v9223, %v9215
    %v9848 = vpack.c.b16 %v9224, %v9216
    %v9849 = vpack.c.b16 %v9225, %v9217
    %v9850 = vpack.c.b16 %v9234, %v9226
    %v9851 = vpack.c.b16 %v9235, %v9227
    %v9852 = vpack.c.b16 %v9236, %v9228
    %v9853 = vpack.c.b16 %v9237, %v9229
    %v9854 = vpack.c.b16 %v9238, %v9230
    %v9855 = vpack.c.b16 %v9239, %v9231
    %v9856 = vpack.c.b16 %v9240, %v9232
    %v9857 = vpack.c.b16 %v9241, %v9233
    %v9858 = vpack.c.b16 %v9250, %v9242
    %v9859 = vpack.c.b16 %v9251, %v9243
    %v9860 = vpack.c.b16 %v9252, %v9244
    %v9861 = vpack.c.b16 %v9253, %v9245
    %v9862 = vpack.c.b16 %v9254, %v9246
    %v9863 = vpack.c.b16 %v9255, %v9247
    %v9864 = vpack.c.b16 %v9256, %v9248
    %v9865 = vpack.c.b16 %v9257, %v9249
    %v9866 = vpack.c.b16 %v9266, %v9258
    %v9867 = vpack.c.b16 %v9267, %v9259
    %v9868 = vpack.c.b16 %v9268, %v9260
    %v9869 = vpack.c.b16 %v9269, %v9261
    %v9870 = vpack.c.b16 %v9270, %v9262
    %v9871 = vpack.c.b16 %v9271, %v9263
    %v9872 = vpack.c.b16 %v9272, %v9264
    %v9873 = vpack.c.b16 %v9273, %v9265
    %v9874 = vpack.c.b16 %v9282, %v9274
    %v9875 = vpack.c.b16 %v9283, %v9275
    %v9876 = vpack.c.b16 %v9284, %v9276
    %v9877 = vpack.c.b16 %v9285, %v9277
    %v9878 = vpack.c.b16 %v9286, %v9278
    %v9879 = vpack.c.b16 %v9287, %v9279
    %v9880 = vpack.c.b16 %v9288, %v9280
    %v9881 = vpack.c.b16 %v9289, %v9281
    %v9882 = vpack.c.b16 %v9298, %v9290
    %v9883 = vpack.c.b16 %v9299, %v9291
    %v9884 = vpack.c.b16 %v9300, %v9292
    %v9885 = vpack.c.b16 %v9301, %v9293
    %v9886 = vpack.c.b16 %v9302, %v9294
    %v9887 = vpack.c.b16 %v9303, %v9295
    %v9888 = vpack.c.b16 %v9304, %v9296
    %v9889 = vpack.c.b16 %v9305, %v9297
    %v9890 = vpack.c.b16 %v9314, %v9306
    %v9891 = vpack.c.b16 %v9315, %v9307
    %v9892 = vpack.c.b16 %v9316, %v9308
    %v9893 = vpack.c.b16 %v9317, %v9309
    %v9894 = vpack.c.b16 %v9318, %v9310
    %v9895 = vpack.c.b16 %v9319, %v9311
    %v9896 = vpack.c.b16 %v9320, %v9312
    %v9897 = vpack.c.b16 %v9321, %v9313
    %v9898 = vpack.c.b16 %v9330, %v9322
    %v9899 = vpack.c.b16 %v9331, %v9323
    %v9900 = vpack.c.b16 %v9332, %v9324
    %v9901 = vpack.c.b16 %v9333, %v9325
    %v9902 = vpack.c.b16 %v9334, %v9326
    %v9903 = vpack.c.b16 %v9335, %v9327
    %v9904 = vpack.c.b16 %v9336, %v9328
    %v9905 = vpack.c.b16 %v9337, %v9329
    %v9906 = vpack.c.b16 %v9346, %v9338
    %v9907 = vpack.c.b16 %v9347, %v9339
    %v9908 = vpack.c.b16 %v9348, %v9340
    %v9909 = vpack.c.b16 %v9349, %v9341
    %v9910 = vpack.c.b16 %v9350, %v9342
    %v9911 = vpack.c.b16 %v9351, %v9343
    %v9912 = vpack.c.b16 %v9352, %v9344
    %v9913 = vpack.c.b16 %v9353, %v9345
    %v9914 = vpack.c.b16 %v9362, %v9354
    %v9915 = vpack.c.b16 %v9363, %v9355
    %v9916 = vpack.c.b16 %v9364, %v9356
    %v9917 = vpack.c.b16 %v9365, %v9357
    %v9918 = vpack.c.b16 %v9366, %v9358
    %v9919 = vpack.c.b16 %v9367, %v9359
    %v9920 = vpack.c.b16 %v9368, %v9360
    %v9921 = vpack.c.b16 %v9369, %v9361
    %v9922 = vpack.c.b16 %v9378, %v9370
    %v9923 = vpack.c.b16 %v9379, %v9371
    %v9924 = vpack.c.b16 %v9380, %v9372
    %v9925 = vpack.c.b16 %v9381, %v9373
    %v9926 = vpack.c.b16 %v9382, %v9374
    %v9927 = vpack.c.b16 %v9383, %v9375
    %v9928 = vpack.c.b16 %v9384, %v9376
    %v9929 = vpack.c.b16 %v9385, %v9377
    %v9930 = vpack.c.b16 %v9394, %v9386
    %v9931 = vpack.c.b16 %v9395, %v9387
    %v9932 = vpack.c.b16 %v9396, %v9388
    %v9933 = vpack.c.b16 %v9397, %v9389
    %v9934 = vpack.c.b16 %v9398, %v9390
    %v9935 = vpack.c.b16 %v9399, %v9391
    %v9936 = vpack.c.b16 %v9400, %v9392
    %v9937 = vpack.c.b16 %v9401, %v9393
    %v9938 = vpack.c.b16 %v9410, %v9402
    %v9939 = vpack.c.b16 %v9411, %v9403
    %v9940 = vpack.c.b16 %v9412, %v9404
    %v9941 = vpack.c.b16 %v9413, %v9405
    %v9942 = vpack.c.b16 %v9414, %v9406
    %v9943 = vpack.c.b16 %v9415, %v9407
    %v9944 = vpack.c.b16 %v9416, %v9408
    %v9945 = vpack.c.b16 %v9417, %v9409
    %v9946 = vpack.c.b16 %v9426, %v9418
    %v9947 = vpack.c.b16 %v9427, %v9419
    %v9948 = vpack.c.b16 %v9428, %v9420
    %v9949 = vpack.c.b16 %v9429, %v9421
    %v9950 = vpack.c.b16 %v9430, %v9422
    %v9951 = vpack.c.b16 %v9431, %v9423
    %v9952 = vpack.c.b16 %v9432, %v9424
    %v9953 = vpack.c.b16 %v9433, %v9425
    %v9954 = vpack.c.b16 %v9442, %v9434
    %v9955 = vpack.c.b16 %v9443, %v9435
    %v9956 = vpack.c.b16 %v9444, %v9436
    %v9957 = vpack.c.b16 %v9445, %v9437
    %v9958 = vpack.c.b16 %v9446, %v9438
    %v9959 = vpack.c.b16 %v9447, %v9439
    %v9960 = vpack.c.b16 %v9448, %v9440
    %v9961 = vpack.c.b16 %v9449, %v9441
    %10474 = vmatpush.bf16.msra.mxu0 %v9506
    %10475 = vmatpush.bf16.msra.mxu0 %v9498
    %10476 = vmatpush.bf16.msra.mxu0 %v9490
    %10477 = vmatpush.bf16.msra.mxu0 %v9482
    %10478 = vmatpush.bf16.msra.mxu0 %v9474
    %10479 = vmatpush.bf16.msra.mxu0 %v9466
    %10480 = vmatpush.bf16.msra.mxu0 %v9458
    %10481 = vmatpush.bf16.msra.mxu0 %v9450
    %10482 = vmatmul.bf16.gmra.mxu0 %v7889
    %v10483 = vpop.f32.mrf.mxu0
    %v10484 = vadd.f32 %v7898, %v10483
    %v10485 = vpop.f32.mrf.mxu0
    %10486 = vdwg.mxu0
    %10487 = vmatpush.bf16.msra.mxu0 %v9570
    %10488 = vmatpush.bf16.msra.mxu0 %v9562
    %10489 = vmatpush.bf16.msra.mxu0 %v9554
    %10490 = vmatpush.bf16.msra.mxu0 %v9546
    %10491 = vmatpush.bf16.msra.mxu0 %v9538
    %10492 = vmatpush.bf16.msra.mxu0 %v9530
    %10493 = vmatpush.bf16.msra.mxu0 %v9522
    %10494 = vmatpush.bf16.msra.mxu0 %v9514
    %10495 = vmatmul.bf16.gmra.mxu0 %v7890
    %v10496 = vpop.f32.mrf.mxu0
    %v10497 = vadd.f32 %v10484, %v10496
    %v10498 = vpop.f32.mrf.mxu0
    %10499 = vdwg.mxu0
    %10500 = vmatpush.bf16.msra.mxu0 %v9634
    %10501 = vmatpush.bf16.msra.mxu0 %v9626
    %10502 = vmatpush.bf16.msra.mxu0 %v9618
    %10503 = vmatpush.bf16.msra.mxu0 %v9610
    %10504 = vmatpush.bf16.msra.mxu0 %v9602
    %10505 = vmatpush.bf16.msra.mxu0 %v9594
    %10506 = vmatpush.bf16.msra.mxu0 %v9586
    %10507 = vmatpush.bf16.msra.mxu0 %v9578
    %10508 = vmatmul.bf16.gmra.mxu0 %v7891
    %v10509 = vpop.f32.mrf.mxu0
    %v10510 = vadd.f32 %v10497, %v10509
    %v10511 = vpop.f32.mrf.mxu0
    %10512 = vdwg.mxu0
    %10513 = vmatpush.bf16.msra.mxu0 %v9698
    %10514 = vmatpush.bf16.msra.mxu0 %v9690
    %10515 = vmatpush.bf16.msra.mxu0 %v9682
    %10516 = vmatpush.bf16.msra.mxu0 %v9674
    %10517 = vmatpush.bf16.msra.mxu0 %v9666
    %10518 = vmatpush.bf16.msra.mxu0 %v9658
    %10519 = vmatpush.bf16.msra.mxu0 %v9650
    %10520 = vmatpush.bf16.msra.mxu0 %v9642
    %10521 = vmatmul.bf16.gmra.mxu0 %v7892
    %v10522 = vpop.f32.mrf.mxu0
    %v10523 = vadd.f32 %v10510, %v10522
    %v10524 = vpop.f32.mrf.mxu0
    %10525 = vdwg.mxu0
    %10526 = vmatpush.bf16.msra.mxu0 %v9762
    %10527 = vmatpush.bf16.msra.mxu0 %v9754
    %10528 = vmatpush.bf16.msra.mxu0 %v9746
    %10529 = vmatpush.bf16.msra.mxu0 %v9738
    %10530 = vmatpush.bf16.msra.mxu0 %v9730
    %10531 = vmatpush.bf16.msra.mxu0 %v9722
    %10532 = vmatpush.bf16.msra.mxu0 %v9714
    %10533 = vmatpush.bf16.msra.mxu0 %v9706
    %10534 = vmatmul.bf16.gmra.mxu0 %v7893
    %v10535 = vpop.f32.mrf.mxu0
    %v10536 = vadd.f32 %v10523, %v10535
    %v10537 = vpop.f32.mrf.mxu0
    %10538 = vdwg.mxu0
    %10539 = vmatpush.bf16.msra.mxu0 %v9826
    %10540 = vmatpush.bf16.msra.mxu0 %v9818
    %10541 = vmatpush.bf16.msra.mxu0 %v9810
    %10542 = vmatpush.bf16.msra.mxu0 %v9802
    %10543 = vmatpush.bf16.msra.mxu0 %v9794
    %10544 = vmatpush.bf16.msra.mxu0 %v9786
    %10545 = vmatpush.bf16.msra.mxu0 %v9778
    %10546 = vmatpush.bf16.msra.mxu0 %v9770
    %10547 = vmatmul.bf16.gmra.mxu0 %v7894
    %v10548 = vpop.f32.mrf.mxu0
    %v10549 = vadd.f32 %v10536, %v10548
    %v10550 = vpop.f32.mrf.mxu0
    %10551 = vdwg.mxu0
    %10552 = vmatpush.bf16.msra.mxu0 %v9890
    %10553 = vmatpush.bf16.msra.mxu0 %v9882
    %10554 = vmatpush.bf16.msra.mxu0 %v9874
    %10555 = vmatpush.bf16.msra.mxu0 %v9866
    %10556 = vmatpush.bf16.msra.mxu0 %v9858
    %10557 = vmatpush.bf16.msra.mxu0 %v9850
    %10558 = vmatpush.bf16.msra.mxu0 %v9842
    %10559 = vmatpush.bf16.msra.mxu0 %v9834
    %10560 = vmatmul.bf16.gmra.mxu0 %v7895
    %v10561 = vpop.f32.mrf.mxu0
    %v10562 = vadd.f32 %v10549, %v10561
    %v10563 = vpop.f32.mrf.mxu0
    %10564 = vdwg.mxu0
    %10565 = vmatpush.bf16.msra.mxu0 %v9954
    %10566 = vmatpush.bf16.msra.mxu0 %v9946
    %10567 = vmatpush.bf16.msra.mxu0 %v9938
    %10568 = vmatpush.bf16.msra.mxu0 %v9930
    %10569 = vmatpush.bf16.msra.mxu0 %v9922
    %10570 = vmatpush.bf16.msra.mxu0 %v9914
    %10571 = vmatpush.bf16.msra.mxu0 %v9906
    %10572 = vmatpush.bf16.msra.mxu0 %v9898
    %10573 = vmatmul.bf16.gmra.mxu0 %v7896
    %v10574 = vpop.f32.mrf.mxu0
    %v10575 = vadd.f32 %v10562, %v10574
    %v10576 = vpop.f32.mrf.mxu0
    %10577 = vdwg.mxu0
    %10578 = vmatpush.bf16.msra.mxu0 %v9507
    %10579 = vmatpush.bf16.msra.mxu0 %v9499
    %10580 = vmatpush.bf16.msra.mxu0 %v9491
    %10581 = vmatpush.bf16.msra.mxu0 %v9483
    %10582 = vmatpush.bf16.msra.mxu0 %v9475
    %10583 = vmatpush.bf16.msra.mxu0 %v9467
    %10584 = vmatpush.bf16.msra.mxu0 %v9459
    %10585 = vmatpush.bf16.msra.mxu0 %v9451
    %10586 = vmatmul.bf16.gmra.mxu0 %v7889
    %v10587 = vpop.f32.mrf.mxu0
    %v10588 = vadd.f32 %v7899, %v10587
    %v10589 = vpop.f32.mrf.mxu0
    %10590 = vdwg.mxu0
    %10591 = vmatpush.bf16.msra.mxu0 %v9571
    %10592 = vmatpush.bf16.msra.mxu0 %v9563
    %10593 = vmatpush.bf16.msra.mxu0 %v9555
    %10594 = vmatpush.bf16.msra.mxu0 %v9547
    %10595 = vmatpush.bf16.msra.mxu0 %v9539
    %10596 = vmatpush.bf16.msra.mxu0 %v9531
    %10597 = vmatpush.bf16.msra.mxu0 %v9523
    %10598 = vmatpush.bf16.msra.mxu0 %v9515
    %10599 = vmatmul.bf16.gmra.mxu0 %v7890
    %v10600 = vpop.f32.mrf.mxu0
    %v10601 = vadd.f32 %v10588, %v10600
    %v10602 = vpop.f32.mrf.mxu0
    %10603 = vdwg.mxu0
    %10604 = vmatpush.bf16.msra.mxu0 %v9635
    %10605 = vmatpush.bf16.msra.mxu0 %v9627
    %10606 = vmatpush.bf16.msra.mxu0 %v9619
    %10607 = vmatpush.bf16.msra.mxu0 %v9611
    %10608 = vmatpush.bf16.msra.mxu0 %v9603
    %10609 = vmatpush.bf16.msra.mxu0 %v9595
    %10610 = vmatpush.bf16.msra.mxu0 %v9587
    %10611 = vmatpush.bf16.msra.mxu0 %v9579
    %10612 = vmatmul.bf16.gmra.mxu0 %v7891
    %v10613 = vpop.f32.mrf.mxu0
    %v10614 = vadd.f32 %v10601, %v10613
    %v10615 = vpop.f32.mrf.mxu0
    %10616 = vdwg.mxu0
    %10617 = vmatpush.bf16.msra.mxu0 %v9699
    %10618 = vmatpush.bf16.msra.mxu0 %v9691
    %10619 = vmatpush.bf16.msra.mxu0 %v9683
    %10620 = vmatpush.bf16.msra.mxu0 %v9675
    %10621 = vmatpush.bf16.msra.mxu0 %v9667
    %10622 = vmatpush.bf16.msra.mxu0 %v9659
    %10623 = vmatpush.bf16.msra.mxu0 %v9651
    %10624 = vmatpush.bf16.msra.mxu0 %v9643
    %10625 = vmatmul.bf16.gmra.mxu0 %v7892
    %v10626 = vpop.f32.mrf.mxu0
    %v10627 = vadd.f32 %v10614, %v10626
    %v10628 = vpop.f32.mrf.mxu0
    %10629 = vdwg.mxu0
    %10630 = vmatpush.bf16.msra.mxu0 %v9763
    %10631 = vmatpush.bf16.msra.mxu0 %v9755
    %10632 = vmatpush.bf16.msra.mxu0 %v9747
    %10633 = vmatpush.bf16.msra.mxu0 %v9739
    %10634 = vmatpush.bf16.msra.mxu0 %v9731
    %10635 = vmatpush.bf16.msra.mxu0 %v9723
    %10636 = vmatpush.bf16.msra.mxu0 %v9715
    %10637 = vmatpush.bf16.msra.mxu0 %v9707
    %10638 = vmatmul.bf16.gmra.mxu0 %v7893
    %v10639 = vpop.f32.mrf.mxu0
    %v10640 = vadd.f32 %v10627, %v10639
    %v10641 = vpop.f32.mrf.mxu0
    %10642 = vdwg.mxu0
    %10643 = vmatpush.bf16.msra.mxu0 %v9827
    %10644 = vmatpush.bf16.msra.mxu0 %v9819
    %10645 = vmatpush.bf16.msra.mxu0 %v9811
    %10646 = vmatpush.bf16.msra.mxu0 %v9803
    %10647 = vmatpush.bf16.msra.mxu0 %v9795
    %10648 = vmatpush.bf16.msra.mxu0 %v9787
    %10649 = vmatpush.bf16.msra.mxu0 %v9779
    %10650 = vmatpush.bf16.msra.mxu0 %v9771
    %10651 = vmatmul.bf16.gmra.mxu0 %v7894
    %v10652 = vpop.f32.mrf.mxu0
    %v10653 = vadd.f32 %v10640, %v10652
    %v10654 = vpop.f32.mrf.mxu0
    %10655 = vdwg.mxu0
    %10656 = vmatpush.bf16.msra.mxu0 %v9891
    %10657 = vmatpush.bf16.msra.mxu0 %v9883
    %10658 = vmatpush.bf16.msra.mxu0 %v9875
    %10659 = vmatpush.bf16.msra.mxu0 %v9867
    %10660 = vmatpush.bf16.msra.mxu0 %v9859
    %10661 = vmatpush.bf16.msra.mxu0 %v9851
    %10662 = vmatpush.bf16.msra.mxu0 %v9843
    %10663 = vmatpush.bf16.msra.mxu0 %v9835
    %10664 = vmatmul.bf16.gmra.mxu0 %v7895
    %v10665 = vpop.f32.mrf.mxu0
    %v10666 = vadd.f32 %v10653, %v10665
    %v10667 = vpop.f32.mrf.mxu0
    %10668 = vdwg.mxu0
    %10669 = vmatpush.bf16.msra.mxu0 %v9955
    %10670 = vmatpush.bf16.msra.mxu0 %v9947
    %10671 = vmatpush.bf16.msra.mxu0 %v9939
    %10672 = vmatpush.bf16.msra.mxu0 %v9931
    %10673 = vmatpush.bf16.msra.mxu0 %v9923
    %10674 = vmatpush.bf16.msra.mxu0 %v9915
    %10675 = vmatpush.bf16.msra.mxu0 %v9907
    %10676 = vmatpush.bf16.msra.mxu0 %v9899
    %10677 = vmatmul.bf16.gmra.mxu0 %v7896
    %v10678 = vpop.f32.mrf.mxu0
    %v10679 = vadd.f32 %v10666, %v10678
    %v10680 = vpop.f32.mrf.mxu0
    %10681 = vdwg.mxu0
    %10682 = vmatpush.bf16.msra.mxu0 %v9508
    %10683 = vmatpush.bf16.msra.mxu0 %v9500
    %10684 = vmatpush.bf16.msra.mxu0 %v9492
    %10685 = vmatpush.bf16.msra.mxu0 %v9484
    %10686 = vmatpush.bf16.msra.mxu0 %v9476
    %10687 = vmatpush.bf16.msra.mxu0 %v9468
    %10688 = vmatpush.bf16.msra.mxu0 %v9460
    %10689 = vmatpush.bf16.msra.mxu0 %v9452
    %10690 = vmatmul.bf16.gmra.mxu0 %v7889
    %v10691 = vpop.f32.mrf.mxu0
    %v10692 = vadd.f32 %v7900, %v10691
    %v10693 = vpop.f32.mrf.mxu0
    %10694 = vdwg.mxu0
    %10695 = vmatpush.bf16.msra.mxu0 %v9572
    %10696 = vmatpush.bf16.msra.mxu0 %v9564
    %10697 = vmatpush.bf16.msra.mxu0 %v9556
    %10698 = vmatpush.bf16.msra.mxu0 %v9548
    %10699 = vmatpush.bf16.msra.mxu0 %v9540
    %10700 = vmatpush.bf16.msra.mxu0 %v9532
    %10701 = vmatpush.bf16.msra.mxu0 %v9524
    %10702 = vmatpush.bf16.msra.mxu0 %v9516
    %10703 = vmatmul.bf16.gmra.mxu0 %v7890
    %v10704 = vpop.f32.mrf.mxu0
    %v10705 = vadd.f32 %v10692, %v10704
    %v10706 = vpop.f32.mrf.mxu0
    %10707 = vdwg.mxu0
    %10708 = vmatpush.bf16.msra.mxu0 %v9636
    %10709 = vmatpush.bf16.msra.mxu0 %v9628
    %10710 = vmatpush.bf16.msra.mxu0 %v9620
    %10711 = vmatpush.bf16.msra.mxu0 %v9612
    %10712 = vmatpush.bf16.msra.mxu0 %v9604
    %10713 = vmatpush.bf16.msra.mxu0 %v9596
    %10714 = vmatpush.bf16.msra.mxu0 %v9588
    %10715 = vmatpush.bf16.msra.mxu0 %v9580
    %10716 = vmatmul.bf16.gmra.mxu0 %v7891
    %v10717 = vpop.f32.mrf.mxu0
    %v10718 = vadd.f32 %v10705, %v10717
    %v10719 = vpop.f32.mrf.mxu0
    %10720 = vdwg.mxu0
    %10721 = vmatpush.bf16.msra.mxu0 %v9700
    %10722 = vmatpush.bf16.msra.mxu0 %v9692
    %10723 = vmatpush.bf16.msra.mxu0 %v9684
    %10724 = vmatpush.bf16.msra.mxu0 %v9676
    %10725 = vmatpush.bf16.msra.mxu0 %v9668
    %10726 = vmatpush.bf16.msra.mxu0 %v9660
    %10727 = vmatpush.bf16.msra.mxu0 %v9652
    %10728 = vmatpush.bf16.msra.mxu0 %v9644
    %10729 = vmatmul.bf16.gmra.mxu0 %v7892
    %v10730 = vpop.f32.mrf.mxu0
    %v10731 = vadd.f32 %v10718, %v10730
    %v10732 = vpop.f32.mrf.mxu0
    %10733 = vdwg.mxu0
    %10734 = vmatpush.bf16.msra.mxu0 %v9764
    %10735 = vmatpush.bf16.msra.mxu0 %v9756
    %10736 = vmatpush.bf16.msra.mxu0 %v9748
    %10737 = vmatpush.bf16.msra.mxu0 %v9740
    %10738 = vmatpush.bf16.msra.mxu0 %v9732
    %10739 = vmatpush.bf16.msra.mxu0 %v9724
    %10740 = vmatpush.bf16.msra.mxu0 %v9716
    %10741 = vmatpush.bf16.msra.mxu0 %v9708
    %10742 = vmatmul.bf16.gmra.mxu0 %v7893
    %v10743 = vpop.f32.mrf.mxu0
    %v10744 = vadd.f32 %v10731, %v10743
    %v10745 = vpop.f32.mrf.mxu0
    %10746 = vdwg.mxu0
    %10747 = vmatpush.bf16.msra.mxu0 %v9828
    %10748 = vmatpush.bf16.msra.mxu0 %v9820
    %10749 = vmatpush.bf16.msra.mxu0 %v9812
    %10750 = vmatpush.bf16.msra.mxu0 %v9804
    %10751 = vmatpush.bf16.msra.mxu0 %v9796
    %10752 = vmatpush.bf16.msra.mxu0 %v9788
    %10753 = vmatpush.bf16.msra.mxu0 %v9780
    %10754 = vmatpush.bf16.msra.mxu0 %v9772
    %10755 = vmatmul.bf16.gmra.mxu0 %v7894
    %v10756 = vpop.f32.mrf.mxu0
    %v10757 = vadd.f32 %v10744, %v10756
    %v10758 = vpop.f32.mrf.mxu0
    %10759 = vdwg.mxu0
    %10760 = vmatpush.bf16.msra.mxu0 %v9892
    %10761 = vmatpush.bf16.msra.mxu0 %v9884
    %10762 = vmatpush.bf16.msra.mxu0 %v9876
    %10763 = vmatpush.bf16.msra.mxu0 %v9868
    %10764 = vmatpush.bf16.msra.mxu0 %v9860
    %10765 = vmatpush.bf16.msra.mxu0 %v9852
    %10766 = vmatpush.bf16.msra.mxu0 %v9844
    %10767 = vmatpush.bf16.msra.mxu0 %v9836
    %10768 = vmatmul.bf16.gmra.mxu0 %v7895
    %v10769 = vpop.f32.mrf.mxu0
    %v10770 = vadd.f32 %v10757, %v10769
    %v10771 = vpop.f32.mrf.mxu0
    %10772 = vdwg.mxu0
    %10773 = vmatpush.bf16.msra.mxu0 %v9956
    %10774 = vmatpush.bf16.msra.mxu0 %v9948
    %10775 = vmatpush.bf16.msra.mxu0 %v9940
    %10776 = vmatpush.bf16.msra.mxu0 %v9932
    %10777 = vmatpush.bf16.msra.mxu0 %v9924
    %10778 = vmatpush.bf16.msra.mxu0 %v9916
    %10779 = vmatpush.bf16.msra.mxu0 %v9908
    %10780 = vmatpush.bf16.msra.mxu0 %v9900
    %10781 = vmatmul.bf16.gmra.mxu0 %v7896
    %v10782 = vpop.f32.mrf.mxu0
    %v10783 = vadd.f32 %v10770, %v10782
    %v10784 = vpop.f32.mrf.mxu0
    %10785 = vdwg.mxu0
    %10786 = vmatpush.bf16.msra.mxu0 %v9509
    %10787 = vmatpush.bf16.msra.mxu0 %v9501
    %10788 = vmatpush.bf16.msra.mxu0 %v9493
    %10789 = vmatpush.bf16.msra.mxu0 %v9485
    %10790 = vmatpush.bf16.msra.mxu0 %v9477
    %10791 = vmatpush.bf16.msra.mxu0 %v9469
    %10792 = vmatpush.bf16.msra.mxu0 %v9461
    %10793 = vmatpush.bf16.msra.mxu0 %v9453
    %10794 = vmatmul.bf16.gmra.mxu0 %v7889
    %v10795 = vpop.f32.mrf.mxu0
    %v10796 = vadd.f32 %v7901, %v10795
    %v10797 = vpop.f32.mrf.mxu0
    %10798 = vdwg.mxu0
    %10799 = vmatpush.bf16.msra.mxu0 %v9573
    %10800 = vmatpush.bf16.msra.mxu0 %v9565
    %10801 = vmatpush.bf16.msra.mxu0 %v9557
    %10802 = vmatpush.bf16.msra.mxu0 %v9549
    %10803 = vmatpush.bf16.msra.mxu0 %v9541
    %10804 = vmatpush.bf16.msra.mxu0 %v9533
    %10805 = vmatpush.bf16.msra.mxu0 %v9525
    %10806 = vmatpush.bf16.msra.mxu0 %v9517
    %10807 = vmatmul.bf16.gmra.mxu0 %v7890
    %v10808 = vpop.f32.mrf.mxu0
    %v10809 = vadd.f32 %v10796, %v10808
    %v10810 = vpop.f32.mrf.mxu0
    %10811 = vdwg.mxu0
    %10812 = vmatpush.bf16.msra.mxu0 %v9637
    %10813 = vmatpush.bf16.msra.mxu0 %v9629
    %10814 = vmatpush.bf16.msra.mxu0 %v9621
    %10815 = vmatpush.bf16.msra.mxu0 %v9613
    %10816 = vmatpush.bf16.msra.mxu0 %v9605
    %10817 = vmatpush.bf16.msra.mxu0 %v9597
    %10818 = vmatpush.bf16.msra.mxu0 %v9589
    %10819 = vmatpush.bf16.msra.mxu0 %v9581
    %10820 = vmatmul.bf16.gmra.mxu0 %v7891
    %v10821 = vpop.f32.mrf.mxu0
    %v10822 = vadd.f32 %v10809, %v10821
    %v10823 = vpop.f32.mrf.mxu0
    %10824 = vdwg.mxu0
    %10825 = vmatpush.bf16.msra.mxu0 %v9701
    %10826 = vmatpush.bf16.msra.mxu0 %v9693
    %10827 = vmatpush.bf16.msra.mxu0 %v9685
    %10828 = vmatpush.bf16.msra.mxu0 %v9677
    %10829 = vmatpush.bf16.msra.mxu0 %v9669
    %10830 = vmatpush.bf16.msra.mxu0 %v9661
    %10831 = vmatpush.bf16.msra.mxu0 %v9653
    %10832 = vmatpush.bf16.msra.mxu0 %v9645
    %10833 = vmatmul.bf16.gmra.mxu0 %v7892
    %v10834 = vpop.f32.mrf.mxu0
    %v10835 = vadd.f32 %v10822, %v10834
    %v10836 = vpop.f32.mrf.mxu0
    %10837 = vdwg.mxu0
    %10838 = vmatpush.bf16.msra.mxu0 %v9765
    %10839 = vmatpush.bf16.msra.mxu0 %v9757
    %10840 = vmatpush.bf16.msra.mxu0 %v9749
    %10841 = vmatpush.bf16.msra.mxu0 %v9741
    %10842 = vmatpush.bf16.msra.mxu0 %v9733
    %10843 = vmatpush.bf16.msra.mxu0 %v9725
    %10844 = vmatpush.bf16.msra.mxu0 %v9717
    %10845 = vmatpush.bf16.msra.mxu0 %v9709
    %10846 = vmatmul.bf16.gmra.mxu0 %v7893
    %v10847 = vpop.f32.mrf.mxu0
    %v10848 = vadd.f32 %v10835, %v10847
    %v10849 = vpop.f32.mrf.mxu0
    %10850 = vdwg.mxu0
    %10851 = vmatpush.bf16.msra.mxu0 %v9829
    %10852 = vmatpush.bf16.msra.mxu0 %v9821
    %10853 = vmatpush.bf16.msra.mxu0 %v9813
    %10854 = vmatpush.bf16.msra.mxu0 %v9805
    %10855 = vmatpush.bf16.msra.mxu0 %v9797
    %10856 = vmatpush.bf16.msra.mxu0 %v9789
    %10857 = vmatpush.bf16.msra.mxu0 %v9781
    %10858 = vmatpush.bf16.msra.mxu0 %v9773
    %10859 = vmatmul.bf16.gmra.mxu0 %v7894
    %v10860 = vpop.f32.mrf.mxu0
    %v10861 = vadd.f32 %v10848, %v10860
    %v10862 = vpop.f32.mrf.mxu0
    %10863 = vdwg.mxu0
    %10864 = vmatpush.bf16.msra.mxu0 %v9893
    %10865 = vmatpush.bf16.msra.mxu0 %v9885
    %10866 = vmatpush.bf16.msra.mxu0 %v9877
    %10867 = vmatpush.bf16.msra.mxu0 %v9869
    %10868 = vmatpush.bf16.msra.mxu0 %v9861
    %10869 = vmatpush.bf16.msra.mxu0 %v9853
    %10870 = vmatpush.bf16.msra.mxu0 %v9845
    %10871 = vmatpush.bf16.msra.mxu0 %v9837
    %10872 = vmatmul.bf16.gmra.mxu0 %v7895
    %v10873 = vpop.f32.mrf.mxu0
    %v10874 = vadd.f32 %v10861, %v10873
    %v10875 = vpop.f32.mrf.mxu0
    %10876 = vdwg.mxu0
    %10877 = vmatpush.bf16.msra.mxu0 %v9957
    %10878 = vmatpush.bf16.msra.mxu0 %v9949
    %10879 = vmatpush.bf16.msra.mxu0 %v9941
    %10880 = vmatpush.bf16.msra.mxu0 %v9933
    %10881 = vmatpush.bf16.msra.mxu0 %v9925
    %10882 = vmatpush.bf16.msra.mxu0 %v9917
    %10883 = vmatpush.bf16.msra.mxu0 %v9909
    %10884 = vmatpush.bf16.msra.mxu0 %v9901
    %10885 = vmatmul.bf16.gmra.mxu0 %v7896
    %v10886 = vpop.f32.mrf.mxu0
    %v10887 = vadd.f32 %v10874, %v10886
    %v10888 = vpop.f32.mrf.mxu0
    %10889 = vdwg.mxu0
    %10890 = vmatpush.bf16.msra.mxu0 %v9510
    %10891 = vmatpush.bf16.msra.mxu0 %v9502
    %10892 = vmatpush.bf16.msra.mxu0 %v9494
    %10893 = vmatpush.bf16.msra.mxu0 %v9486
    %10894 = vmatpush.bf16.msra.mxu0 %v9478
    %10895 = vmatpush.bf16.msra.mxu0 %v9470
    %10896 = vmatpush.bf16.msra.mxu0 %v9462
    %10897 = vmatpush.bf16.msra.mxu0 %v9454
    %10898 = vmatmul.bf16.gmra.mxu0 %v7889
    %v10899 = vpop.f32.mrf.mxu0
    %v10900 = vadd.f32 %v7902, %v10899
    %v10901 = vpop.f32.mrf.mxu0
    %10902 = vdwg.mxu0
    %10903 = vmatpush.bf16.msra.mxu0 %v9574
    %10904 = vmatpush.bf16.msra.mxu0 %v9566
    %10905 = vmatpush.bf16.msra.mxu0 %v9558
    %10906 = vmatpush.bf16.msra.mxu0 %v9550
    %10907 = vmatpush.bf16.msra.mxu0 %v9542
    %10908 = vmatpush.bf16.msra.mxu0 %v9534
    %10909 = vmatpush.bf16.msra.mxu0 %v9526
    %10910 = vmatpush.bf16.msra.mxu0 %v9518
    %10911 = vmatmul.bf16.gmra.mxu0 %v7890
    %v10912 = vpop.f32.mrf.mxu0
    %v10913 = vadd.f32 %v10900, %v10912
    %v10914 = vpop.f32.mrf.mxu0
    %10915 = vdwg.mxu0
    %10916 = vmatpush.bf16.msra.mxu0 %v9638
    %10917 = vmatpush.bf16.msra.mxu0 %v9630
    %10918 = vmatpush.bf16.msra.mxu0 %v9622
    %10919 = vmatpush.bf16.msra.mxu0 %v9614
    %10920 = vmatpush.bf16.msra.mxu0 %v9606
    %10921 = vmatpush.bf16.msra.mxu0 %v9598
    %10922 = vmatpush.bf16.msra.mxu0 %v9590
    %10923 = vmatpush.bf16.msra.mxu0 %v9582
    %10924 = vmatmul.bf16.gmra.mxu0 %v7891
    %v10925 = vpop.f32.mrf.mxu0
    %v10926 = vadd.f32 %v10913, %v10925
    %v10927 = vpop.f32.mrf.mxu0
    %10928 = vdwg.mxu0
    %10929 = vmatpush.bf16.msra.mxu0 %v9702
    %10930 = vmatpush.bf16.msra.mxu0 %v9694
    %10931 = vmatpush.bf16.msra.mxu0 %v9686
    %10932 = vmatpush.bf16.msra.mxu0 %v9678
    %10933 = vmatpush.bf16.msra.mxu0 %v9670
    %10934 = vmatpush.bf16.msra.mxu0 %v9662
    %10935 = vmatpush.bf16.msra.mxu0 %v9654
    %10936 = vmatpush.bf16.msra.mxu0 %v9646
    %10937 = vmatmul.bf16.gmra.mxu0 %v7892
    %v10938 = vpop.f32.mrf.mxu0
    %v10939 = vadd.f32 %v10926, %v10938
    %v10940 = vpop.f32.mrf.mxu0
    %10941 = vdwg.mxu0
    %10942 = vmatpush.bf16.msra.mxu0 %v9766
    %10943 = vmatpush.bf16.msra.mxu0 %v9758
    %10944 = vmatpush.bf16.msra.mxu0 %v9750
    %10945 = vmatpush.bf16.msra.mxu0 %v9742
    %10946 = vmatpush.bf16.msra.mxu0 %v9734
    %10947 = vmatpush.bf16.msra.mxu0 %v9726
    %10948 = vmatpush.bf16.msra.mxu0 %v9718
    %10949 = vmatpush.bf16.msra.mxu0 %v9710
    %10950 = vmatmul.bf16.gmra.mxu0 %v7893
    %v10951 = vpop.f32.mrf.mxu0
    %v10952 = vadd.f32 %v10939, %v10951
    %v10953 = vpop.f32.mrf.mxu0
    %10954 = vdwg.mxu0
    %10955 = vmatpush.bf16.msra.mxu0 %v9830
    %10956 = vmatpush.bf16.msra.mxu0 %v9822
    %10957 = vmatpush.bf16.msra.mxu0 %v9814
    %10958 = vmatpush.bf16.msra.mxu0 %v9806
    %10959 = vmatpush.bf16.msra.mxu0 %v9798
    %10960 = vmatpush.bf16.msra.mxu0 %v9790
    %10961 = vmatpush.bf16.msra.mxu0 %v9782
    %10962 = vmatpush.bf16.msra.mxu0 %v9774
    %10963 = vmatmul.bf16.gmra.mxu0 %v7894
    %v10964 = vpop.f32.mrf.mxu0
    %v10965 = vadd.f32 %v10952, %v10964
    %v10966 = vpop.f32.mrf.mxu0
    %10967 = vdwg.mxu0
    %10968 = vmatpush.bf16.msra.mxu0 %v9894
    %10969 = vmatpush.bf16.msra.mxu0 %v9886
    %10970 = vmatpush.bf16.msra.mxu0 %v9878
    %10971 = vmatpush.bf16.msra.mxu0 %v9870
    %10972 = vmatpush.bf16.msra.mxu0 %v9862
    %10973 = vmatpush.bf16.msra.mxu0 %v9854
    %10974 = vmatpush.bf16.msra.mxu0 %v9846
    %10975 = vmatpush.bf16.msra.mxu0 %v9838
    %10976 = vmatmul.bf16.gmra.mxu0 %v7895
    %v10977 = vpop.f32.mrf.mxu0
    %v10978 = vadd.f32 %v10965, %v10977
    %v10979 = vpop.f32.mrf.mxu0
    %10980 = vdwg.mxu0
    %10981 = vmatpush.bf16.msra.mxu0 %v9958
    %10982 = vmatpush.bf16.msra.mxu0 %v9950
    %10983 = vmatpush.bf16.msra.mxu0 %v9942
    %10984 = vmatpush.bf16.msra.mxu0 %v9934
    %10985 = vmatpush.bf16.msra.mxu0 %v9926
    %10986 = vmatpush.bf16.msra.mxu0 %v9918
    %10987 = vmatpush.bf16.msra.mxu0 %v9910
    %10988 = vmatpush.bf16.msra.mxu0 %v9902
    %10989 = vmatmul.bf16.gmra.mxu0 %v7896
    %v10990 = vpop.f32.mrf.mxu0
    %v10991 = vadd.f32 %v10978, %v10990
    %v10992 = vpop.f32.mrf.mxu0
    %10993 = vdwg.mxu0
    %10994 = vmatpush.bf16.msra.mxu0 %v9511
    %10995 = vmatpush.bf16.msra.mxu0 %v9503
    %10996 = vmatpush.bf16.msra.mxu0 %v9495
    %10997 = vmatpush.bf16.msra.mxu0 %v9487
    %10998 = vmatpush.bf16.msra.mxu0 %v9479
    %10999 = vmatpush.bf16.msra.mxu0 %v9471
    %11000 = vmatpush.bf16.msra.mxu0 %v9463
    %11001 = vmatpush.bf16.msra.mxu0 %v9455
    %11002 = vmatmul.bf16.gmra.mxu0 %v7889
    %v11003 = vpop.f32.mrf.mxu0
    %v11004 = vadd.f32 %v7903, %v11003
    %v11005 = vpop.f32.mrf.mxu0
    %11006 = vdwg.mxu0
    %11007 = vmatpush.bf16.msra.mxu0 %v9575
    %11008 = vmatpush.bf16.msra.mxu0 %v9567
    %11009 = vmatpush.bf16.msra.mxu0 %v9559
    %11010 = vmatpush.bf16.msra.mxu0 %v9551
    %11011 = vmatpush.bf16.msra.mxu0 %v9543
    %11012 = vmatpush.bf16.msra.mxu0 %v9535
    %11013 = vmatpush.bf16.msra.mxu0 %v9527
    %11014 = vmatpush.bf16.msra.mxu0 %v9519
    %11015 = vmatmul.bf16.gmra.mxu0 %v7890
    %v11016 = vpop.f32.mrf.mxu0
    %v11017 = vadd.f32 %v11004, %v11016
    %v11018 = vpop.f32.mrf.mxu0
    %11019 = vdwg.mxu0
    %11020 = vmatpush.bf16.msra.mxu0 %v9639
    %11021 = vmatpush.bf16.msra.mxu0 %v9631
    %11022 = vmatpush.bf16.msra.mxu0 %v9623
    %11023 = vmatpush.bf16.msra.mxu0 %v9615
    %11024 = vmatpush.bf16.msra.mxu0 %v9607
    %11025 = vmatpush.bf16.msra.mxu0 %v9599
    %11026 = vmatpush.bf16.msra.mxu0 %v9591
    %11027 = vmatpush.bf16.msra.mxu0 %v9583
    %11028 = vmatmul.bf16.gmra.mxu0 %v7891
    %v11029 = vpop.f32.mrf.mxu0
    %v11030 = vadd.f32 %v11017, %v11029
    %v11031 = vpop.f32.mrf.mxu0
    %11032 = vdwg.mxu0
    %11033 = vmatpush.bf16.msra.mxu0 %v9703
    %11034 = vmatpush.bf16.msra.mxu0 %v9695
    %11035 = vmatpush.bf16.msra.mxu0 %v9687
    %11036 = vmatpush.bf16.msra.mxu0 %v9679
    %11037 = vmatpush.bf16.msra.mxu0 %v9671
    %11038 = vmatpush.bf16.msra.mxu0 %v9663
    %11039 = vmatpush.bf16.msra.mxu0 %v9655
    %11040 = vmatpush.bf16.msra.mxu0 %v9647
    %11041 = vmatmul.bf16.gmra.mxu0 %v7892
    %v11042 = vpop.f32.mrf.mxu0
    %v11043 = vadd.f32 %v11030, %v11042
    %v11044 = vpop.f32.mrf.mxu0
    %11045 = vdwg.mxu0
    %11046 = vmatpush.bf16.msra.mxu0 %v9767
    %11047 = vmatpush.bf16.msra.mxu0 %v9759
    %11048 = vmatpush.bf16.msra.mxu0 %v9751
    %11049 = vmatpush.bf16.msra.mxu0 %v9743
    %11050 = vmatpush.bf16.msra.mxu0 %v9735
    %11051 = vmatpush.bf16.msra.mxu0 %v9727
    %11052 = vmatpush.bf16.msra.mxu0 %v9719
    %11053 = vmatpush.bf16.msra.mxu0 %v9711
    %11054 = vmatmul.bf16.gmra.mxu0 %v7893
    %v11055 = vpop.f32.mrf.mxu0
    %v11056 = vadd.f32 %v11043, %v11055
    %v11057 = vpop.f32.mrf.mxu0
    %11058 = vdwg.mxu0
    %11059 = vmatpush.bf16.msra.mxu0 %v9831
    %11060 = vmatpush.bf16.msra.mxu0 %v9823
    %11061 = vmatpush.bf16.msra.mxu0 %v9815
    %11062 = vmatpush.bf16.msra.mxu0 %v9807
    %11063 = vmatpush.bf16.msra.mxu0 %v9799
    %11064 = vmatpush.bf16.msra.mxu0 %v9791
    %11065 = vmatpush.bf16.msra.mxu0 %v9783
    %11066 = vmatpush.bf16.msra.mxu0 %v9775
    %11067 = vmatmul.bf16.gmra.mxu0 %v7894
    %v11068 = vpop.f32.mrf.mxu0
    %v11069 = vadd.f32 %v11056, %v11068
    %v11070 = vpop.f32.mrf.mxu0
    %11071 = vdwg.mxu0
    %11072 = vmatpush.bf16.msra.mxu0 %v9895
    %11073 = vmatpush.bf16.msra.mxu0 %v9887
    %11074 = vmatpush.bf16.msra.mxu0 %v9879
    %11075 = vmatpush.bf16.msra.mxu0 %v9871
    %11076 = vmatpush.bf16.msra.mxu0 %v9863
    %11077 = vmatpush.bf16.msra.mxu0 %v9855
    %11078 = vmatpush.bf16.msra.mxu0 %v9847
    %11079 = vmatpush.bf16.msra.mxu0 %v9839
    %11080 = vmatmul.bf16.gmra.mxu0 %v7895
    %v11081 = vpop.f32.mrf.mxu0
    %v11082 = vadd.f32 %v11069, %v11081
    %v11083 = vpop.f32.mrf.mxu0
    %11084 = vdwg.mxu0
    %11085 = vmatpush.bf16.msra.mxu0 %v9959
    %11086 = vmatpush.bf16.msra.mxu0 %v9951
    %11087 = vmatpush.bf16.msra.mxu0 %v9943
    %11088 = vmatpush.bf16.msra.mxu0 %v9935
    %11089 = vmatpush.bf16.msra.mxu0 %v9927
    %11090 = vmatpush.bf16.msra.mxu0 %v9919
    %11091 = vmatpush.bf16.msra.mxu0 %v9911
    %11092 = vmatpush.bf16.msra.mxu0 %v9903
    %11093 = vmatmul.bf16.gmra.mxu0 %v7896
    %v11094 = vpop.f32.mrf.mxu0
    %v11095 = vadd.f32 %v11082, %v11094
    %v11096 = vpop.f32.mrf.mxu0
    %11097 = vdwg.mxu0
    %11098 = vmatpush.bf16.msra.mxu0 %v9512
    %11099 = vmatpush.bf16.msra.mxu0 %v9504
    %11100 = vmatpush.bf16.msra.mxu0 %v9496
    %11101 = vmatpush.bf16.msra.mxu0 %v9488
    %11102 = vmatpush.bf16.msra.mxu0 %v9480
    %11103 = vmatpush.bf16.msra.mxu0 %v9472
    %11104 = vmatpush.bf16.msra.mxu0 %v9464
    %11105 = vmatpush.bf16.msra.mxu0 %v9456
    %11106 = vmatmul.bf16.gmra.mxu0 %v7889
    %v11107 = vpop.f32.mrf.mxu0
    %v11108 = vadd.f32 %v7904, %v11107
    %v11109 = vpop.f32.mrf.mxu0
    %11110 = vdwg.mxu0
    %11111 = vmatpush.bf16.msra.mxu0 %v9576
    %11112 = vmatpush.bf16.msra.mxu0 %v9568
    %11113 = vmatpush.bf16.msra.mxu0 %v9560
    %11114 = vmatpush.bf16.msra.mxu0 %v9552
    %11115 = vmatpush.bf16.msra.mxu0 %v9544
    %11116 = vmatpush.bf16.msra.mxu0 %v9536
    %11117 = vmatpush.bf16.msra.mxu0 %v9528
    %11118 = vmatpush.bf16.msra.mxu0 %v9520
    %11119 = vmatmul.bf16.gmra.mxu0 %v7890
    %v11120 = vpop.f32.mrf.mxu0
    %v11121 = vadd.f32 %v11108, %v11120
    %v11122 = vpop.f32.mrf.mxu0
    %11123 = vdwg.mxu0
    %11124 = vmatpush.bf16.msra.mxu0 %v9640
    %11125 = vmatpush.bf16.msra.mxu0 %v9632
    %11126 = vmatpush.bf16.msra.mxu0 %v9624
    %11127 = vmatpush.bf16.msra.mxu0 %v9616
    %11128 = vmatpush.bf16.msra.mxu0 %v9608
    %11129 = vmatpush.bf16.msra.mxu0 %v9600
    %11130 = vmatpush.bf16.msra.mxu0 %v9592
    %11131 = vmatpush.bf16.msra.mxu0 %v9584
    %11132 = vmatmul.bf16.gmra.mxu0 %v7891
    %v11133 = vpop.f32.mrf.mxu0
    %v11134 = vadd.f32 %v11121, %v11133
    %v11135 = vpop.f32.mrf.mxu0
    %11136 = vdwg.mxu0
    %11137 = vmatpush.bf16.msra.mxu0 %v9704
    %11138 = vmatpush.bf16.msra.mxu0 %v9696
    %11139 = vmatpush.bf16.msra.mxu0 %v9688
    %11140 = vmatpush.bf16.msra.mxu0 %v9680
    %11141 = vmatpush.bf16.msra.mxu0 %v9672
    %11142 = vmatpush.bf16.msra.mxu0 %v9664
    %11143 = vmatpush.bf16.msra.mxu0 %v9656
    %11144 = vmatpush.bf16.msra.mxu0 %v9648
    %11145 = vmatmul.bf16.gmra.mxu0 %v7892
    %v11146 = vpop.f32.mrf.mxu0
    %v11147 = vadd.f32 %v11134, %v11146
    %v11148 = vpop.f32.mrf.mxu0
    %11149 = vdwg.mxu0
    %11150 = vmatpush.bf16.msra.mxu0 %v9768
    %11151 = vmatpush.bf16.msra.mxu0 %v9760
    %11152 = vmatpush.bf16.msra.mxu0 %v9752
    %11153 = vmatpush.bf16.msra.mxu0 %v9744
    %11154 = vmatpush.bf16.msra.mxu0 %v9736
    %11155 = vmatpush.bf16.msra.mxu0 %v9728
    %11156 = vmatpush.bf16.msra.mxu0 %v9720
    %11157 = vmatpush.bf16.msra.mxu0 %v9712
    %11158 = vmatmul.bf16.gmra.mxu0 %v7893
    %v11159 = vpop.f32.mrf.mxu0
    %v11160 = vadd.f32 %v11147, %v11159
    %v11161 = vpop.f32.mrf.mxu0
    %11162 = vdwg.mxu0
    %11163 = vmatpush.bf16.msra.mxu0 %v9832
    %11164 = vmatpush.bf16.msra.mxu0 %v9824
    %11165 = vmatpush.bf16.msra.mxu0 %v9816
    %11166 = vmatpush.bf16.msra.mxu0 %v9808
    %11167 = vmatpush.bf16.msra.mxu0 %v9800
    %11168 = vmatpush.bf16.msra.mxu0 %v9792
    %11169 = vmatpush.bf16.msra.mxu0 %v9784
    %11170 = vmatpush.bf16.msra.mxu0 %v9776
    %11171 = vmatmul.bf16.gmra.mxu0 %v7894
    %v11172 = vpop.f32.mrf.mxu0
    %v11173 = vadd.f32 %v11160, %v11172
    %v11174 = vpop.f32.mrf.mxu0
    %11175 = vdwg.mxu0
    %11176 = vmatpush.bf16.msra.mxu0 %v9896
    %11177 = vmatpush.bf16.msra.mxu0 %v9888
    %11178 = vmatpush.bf16.msra.mxu0 %v9880
    %11179 = vmatpush.bf16.msra.mxu0 %v9872
    %11180 = vmatpush.bf16.msra.mxu0 %v9864
    %11181 = vmatpush.bf16.msra.mxu0 %v9856
    %11182 = vmatpush.bf16.msra.mxu0 %v9848
    %11183 = vmatpush.bf16.msra.mxu0 %v9840
    %11184 = vmatmul.bf16.gmra.mxu0 %v7895
    %v11185 = vpop.f32.mrf.mxu0
    %v11186 = vadd.f32 %v11173, %v11185
    %v11187 = vpop.f32.mrf.mxu0
    %11188 = vdwg.mxu0
    %11189 = vmatpush.bf16.msra.mxu0 %v9960
    %11190 = vmatpush.bf16.msra.mxu0 %v9952
    %11191 = vmatpush.bf16.msra.mxu0 %v9944
    %11192 = vmatpush.bf16.msra.mxu0 %v9936
    %11193 = vmatpush.bf16.msra.mxu0 %v9928
    %11194 = vmatpush.bf16.msra.mxu0 %v9920
    %11195 = vmatpush.bf16.msra.mxu0 %v9912
    %11196 = vmatpush.bf16.msra.mxu0 %v9904
    %11197 = vmatmul.bf16.gmra.mxu0 %v7896
    %v11198 = vpop.f32.mrf.mxu0
    %v11199 = vadd.f32 %v11186, %v11198
    %v11200 = vpop.f32.mrf.mxu0
    %11201 = vdwg.mxu0
    %11202 = vmatpush.bf16.msra.mxu0 %v9513
    %11203 = vmatpush.bf16.msra.mxu0 %v9505
    %11204 = vmatpush.bf16.msra.mxu0 %v9497
    %11205 = vmatpush.bf16.msra.mxu0 %v9489
    %11206 = vmatpush.bf16.msra.mxu0 %v9481
    %11207 = vmatpush.bf16.msra.mxu0 %v9473
    %11208 = vmatpush.bf16.msra.mxu0 %v9465
    %11209 = vmatpush.bf16.msra.mxu0 %v9457
    %11210 = vmatmul.bf16.gmra.mxu0 %v7889
    %v11211 = vpop.f32.mrf.mxu0
    %v11212 = vadd.f32 %v7905, %v11211
    %v11213 = vpop.f32.mrf.mxu0
    %11214 = vdwg.mxu0
    %11215 = vmatpush.bf16.msra.mxu0 %v9577
    %11216 = vmatpush.bf16.msra.mxu0 %v9569
    %11217 = vmatpush.bf16.msra.mxu0 %v9561
    %11218 = vmatpush.bf16.msra.mxu0 %v9553
    %11219 = vmatpush.bf16.msra.mxu0 %v9545
    %11220 = vmatpush.bf16.msra.mxu0 %v9537
    %11221 = vmatpush.bf16.msra.mxu0 %v9529
    %11222 = vmatpush.bf16.msra.mxu0 %v9521
    %11223 = vmatmul.bf16.gmra.mxu0 %v7890
    %v11224 = vpop.f32.mrf.mxu0
    %v11225 = vadd.f32 %v11212, %v11224
    %v11226 = vpop.f32.mrf.mxu0
    %11227 = vdwg.mxu0
    %11228 = vmatpush.bf16.msra.mxu0 %v9641
    %11229 = vmatpush.bf16.msra.mxu0 %v9633
    %11230 = vmatpush.bf16.msra.mxu0 %v9625
    %11231 = vmatpush.bf16.msra.mxu0 %v9617
    %11232 = vmatpush.bf16.msra.mxu0 %v9609
    %11233 = vmatpush.bf16.msra.mxu0 %v9601
    %11234 = vmatpush.bf16.msra.mxu0 %v9593
    %11235 = vmatpush.bf16.msra.mxu0 %v9585
    %11236 = vmatmul.bf16.gmra.mxu0 %v7891
    %v11237 = vpop.f32.mrf.mxu0
    %v11238 = vadd.f32 %v11225, %v11237
    %v11239 = vpop.f32.mrf.mxu0
    %11240 = vdwg.mxu0
    %11241 = vmatpush.bf16.msra.mxu0 %v9705
    %11242 = vmatpush.bf16.msra.mxu0 %v9697
    %11243 = vmatpush.bf16.msra.mxu0 %v9689
    %11244 = vmatpush.bf16.msra.mxu0 %v9681
    %11245 = vmatpush.bf16.msra.mxu0 %v9673
    %11246 = vmatpush.bf16.msra.mxu0 %v9665
    %11247 = vmatpush.bf16.msra.mxu0 %v9657
    %11248 = vmatpush.bf16.msra.mxu0 %v9649
    %11249 = vmatmul.bf16.gmra.mxu0 %v7892
    %v11250 = vpop.f32.mrf.mxu0
    %v11251 = vadd.f32 %v11238, %v11250
    %v11252 = vpop.f32.mrf.mxu0
    %11253 = vdwg.mxu0
    %11254 = vmatpush.bf16.msra.mxu0 %v9769
    %11255 = vmatpush.bf16.msra.mxu0 %v9761
    %11256 = vmatpush.bf16.msra.mxu0 %v9753
    %11257 = vmatpush.bf16.msra.mxu0 %v9745
    %11258 = vmatpush.bf16.msra.mxu0 %v9737
    %11259 = vmatpush.bf16.msra.mxu0 %v9729
    %11260 = vmatpush.bf16.msra.mxu0 %v9721
    %11261 = vmatpush.bf16.msra.mxu0 %v9713
    %11262 = vmatmul.bf16.gmra.mxu0 %v7893
    %v11263 = vpop.f32.mrf.mxu0
    %v11264 = vadd.f32 %v11251, %v11263
    %v11265 = vpop.f32.mrf.mxu0
    %11266 = vdwg.mxu0
    %11267 = vmatpush.bf16.msra.mxu0 %v9833
    %11268 = vmatpush.bf16.msra.mxu0 %v9825
    %11269 = vmatpush.bf16.msra.mxu0 %v9817
    %11270 = vmatpush.bf16.msra.mxu0 %v9809
    %11271 = vmatpush.bf16.msra.mxu0 %v9801
    %11272 = vmatpush.bf16.msra.mxu0 %v9793
    %11273 = vmatpush.bf16.msra.mxu0 %v9785
    %11274 = vmatpush.bf16.msra.mxu0 %v9777
    %11275 = vmatmul.bf16.gmra.mxu0 %v7894
    %v11276 = vpop.f32.mrf.mxu0
    %v11277 = vadd.f32 %v11264, %v11276
    %v11278 = vpop.f32.mrf.mxu0
    %11279 = vdwg.mxu0
    %11280 = vmatpush.bf16.msra.mxu0 %v9897
    %11281 = vmatpush.bf16.msra.mxu0 %v9889
    %11282 = vmatpush.bf16.msra.mxu0 %v9881
    %11283 = vmatpush.bf16.msra.mxu0 %v9873
    %11284 = vmatpush.bf16.msra.mxu0 %v9865
    %11285 = vmatpush.bf16.msra.mxu0 %v9857
    %11286 = vmatpush.bf16.msra.mxu0 %v9849
    %11287 = vmatpush.bf16.msra.mxu0 %v9841
    %11288 = vmatmul.bf16.gmra.mxu0 %v7895
    %v11289 = vpop.f32.mrf.mxu0
    %v11290 = vadd.f32 %v11277, %v11289
    %v11291 = vpop.f32.mrf.mxu0
    %11292 = vdwg.mxu0
    %11293 = vmatpush.bf16.msra.mxu0 %v9961
    %11294 = vmatpush.bf16.msra.mxu0 %v9953
    %11295 = vmatpush.bf16.msra.mxu0 %v9945
    %11296 = vmatpush.bf16.msra.mxu0 %v9937
    %11297 = vmatpush.bf16.msra.mxu0 %v9929
    %11298 = vmatpush.bf16.msra.mxu0 %v9921
    %11299 = vmatpush.bf16.msra.mxu0 %v9913
    %11300 = vmatpush.bf16.msra.mxu0 %v9905
    %11301 = vmatmul.bf16.gmra.mxu0 %v7896
    %v11302 = vpop.f32.mrf.mxu0
    %v11303 = vadd.f32 %v11290, %v11302
    %v11304 = vpop.f32.mrf.mxu0
    %11305 = vdwg.mxu0
    %v11306 = vmax.f32 %v10575, 0.0
    %v11307 = vmax.f32 %v10679, 0.0
    %v11308 = vmax.f32 %v10783, 0.0
    %v11309 = vmax.f32 %v10887, 0.0
    %v11310 = vmax.f32 %v10991, 0.0
    %v11311 = vmax.f32 %v11095, 0.0
    %v11312 = vmax.f32 %v11199, 0.0
    %v11313 = vmax.f32 %v11303, 0.0
    %v11314 = vpack.c.bf16 %v11306, %v11306
    %v11315 = vpack.c.bf16 %v11307, %v11307
    %v11316 = vpack.c.bf16 %v11308, %v11308
    %v11317 = vpack.c.bf16 %v11309, %v11309
    %v11318 = vpack.c.bf16 %v11310, %v11310
    %v11319 = vpack.c.bf16 %v11311, %v11311
    %v11320 = vpack.c.bf16 %v11312, %v11312
    %v11321 = vpack.c.bf16 %v11313, %v11313
    %v11323 = vperm.slane %v7439, 0
    %v11453 = vunpack.c.l.b16 %v7311
    %v11454 = vunpack.c.l.b16 %v7312
    %v11455 = vunpack.c.l.b16 %v7313
    %v11456 = vunpack.c.l.b16 %v7314
    %v11457 = vunpack.c.l.b16 %v7315
    %v11458 = vunpack.c.l.b16 %v7316
    %v11459 = vunpack.c.l.b16 %v7317
    %v11460 = vunpack.c.l.b16 %v7318
    %v11461 = vunpack.c.l.b16 %v7319
    %v11462 = vunpack.c.l.b16 %v7320
    %v11463 = vunpack.c.l.b16 %v7321
    %v11464 = vunpack.c.l.b16 %v7322
    %v11465 = vunpack.c.l.b16 %v7323
    %v11466 = vunpack.c.l.b16 %v7324
    %v11467 = vunpack.c.l.b16 %v7325
    %v11468 = vunpack.c.l.b16 %v7326
    %v11469 = vunpack.c.l.b16 %v7327
    %v11470 = vunpack.c.l.b16 %v7328
    %v11471 = vunpack.c.l.b16 %v7329
    %v11472 = vunpack.c.l.b16 %v7330
    %v11473 = vunpack.c.l.b16 %v7331
    %v11474 = vunpack.c.l.b16 %v7332
    %v11475 = vunpack.c.l.b16 %v7333
    %v11476 = vunpack.c.l.b16 %v7334
    %v11477 = vunpack.c.l.b16 %v7335
    %v11478 = vunpack.c.l.b16 %v7336
    %v11479 = vunpack.c.l.b16 %v7337
    %v11480 = vunpack.c.l.b16 %v7338
    %v11481 = vunpack.c.l.b16 %v7339
    %v11482 = vunpack.c.l.b16 %v7340
    %v11483 = vunpack.c.l.b16 %v7341
    %v11484 = vunpack.c.l.b16 %v7342
    %v11485 = vunpack.c.l.b16 %v7343
    %v11486 = vunpack.c.l.b16 %v7344
    %v11487 = vunpack.c.l.b16 %v7345
    %v11488 = vunpack.c.l.b16 %v7346
    %v11489 = vunpack.c.l.b16 %v7347
    %v11490 = vunpack.c.l.b16 %v7348
    %v11491 = vunpack.c.l.b16 %v7349
    %v11492 = vunpack.c.l.b16 %v7350
    %v11493 = vunpack.c.l.b16 %v7351
    %v11494 = vunpack.c.l.b16 %v7352
    %v11495 = vunpack.c.l.b16 %v7353
    %v11496 = vunpack.c.l.b16 %v7354
    %v11497 = vunpack.c.l.b16 %v7355
    %v11498 = vunpack.c.l.b16 %v7356
    %v11499 = vunpack.c.l.b16 %v7357
    %v11500 = vunpack.c.l.b16 %v7358
    %v11501 = vunpack.c.l.b16 %v7359
    %v11502 = vunpack.c.l.b16 %v7360
    %v11503 = vunpack.c.l.b16 %v7361
    %v11504 = vunpack.c.l.b16 %v7362
    %v11505 = vunpack.c.l.b16 %v7363
    %v11506 = vunpack.c.l.b16 %v7364
    %v11507 = vunpack.c.l.b16 %v7365
    %v11508 = vunpack.c.l.b16 %v7366
    %v11509 = vunpack.c.l.b16 %v7367
    %v11510 = vunpack.c.l.b16 %v7368
    %v11511 = vunpack.c.l.b16 %v7369
    %v11512 = vunpack.c.l.b16 %v7370
    %v11513 = vunpack.c.l.b16 %v7371
    %v11514 = vunpack.c.l.b16 %v7372
    %v11515 = vunpack.c.l.b16 %v7373
    %v11516 = vunpack.c.l.b16 %v7374
    %v11517 = vunpack.c.l.b16 %v7375
    %v11518 = vunpack.c.l.b16 %v7376
    %v11519 = vunpack.c.l.b16 %v7377
    %v11520 = vunpack.c.l.b16 %v7378
    %v11521 = vunpack.c.l.b16 %v7379
    %v11522 = vunpack.c.l.b16 %v7380
    %v11523 = vunpack.c.l.b16 %v7381
    %v11524 = vunpack.c.l.b16 %v7382
    %v11525 = vunpack.c.l.b16 %v7383
    %v11526 = vunpack.c.l.b16 %v7384
    %v11527 = vunpack.c.l.b16 %v7385
    %v11528 = vunpack.c.l.b16 %v7386
    %v11529 = vunpack.c.l.b16 %v7387
    %v11530 = vunpack.c.l.b16 %v7388
    %v11531 = vunpack.c.l.b16 %v7389
    %v11532 = vunpack.c.l.b16 %v7390
    %v11533 = vunpack.c.l.b16 %v7391
    %v11534 = vunpack.c.l.b16 %v7392
    %v11535 = vunpack.c.l.b16 %v7393
    %v11536 = vunpack.c.l.b16 %v7394
    %v11537 = vunpack.c.l.b16 %v7395
    %v11538 = vunpack.c.l.b16 %v7396
    %v11539 = vunpack.c.l.b16 %v7397
    %v11540 = vunpack.c.l.b16 %v7398
    %v11541 = vunpack.c.l.b16 %v7399
    %v11542 = vunpack.c.l.b16 %v7400
    %v11543 = vunpack.c.l.b16 %v7401
    %v11544 = vunpack.c.l.b16 %v7402
    %v11545 = vunpack.c.l.b16 %v7403
    %v11546 = vunpack.c.l.b16 %v7404
    %v11547 = vunpack.c.l.b16 %v7405
    %v11548 = vunpack.c.l.b16 %v7406
    %v11549 = vunpack.c.l.b16 %v7407
    %v11550 = vunpack.c.l.b16 %v7408
    %v11551 = vunpack.c.l.b16 %v7409
    %v11552 = vunpack.c.l.b16 %v7410
    %v11553 = vunpack.c.l.b16 %v7411
    %v11554 = vunpack.c.l.b16 %v7412
    %v11555 = vunpack.c.l.b16 %v7413
    %v11556 = vunpack.c.l.b16 %v7414
    %v11557 = vunpack.c.l.b16 %v7415
    %v11558 = vunpack.c.l.b16 %v7416
    %v11559 = vunpack.c.l.b16 %v7417
    %v11560 = vunpack.c.l.b16 %v7418
    %v11561 = vunpack.c.l.b16 %v7419
    %v11562 = vunpack.c.l.b16 %v7420
    %v11563 = vunpack.c.l.b16 %v7421
    %v11564 = vunpack.c.l.b16 %v7422
    %v11565 = vunpack.c.l.b16 %v7423
    %v11566 = vunpack.c.l.b16 %v7424
    %v11567 = vunpack.c.l.b16 %v7425
    %v11568 = vunpack.c.l.b16 %v7426
    %v11569 = vunpack.c.l.b16 %v7427
    %v11570 = vunpack.c.l.b16 %v7428
    %v11571 = vunpack.c.l.b16 %v7429
    %v11572 = vunpack.c.l.b16 %v7430
    %v11573 = vunpack.c.l.b16 %v7431
    %v11574 = vunpack.c.l.b16 %v7432
    %v11575 = vunpack.c.l.b16 %v7433
    %v11576 = vunpack.c.l.b16 %v7434
    %v11577 = vunpack.c.l.b16 %v7435
    %v11578 = vunpack.c.l.b16 %v7436
    %v11579 = vunpack.c.l.b16 %v7437
    %v11580 = vunpack.c.l.b16 %v7438
    %v11581 = vpack.c.b16 %v11454, %v11453
    %v11582 = vpack.c.b16 %v11456, %v11455
    %v11583 = vpack.c.b16 %v11458, %v11457
    %v11584 = vpack.c.b16 %v11460, %v11459
    %v11585 = vpack.c.b16 %v11462, %v11461
    %v11586 = vpack.c.b16 %v11464, %v11463
    %v11587 = vpack.c.b16 %v11466, %v11465
    %v11588 = vpack.c.b16 %v11468, %v11467
    %v11589 = vpack.c.b16 %v11470, %v11469
    %v11590 = vpack.c.b16 %v11472, %v11471
    %v11591 = vpack.c.b16 %v11474, %v11473
    %v11592 = vpack.c.b16 %v11476, %v11475
    %v11593 = vpack.c.b16 %v11478, %v11477
    %v11594 = vpack.c.b16 %v11480, %v11479
    %v11595 = vpack.c.b16 %v11482, %v11481
    %v11596 = vpack.c.b16 %v11484, %v11483
    %v11597 = vpack.c.b16 %v11486, %v11485
    %v11598 = vpack.c.b16 %v11488, %v11487
    %v11599 = vpack.c.b16 %v11490, %v11489
    %v11600 = vpack.c.b16 %v11492, %v11491
    %v11601 = vpack.c.b16 %v11494, %v11493
    %v11602 = vpack.c.b16 %v11496, %v11495
    %v11603 = vpack.c.b16 %v11498, %v11497
    %v11604 = vpack.c.b16 %v11500, %v11499
    %v11605 = vpack.c.b16 %v11502, %v11501
    %v11606 = vpack.c.b16 %v11504, %v11503
    %v11607 = vpack.c.b16 %v11506, %v11505
    %v11608 = vpack.c.b16 %v11508, %v11507
    %v11609 = vpack.c.b16 %v11510, %v11509
    %v11610 = vpack.c.b16 %v11512, %v11511
    %v11611 = vpack.c.b16 %v11514, %v11513
    %v11612 = vpack.c.b16 %v11516, %v11515
    %v11613 = vpack.c.b16 %v11518, %v11517
    %v11614 = vpack.c.b16 %v11520, %v11519
    %v11615 = vpack.c.b16 %v11522, %v11521
    %v11616 = vpack.c.b16 %v11524, %v11523
    %v11617 = vpack.c.b16 %v11526, %v11525
    %v11618 = vpack.c.b16 %v11528, %v11527
    %v11619 = vpack.c.b16 %v11530, %v11529
    %v11620 = vpack.c.b16 %v11532, %v11531
    %v11621 = vpack.c.b16 %v11534, %v11533
    %v11622 = vpack.c.b16 %v11536, %v11535
    %v11623 = vpack.c.b16 %v11538, %v11537
    %v11624 = vpack.c.b16 %v11540, %v11539
    %v11625 = vpack.c.b16 %v11542, %v11541
    %v11626 = vpack.c.b16 %v11544, %v11543
    %v11627 = vpack.c.b16 %v11546, %v11545
    %v11628 = vpack.c.b16 %v11548, %v11547
    %v11629 = vpack.c.b16 %v11550, %v11549
    %v11630 = vpack.c.b16 %v11552, %v11551
    %v11631 = vpack.c.b16 %v11554, %v11553
    %v11632 = vpack.c.b16 %v11556, %v11555
    %v11633 = vpack.c.b16 %v11558, %v11557
    %v11634 = vpack.c.b16 %v11560, %v11559
    %v11635 = vpack.c.b16 %v11562, %v11561
    %v11636 = vpack.c.b16 %v11564, %v11563
    %v11637 = vpack.c.b16 %v11566, %v11565
    %v11638 = vpack.c.b16 %v11568, %v11567
    %v11639 = vpack.c.b16 %v11570, %v11569
    %v11640 = vpack.c.b16 %v11572, %v11571
    %v11641 = vpack.c.b16 %v11574, %v11573
    %v11642 = vpack.c.b16 %v11576, %v11575
    %v11643 = vpack.c.b16 %v11578, %v11577
    %v11644 = vpack.c.b16 %v11580, %v11579
    %11709 = vmatpush.bf16.msra.mxu0 %v11588
    %11710 = vmatpush.bf16.msra.mxu0 %v11587
    %11711 = vmatpush.bf16.msra.mxu0 %v11586
    %11712 = vmatpush.bf16.msra.mxu0 %v11585
    %11713 = vmatpush.bf16.msra.mxu0 %v11584
    %11714 = vmatpush.bf16.msra.mxu0 %v11583
    %11715 = vmatpush.bf16.msra.mxu0 %v11582
    %11716 = vmatpush.bf16.msra.mxu0 %v11581
    %11717 = vmatmul.bf16.gmra.mxu0 %v11314
    %v11718 = vpop.f32.mrf.mxu0
    %v11719 = vadd.f32 %v11323, %v11718
    %v11720 = vpop.f32.mrf.mxu0
    %11721 = vdwg.mxu0
    %11722 = vmatpush.bf16.msra.mxu0 %v11596
    %11723 = vmatpush.bf16.msra.mxu0 %v11595
    %11724 = vmatpush.bf16.msra.mxu0 %v11594
    %11725 = vmatpush.bf16.msra.mxu0 %v11593
    %11726 = vmatpush.bf16.msra.mxu0 %v11592
    %11727 = vmatpush.bf16.msra.mxu0 %v11591
    %11728 = vmatpush.bf16.msra.mxu0 %v11590
    %11729 = vmatpush.bf16.msra.mxu0 %v11589
    %11730 = vmatmul.bf16.gmra.mxu0 %v11315
    %v11731 = vpop.f32.mrf.mxu0
    %v11732 = vadd.f32 %v11719, %v11731
    %v11733 = vpop.f32.mrf.mxu0
    %11734 = vdwg.mxu0
    %11735 = vmatpush.bf16.msra.mxu0 %v11604
    %11736 = vmatpush.bf16.msra.mxu0 %v11603
    %11737 = vmatpush.bf16.msra.mxu0 %v11602
    %11738 = vmatpush.bf16.msra.mxu0 %v11601
    %11739 = vmatpush.bf16.msra.mxu0 %v11600
    %11740 = vmatpush.bf16.msra.mxu0 %v11599
    %11741 = vmatpush.bf16.msra.mxu0 %v11598
    %11742 = vmatpush.bf16.msra.mxu0 %v11597
    %11743 = vmatmul.bf16.gmra.mxu0 %v11316
    %v11744 = vpop.f32.mrf.mxu0
    %v11745 = vadd.f32 %v11732, %v11744
    %v11746 = vpop.f32.mrf.mxu0
    %11747 = vdwg.mxu0
    %11748 = vmatpush.bf16.msra.mxu0 %v11612
    %11749 = vmatpush.bf16.msra.mxu0 %v11611
    %11750 = vmatpush.bf16.msra.mxu0 %v11610
    %11751 = vmatpush.bf16.msra.mxu0 %v11609
    %11752 = vmatpush.bf16.msra.mxu0 %v11608
    %11753 = vmatpush.bf16.msra.mxu0 %v11607
    %11754 = vmatpush.bf16.msra.mxu0 %v11606
    %11755 = vmatpush.bf16.msra.mxu0 %v11605
    %11756 = vmatmul.bf16.gmra.mxu0 %v11317
    %v11757 = vpop.f32.mrf.mxu0
    %v11758 = vadd.f32 %v11745, %v11757
    %v11759 = vpop.f32.mrf.mxu0
    %11760 = vdwg.mxu0
    %11761 = vmatpush.bf16.msra.mxu0 %v11620
    %11762 = vmatpush.bf16.msra.mxu0 %v11619
    %11763 = vmatpush.bf16.msra.mxu0 %v11618
    %11764 = vmatpush.bf16.msra.mxu0 %v11617
    %11765 = vmatpush.bf16.msra.mxu0 %v11616
    %11766 = vmatpush.bf16.msra.mxu0 %v11615
    %11767 = vmatpush.bf16.msra.mxu0 %v11614
    %11768 = vmatpush.bf16.msra.mxu0 %v11613
    %11769 = vmatmul.bf16.gmra.mxu0 %v11318
    %v11770 = vpop.f32.mrf.mxu0
    %v11771 = vadd.f32 %v11758, %v11770
    %v11772 = vpop.f32.mrf.mxu0
    %11773 = vdwg.mxu0
    %11774 = vmatpush.bf16.msra.mxu0 %v11628
    %11775 = vmatpush.bf16.msra.mxu0 %v11627
    %11776 = vmatpush.bf16.msra.mxu0 %v11626
    %11777 = vmatpush.bf16.msra.mxu0 %v11625
    %11778 = vmatpush.bf16.msra.mxu0 %v11624
    %11779 = vmatpush.bf16.msra.mxu0 %v11623
    %11780 = vmatpush.bf16.msra.mxu0 %v11622
    %11781 = vmatpush.bf16.msra.mxu0 %v11621
    %11782 = vmatmul.bf16.gmra.mxu0 %v11319
    %v11783 = vpop.f32.mrf.mxu0
    %v11784 = vadd.f32 %v11771, %v11783
    %v11785 = vpop.f32.mrf.mxu0
    %11786 = vdwg.mxu0
    %11787 = vmatpush.bf16.msra.mxu0 %v11636
    %11788 = vmatpush.bf16.msra.mxu0 %v11635
    %11789 = vmatpush.bf16.msra.mxu0 %v11634
    %11790 = vmatpush.bf16.msra.mxu0 %v11633
    %11791 = vmatpush.bf16.msra.mxu0 %v11632
    %11792 = vmatpush.bf16.msra.mxu0 %v11631
    %11793 = vmatpush.bf16.msra.mxu0 %v11630
    %11794 = vmatpush.bf16.msra.mxu0 %v11629
    %11795 = vmatmul.bf16.gmra.mxu0 %v11320
    %v11796 = vpop.f32.mrf.mxu0
    %v11797 = vadd.f32 %v11784, %v11796
    %v11798 = vpop.f32.mrf.mxu0
    %11799 = vdwg.mxu0
    %11800 = vmatpush.bf16.msra.mxu0 %v11644
    %11801 = vmatpush.bf16.msra.mxu0 %v11643
    %11802 = vmatpush.bf16.msra.mxu0 %v11642
    %11803 = vmatpush.bf16.msra.mxu0 %v11641
    %11804 = vmatpush.bf16.msra.mxu0 %v11640
    %11805 = vmatpush.bf16.msra.mxu0 %v11639
    %11806 = vmatpush.bf16.msra.mxu0 %v11638
    %11807 = vmatpush.bf16.msra.mxu0 %v11637
    %11808 = vmatmul.bf16.gmra.mxu0 %v11321
    %v11809 = vpop.f32.mrf.mxu0
    %v11810 = vadd.f32 %v11797, %v11809
    %v11811 = vpop.f32.mrf.mxu0
    %11812 = vdwg.mxu0
    %11813 = vst [vmem:[#allocation50] sm:$0x3] %v11810
    // Predicated region
    $region246: #{alexnet_dann_forward.1} parent=1 // pred_check
      _
    $region247: #{alexnet_dann_forward.1} parent=1 // pred_check_branch
      %11815 = sbr.rel (0) target = $region249
    $region248: #{alexnet_dann_forward.1} parent=1 // pred_region
      %11817 = vsyncadd [#allocation4], 0
      %s11819 = sshll.u32 [#allocation49], 4
      %s11820 = int_to_ptr.vmem [resolvable:$true] %s11819
      %s11821 = sshll.u32 %s63, 4
      %s11822 = int_to_ptr.hbm [resolvable:$true] %s11821
      %11824 = dma.vmem_to_hbm [thread:$0]  %s11820, 32, %s11822, [#allocation4]
    $region249: #{alexnet_dann_forward.1} parent=1 // pred_fallthru
      _
    // Predicated region
    $region250: #{alexnet_dann_forward.1} parent=1 // pred_check
      _
    $region251: #{alexnet_dann_forward.1} parent=1 // pred_check_branch
      %11826 = sbr.rel (0) target = $region253
    $region252: #{alexnet_dann_forward.1} parent=1 // pred_region
      %11828 = vsyncadd [#allocation51], 0
      %s11830 = sshll.u32 [#allocation50], 4
      %s11831 = int_to_ptr.vmem [resolvable:$true] %s11830
      %s11832 = sshll.u32 %s65, 4
      %s11833 = int_to_ptr.hbm [resolvable:$true] %s11832
      %11835 = dma.vmem_to_hbm [thread:$0]  %s11831, 32, %s11833, [#allocation51]
    $region253: #{alexnet_dann_forward.1} parent=1 // pred_fallthru
      _
    // Predicated region
    $region254: #{alexnet_dann_forward.1} parent=1 // pred_check
      _
    $region255: #{alexnet_dann_forward.1} parent=1 // pred_check_branch
      %11837 = sbr.rel (0) target = $region257
    $region256: #{alexnet_dann_forward.1} parent=1 // pred_region
      %11839 = dma.done [#allocation4], 32
    $region257: #{alexnet_dann_forward.1} parent=1 // pred_fallthru
      _
    // Predicated region
    $region258: #{alexnet_dann_forward.1} parent=1 // pred_check
      _
    $region259: #{alexnet_dann_forward.1} parent=1 // pred_check_branch
      %11841 = sbr.rel (0) target = $region261
    $region260: #{alexnet_dann_forward.1} parent=1 // pred_region
      %11843 = dma.done [#allocation51], 32
    $region261: #{alexnet_dann_forward.1} parent=1 // pred_fallthru
      _
    %11844 = vsyncpa [#allocation3], 1
    %11845 = vsyncpa [#allocation6], 1
    %11846 = vsyncpa [#allocation9], 1
    %11847 = vsyncpa [#allocation12], 1
    %11848 = vsyncpa [#allocation15], 1
    %11849 = vsyncpa [#allocation18], 1
    %11850 = vsyncpa [#allocation21], 1
    %11851 = vsyncpa [#allocation24], 1
    %11852 = vsyncpa [#allocation27], 1
    %11853 = vsyncpa [#allocation30], 1
    %11854 = vsyncpa [#allocation33], 1
    %11855 = vsyncpa [#allocation36], 1
    %11856 = vsyncpa [#allocation39], 1
    %11857 = vsyncpa [#allocation42], 1
    %11858 = vsyncpa [#allocation45], 1
    %11859 = vsyncpa [#allocation48], 1
    %11860 = vsyncpa [#allocation4], 1
    %11861 = vsyncpa [#allocation51], 1

</llo_original>
